<compile_context>
chip_gen: v6e
topology: v6e:2x2x1
jax: 0.10.0
libtpu: 0.0.40
codegen_flags: <defaults>
</compile_context>

<pallas_src>
import functools

import jax
import jax.numpy as jnp
import numpy as np
from jax.experimental import pallas as pl
from jax.experimental.pallas import tpu as pltpu


# ---------------------------------------------------------------------------
# GEMM + bias + ReLU kernel (MXU).  bf16 operands, f32 accumulate / output.
# ---------------------------------------------------------------------------

def _matmul_bias_kernel(x_ref, w_ref, b_ref, o_ref, *, apply_relu):
    # x_ref: (tm, K) bf16   w_ref: (K, Cout) bf16   b_ref: (1, Cout) f32
    acc = jnp.dot(x_ref[...], w_ref[...], preferred_element_type=jnp.float32)
    acc = acc + b_ref[...]
    if apply_relu:
        acc = jnp.maximum(acc, 0.0)
    o_ref[...] = acc.astype(o_ref.dtype)


def _pick_row_tile(M):
    """Whole block for small M; >=2 parallel row blocks for the large GEMMs so
    a v7x chip (2 TensorCores) can split them.  Capped at 1024 rows so the
    working set stays far below the scoped VMEM limit on every generation."""
    if M <= 256:
        return M
    for tm in (1024, 512, 256, 128):
        if M % tm == 0 and M // tm >= 2:
            return tm
    return M


def matmul_bias(x, w, b, *, apply_relu):
    """out = (relu)(x @ w + b) on the MXU (bf16 inputs, f32 accumulation)."""
    M, K = x.shape
    Kw, N = w.shape
    assert K == Kw
    b2 = b.reshape(1, N).astype(jnp.float32)

    tm = _pick_row_tile(M)
    grid = (M // tm,)

    return pl.pallas_call(
        functools.partial(_matmul_bias_kernel, apply_relu=apply_relu),
        out_shape=jax.ShapeDtypeStruct((M, N), jnp.float32),
        grid=grid,
        in_specs=[
            pl.BlockSpec((tm, K), lambda i: (i, 0)),
            # Constant block index -> weight / bias stay resident across steps.
            pl.BlockSpec((K, N), lambda i: (0, 0)),
            pl.BlockSpec((1, N), lambda i: (0, 0)),
        ],
        out_specs=pl.BlockSpec((tm, N), lambda i: (i, 0)),
        compiler_params=pltpu.CompilerParams(
            dimension_semantics=("parallel",),
            vmem_limit_bytes=32 * 1024 * 1024),
    )(x.astype(jnp.bfloat16), w.astype(jnp.bfloat16), b2)


# ---------------------------------------------------------------------------
# Pooling kernel: k x k window reduction, transpose-free.
# The wrapper only does a contiguous (metadata-only) reshape of NHWC into
# (N*Ho, k, Wo, k*C); the kernel reduces the window via an outer-dim index
# (row offset) and static lane slices (column offset).
# ---------------------------------------------------------------------------

def _pool_kernel(x_ref, o_ref, *, k, C, op):
    # x_ref: (N*Ho, k, Wo, k*C)   o_ref: (N*Ho, Wo, C)
    v = x_ref[...]
    acc = None
    for i in range(k):                       # window row (outer dim)
        row = v[:, i]                        # (N*Ho, Wo, k*C)
        for j in range(k):                   # window col (lane slice)
            tap = row[:, :, j * C:(j + 1) * C]
            if acc is None:
                acc = tap
            elif op == "max":
                acc = jnp.maximum(acc, tap)
            else:
                acc = acc + tap
    if op == "mean":
        acc = acc * (1.0 / float(k * k))
    o_ref[...] = acc.astype(o_ref.dtype)


def pool2d(x, k, op):
    """k x k pooling (stride k), op in {"max", "mean"}.  x is NHWC."""
    N, H, W, C = x.shape
    Ho, Wo = H // k, W // k
    xr = x.reshape(N * Ho, k, Wo, k * C)     # contiguous regroup, no transpose
    out = pl.pallas_call(
        functools.partial(_pool_kernel, k=k, C=C, op=op),
        out_shape=jax.ShapeDtypeStruct((N * Ho, Wo, C), jnp.float32),
    )(xr.astype(jnp.float32))
    return out.reshape(N, Ho, Wo, C)


# ---------------------------------------------------------------------------
# Head kernel: adaptive_avg_pool2d(1) + flatten + Linear fused in one call.
# The global average is expressed as a tiny matmul (averaging matrix) so every
# in-kernel op is a plain 2-D dot.
# ---------------------------------------------------------------------------

def _head_kernel(x_ref, p_ref, w_ref, b_ref, o_ref):
    # x_ref: (N*HW, C)  p_ref: (N, N*HW)  w_ref: (C, O)  b_ref: (1, O)
    pooled = jnp.dot(p_ref[...], x_ref[...], preferred_element_type=jnp.float32)
    o_ref[...] = (jnp.dot(pooled, w_ref[...], preferred_element_type=jnp.float32)
                  + b_ref[...])


def head(x, wf, bf):
    N, H, W, C = x.shape
    HW = H * W
    x2 = x.reshape(N * HW, C).astype(jnp.float32)
    pool_mat = jnp.repeat(jnp.eye(N, dtype=jnp.float32), HW, axis=1) / float(HW)
    w = wf.T.astype(jnp.float32)             # (C, num_out)
    b2 = bf.reshape(1, -1).astype(jnp.float32)
    return pl.pallas_call(
        _head_kernel,
        out_shape=jax.ShapeDtypeStruct((N, w.shape[1]), jnp.float32),
    )(x2, pool_mat, w, b2)


# ---------------------------------------------------------------------------
# Conv wrapper: stride-aware im2col (XLA layout glue) + Pallas GEMM kernel.
# ---------------------------------------------------------------------------

def _im2col_3x3(x, stride):
    # (N,H,W,C) -> (N*Ho*Wo, 9*C); column order (kh, kw, cin).  Stride-aware:
    # the stride-2 conv1 gathers taps only at even output positions (no 4x
    # redundant GEMM rows, no post-hoc subsampling).
    N, H, W, C = x.shape
    Ho = (H - 1) // stride + 1
    Wo = (W - 1) // stride + 1
    xp = jnp.pad(x, ((0, 0), (1, 1), (1, 1), (0, 0)))
    taps = [xp[:, dy:dy + (Ho - 1) * stride + 1:stride,
                  dx:dx + (Wo - 1) * stride + 1:stride, :]
            for dy in range(3) for dx in range(3)]
    patches = jnp.stack(taps, axis=3)        # (N, Ho, Wo, 9, C)
    return patches.reshape(N * Ho * Wo, 9 * C), Ho, Wo


def conv3x3_relu(x, w_oihw, b, *, stride=1):
    """relu(Conv2d(k=3, pad=1, stride))(x).  x: NHWC, w: (Cout, Cin, 3, 3)."""
    N, H, W, C = x.shape
    Cout = w_oihw.shape[0]
    # (Cout, Cin, kh, kw) -> (kh, kw, Cin, Cout) -> (9*Cin, Cout)
    wmat = jnp.transpose(w_oihw, (2, 3, 1, 0)).reshape(9 * C, Cout)
    patches, Ho, Wo = _im2col_3x3(x, stride)
    y = matmul_bias(patches, wmat, b, apply_relu=True)
    return y.reshape(N, Ho, Wo, Cout)


# ---------------------------------------------------------------------------
# UNet forward (mirrors the PyTorch module exactly)
# ---------------------------------------------------------------------------

def unet_forward(x, p):
    identity = pool2d(x, 4, "mean")                      # F.avg_pool2d(x, 4)
    x = conv3x3_relu(x, p["w1"], p["b1"], stride=2)      # relu(conv1)
    x = pool2d(x, 2, "max")                              # max_pool2d(2)
    x = jnp.concatenate([x, identity], axis=-1)

    identity = pool2d(x, 2, "mean")
    x = conv3x3_relu(x, p["w2"], p["b2"])
    x = pool2d(x, 2, "max")
    x = jnp.concatenate([x, identity], axis=-1)

    identity = pool2d(x, 2, "mean")
    x = conv3x3_relu(x, p["w3"], p["b3"])
    x = pool2d(x, 2, "max")
    x = jnp.concatenate([x, identity], axis=-1)

    identity = pool2d(x, 2, "mean")
    x = conv3x3_relu(x, p["w4"], p["b4"])
    x = pool2d(x, 2, "max")
    x = jnp.concatenate([x, identity], axis=-1)

    x = conv3x3_relu(x, p["w5"], p["b5"])
    return head(x, p["wf"], p["bf"])                     # avgpool+flatten+fcl


# ---------------------------------------------------------------------------
# Deterministic parameter init (PyTorch shape conventions)
# ---------------------------------------------------------------------------

def init_params(key, c_in=3, init_f=16, num_out=2):
    convs = [
        (init_f, c_in),                       # conv1
        (2 * init_f, c_in + init_f),          # conv2
        (4 * init_f, c_in + 3 * init_f),      # conv3
        (8 * init_f, c_in + 7 * init_f),      # conv4
        (16 * init_f, c_in + 15 * init_f),    # conv5
    ]
    keys = jax.random.split(key, 2 * len(convs) + 2)
    p = {}
    for i, (co, ci) in enumerate(convs, start=1):
        scale = 1.0 / np.sqrt(ci * 9)
        p[f"w{i}"] = scale * jax.random.normal(keys[2 * i - 2], (co, ci, 3, 3), jnp.float32)
        p[f"b{i}"] = scale * jax.random.normal(keys[2 * i - 1], (co,), jnp.float32)
    scale = 1.0 / np.sqrt(16 * init_f)
    p["wf"] = scale * jax.random.normal(keys[-2], (num_out, 16 * init_f), jnp.float32)
    p["bf"] = scale * jax.random.normal(keys[-1], (num_out,), jnp.float32)
    return p


# ---------------------------------------------------------------------------
# Pure-JAX reference (f32, HIGHEST precision) for a numerical sanity check
# ---------------------------------------------------------------------------

def reference_forward(x, p):
    dn = ("NHWC", "HWIO", "NHWC")

    def conv(x, w, b, stride):
        w_hwio = jnp.transpose(w, (2, 3, 1, 0))
        y = jax.lax.conv_general_dilated(
            x, w_hwio, (stride, stride), ((1, 1), (1, 1)),
            dimension_numbers=dn, precision=jax.lax.Precision.HIGHEST)
        return jax.nn.relu(y + b)

    def maxp(x, k):
        return jax.lax.reduce_window(x, -jnp.inf, jax.lax.max,
                                     (1, k, k, 1), (1, k, k, 1), "VALID")

    def avgp(x, k):
        s = jax.lax.reduce_window(x, 0.0, jax.lax.add,
                                  (1, k, k, 1), (1, k, k, 1), "VALID")
        return s / float(k * k)

    identity = avgp(x, 4)
    x = conv(x, p["w1"], p["b1"], 2); x = maxp(x, 2)
    x = jnp.concatenate([x, identity], -1)
    identity = avgp(x, 2)
    x = conv(x, p["w2"], p["b2"], 1); x = maxp(x, 2)
    x = jnp.concatenate([x, identity], -1)
    identity = avgp(x, 2)
    x = conv(x, p["w3"], p["b3"], 1); x = maxp(x, 2)
    x = jnp.concatenate([x, identity], -1)
    identity = avgp(x, 2)
    x = conv(x, p["w4"], p["b4"], 1); x = maxp(x, 2)
    x = jnp.concatenate([x, identity], -1)
    x = conv(x, p["w5"], p["b5"], 1)
    x = jnp.mean(x, axis=(1, 2))
    return x @ p["wf"].T + p["bf"]


if __name__ == "__main__":
    key = jax.random.PRNGKey(0)
    kx, kp = jax.random.split(key)

    # PyTorch-style input (NCHW): batch=2, channels=3, spatial=64.
    x_nchw = jax.random.normal(kx, (2, 3, 64, 64), jnp.float32)
    x_nhwc = jnp.transpose(x_nchw, (0, 2, 3, 1))

    params = init_params(kp)

    out = jax.block_until_ready(jax.jit(unet_forward)(x_nhwc, params))
    assert out.shape == (2, 2), out.shape

    # Tolerance accounts for bf16 MXU operands vs. the f32 HIGHEST reference.
    ref = jax.block_until_ready(reference_forward(x_nhwc, params))
    np.testing.assert_allclose(np.asarray(out), np.asarray(ref), rtol=5e-2, atol=5e-2)

    print("KERNEL_OK")
</pallas_src>

<mosaic_0001>
module attributes {stable_mosaic.version = 11 : i64} {
  func.func @_pool_kernel(%arg0: memref<32x4x16x12xf32, #tpu.memory_space<vmem>>, %arg1: memref<32x16x3xf32, #tpu.memory_space<vmem>>) attributes {dimension_semantics = [], scalar_prefetch = 0 : i64, scratch_operands = 0 : i64, tpu.core_type = #tpu.core_type<tc>} {
    %c0 = arith.constant 0 : index
    %c0_0 = arith.constant 0 : index
    %c0_1 = arith.constant 0 : index
    %c0_2 = arith.constant 0 : index
    %0 = vector.load %arg0[%c0, %c0_0, %c0_1, %c0_2] : memref<32x4x16x12xf32, #tpu.memory_space<vmem>>, vector<32x4x16x12xf32>
    %1 = vector.extract_strided_slice %0 {offsets = [0, 0, 0, 0], sizes = [32, 1, 16, 12], strides = [1, 1, 1, 1]} : vector<32x4x16x12xf32> to vector<32x1x16x12xf32>
    %2 = vector.shape_cast %1 : vector<32x1x16x12xf32> to vector<32x16x12xf32>
    %3 = vector.extract_strided_slice %2 {offsets = [0, 0, 0], sizes = [32, 16, 3], strides = [1, 1, 1]} : vector<32x16x12xf32> to vector<32x16x3xf32>
    %4 = vector.extract_strided_slice %2 {offsets = [0, 0, 3], sizes = [32, 16, 3], strides = [1, 1, 1]} : vector<32x16x12xf32> to vector<32x16x3xf32>
    %5 = arith.addf %3, %4 : vector<32x16x3xf32>
    %6 = vector.extract_strided_slice %2 {offsets = [0, 0, 6], sizes = [32, 16, 3], strides = [1, 1, 1]} : vector<32x16x12xf32> to vector<32x16x3xf32>
    %7 = arith.addf %5, %6 : vector<32x16x3xf32>
    %8 = vector.extract_strided_slice %2 {offsets = [0, 0, 9], sizes = [32, 16, 3], strides = [1, 1, 1]} : vector<32x16x12xf32> to vector<32x16x3xf32>
    %9 = arith.addf %7, %8 : vector<32x16x3xf32>
    %10 = vector.extract_strided_slice %0 {offsets = [0, 1, 0, 0], sizes = [32, 1, 16, 12], strides = [1, 1, 1, 1]} : vector<32x4x16x12xf32> to vector<32x1x16x12xf32>
    %11 = vector.shape_cast %10 : vector<32x1x16x12xf32> to vector<32x16x12xf32>
    %12 = vector.extract_strided_slice %11 {offsets = [0, 0, 0], sizes = [32, 16, 3], strides = [1, 1, 1]} : vector<32x16x12xf32> to vector<32x16x3xf32>
    %13 = arith.addf %9, %12 : vector<32x16x3xf32>
    %14 = vector.extract_strided_slice %11 {offsets = [0, 0, 3], sizes = [32, 16, 3], strides = [1, 1, 1]} : vector<32x16x12xf32> to vector<32x16x3xf32>
    %15 = arith.addf %13, %14 : vector<32x16x3xf32>
    %16 = vector.extract_strided_slice %11 {offsets = [0, 0, 6], sizes = [32, 16, 3], strides = [1, 1, 1]} : vector<32x16x12xf32> to vector<32x16x3xf32>
    %17 = arith.addf %15, %16 : vector<32x16x3xf32>
    %18 = vector.extract_strided_slice %11 {offsets = [0, 0, 9], sizes = [32, 16, 3], strides = [1, 1, 1]} : vector<32x16x12xf32> to vector<32x16x3xf32>
    %19 = arith.addf %17, %18 : vector<32x16x3xf32>
    %20 = vector.extract_strided_slice %0 {offsets = [0, 2, 0, 0], sizes = [32, 1, 16, 12], strides = [1, 1, 1, 1]} : vector<32x4x16x12xf32> to vector<32x1x16x12xf32>
    %21 = vector.shape_cast %20 : vector<32x1x16x12xf32> to vector<32x16x12xf32>
    %22 = vector.extract_strided_slice %21 {offsets = [0, 0, 0], sizes = [32, 16, 3], strides = [1, 1, 1]} : vector<32x16x12xf32> to vector<32x16x3xf32>
    %23 = arith.addf %19, %22 : vector<32x16x3xf32>
    %24 = vector.extract_strided_slice %21 {offsets = [0, 0, 3], sizes = [32, 16, 3], strides = [1, 1, 1]} : vector<32x16x12xf32> to vector<32x16x3xf32>
    %25 = arith.addf %23, %24 : vector<32x16x3xf32>
    %26 = vector.extract_strided_slice %21 {offsets = [0, 0, 6], sizes = [32, 16, 3], strides = [1, 1, 1]} : vector<32x16x12xf32> to vector<32x16x3xf32>
    %27 = arith.addf %25, %26 : vector<32x16x3xf32>
    %28 = vector.extract_strided_slice %21 {offsets = [0, 0, 9], sizes = [32, 16, 3], strides = [1, 1, 1]} : vector<32x16x12xf32> to vector<32x16x3xf32>
    %29 = arith.addf %27, %28 : vector<32x16x3xf32>
    %30 = vector.extract_strided_slice %0 {offsets = [0, 3, 0, 0], sizes = [32, 1, 16, 12], strides = [1, 1, 1, 1]} : vector<32x4x16x12xf32> to vector<32x1x16x12xf32>
    %31 = vector.shape_cast %30 : vector<32x1x16x12xf32> to vector<32x16x12xf32>
    %32 = vector.extract_strided_slice %31 {offsets = [0, 0, 0], sizes = [32, 16, 3], strides = [1, 1, 1]} : vector<32x16x12xf32> to vector<32x16x3xf32>
    %33 = arith.addf %29, %32 : vector<32x16x3xf32>
    %34 = vector.extract_strided_slice %31 {offsets = [0, 0, 3], sizes = [32, 16, 3], strides = [1, 1, 1]} : vector<32x16x12xf32> to vector<32x16x3xf32>
    %35 = arith.addf %33, %34 : vector<32x16x3xf32>
    %36 = vector.extract_strided_slice %31 {offsets = [0, 0, 6], sizes = [32, 16, 3], strides = [1, 1, 1]} : vector<32x16x12xf32> to vector<32x16x3xf32>
    %37 = arith.addf %35, %36 : vector<32x16x3xf32>
    %38 = vector.extract_strided_slice %31 {offsets = [0, 0, 9], sizes = [32, 16, 3], strides = [1, 1, 1]} : vector<32x16x12xf32> to vector<32x16x3xf32>
    %39 = arith.addf %37, %38 : vector<32x16x3xf32>
    %cst = arith.constant 6.250000e-02 : f32
    %40 = vector.broadcast %cst : f32 to vector<32x16x3xf32>
    %41 = arith.mulf %39, %40 : vector<32x16x3xf32>
    %c0_3 = arith.constant 0 : index
    %c0_4 = arith.constant 0 : index
    %c0_5 = arith.constant 0 : index
    %42 = vector.load %arg1[%c0_3, %c0_4, %c0_5] : memref<32x16x3xf32, #tpu.memory_space<vmem>>, vector<32x16x3xf32>
    tpu.vector_store %arg1[%c0_3, %c0_4, %c0_5], %41 {strides = array<i32>} : memref<32x16x3xf32, #tpu.memory_space<vmem>>, vector<32x16x3xf32>,
    return
  }
}

module attributes {stable_mosaic.version = 11 : i64} {
  func.func @_matmul_bias_kernel(%arg0: i32, %arg1: memref<1024x27xbf16, #tpu.memory_space<vmem>>, %arg2: memref<27x16xbf16, #tpu.memory_space<vmem>>, %arg3: memref<1x16xf32, #tpu.memory_space<vmem>>, %arg4: memref<1024x16xf32, #tpu.memory_space<vmem>>) attributes {dimension_semantics = [#tpu.dimension_semantics<parallel>], iteration_bounds = array<i64: 2>, scalar_prefetch = 0 : i64, scratch_operands = 0 : i64, tpu.core_type = #tpu.core_type<tc>, window_params = [{transform_indices = @transform_0, window_bounds = array<i64: 1024, 27>}, {pipeline_mode = #tpu.pipeline_mode<synchronous>, transform_indices = @transform_1, window_bounds = array<i64: 27, 16>}, {pipeline_mode = #tpu.pipeline_mode<synchronous>, transform_indices = @transform_2, window_bounds = array<i64: 1, 16>}, {transform_indices = @transform_3, window_bounds = array<i64: 1024, 16>}]} {
    %c0 = arith.constant 0 : index
    %c0_0 = arith.constant 0 : index
    %0 = vector.load %arg1[%c0, %c0_0] : memref<1024x27xbf16, #tpu.memory_space<vmem>>, vector<1024x27xbf16>
    %c0_1 = arith.constant 0 : index
    %c0_2 = arith.constant 0 : index
    %1 = vector.load %arg2[%c0_1, %c0_2] : memref<27x16xbf16, #tpu.memory_space<vmem>>, vector<27x16xbf16>
    %cst = arith.constant dense<0.000000e+00> : vector<1024x16xf32>
    %2 = tpu.matmul %0, %1, %cst {dimension_numbers = #tpu.dot_dimension_numbers<[1], [0], [0], [1], [0, 0, 1, 1], [], []>} : vector<1024x27xbf16>, vector<27x16xbf16>, vector<1024x16xf32> -> vector<1024x16xf32>
    %c0_3 = arith.constant 0 : index
    %c0_4 = arith.constant 0 : index
    %3 = vector.load %arg3[%c0_3, %c0_4] : memref<1x16xf32, #tpu.memory_space<vmem>>, vector<1x16xf32>
    %4 = vector.broadcast %3 : vector<1x16xf32> to vector<1024x16xf32>
    %5 = arith.addf %2, %4 : vector<1024x16xf32>
    %cst_5 = arith.constant 0.000000e+00 : f32
    %6 = vector.broadcast %cst_5 : f32 to vector<1024x16xf32>
    %7 = arith.maximumf %5, %6 : vector<1024x16xf32>
    %c0_6 = arith.constant 0 : index
    %c0_7 = arith.constant 0 : index
    %8 = vector.load %arg4[%c0_6, %c0_7] : memref<1024x16xf32, #tpu.memory_space<vmem>>, vector<1024x16xf32>
    tpu.vector_store %arg4[%c0_6, %c0_7], %7 {strides = array<i32>} : memref<1024x16xf32, #tpu.memory_space<vmem>>, vector<1024x16xf32>,
    return
  }
  func.func @transform_0(%arg0: i32) -> (i32, i32) {
    %c0_i32 = arith.constant 0 : i32
    %c0_i32_0 = arith.constant 0 : i32
    return %arg0, %c0_i32 : i32, i32
  }
  func.func @transform_1(%arg0: i32) -> (i32, i32) {
    %c0_i32 = arith.constant 0 : i32
    %c0_i32_0 = arith.constant 0 : i32
    %c0_i32_1 = arith.constant 0 : i32
    return %c0_i32, %c0_i32_0 : i32, i32
  }
  func.func @transform_2(%arg0: i32) -> (i32, i32) {
    %c0_i32 = arith.constant 0 : i32
    %c0_i32_0 = arith.constant 0 : i32
    %c0_i32_1 = arith.constant 0 : i32
    return %c0_i32, %c0_i32_0 : i32, i32
  }
  func.func @transform_3(%arg0: i32) -> (i32, i32) {
    %c0_i32 = arith.constant 0 : i32
    %c0_i32_0 = arith.constant 0 : i32
    return %arg0, %c0_i32 : i32, i32
  }
}

module attributes {stable_mosaic.version = 11 : i64} {
  func.func @_pool_kernel(%arg0: memref<32x2x16x32xf32, #tpu.memory_space<vmem>>, %arg1: memref<32x16x16xf32, #tpu.memory_space<vmem>>) attributes {dimension_semantics = [], scalar_prefetch = 0 : i64, scratch_operands = 0 : i64, tpu.core_type = #tpu.core_type<tc>} {
    %c0 = arith.constant 0 : index
    %c0_0 = arith.constant 0 : index
    %c0_1 = arith.constant 0 : index
    %c0_2 = arith.constant 0 : index
    %0 = vector.load %arg0[%c0, %c0_0, %c0_1, %c0_2] : memref<32x2x16x32xf32, #tpu.memory_space<vmem>>, vector<32x2x16x32xf32>
    %1 = vector.extract_strided_slice %0 {offsets = [0, 0, 0, 0], sizes = [32, 1, 16, 32], strides = [1, 1, 1, 1]} : vector<32x2x16x32xf32> to vector<32x1x16x32xf32>
    %2 = vector.shape_cast %1 : vector<32x1x16x32xf32> to vector<32x16x32xf32>
    %3 = vector.extract_strided_slice %2 {offsets = [0, 0, 0], sizes = [32, 16, 16], strides = [1, 1, 1]} : vector<32x16x32xf32> to vector<32x16x16xf32>
    %4 = vector.extract_strided_slice %2 {offsets = [0, 0, 16], sizes = [32, 16, 16], strides = [1, 1, 1]} : vector<32x16x32xf32> to vector<32x16x16xf32>
    %5 = arith.maximumf %3, %4 : vector<32x16x16xf32>
    %6 = vector.extract_strided_slice %0 {offsets = [0, 1, 0, 0], sizes = [32, 1, 16, 32], strides = [1, 1, 1, 1]} : vector<32x2x16x32xf32> to vector<32x1x16x32xf32>
    %7 = vector.shape_cast %6 : vector<32x1x16x32xf32> to vector<32x16x32xf32>
    %8 = vector.extract_strided_slice %7 {offsets = [0, 0, 0], sizes = [32, 16, 16], strides = [1, 1, 1]} : vector<32x16x32xf32> to vector<32x16x16xf32>
    %9 = arith.maximumf %5, %8 : vector<32x16x16xf32>
    %10 = vector.extract_strided_slice %7 {offsets = [0, 0, 16], sizes = [32, 16, 16], strides = [1, 1, 1]} : vector<32x16x32xf32> to vector<32x16x16xf32>
    %11 = arith.maximumf %9, %10 : vector<32x16x16xf32>
    %c0_3 = arith.constant 0 : index
    %c0_4 = arith.constant 0 : index
    %c0_5 = arith.constant 0 : index
    %12 = vector.load %arg1[%c0_3, %c0_4, %c0_5] : memref<32x16x16xf32, #tpu.memory_space<vmem>>, vector<32x16x16xf32>
    tpu.vector_store %arg1[%c0_3, %c0_4, %c0_5], %11 {strides = array<i32>} : memref<32x16x16xf32, #tpu.memory_space<vmem>>, vector<32x16x16xf32>,
    return
  }
}

module attributes {stable_mosaic.version = 11 : i64} {
  func.func @_pool_kernel(%arg0: memref<16x2x8x38xf32, #tpu.memory_space<vmem>>, %arg1: memref<16x8x19xf32, #tpu.memory_space<vmem>>) attributes {dimension_semantics = [], scalar_prefetch = 0 : i64, scratch_operands = 0 : i64, tpu.core_type = #tpu.core_type<tc>} {
    %c0 = arith.constant 0 : index
    %c0_0 = arith.constant 0 : index
    %c0_1 = arith.constant 0 : index
    %c0_2 = arith.constant 0 : index
    %0 = vector.load %arg0[%c0, %c0_0, %c0_1, %c0_2] : memref<16x2x8x38xf32, #tpu.memory_space<vmem>>, vector<16x2x8x38xf32>
    %1 = vector.extract_strided_slice %0 {offsets = [0, 0, 0, 0], sizes = [16, 1, 8, 38], strides = [1, 1, 1, 1]} : vector<16x2x8x38xf32> to vector<16x1x8x38xf32>
    %2 = vector.shape_cast %1 : vector<16x1x8x38xf32> to vector<16x8x38xf32>
    %3 = vector.extract_strided_slice %2 {offsets = [0, 0, 0], sizes = [16, 8, 19], strides = [1, 1, 1]} : vector<16x8x38xf32> to vector<16x8x19xf32>
    %4 = vector.extract_strided_slice %2 {offsets = [0, 0, 19], sizes = [16, 8, 19], strides = [1, 1, 1]} : vector<16x8x38xf32> to vector<16x8x19xf32>
    %5 = arith.addf %3, %4 : vector<16x8x19xf32>
    %6 = vector.extract_strided_slice %0 {offsets = [0, 1, 0, 0], sizes = [16, 1, 8, 38], strides = [1, 1, 1, 1]} : vector<16x2x8x38xf32> to vector<16x1x8x38xf32>
    %7 = vector.shape_cast %6 : vector<16x1x8x38xf32> to vector<16x8x38xf32>
    %8 = vector.extract_strided_slice %7 {offsets = [0, 0, 0], sizes = [16, 8, 19], strides = [1, 1, 1]} : vector<16x8x38xf32> to vector<16x8x19xf32>
    %9 = arith.addf %5, %8 : vector<16x8x19xf32>
    %10 = vector.extract_strided_slice %7 {offsets = [0, 0, 19], sizes = [16, 8, 19], strides = [1, 1, 1]} : vector<16x8x38xf32> to vector<16x8x19xf32>
    %11 = arith.addf %9, %10 : vector<16x8x19xf32>
    %cst = arith.constant 2.500000e-01 : f32
    %12 = vector.broadcast %cst : f32 to vector<16x8x19xf32>
    %13 = arith.mulf %11, %12 : vector<16x8x19xf32>
    %c0_3 = arith.constant 0 : index
    %c0_4 = arith.constant 0 : index
    %c0_5 = arith.constant 0 : index
    %14 = vector.load %arg1[%c0_3, %c0_4, %c0_5] : memref<16x8x19xf32, #tpu.memory_space<vmem>>, vector<16x8x19xf32>
    tpu.vector_store %arg1[%c0_3, %c0_4, %c0_5], %13 {strides = array<i32>} : memref<16x8x19xf32, #tpu.memory_space<vmem>>, vector<16x8x19xf32>,
    return
  }
}

module attributes {stable_mosaic.version = 11 : i64} {
  func.func @_matmul_bias_kernel(%arg0: i32, %arg1: memref<256x171xbf16, #tpu.memory_space<vmem>>, %arg2: memref<171x32xbf16, #tpu.memory_space<vmem>>, %arg3: memref<1x32xf32, #tpu.memory_space<vmem>>, %arg4: memref<256x32xf32, #tpu.memory_space<vmem>>) attributes {dimension_semantics = [#tpu.dimension_semantics<parallel>], iteration_bounds = array<i64: 2>, scalar_prefetch = 0 : i64, scratch_operands = 0 : i64, tpu.core_type = #tpu.core_type<tc>, window_params = [{transform_indices = @transform_0, window_bounds = array<i64: 256, 171>}, {pipeline_mode = #tpu.pipeline_mode<synchronous>, transform_indices = @transform_1, window_bounds = array<i64: 171, 32>}, {pipeline_mode = #tpu.pipeline_mode<synchronous>, transform_indices = @transform_2, window_bounds = array<i64: 1, 32>}, {transform_indices = @transform_3, window_bounds = array<i64: 256, 32>}]} {
    %c0 = arith.constant 0 : index
    %c0_0 = arith.constant 0 : index
    %0 = vector.load %arg1[%c0, %c0_0] : memref<256x171xbf16, #tpu.memory_space<vmem>>, vector<256x171xbf16>
    %c0_1 = arith.constant 0 : index
    %c0_2 = arith.constant 0 : index
    %1 = vector.load %arg2[%c0_1, %c0_2] : memref<171x32xbf16, #tpu.memory_space<vmem>>, vector<171x32xbf16>
    %cst = arith.constant dense<0.000000e+00> : vector<256x32xf32>
    %2 = tpu.matmul %0, %1, %cst {dimension_numbers = #tpu.dot_dimension_numbers<[1], [0], [0], [1], [0, 0, 1, 1], [], []>} : vector<256x171xbf16>, vector<171x32xbf16>, vector<256x32xf32> -> vector<256x32xf32>
    %c0_3 = arith.constant 0 : index
    %c0_4 = arith.constant 0 : index
    %3 = vector.load %arg3[%c0_3, %c0_4] : memref<1x32xf32, #tpu.memory_space<vmem>>, vector<1x32xf32>
    %4 = vector.broadcast %3 : vector<1x32xf32> to vector<256x32xf32>
    %5 = arith.addf %2, %4 : vector<256x32xf32>
    %cst_5 = arith.constant 0.000000e+00 : f32
    %6 = vector.broadcast %cst_5 : f32 to vector<256x32xf32>
    %7 = arith.maximumf %5, %6 : vector<256x32xf32>
    %c0_6 = arith.constant 0 : index
    %c0_7 = arith.constant 0 : index
    %8 = vector.load %arg4[%c0_6, %c0_7] : memref<256x32xf32, #tpu.memory_space<vmem>>, vector<256x32xf32>
    tpu.vector_store %arg4[%c0_6, %c0_7], %7 {strides = array<i32>} : memref<256x32xf32, #tpu.memory_space<vmem>>, vector<256x32xf32>,
    return
  }
  func.func @transform_0(%arg0: i32) -> (i32, i32) {
    %c0_i32 = arith.constant 0 : i32
    %c0_i32_0 = arith.constant 0 : i32
    return %arg0, %c0_i32 : i32, i32
  }
  func.func @transform_1(%arg0: i32) -> (i32, i32) {
    %c0_i32 = arith.constant 0 : i32
    %c0_i32_0 = arith.constant 0 : i32
    %c0_i32_1 = arith.constant 0 : i32
    return %c0_i32, %c0_i32_0 : i32, i32
  }
  func.func @transform_2(%arg0: i32) -> (i32, i32) {
    %c0_i32 = arith.constant 0 : i32
    %c0_i32_0 = arith.constant 0 : i32
    %c0_i32_1 = arith.constant 0 : i32
    return %c0_i32, %c0_i32_0 : i32, i32
  }
  func.func @transform_3(%arg0: i32) -> (i32, i32) {
    %c0_i32 = arith.constant 0 : i32
    %c0_i32_0 = arith.constant 0 : i32
    return %arg0, %c0_i32 : i32, i32
  }
}

module attributes {stable_mosaic.version = 11 : i64} {
  func.func @_pool_kernel(%arg0: memref<16x2x8x64xf32, #tpu.memory_space<vmem>>, %arg1: memref<16x8x32xf32, #tpu.memory_space<vmem>>) attributes {dimension_semantics = [], scalar_prefetch = 0 : i64, scratch_operands = 0 : i64, tpu.core_type = #tpu.core_type<tc>} {
    %c0 = arith.constant 0 : index
    %c0_0 = arith.constant 0 : index
    %c0_1 = arith.constant 0 : index
    %c0_2 = arith.constant 0 : index
    %0 = vector.load %arg0[%c0, %c0_0, %c0_1, %c0_2] : memref<16x2x8x64xf32, #tpu.memory_space<vmem>>, vector<16x2x8x64xf32>
    %1 = vector.extract_strided_slice %0 {offsets = [0, 0, 0, 0], sizes = [16, 1, 8, 64], strides = [1, 1, 1, 1]} : vector<16x2x8x64xf32> to vector<16x1x8x64xf32>
    %2 = vector.shape_cast %1 : vector<16x1x8x64xf32> to vector<16x8x64xf32>
    %3 = vector.extract_strided_slice %2 {offsets = [0, 0, 0], sizes = [16, 8, 32], strides = [1, 1, 1]} : vector<16x8x64xf32> to vector<16x8x32xf32>
    %4 = vector.extract_strided_slice %2 {offsets = [0, 0, 32], sizes = [16, 8, 32], strides = [1, 1, 1]} : vector<16x8x64xf32> to vector<16x8x32xf32>
    %5 = arith.maximumf %3, %4 : vector<16x8x32xf32>
    %6 = vector.extract_strided_slice %0 {offsets = [0, 1, 0, 0], sizes = [16, 1, 8, 64], strides = [1, 1, 1, 1]} : vector<16x2x8x64xf32> to vector<16x1x8x64xf32>
    %7 = vector.shape_cast %6 : vector<16x1x8x64xf32> to vector<16x8x64xf32>
    %8 = vector.extract_strided_slice %7 {offsets = [0, 0, 0], sizes = [16, 8, 32], strides = [1, 1, 1]} : vector<16x8x64xf32> to vector<16x8x32xf32>
    %9 = arith.maximumf %5, %8 : vector<16x8x32xf32>
    %10 = vector.extract_strided_slice %7 {offsets = [0, 0, 32], sizes = [16, 8, 32], strides = [1, 1, 1]} : vector<16x8x64xf32> to vector<16x8x32xf32>
    %11 = arith.maximumf %9, %10 : vector<16x8x32xf32>
    %c0_3 = arith.constant 0 : index
    %c0_4 = arith.constant 0 : index
    %c0_5 = arith.constant 0 : index
    %12 = vector.load %arg1[%c0_3, %c0_4, %c0_5] : memref<16x8x32xf32, #tpu.memory_space<vmem>>, vector<16x8x32xf32>
    tpu.vector_store %arg1[%c0_3, %c0_4, %c0_5], %11 {strides = array<i32>} : memref<16x8x32xf32, #tpu.memory_space<vmem>>, vector<16x8x32xf32>,
    return
  }
}

module attributes {stable_mosaic.version = 11 : i64} {
  func.func @_pool_kernel(%arg0: memref<8x2x4x102xf32, #tpu.memory_space<vmem>>, %arg1: memref<8x4x51xf32, #tpu.memory_space<vmem>>) attributes {dimension_semantics = [], scalar_prefetch = 0 : i64, scratch_operands = 0 : i64, tpu.core_type = #tpu.core_type<tc>} {
    %c0 = arith.constant 0 : index
    %c0_0 = arith.constant 0 : index
    %c0_1 = arith.constant 0 : index
    %c0_2 = arith.constant 0 : index
    %0 = vector.load %arg0[%c0, %c0_0, %c0_1, %c0_2] : memref<8x2x4x102xf32, #tpu.memory_space<vmem>>, vector<8x2x4x102xf32>
    %1 = vector.extract_strided_slice %0 {offsets = [0, 0, 0, 0], sizes = [8, 1, 4, 102], strides = [1, 1, 1, 1]} : vector<8x2x4x102xf32> to vector<8x1x4x102xf32>
    %2 = vector.shape_cast %1 : vector<8x1x4x102xf32> to vector<8x4x102xf32>
    %3 = vector.extract_strided_slice %2 {offsets = [0, 0, 0], sizes = [8, 4, 51], strides = [1, 1, 1]} : vector<8x4x102xf32> to vector<8x4x51xf32>
    %4 = vector.extract_strided_slice %2 {offsets = [0, 0, 51], sizes = [8, 4, 51], strides = [1, 1, 1]} : vector<8x4x102xf32> to vector<8x4x51xf32>
    %5 = arith.addf %3, %4 : vector<8x4x51xf32>
    %6 = vector.extract_strided_slice %0 {offsets = [0, 1, 0, 0], sizes = [8, 1, 4, 102], strides = [1, 1, 1, 1]} : vector<8x2x4x102xf32> to vector<8x1x4x102xf32>
    %7 = vector.shape_cast %6 : vector<8x1x4x102xf32> to vector<8x4x102xf32>
    %8 = vector.extract_strided_slice %7 {offsets = [0, 0, 0], sizes = [8, 4, 51], strides = [1, 1, 1]} : vector<8x4x102xf32> to vector<8x4x51xf32>
    %9 = arith.addf %5, %8 : vector<8x4x51xf32>
    %10 = vector.extract_strided_slice %7 {offsets = [0, 0, 51], sizes = [8, 4, 51], strides = [1, 1, 1]} : vector<8x4x102xf32> to vector<8x4x51xf32>
    %11 = arith.addf %9, %10 : vector<8x4x51xf32>
    %cst = arith.constant 2.500000e-01 : f32
    %12 = vector.broadcast %cst : f32 to vector<8x4x51xf32>
    %13 = arith.mulf %11, %12 : vector<8x4x51xf32>
    %c0_3 = arith.constant 0 : index
    %c0_4 = arith.constant 0 : index
    %c0_5 = arith.constant 0 : index
    %14 = vector.load %arg1[%c0_3, %c0_4, %c0_5] : memref<8x4x51xf32, #tpu.memory_space<vmem>>, vector<8x4x51xf32>
    tpu.vector_store %arg1[%c0_3, %c0_4, %c0_5], %13 {strides = array<i32>} : memref<8x4x51xf32, #tpu.memory_space<vmem>>, vector<8x4x51xf32>,
    return
  }
}

module attributes {stable_mosaic.version = 11 : i64} {
  func.func @_matmul_bias_kernel(%arg0: i32, %arg1: memref<128x459xbf16, #tpu.memory_space<vmem>>, %arg2: memref<459x64xbf16, #tpu.memory_space<vmem>>, %arg3: memref<1x64xf32, #tpu.memory_space<vmem>>, %arg4: memref<128x64xf32, #tpu.memory_space<vmem>>) attributes {dimension_semantics = [#tpu.dimension_semantics<parallel>], iteration_bounds = array<i64: 1>, scalar_prefetch = 0 : i64, scratch_operands = 0 : i64, tpu.core_type = #tpu.core_type<tc>, window_params = [{transform_indices = @transform_0, window_bounds = array<i64: 128, 459>}, {pipeline_mode = #tpu.pipeline_mode<synchronous>, transform_indices = @transform_1, window_bounds = array<i64: 459, 64>}, {pipeline_mode = #tpu.pipeline_mode<synchronous>, transform_indices = @transform_2, window_bounds = array<i64: 1, 64>}, {transform_indices = @transform_3, window_bounds = array<i64: 128, 64>}]} {
    %c0 = arith.constant 0 : index
    %c0_0 = arith.constant 0 : index
    %0 = vector.load %arg1[%c0, %c0_0] : memref<128x459xbf16, #tpu.memory_space<vmem>>, vector<128x459xbf16>
    %c0_1 = arith.constant 0 : index
    %c0_2 = arith.constant 0 : index
    %1 = vector.load %arg2[%c0_1, %c0_2] : memref<459x64xbf16, #tpu.memory_space<vmem>>, vector<459x64xbf16>
    %cst = arith.constant dense<0.000000e+00> : vector<128x64xf32>
    %2 = tpu.matmul %0, %1, %cst {dimension_numbers = #tpu.dot_dimension_numbers<[1], [0], [0], [1], [0, 0, 1, 1], [], []>} : vector<128x459xbf16>, vector<459x64xbf16>, vector<128x64xf32> -> vector<128x64xf32>
    %c0_3 = arith.constant 0 : index
    %c0_4 = arith.constant 0 : index
    %3 = vector.load %arg3[%c0_3, %c0_4] : memref<1x64xf32, #tpu.memory_space<vmem>>, vector<1x64xf32>
    %4 = vector.broadcast %3 : vector<1x64xf32> to vector<128x64xf32>
    %5 = arith.addf %2, %4 : vector<128x64xf32>
    %cst_5 = arith.constant 0.000000e+00 : f32
    %6 = vector.broadcast %cst_5 : f32 to vector<128x64xf32>
    %7 = arith.maximumf %5, %6 : vector<128x64xf32>
    %c0_6 = arith.constant 0 : index
    %c0_7 = arith.constant 0 : index
    %8 = vector.load %arg4[%c0_6, %c0_7] : memref<128x64xf32, #tpu.memory_space<vmem>>, vector<128x64xf32>
    tpu.vector_store %arg4[%c0_6, %c0_7], %7 {strides = array<i32>} : memref<128x64xf32, #tpu.memory_space<vmem>>, vector<128x64xf32>,
    return
  }
  func.func @transform_0(%arg0: i32) -> (i32, i32) {
    %c0_i32 = arith.constant 0 : i32
    %c0_i32_0 = arith.constant 0 : i32
    return %arg0, %c0_i32 : i32, i32
  }
  func.func @transform_1(%arg0: i32) -> (i32, i32) {
    %c0_i32 = arith.constant 0 : i32
    %c0_i32_0 = arith.constant 0 : i32
    %c0_i32_1 = arith.constant 0 : i32
    return %c0_i32, %c0_i32_0 : i32, i32
  }
  func.func @transform_2(%arg0: i32) -> (i32, i32) {
    %c0_i32 = arith.constant 0 : i32
    %c0_i32_0 = arith.constant 0 : i32
    %c0_i32_1 = arith.constant 0 : i32
    return %c0_i32, %c0_i32_0 : i32, i32
  }
  func.func @transform_3(%arg0: i32) -> (i32, i32) {
    %c0_i32 = arith.constant 0 : i32
    %c0_i32_0 = arith.constant 0 : i32
    return %arg0, %c0_i32 : i32, i32
  }
}

module attributes {stable_mosaic.version = 11 : i64} {
  func.func @_pool_kernel(%arg0: memref<8x2x4x128xf32, #tpu.memory_space<vmem>>, %arg1: memref<8x4x64xf32, #tpu.memory_space<vmem>>) attributes {dimension_semantics = [], scalar_prefetch = 0 : i64, scratch_operands = 0 : i64, tpu.core_type = #tpu.core_type<tc>} {
    %c0 = arith.constant 0 : index
    %c0_0 = arith.constant 0 : index
    %c0_1 = arith.constant 0 : index
    %c0_2 = arith.constant 0 : index
    %0 = vector.load %arg0[%c0, %c0_0, %c0_1, %c0_2] : memref<8x2x4x128xf32, #tpu.memory_space<vmem>>, vector<8x2x4x128xf32>
    %1 = vector.extract_strided_slice %0 {offsets = [0, 0, 0, 0], sizes = [8, 1, 4, 128], strides = [1, 1, 1, 1]} : vector<8x2x4x128xf32> to vector<8x1x4x128xf32>
    %2 = vector.shape_cast %1 : vector<8x1x4x128xf32> to vector<8x4x128xf32>
    %3 = vector.extract_strided_slice %2 {offsets = [0, 0, 0], sizes = [8, 4, 64], strides = [1, 1, 1]} : vector<8x4x128xf32> to vector<8x4x64xf32>
    %4 = vector.extract_strided_slice %2 {offsets = [0, 0, 64], sizes = [8, 4, 64], strides = [1, 1, 1]} : vector<8x4x128xf32> to vector<8x4x64xf32>
    %5 = arith.maximumf %3, %4 : vector<8x4x64xf32>
    %6 = vector.extract_strided_slice %0 {offsets = [0, 1, 0, 0], sizes = [8, 1, 4, 128], strides = [1, 1, 1, 1]} : vector<8x2x4x128xf32> to vector<8x1x4x128xf32>
    %7 = vector.shape_cast %6 : vector<8x1x4x128xf32> to vector<8x4x128xf32>
    %8 = vector.extract_strided_slice %7 {offsets = [0, 0, 0], sizes = [8, 4, 64], strides = [1, 1, 1]} : vector<8x4x128xf32> to vector<8x4x64xf32>
    %9 = arith.maximumf %5, %8 : vector<8x4x64xf32>
    %10 = vector.extract_strided_slice %7 {offsets = [0, 0, 64], sizes = [8, 4, 64], strides = [1, 1, 1]} : vector<8x4x128xf32> to vector<8x4x64xf32>
    %11 = arith.maximumf %9, %10 : vector<8x4x64xf32>
    %c0_3 = arith.constant 0 : index
    %c0_4 = arith.constant 0 : index
    %c0_5 = arith.constant 0 : index
    %12 = vector.load %arg1[%c0_3, %c0_4, %c0_5] : memref<8x4x64xf32, #tpu.memory_space<vmem>>, vector<8x4x64xf32>
    tpu.vector_store %arg1[%c0_3, %c0_4, %c0_5], %11 {strides = array<i32>} : memref<8x4x64xf32, #tpu.memory_space<vmem>>, vector<8x4x64xf32>,
    return
  }
}

module attributes {stable_mosaic.version = 11 : i64} {
  func.func @_pool_kernel(%arg0: memref<4x2x2x230xf32, #tpu.memory_space<vmem>>, %arg1: memref<4x2x115xf32, #tpu.memory_space<vmem>>) attributes {dimension_semantics = [], scalar_prefetch = 0 : i64, scratch_operands = 0 : i64, tpu.core_type = #tpu.core_type<tc>} {
    %c0 = arith.constant 0 : index
    %c0_0 = arith.constant 0 : index
    %c0_1 = arith.constant 0 : index
    %c0_2 = arith.constant 0 : index
    %0 = vector.load %arg0[%c0, %c0_0, %c0_1, %c0_2] : memref<4x2x2x230xf32, #tpu.memory_space<vmem>>, vector<4x2x2x230xf32>
    %1 = vector.extract_strided_slice %0 {offsets = [0, 0, 0, 0], sizes = [4, 1, 2, 230], strides = [1, 1, 1, 1]} : vector<4x2x2x230xf32> to vector<4x1x2x230xf32>
    %2 = vector.shape_cast %1 : vector<4x1x2x230xf32> to vector<4x2x230xf32>
    %3 = vector.extract_strided_slice %2 {offsets = [0, 0, 0], sizes = [4, 2, 115], strides = [1, 1, 1]} : vector<4x2x230xf32> to vector<4x2x115xf32>
    %4 = vector.extract_strided_slice %2 {offsets = [0, 0, 115], sizes = [4, 2, 115], strides = [1, 1, 1]} : vector<4x2x230xf32> to vector<4x2x115xf32>
    %5 = arith.addf %3, %4 : vector<4x2x115xf32>
    %6 = vector.extract_strided_slice %0 {offsets = [0, 1, 0, 0], sizes = [4, 1, 2, 230], strides = [1, 1, 1, 1]} : vector<4x2x2x230xf32> to vector<4x1x2x230xf32>
    %7 = vector.shape_cast %6 : vector<4x1x2x230xf32> to vector<4x2x230xf32>
    %8 = vector.extract_strided_slice %7 {offsets = [0, 0, 0], sizes = [4, 2, 115], strides = [1, 1, 1]} : vector<4x2x230xf32> to vector<4x2x115xf32>
    %9 = arith.addf %5, %8 : vector<4x2x115xf32>
    %10 = vector.extract_strided_slice %7 {offsets = [0, 0, 115], sizes = [4, 2, 115], strides = [1, 1, 1]} : vector<4x2x230xf32> to vector<4x2x115xf32>
    %11 = arith.addf %9, %10 : vector<4x2x115xf32>
    %cst = arith.constant 2.500000e-01 : f32
    %12 = vector.broadcast %cst : f32 to vector<4x2x115xf32>
    %13 = arith.mulf %11, %12 : vector<4x2x115xf32>
    %c0_3 = arith.constant 0 : index
    %c0_4 = arith.constant 0 : index
    %c0_5 = arith.constant 0 : index
    %14 = vector.load %arg1[%c0_3, %c0_4, %c0_5] : memref<4x2x115xf32, #tpu.memory_space<vmem>>, vector<4x2x115xf32>
    tpu.vector_store %arg1[%c0_3, %c0_4, %c0_5], %13 {strides = array<i32>} : memref<4x2x115xf32, #tpu.memory_space<vmem>>, vector<4x2x115xf32>,
    return
  }
}

module attributes {stable_mosaic.version = 11 : i64} {
  func.func @_matmul_bias_kernel(%arg0: i32, %arg1: memref<32x1035xbf16, #tpu.memory_space<vmem>>, %arg2: memref<1035x128xbf16, #tpu.memory_space<vmem>>, %arg3: memref<1x128xf32, #tpu.memory_space<vmem>>, %arg4: memref<32x128xf32, #tpu.memory_space<vmem>>) attributes {dimension_semantics = [#tpu.dimension_semantics<parallel>], iteration_bounds = array<i64: 1>, scalar_prefetch = 0 : i64, scratch_operands = 0 : i64, tpu.core_type = #tpu.core_type<tc>, window_params = [{transform_indices = @transform_0, window_bounds = array<i64: 32, 1035>}, {pipeline_mode = #tpu.pipeline_mode<synchronous>, transform_indices = @transform_1, window_bounds = array<i64: 1035, 128>}, {pipeline_mode = #tpu.pipeline_mode<synchronous>, transform_indices = @transform_2, window_bounds = array<i64: 1, 128>}, {transform_indices = @transform_3, window_bounds = array<i64: 32, 128>}]} {
    %c0 = arith.constant 0 : index
    %c0_0 = arith.constant 0 : index
    %0 = vector.load %arg1[%c0, %c0_0] : memref<32x1035xbf16, #tpu.memory_space<vmem>>, vector<32x1035xbf16>
    %c0_1 = arith.constant 0 : index
    %c0_2 = arith.constant 0 : index
    %1 = vector.load %arg2[%c0_1, %c0_2] : memref<1035x128xbf16, #tpu.memory_space<vmem>>, vector<1035x128xbf16>
    %cst = arith.constant dense<0.000000e+00> : vector<32x128xf32>
    %2 = tpu.matmul %0, %1, %cst {dimension_numbers = #tpu.dot_dimension_numbers<[1], [0], [0], [1], [0, 0, 1, 1], [], []>} : vector<32x1035xbf16>, vector<1035x128xbf16>, vector<32x128xf32> -> vector<32x128xf32>
    %c0_3 = arith.constant 0 : index
    %c0_4 = arith.constant 0 : index
    %3 = vector.load %arg3[%c0_3, %c0_4] : memref<1x128xf32, #tpu.memory_space<vmem>>, vector<1x128xf32>
    %4 = vector.broadcast %3 : vector<1x128xf32> to vector<32x128xf32>
    %5 = arith.addf %2, %4 : vector<32x128xf32>
    %cst_5 = arith.constant 0.000000e+00 : f32
    %6 = vector.broadcast %cst_5 : f32 to vector<32x128xf32>
    %7 = arith.maximumf %5, %6 : vector<32x128xf32>
    %c0_6 = arith.constant 0 : index
    %c0_7 = arith.constant 0 : index
    %8 = vector.load %arg4[%c0_6, %c0_7] : memref<32x128xf32, #tpu.memory_space<vmem>>, vector<32x128xf32>
    tpu.vector_store %arg4[%c0_6, %c0_7], %7 {strides = array<i32>} : memref<32x128xf32, #tpu.memory_space<vmem>>, vector<32x128xf32>,
    return
  }
  func.func @transform_0(%arg0: i32) -> (i32, i32) {
    %c0_i32 = arith.constant 0 : i32
    %c0_i32_0 = arith.constant 0 : i32
    return %arg0, %c0_i32 : i32, i32
  }
  func.func @transform_1(%arg0: i32) -> (i32, i32) {
    %c0_i32 = arith.constant 0 : i32
    %c0_i32_0 = arith.constant 0 : i32
    %c0_i32_1 = arith.constant 0 : i32
    return %c0_i32, %c0_i32_0 : i32, i32
  }
  func.func @transform_2(%arg0: i32) -> (i32, i32) {
    %c0_i32 = arith.constant 0 : i32
    %c0_i32_0 = arith.constant 0 : i32
    %c0_i32_1 = arith.constant 0 : i32
    return %c0_i32, %c0_i32_0 : i32, i32
  }
  func.func @transform_3(%arg0: i32) -> (i32, i32) {
    %c0_i32 = arith.constant 0 : i32
    %c0_i32_0 = arith.constant 0 : i32
    return %arg0, %c0_i32 : i32, i32
  }
}

module attributes {stable_mosaic.version = 11 : i64} {
  func.func @_pool_kernel(%arg0: memref<4x2x2x256xf32, #tpu.memory_space<vmem>>, %arg1: memref<4x2x128xf32, #tpu.memory_space<vmem>>) attributes {dimension_semantics = [], scalar_prefetch = 0 : i64, scratch_operands = 0 : i64, tpu.core_type = #tpu.core_type<tc>} {
    %c0 = arith.constant 0 : index
    %c0_0 = arith.constant 0 : index
    %c0_1 = arith.constant 0 : index
    %c0_2 = arith.constant 0 : index
    %0 = vector.load %arg0[%c0, %c0_0, %c0_1, %c0_2] : memref<4x2x2x256xf32, #tpu.memory_space<vmem>>, vector<4x2x2x256xf32>
    %1 = vector.extract_strided_slice %0 {offsets = [0, 0, 0, 0], sizes = [4, 1, 2, 256], strides = [1, 1, 1, 1]} : vector<4x2x2x256xf32> to vector<4x1x2x256xf32>
    %2 = vector.shape_cast %1 : vector<4x1x2x256xf32> to vector<4x2x256xf32>
    %3 = vector.extract_strided_slice %2 {offsets = [0, 0, 0], sizes = [4, 2, 128], strides = [1, 1, 1]} : vector<4x2x256xf32> to vector<4x2x128xf32>
    %4 = vector.extract_strided_slice %2 {offsets = [0, 0, 128], sizes = [4, 2, 128], strides = [1, 1, 1]} : vector<4x2x256xf32> to vector<4x2x128xf32>
    %5 = arith.maximumf %3, %4 : vector<4x2x128xf32>
    %6 = vector.extract_strided_slice %0 {offsets = [0, 1, 0, 0], sizes = [4, 1, 2, 256], strides = [1, 1, 1, 1]} : vector<4x2x2x256xf32> to vector<4x1x2x256xf32>
    %7 = vector.shape_cast %6 : vector<4x1x2x256xf32> to vector<4x2x256xf32>
    %8 = vector.extract_strided_slice %7 {offsets = [0, 0, 0], sizes = [4, 2, 128], strides = [1, 1, 1]} : vector<4x2x256xf32> to vector<4x2x128xf32>
    %9 = arith.maximumf %5, %8 : vector<4x2x128xf32>
    %10 = vector.extract_strided_slice %7 {offsets = [0, 0, 128], sizes = [4, 2, 128], strides = [1, 1, 1]} : vector<4x2x256xf32> to vector<4x2x128xf32>
    %11 = arith.maximumf %9, %10 : vector<4x2x128xf32>
    %c0_3 = arith.constant 0 : index
    %c0_4 = arith.constant 0 : index
    %c0_5 = arith.constant 0 : index
    %12 = vector.load %arg1[%c0_3, %c0_4, %c0_5] : memref<4x2x128xf32, #tpu.memory_space<vmem>>, vector<4x2x128xf32>
    tpu.vector_store %arg1[%c0_3, %c0_4, %c0_5], %11 {strides = array<i32>} : memref<4x2x128xf32, #tpu.memory_space<vmem>>, vector<4x2x128xf32>,
    return
  }
}

module attributes {stable_mosaic.version = 11 : i64} {
  func.func @_matmul_bias_kernel(%arg0: i32, %arg1: memref<8x2187xbf16, #tpu.memory_space<vmem>>, %arg2: memref<2187x256xbf16, #tpu.memory_space<vmem>>, %arg3: memref<1x256xf32, #tpu.memory_space<vmem>>, %arg4: memref<8x256xf32, #tpu.memory_space<vmem>>) attributes {dimension_semantics = [#tpu.dimension_semantics<parallel>], iteration_bounds = array<i64: 1>, scalar_prefetch = 0 : i64, scratch_operands = 0 : i64, tpu.core_type = #tpu.core_type<tc>, window_params = [{transform_indices = @transform_0, window_bounds = array<i64: 8, 2187>}, {pipeline_mode = #tpu.pipeline_mode<synchronous>, transform_indices = @transform_1, window_bounds = array<i64: 2187, 256>}, {pipeline_mode = #tpu.pipeline_mode<synchronous>, transform_indices = @transform_2, window_bounds = array<i64: 1, 256>}, {transform_indices = @transform_3, window_bounds = array<i64: 8, 256>}]} {
    %c0 = arith.constant 0 : index
    %c0_0 = arith.constant 0 : index
    %0 = vector.load %arg1[%c0, %c0_0] : memref<8x2187xbf16, #tpu.memory_space<vmem>>, vector<8x2187xbf16>
    %c0_1 = arith.constant 0 : index
    %c0_2 = arith.constant 0 : index
    %1 = vector.load %arg2[%c0_1, %c0_2] : memref<2187x256xbf16, #tpu.memory_space<vmem>>, vector<2187x256xbf16>
    %cst = arith.constant dense<0.000000e+00> : vector<8x256xf32>
    %2 = tpu.matmul %0, %1, %cst {dimension_numbers = #tpu.dot_dimension_numbers<[1], [0], [0], [1], [0, 0, 1, 1], [], []>} : vector<8x2187xbf16>, vector<2187x256xbf16>, vector<8x256xf32> -> vector<8x256xf32>
    %c0_3 = arith.constant 0 : index
    %c0_4 = arith.constant 0 : index
    %3 = vector.load %arg3[%c0_3, %c0_4] : memref<1x256xf32, #tpu.memory_space<vmem>>, vector<1x256xf32>
    %4 = vector.broadcast %3 : vector<1x256xf32> to vector<8x256xf32>
    %5 = arith.addf %2, %4 : vector<8x256xf32>
    %cst_5 = arith.constant 0.000000e+00 : f32
    %6 = vector.broadcast %cst_5 : f32 to vector<8x256xf32>
    %7 = arith.maximumf %5, %6 : vector<8x256xf32>
    %c0_6 = arith.constant 0 : index
    %c0_7 = arith.constant 0 : index
    %8 = vector.load %arg4[%c0_6, %c0_7] : memref<8x256xf32, #tpu.memory_space<vmem>>, vector<8x256xf32>
    tpu.vector_store %arg4[%c0_6, %c0_7], %7 {strides = array<i32>} : memref<8x256xf32, #tpu.memory_space<vmem>>, vector<8x256xf32>,
    return
  }
  func.func @transform_0(%arg0: i32) -> (i32, i32) {
    %c0_i32 = arith.constant 0 : i32
    %c0_i32_0 = arith.constant 0 : i32
    return %arg0, %c0_i32 : i32, i32
  }
  func.func @transform_1(%arg0: i32) -> (i32, i32) {
    %c0_i32 = arith.constant 0 : i32
    %c0_i32_0 = arith.constant 0 : i32
    %c0_i32_1 = arith.constant 0 : i32
    return %c0_i32, %c0_i32_0 : i32, i32
  }
  func.func @transform_2(%arg0: i32) -> (i32, i32) {
    %c0_i32 = arith.constant 0 : i32
    %c0_i32_0 = arith.constant 0 : i32
    %c0_i32_1 = arith.constant 0 : i32
    return %c0_i32, %c0_i32_0 : i32, i32
  }
  func.func @transform_3(%arg0: i32) -> (i32, i32) {
    %c0_i32 = arith.constant 0 : i32
    %c0_i32_0 = arith.constant 0 : i32
    return %arg0, %c0_i32 : i32, i32
  }
}

module attributes {stable_mosaic.version = 11 : i64} {
  func.func @_head_kernel(%arg0: memref<8x256xf32, #tpu.memory_space<vmem>>, %arg1: memref<2x8xf32, #tpu.memory_space<vmem>>, %arg2: memref<256x2xf32, #tpu.memory_space<vmem>>, %arg3: memref<1x2xf32, #tpu.memory_space<vmem>>, %arg4: memref<2x2xf32, #tpu.memory_space<vmem>>) attributes {dimension_semantics = [], scalar_prefetch = 0 : i64, scratch_operands = 0 : i64, tpu.core_type = #tpu.core_type<tc>} {
    %c0 = arith.constant 0 : index
    %c0_0 = arith.constant 0 : index
    %0 = vector.load %arg1[%c0, %c0_0] : memref<2x8xf32, #tpu.memory_space<vmem>>, vector<2x8xf32>
    %c0_1 = arith.constant 0 : index
    %c0_2 = arith.constant 0 : index
    %1 = vector.load %arg0[%c0_1, %c0_2] : memref<8x256xf32, #tpu.memory_space<vmem>>, vector<8x256xf32>
    %cst = arith.constant dense<0.000000e+00> : vector<2x256xf32>
    %2 = tpu.matmul %0, %1, %cst {dimension_numbers = #tpu.dot_dimension_numbers<[1], [0], [0], [1], [0, 0, 1, 1], [], []>} : vector<2x8xf32>, vector<8x256xf32>, vector<2x256xf32> -> vector<2x256xf32>
    %c0_3 = arith.constant 0 : index
    %c0_4 = arith.constant 0 : index
    %3 = vector.load %arg2[%c0_3, %c0_4] : memref<256x2xf32, #tpu.memory_space<vmem>>, vector<256x2xf32>
    %cst_5 = arith.constant dense<0.000000e+00> : vector<2x2xf32>
    %4 = tpu.matmul %2, %3, %cst_5 {dimension_numbers = #tpu.dot_dimension_numbers<[1], [0], [0], [1], [0, 0, 1, 1], [], []>} : vector<2x256xf32>, vector<256x2xf32>, vector<2x2xf32> -> vector<2x2xf32>
    %c0_6 = arith.constant 0 : index
    %c0_7 = arith.constant 0 : index
    %5 = vector.load %arg3[%c0_6, %c0_7] : memref<1x2xf32, #tpu.memory_space<vmem>>, vector<1x2xf32>
    %6 = vector.broadcast %5 : vector<1x2xf32> to vector<2x2xf32>
    %7 = arith.addf %4, %6 : vector<2x2xf32>
    %c0_8 = arith.constant 0 : index
    %c0_9 = arith.constant 0 : index
    %8 = vector.load %arg4[%c0_8, %c0_9] : memref<2x2xf32, #tpu.memory_space<vmem>>, vector<2x2xf32>
    tpu.vector_store %arg4[%c0_8, %c0_9], %7 {strides = array<i32>} : memref<2x2xf32, #tpu.memory_space<vmem>>, vector<2x2xf32>,
    return
  }
}

</mosaic_0001>

<llo_original>
// kernel: unet_forward.14
$region0: #{unet_forward.14}
  #allocation0 [shape = 'u32[]', space=smem, size = 0x4, offset = 0x4, fixed_abs, tag = 'smem constant byte address 0x4 - core index']
  #allocation1 [shape = 'u32[144,128]{1,0:T(1,128)}', space=vmem, size = 0x12000, scoped, tag = 'internal scratch']
  %s0 = inlined_call_operand.vmem [shape: f32[32,4,16,12], index: 0, kind: input, shape index: {}]
  %s1 = inlined_call_operand.vmem [shape: f32[32,16,3], index: 1, kind: output, shape index: {}]
  %s2 = sld [smem:[#allocation0]]
  $region14: #{unet_forward.14} parent=0
    _
  %s4 = ssub.s32 1, %s2
  %s5 = scalar_select 0, %s4, %s2
  // Predicated region
  $region2: #{unet_forward.14} parent=0 // pred_check
    _
  $region3: #{unet_forward.14} parent=0 // pred_check_branch
    %7 = sbr.rel (0) target = $region5
  $region4: #{unet_forward.14} parent=0 // pred_region
    _
  $region5: #{unet_forward.14} parent=0 // pred_fallthru
    _
  %v8 = vld [vmem:[%s0] sm:$0xff]
  %v9 = vld [vmem:[%s0 + $0x8] sm:$0xff]
  %v10 = vld [vmem:[%s0 + $0x10] sm:$0xff]
  %v11 = vld [vmem:[%s0 + $0x18] sm:$0xff]
  %v12 = vld [vmem:[%s0 + $0x20] sm:$0xff]
  %v13 = vld [vmem:[%s0 + $0x28] sm:$0xff]
  %v14 = vld [vmem:[%s0 + $0x30] sm:$0xff]
  %v15 = vld [vmem:[%s0 + $0x38] sm:$0xff]
  %v16 = vld [vmem:[%s0 + $0x40] sm:$0xff]
  %v17 = vld [vmem:[%s0 + $0x48] sm:$0xff]
  %v18 = vld [vmem:[%s0 + $0x50] sm:$0xff]
  %v19 = vld [vmem:[%s0 + $0x58] sm:$0xff]
  %v20 = vld [vmem:[%s0 + $0x60] sm:$0xff]
  %v21 = vld [vmem:[%s0 + $0x68] sm:$0xff]
  %v22 = vld [vmem:[%s0 + $0x70] sm:$0xff]
  %v23 = vld [vmem:[%s0 + $0x78] sm:$0xff]
  %v24 = vld [vmem:[%s0 + $0x80] sm:$0xff]
  %v25 = vld [vmem:[%s0 + $0x88] sm:$0xff]
  %v26 = vld [vmem:[%s0 + $0x90] sm:$0xff]
  %v27 = vld [vmem:[%s0 + $0x98] sm:$0xff]
  %v28 = vld [vmem:[%s0 + $0xa0] sm:$0xff]
  %v29 = vld [vmem:[%s0 + $0xa8] sm:$0xff]
  %v30 = vld [vmem:[%s0 + $0xb0] sm:$0xff]
  %v31 = vld [vmem:[%s0 + $0xb8] sm:$0xff]
  %v32 = vld [vmem:[%s0 + $0xc0] sm:$0xff]
  %v33 = vld [vmem:[%s0 + $0xc8] sm:$0xff]
  %v34 = vld [vmem:[%s0 + $0xd0] sm:$0xff]
  %v35 = vld [vmem:[%s0 + $0xd8] sm:$0xff]
  %v36 = vld [vmem:[%s0 + $0xe0] sm:$0xff]
  %v37 = vld [vmem:[%s0 + $0xe8] sm:$0xff]
  %v38 = vld [vmem:[%s0 + $0xf0] sm:$0xff]
  %v39 = vld [vmem:[%s0 + $0xf8] sm:$0xff]
  %v40 = vld [vmem:[%s0 + $0x100] sm:$0xff]
  %v41 = vld [vmem:[%s0 + $0x108] sm:$0xff]
  %v42 = vld [vmem:[%s0 + $0x110] sm:$0xff]
  %v43 = vld [vmem:[%s0 + $0x118] sm:$0xff]
  %v44 = vld [vmem:[%s0 + $0x120] sm:$0xff]
  %v45 = vld [vmem:[%s0 + $0x128] sm:$0xff]
  %v46 = vld [vmem:[%s0 + $0x130] sm:$0xff]
  %v47 = vld [vmem:[%s0 + $0x138] sm:$0xff]
  %v48 = vld [vmem:[%s0 + $0x140] sm:$0xff]
  %v49 = vld [vmem:[%s0 + $0x148] sm:$0xff]
  %v50 = vld [vmem:[%s0 + $0x150] sm:$0xff]
  %v51 = vld [vmem:[%s0 + $0x158] sm:$0xff]
  %v52 = vld [vmem:[%s0 + $0x160] sm:$0xff]
  %v53 = vld [vmem:[%s0 + $0x168] sm:$0xff]
  %v54 = vld [vmem:[%s0 + $0x170] sm:$0xff]
  %v55 = vld [vmem:[%s0 + $0x178] sm:$0xff]
  %v56 = vld [vmem:[%s0 + $0x180] sm:$0xff]
  %v57 = vld [vmem:[%s0 + $0x188] sm:$0xff]
  %v58 = vld [vmem:[%s0 + $0x190] sm:$0xff]
  %v59 = vld [vmem:[%s0 + $0x198] sm:$0xff]
  %v60 = vld [vmem:[%s0 + $0x1a0] sm:$0xff]
  %v61 = vld [vmem:[%s0 + $0x1a8] sm:$0xff]
  %v62 = vld [vmem:[%s0 + $0x1b0] sm:$0xff]
  %v63 = vld [vmem:[%s0 + $0x1b8] sm:$0xff]
  %v64 = vld [vmem:[%s0 + $0x1c0] sm:$0xff]
  %v65 = vld [vmem:[%s0 + $0x1c8] sm:$0xff]
  %v66 = vld [vmem:[%s0 + $0x1d0] sm:$0xff]
  %v67 = vld [vmem:[%s0 + $0x1d8] sm:$0xff]
  %v68 = vld [vmem:[%s0 + $0x1e0] sm:$0xff]
  %v69 = vld [vmem:[%s0 + $0x1e8] sm:$0xff]
  %v70 = vld [vmem:[%s0 + $0x1f0] sm:$0xff]
  %v71 = vld [vmem:[%s0 + $0x1f8] sm:$0xff]
  %v72 = vld [vmem:[%s0 + $0x200] sm:$0xff]
  %v73 = vld [vmem:[%s0 + $0x208] sm:$0xff]
  %v74 = vld [vmem:[%s0 + $0x210] sm:$0xff]
  %v75 = vld [vmem:[%s0 + $0x218] sm:$0xff]
  %v76 = vld [vmem:[%s0 + $0x220] sm:$0xff]
  %v77 = vld [vmem:[%s0 + $0x228] sm:$0xff]
  %v78 = vld [vmem:[%s0 + $0x230] sm:$0xff]
  %v79 = vld [vmem:[%s0 + $0x238] sm:$0xff]
  %v80 = vld [vmem:[%s0 + $0x240] sm:$0xff]
  %v81 = vld [vmem:[%s0 + $0x248] sm:$0xff]
  %v82 = vld [vmem:[%s0 + $0x250] sm:$0xff]
  %v83 = vld [vmem:[%s0 + $0x258] sm:$0xff]
  %v84 = vld [vmem:[%s0 + $0x260] sm:$0xff]
  %v85 = vld [vmem:[%s0 + $0x268] sm:$0xff]
  %v86 = vld [vmem:[%s0 + $0x270] sm:$0xff]
  %v87 = vld [vmem:[%s0 + $0x278] sm:$0xff]
  %v88 = vld [vmem:[%s0 + $0x280] sm:$0xff]
  %v89 = vld [vmem:[%s0 + $0x288] sm:$0xff]
  %v90 = vld [vmem:[%s0 + $0x290] sm:$0xff]
  %v91 = vld [vmem:[%s0 + $0x298] sm:$0xff]
  %v92 = vld [vmem:[%s0 + $0x2a0] sm:$0xff]
  %v93 = vld [vmem:[%s0 + $0x2a8] sm:$0xff]
  %v94 = vld [vmem:[%s0 + $0x2b0] sm:$0xff]
  %v95 = vld [vmem:[%s0 + $0x2b8] sm:$0xff]
  %v96 = vld [vmem:[%s0 + $0x2c0] sm:$0xff]
  %v97 = vld [vmem:[%s0 + $0x2c8] sm:$0xff]
  %v98 = vld [vmem:[%s0 + $0x2d0] sm:$0xff]
  %v99 = vld [vmem:[%s0 + $0x2d8] sm:$0xff]
  %v100 = vld [vmem:[%s0 + $0x2e0] sm:$0xff]
  %v101 = vld [vmem:[%s0 + $0x2e8] sm:$0xff]
  %v102 = vld [vmem:[%s0 + $0x2f0] sm:$0xff]
  %v103 = vld [vmem:[%s0 + $0x2f8] sm:$0xff]
  %v104 = vld [vmem:[%s0 + $0x300] sm:$0xff]
  %v105 = vld [vmem:[%s0 + $0x308] sm:$0xff]
  %v106 = vld [vmem:[%s0 + $0x310] sm:$0xff]
  %v107 = vld [vmem:[%s0 + $0x318] sm:$0xff]
  %v108 = vld [vmem:[%s0 + $0x320] sm:$0xff]
  %v109 = vld [vmem:[%s0 + $0x328] sm:$0xff]
  %v110 = vld [vmem:[%s0 + $0x330] sm:$0xff]
  %v111 = vld [vmem:[%s0 + $0x338] sm:$0xff]
  %v112 = vld [vmem:[%s0 + $0x340] sm:$0xff]
  %v113 = vld [vmem:[%s0 + $0x348] sm:$0xff]
  %v114 = vld [vmem:[%s0 + $0x350] sm:$0xff]
  %v115 = vld [vmem:[%s0 + $0x358] sm:$0xff]
  %v116 = vld [vmem:[%s0 + $0x360] sm:$0xff]
  %v117 = vld [vmem:[%s0 + $0x368] sm:$0xff]
  %v118 = vld [vmem:[%s0 + $0x370] sm:$0xff]
  %v119 = vld [vmem:[%s0 + $0x378] sm:$0xff]
  %v120 = vld [vmem:[%s0 + $0x380] sm:$0xff]
  %v121 = vld [vmem:[%s0 + $0x388] sm:$0xff]
  %v122 = vld [vmem:[%s0 + $0x390] sm:$0xff]
  %v123 = vld [vmem:[%s0 + $0x398] sm:$0xff]
  %v124 = vld [vmem:[%s0 + $0x3a0] sm:$0xff]
  %v125 = vld [vmem:[%s0 + $0x3a8] sm:$0xff]
  %v126 = vld [vmem:[%s0 + $0x3b0] sm:$0xff]
  %v127 = vld [vmem:[%s0 + $0x3b8] sm:$0xff]
  %v128 = vld [vmem:[%s0 + $0x3c0] sm:$0xff]
  %v129 = vld [vmem:[%s0 + $0x3c8] sm:$0xff]
  %v130 = vld [vmem:[%s0 + $0x3d0] sm:$0xff]
  %v131 = vld [vmem:[%s0 + $0x3d8] sm:$0xff]
  %v132 = vld [vmem:[%s0 + $0x3e0] sm:$0xff]
  %v133 = vld [vmem:[%s0 + $0x3e8] sm:$0xff]
  %v134 = vld [vmem:[%s0 + $0x3f0] sm:$0xff]
  %v135 = vld [vmem:[%s0 + $0x3f8] sm:$0xff]
  %v136 = vld [vmem:[%s0 + $0x400] sm:$0xff]
  %v137 = vld [vmem:[%s0 + $0x408] sm:$0xff]
  %v138 = vld [vmem:[%s0 + $0x410] sm:$0xff]
  %v139 = vld [vmem:[%s0 + $0x418] sm:$0xff]
  %v140 = vld [vmem:[%s0 + $0x420] sm:$0xff]
  %v141 = vld [vmem:[%s0 + $0x428] sm:$0xff]
  %v142 = vld [vmem:[%s0 + $0x430] sm:$0xff]
  %v143 = vld [vmem:[%s0 + $0x438] sm:$0xff]
  %v144 = vld [vmem:[%s0 + $0x440] sm:$0xff]
  %v145 = vld [vmem:[%s0 + $0x448] sm:$0xff]
  %v146 = vld [vmem:[%s0 + $0x450] sm:$0xff]
  %v147 = vld [vmem:[%s0 + $0x458] sm:$0xff]
  %v148 = vld [vmem:[%s0 + $0x460] sm:$0xff]
  %v149 = vld [vmem:[%s0 + $0x468] sm:$0xff]
  %v150 = vld [vmem:[%s0 + $0x470] sm:$0xff]
  %v151 = vld [vmem:[%s0 + $0x478] sm:$0xff]
  %v152 = vld [vmem:[%s0 + $0x480] sm:$0xff]
  %v153 = vld [vmem:[%s0 + $0x488] sm:$0xff]
  %v154 = vld [vmem:[%s0 + $0x490] sm:$0xff]
  %v155 = vld [vmem:[%s0 + $0x498] sm:$0xff]
  %v156 = vld [vmem:[%s0 + $0x4a0] sm:$0xff]
  %v157 = vld [vmem:[%s0 + $0x4a8] sm:$0xff]
  %v158 = vld [vmem:[%s0 + $0x4b0] sm:$0xff]
  %v159 = vld [vmem:[%s0 + $0x4b8] sm:$0xff]
  %v160 = vld [vmem:[%s0 + $0x4c0] sm:$0xff]
  %v161 = vld [vmem:[%s0 + $0x4c8] sm:$0xff]
  %v162 = vld [vmem:[%s0 + $0x4d0] sm:$0xff]
  %v163 = vld [vmem:[%s0 + $0x4d8] sm:$0xff]
  %v164 = vld [vmem:[%s0 + $0x4e0] sm:$0xff]
  %v165 = vld [vmem:[%s0 + $0x4e8] sm:$0xff]
  %v166 = vld [vmem:[%s0 + $0x4f0] sm:$0xff]
  %v167 = vld [vmem:[%s0 + $0x4f8] sm:$0xff]
  %v168 = vld [vmem:[%s0 + $0x500] sm:$0xff]
  %v169 = vld [vmem:[%s0 + $0x508] sm:$0xff]
  %v170 = vld [vmem:[%s0 + $0x510] sm:$0xff]
  %v171 = vld [vmem:[%s0 + $0x518] sm:$0xff]
  %v172 = vld [vmem:[%s0 + $0x520] sm:$0xff]
  %v173 = vld [vmem:[%s0 + $0x528] sm:$0xff]
  %v174 = vld [vmem:[%s0 + $0x530] sm:$0xff]
  %v175 = vld [vmem:[%s0 + $0x538] sm:$0xff]
  %v176 = vld [vmem:[%s0 + $0x540] sm:$0xff]
  %v177 = vld [vmem:[%s0 + $0x548] sm:$0xff]
  %v178 = vld [vmem:[%s0 + $0x550] sm:$0xff]
  %v179 = vld [vmem:[%s0 + $0x558] sm:$0xff]
  %v180 = vld [vmem:[%s0 + $0x560] sm:$0xff]
  %v181 = vld [vmem:[%s0 + $0x568] sm:$0xff]
  %v182 = vld [vmem:[%s0 + $0x570] sm:$0xff]
  %v183 = vld [vmem:[%s0 + $0x578] sm:$0xff]
  %v184 = vld [vmem:[%s0 + $0x580] sm:$0xff]
  %v185 = vld [vmem:[%s0 + $0x588] sm:$0xff]
  %v186 = vld [vmem:[%s0 + $0x590] sm:$0xff]
  %v187 = vld [vmem:[%s0 + $0x598] sm:$0xff]
  %v188 = vld [vmem:[%s0 + $0x5a0] sm:$0xff]
  %v189 = vld [vmem:[%s0 + $0x5a8] sm:$0xff]
  %v190 = vld [vmem:[%s0 + $0x5b0] sm:$0xff]
  %v191 = vld [vmem:[%s0 + $0x5b8] sm:$0xff]
  %v192 = vld [vmem:[%s0 + $0x5c0] sm:$0xff]
  %v193 = vld [vmem:[%s0 + $0x5c8] sm:$0xff]
  %v194 = vld [vmem:[%s0 + $0x5d0] sm:$0xff]
  %v195 = vld [vmem:[%s0 + $0x5d8] sm:$0xff]
  %v196 = vld [vmem:[%s0 + $0x5e0] sm:$0xff]
  %v197 = vld [vmem:[%s0 + $0x5e8] sm:$0xff]
  %v198 = vld [vmem:[%s0 + $0x5f0] sm:$0xff]
  %v199 = vld [vmem:[%s0 + $0x5f8] sm:$0xff]
  %v200 = vld [vmem:[%s0 + $0x600] sm:$0xff]
  %v201 = vld [vmem:[%s0 + $0x608] sm:$0xff]
  %v202 = vld [vmem:[%s0 + $0x610] sm:$0xff]
  %v203 = vld [vmem:[%s0 + $0x618] sm:$0xff]
  %v204 = vld [vmem:[%s0 + $0x620] sm:$0xff]
  %v205 = vld [vmem:[%s0 + $0x628] sm:$0xff]
  %v206 = vld [vmem:[%s0 + $0x630] sm:$0xff]
  %v207 = vld [vmem:[%s0 + $0x638] sm:$0xff]
  %v208 = vld [vmem:[%s0 + $0x640] sm:$0xff]
  %v209 = vld [vmem:[%s0 + $0x648] sm:$0xff]
  %v210 = vld [vmem:[%s0 + $0x650] sm:$0xff]
  %v211 = vld [vmem:[%s0 + $0x658] sm:$0xff]
  %v212 = vld [vmem:[%s0 + $0x660] sm:$0xff]
  %v213 = vld [vmem:[%s0 + $0x668] sm:$0xff]
  %v214 = vld [vmem:[%s0 + $0x670] sm:$0xff]
  %v215 = vld [vmem:[%s0 + $0x678] sm:$0xff]
  %v216 = vld [vmem:[%s0 + $0x680] sm:$0xff]
  %v217 = vld [vmem:[%s0 + $0x688] sm:$0xff]
  %v218 = vld [vmem:[%s0 + $0x690] sm:$0xff]
  %v219 = vld [vmem:[%s0 + $0x698] sm:$0xff]
  %v220 = vld [vmem:[%s0 + $0x6a0] sm:$0xff]
  %v221 = vld [vmem:[%s0 + $0x6a8] sm:$0xff]
  %v222 = vld [vmem:[%s0 + $0x6b0] sm:$0xff]
  %v223 = vld [vmem:[%s0 + $0x6b8] sm:$0xff]
  %v224 = vld [vmem:[%s0 + $0x6c0] sm:$0xff]
  %v225 = vld [vmem:[%s0 + $0x6c8] sm:$0xff]
  %v226 = vld [vmem:[%s0 + $0x6d0] sm:$0xff]
  %v227 = vld [vmem:[%s0 + $0x6d8] sm:$0xff]
  %v228 = vld [vmem:[%s0 + $0x6e0] sm:$0xff]
  %v229 = vld [vmem:[%s0 + $0x6e8] sm:$0xff]
  %v230 = vld [vmem:[%s0 + $0x6f0] sm:$0xff]
  %v231 = vld [vmem:[%s0 + $0x6f8] sm:$0xff]
  %v232 = vld [vmem:[%s0 + $0x700] sm:$0xff]
  %v233 = vld [vmem:[%s0 + $0x708] sm:$0xff]
  %v234 = vld [vmem:[%s0 + $0x710] sm:$0xff]
  %v235 = vld [vmem:[%s0 + $0x718] sm:$0xff]
  %v236 = vld [vmem:[%s0 + $0x720] sm:$0xff]
  %v237 = vld [vmem:[%s0 + $0x728] sm:$0xff]
  %v238 = vld [vmem:[%s0 + $0x730] sm:$0xff]
  %v239 = vld [vmem:[%s0 + $0x738] sm:$0xff]
  %v240 = vld [vmem:[%s0 + $0x740] sm:$0xff]
  %v241 = vld [vmem:[%s0 + $0x748] sm:$0xff]
  %v242 = vld [vmem:[%s0 + $0x750] sm:$0xff]
  %v243 = vld [vmem:[%s0 + $0x758] sm:$0xff]
  %v244 = vld [vmem:[%s0 + $0x760] sm:$0xff]
  %v245 = vld [vmem:[%s0 + $0x768] sm:$0xff]
  %v246 = vld [vmem:[%s0 + $0x770] sm:$0xff]
  %v247 = vld [vmem:[%s0 + $0x778] sm:$0xff]
  %v248 = vld [vmem:[%s0 + $0x780] sm:$0xff]
  %v249 = vld [vmem:[%s0 + $0x788] sm:$0xff]
  %v250 = vld [vmem:[%s0 + $0x790] sm:$0xff]
  %v251 = vld [vmem:[%s0 + $0x798] sm:$0xff]
  %v252 = vld [vmem:[%s0 + $0x7a0] sm:$0xff]
  %v253 = vld [vmem:[%s0 + $0x7a8] sm:$0xff]
  %v254 = vld [vmem:[%s0 + $0x7b0] sm:$0xff]
  %v255 = vld [vmem:[%s0 + $0x7b8] sm:$0xff]
  %v256 = vld [vmem:[%s0 + $0x7c0] sm:$0xff]
  %v257 = vld [vmem:[%s0 + $0x7c8] sm:$0xff]
  %v258 = vld [vmem:[%s0 + $0x7d0] sm:$0xff]
  %v259 = vld [vmem:[%s0 + $0x7d8] sm:$0xff]
  %v260 = vld [vmem:[%s0 + $0x7e0] sm:$0xff]
  %v261 = vld [vmem:[%s0 + $0x7e8] sm:$0xff]
  %v262 = vld [vmem:[%s0 + $0x7f0] sm:$0xff]
  %v263 = vld [vmem:[%s0 + $0x7f8] sm:$0xff]
  %328 = vrot.lane.b32.xlu0 %v8, 125
  %v329 = vpop.permute.xlu0 %328
  %330 = vrot.lane.b32.xlu0 %v9, 125
  %v331 = vpop.permute.xlu0 %330
  %332 = vrot.lane.b32.xlu0 %v16, 125
  %v333 = vpop.permute.xlu0 %332
  %334 = vrot.lane.b32.xlu0 %v17, 125
  %v335 = vpop.permute.xlu0 %334
  %336 = vrot.lane.b32.xlu0 %v24, 125
  %v337 = vpop.permute.xlu0 %336
  %338 = vrot.lane.b32.xlu0 %v25, 125
  %v339 = vpop.permute.xlu0 %338
  %340 = vrot.lane.b32.xlu0 %v32, 125
  %v341 = vpop.permute.xlu0 %340
  %342 = vrot.lane.b32.xlu0 %v33, 125
  %v343 = vpop.permute.xlu0 %342
  %344 = vrot.lane.b32.xlu0 %v40, 125
  %v345 = vpop.permute.xlu0 %344
  %346 = vrot.lane.b32.xlu0 %v41, 125
  %v347 = vpop.permute.xlu0 %346
  %348 = vrot.lane.b32.xlu0 %v48, 125
  %v349 = vpop.permute.xlu0 %348
  %350 = vrot.lane.b32.xlu0 %v49, 125
  %v351 = vpop.permute.xlu0 %350
  %352 = vrot.lane.b32.xlu0 %v56, 125
  %v353 = vpop.permute.xlu0 %352
  %354 = vrot.lane.b32.xlu0 %v57, 125
  %v355 = vpop.permute.xlu0 %354
  %356 = vrot.lane.b32.xlu0 %v64, 125
  %v357 = vpop.permute.xlu0 %356
  %358 = vrot.lane.b32.xlu0 %v65, 125
  %v359 = vpop.permute.xlu0 %358
  %360 = vrot.lane.b32.xlu0 %v72, 125
  %v361 = vpop.permute.xlu0 %360
  %362 = vrot.lane.b32.xlu0 %v73, 125
  %v363 = vpop.permute.xlu0 %362
  %364 = vrot.lane.b32.xlu0 %v80, 125
  %v365 = vpop.permute.xlu0 %364
  %366 = vrot.lane.b32.xlu0 %v81, 125
  %v367 = vpop.permute.xlu0 %366
  %368 = vrot.lane.b32.xlu0 %v88, 125
  %v369 = vpop.permute.xlu0 %368
  %370 = vrot.lane.b32.xlu0 %v89, 125
  %v371 = vpop.permute.xlu0 %370
  %372 = vrot.lane.b32.xlu0 %v96, 125
  %v373 = vpop.permute.xlu0 %372
  %374 = vrot.lane.b32.xlu0 %v97, 125
  %v375 = vpop.permute.xlu0 %374
  %376 = vrot.lane.b32.xlu0 %v104, 125
  %v377 = vpop.permute.xlu0 %376
  %378 = vrot.lane.b32.xlu0 %v105, 125
  %v379 = vpop.permute.xlu0 %378
  %380 = vrot.lane.b32.xlu0 %v112, 125
  %v381 = vpop.permute.xlu0 %380
  %382 = vrot.lane.b32.xlu0 %v113, 125
  %v383 = vpop.permute.xlu0 %382
  %384 = vrot.lane.b32.xlu0 %v120, 125
  %v385 = vpop.permute.xlu0 %384
  %386 = vrot.lane.b32.xlu0 %v121, 125
  %v387 = vpop.permute.xlu0 %386
  %388 = vrot.lane.b32.xlu0 %v128, 125
  %v389 = vpop.permute.xlu0 %388
  %390 = vrot.lane.b32.xlu0 %v129, 125
  %v391 = vpop.permute.xlu0 %390
  %392 = vrot.lane.b32.xlu0 %v136, 125
  %v393 = vpop.permute.xlu0 %392
  %394 = vrot.lane.b32.xlu0 %v137, 125
  %v395 = vpop.permute.xlu0 %394
  %396 = vrot.lane.b32.xlu0 %v144, 125
  %v397 = vpop.permute.xlu0 %396
  %398 = vrot.lane.b32.xlu0 %v145, 125
  %v399 = vpop.permute.xlu0 %398
  %400 = vrot.lane.b32.xlu0 %v152, 125
  %v401 = vpop.permute.xlu0 %400
  %402 = vrot.lane.b32.xlu0 %v153, 125
  %v403 = vpop.permute.xlu0 %402
  %404 = vrot.lane.b32.xlu0 %v160, 125
  %v405 = vpop.permute.xlu0 %404
  %406 = vrot.lane.b32.xlu0 %v161, 125
  %v407 = vpop.permute.xlu0 %406
  %408 = vrot.lane.b32.xlu0 %v168, 125
  %v409 = vpop.permute.xlu0 %408
  %410 = vrot.lane.b32.xlu0 %v169, 125
  %v411 = vpop.permute.xlu0 %410
  %412 = vrot.lane.b32.xlu0 %v176, 125
  %v413 = vpop.permute.xlu0 %412
  %414 = vrot.lane.b32.xlu0 %v177, 125
  %v415 = vpop.permute.xlu0 %414
  %416 = vrot.lane.b32.xlu0 %v184, 125
  %v417 = vpop.permute.xlu0 %416
  %418 = vrot.lane.b32.xlu0 %v185, 125
  %v419 = vpop.permute.xlu0 %418
  %420 = vrot.lane.b32.xlu0 %v192, 125
  %v421 = vpop.permute.xlu0 %420
  %422 = vrot.lane.b32.xlu0 %v193, 125
  %v423 = vpop.permute.xlu0 %422
  %424 = vrot.lane.b32.xlu0 %v200, 125
  %v425 = vpop.permute.xlu0 %424
  %426 = vrot.lane.b32.xlu0 %v201, 125
  %v427 = vpop.permute.xlu0 %426
  %428 = vrot.lane.b32.xlu0 %v208, 125
  %v429 = vpop.permute.xlu0 %428
  %430 = vrot.lane.b32.xlu0 %v209, 125
  %v431 = vpop.permute.xlu0 %430
  %432 = vrot.lane.b32.xlu0 %v216, 125
  %v433 = vpop.permute.xlu0 %432
  %434 = vrot.lane.b32.xlu0 %v217, 125
  %v435 = vpop.permute.xlu0 %434
  %436 = vrot.lane.b32.xlu0 %v224, 125
  %v437 = vpop.permute.xlu0 %436
  %438 = vrot.lane.b32.xlu0 %v225, 125
  %v439 = vpop.permute.xlu0 %438
  %440 = vrot.lane.b32.xlu0 %v232, 125
  %v441 = vpop.permute.xlu0 %440
  %442 = vrot.lane.b32.xlu0 %v233, 125
  %v443 = vpop.permute.xlu0 %442
  %444 = vrot.lane.b32.xlu0 %v240, 125
  %v445 = vpop.permute.xlu0 %444
  %446 = vrot.lane.b32.xlu0 %v241, 125
  %v447 = vpop.permute.xlu0 %446
  %448 = vrot.lane.b32.xlu0 %v248, 125
  %v449 = vpop.permute.xlu0 %448
  %450 = vrot.lane.b32.xlu0 %v249, 125
  %v451 = vpop.permute.xlu0 %450
  %452 = vrot.lane.b32.xlu0 %v256, 125
  %v453 = vpop.permute.xlu0 %452
  %454 = vrot.lane.b32.xlu0 %v257, 125
  %v455 = vpop.permute.xlu0 %454
  %v520 = vadd.f32 %v8, %v329
  %v521 = vadd.f32 %v9, %v331
  %v522 = vadd.f32 %v16, %v333
  %v523 = vadd.f32 %v17, %v335
  %v524 = vadd.f32 %v24, %v337
  %v525 = vadd.f32 %v25, %v339
  %v526 = vadd.f32 %v32, %v341
  %v527 = vadd.f32 %v33, %v343
  %v528 = vadd.f32 %v40, %v345
  %v529 = vadd.f32 %v41, %v347
  %v530 = vadd.f32 %v48, %v349
  %v531 = vadd.f32 %v49, %v351
  %v532 = vadd.f32 %v56, %v353
  %v533 = vadd.f32 %v57, %v355
  %v534 = vadd.f32 %v64, %v357
  %v535 = vadd.f32 %v65, %v359
  %v536 = vadd.f32 %v72, %v361
  %v537 = vadd.f32 %v73, %v363
  %v538 = vadd.f32 %v80, %v365
  %v539 = vadd.f32 %v81, %v367
  %v540 = vadd.f32 %v88, %v369
  %v541 = vadd.f32 %v89, %v371
  %v542 = vadd.f32 %v96, %v373
  %v543 = vadd.f32 %v97, %v375
  %v544 = vadd.f32 %v104, %v377
  %v545 = vadd.f32 %v105, %v379
  %v546 = vadd.f32 %v112, %v381
  %v547 = vadd.f32 %v113, %v383
  %v548 = vadd.f32 %v120, %v385
  %v549 = vadd.f32 %v121, %v387
  %v550 = vadd.f32 %v128, %v389
  %v551 = vadd.f32 %v129, %v391
  %v552 = vadd.f32 %v136, %v393
  %v553 = vadd.f32 %v137, %v395
  %v554 = vadd.f32 %v144, %v397
  %v555 = vadd.f32 %v145, %v399
  %v556 = vadd.f32 %v152, %v401
  %v557 = vadd.f32 %v153, %v403
  %v558 = vadd.f32 %v160, %v405
  %v559 = vadd.f32 %v161, %v407
  %v560 = vadd.f32 %v168, %v409
  %v561 = vadd.f32 %v169, %v411
  %v562 = vadd.f32 %v176, %v413
  %v563 = vadd.f32 %v177, %v415
  %v564 = vadd.f32 %v184, %v417
  %v565 = vadd.f32 %v185, %v419
  %v566 = vadd.f32 %v192, %v421
  %v567 = vadd.f32 %v193, %v423
  %v568 = vadd.f32 %v200, %v425
  %v569 = vadd.f32 %v201, %v427
  %v570 = vadd.f32 %v208, %v429
  %v571 = vadd.f32 %v209, %v431
  %v572 = vadd.f32 %v216, %v433
  %v573 = vadd.f32 %v217, %v435
  %v574 = vadd.f32 %v224, %v437
  %v575 = vadd.f32 %v225, %v439
  %v576 = vadd.f32 %v232, %v441
  %v577 = vadd.f32 %v233, %v443
  %v578 = vadd.f32 %v240, %v445
  %v579 = vadd.f32 %v241, %v447
  %v580 = vadd.f32 %v248, %v449
  %v581 = vadd.f32 %v249, %v451
  %v582 = vadd.f32 %v256, %v453
  %v583 = vadd.f32 %v257, %v455
  %584 = vrot.lane.b32.xlu0 %v8, 122
  %v585 = vpop.permute.xlu0 %584
  %586 = vrot.lane.b32.xlu0 %v9, 122
  %v587 = vpop.permute.xlu0 %586
  %588 = vrot.lane.b32.xlu0 %v16, 122
  %v589 = vpop.permute.xlu0 %588
  %590 = vrot.lane.b32.xlu0 %v17, 122
  %v591 = vpop.permute.xlu0 %590
  %592 = vrot.lane.b32.xlu0 %v24, 122
  %v593 = vpop.permute.xlu0 %592
  %594 = vrot.lane.b32.xlu0 %v25, 122
  %v595 = vpop.permute.xlu0 %594
  %596 = vrot.lane.b32.xlu0 %v32, 122
  %v597 = vpop.permute.xlu0 %596
  %598 = vrot.lane.b32.xlu0 %v33, 122
  %v599 = vpop.permute.xlu0 %598
  %600 = vrot.lane.b32.xlu0 %v40, 122
  %v601 = vpop.permute.xlu0 %600
  %602 = vrot.lane.b32.xlu0 %v41, 122
  %v603 = vpop.permute.xlu0 %602
  %604 = vrot.lane.b32.xlu0 %v48, 122
  %v605 = vpop.permute.xlu0 %604
  %606 = vrot.lane.b32.xlu0 %v49, 122
  %v607 = vpop.permute.xlu0 %606
  %608 = vrot.lane.b32.xlu0 %v56, 122
  %v609 = vpop.permute.xlu0 %608
  %610 = vrot.lane.b32.xlu0 %v57, 122
  %v611 = vpop.permute.xlu0 %610
  %612 = vrot.lane.b32.xlu0 %v64, 122
  %v613 = vpop.permute.xlu0 %612
  %614 = vrot.lane.b32.xlu0 %v65, 122
  %v615 = vpop.permute.xlu0 %614
  %616 = vrot.lane.b32.xlu0 %v72, 122
  %v617 = vpop.permute.xlu0 %616
  %618 = vrot.lane.b32.xlu0 %v73, 122
  %v619 = vpop.permute.xlu0 %618
  %620 = vrot.lane.b32.xlu0 %v80, 122
  %v621 = vpop.permute.xlu0 %620
  %622 = vrot.lane.b32.xlu0 %v81, 122
  %v623 = vpop.permute.xlu0 %622
  %624 = vrot.lane.b32.xlu0 %v88, 122
  %v625 = vpop.permute.xlu0 %624
  %626 = vrot.lane.b32.xlu0 %v89, 122
  %v627 = vpop.permute.xlu0 %626
  %628 = vrot.lane.b32.xlu0 %v96, 122
  %v629 = vpop.permute.xlu0 %628
  %630 = vrot.lane.b32.xlu0 %v97, 122
  %v631 = vpop.permute.xlu0 %630
  %632 = vrot.lane.b32.xlu0 %v104, 122
  %v633 = vpop.permute.xlu0 %632
  %634 = vrot.lane.b32.xlu0 %v105, 122
  %v635 = vpop.permute.xlu0 %634
  %636 = vrot.lane.b32.xlu0 %v112, 122
  %v637 = vpop.permute.xlu0 %636
  %638 = vrot.lane.b32.xlu0 %v113, 122
  %v639 = vpop.permute.xlu0 %638
  %640 = vrot.lane.b32.xlu0 %v120, 122
  %v641 = vpop.permute.xlu0 %640
  %642 = vrot.lane.b32.xlu0 %v121, 122
  %v643 = vpop.permute.xlu0 %642
  %644 = vrot.lane.b32.xlu0 %v128, 122
  %v645 = vpop.permute.xlu0 %644
  %646 = vrot.lane.b32.xlu0 %v129, 122
  %v647 = vpop.permute.xlu0 %646
  %648 = vrot.lane.b32.xlu0 %v136, 122
  %v649 = vpop.permute.xlu0 %648
  %650 = vrot.lane.b32.xlu0 %v137, 122
  %v651 = vpop.permute.xlu0 %650
  %652 = vrot.lane.b32.xlu0 %v144, 122
  %v653 = vpop.permute.xlu0 %652
  %654 = vrot.lane.b32.xlu0 %v145, 122
  %v655 = vpop.permute.xlu0 %654
  %656 = vrot.lane.b32.xlu0 %v152, 122
  %v657 = vpop.permute.xlu0 %656
  %658 = vrot.lane.b32.xlu0 %v153, 122
  %v659 = vpop.permute.xlu0 %658
  %660 = vrot.lane.b32.xlu0 %v160, 122
  %v661 = vpop.permute.xlu0 %660
  %662 = vrot.lane.b32.xlu0 %v161, 122
  %v663 = vpop.permute.xlu0 %662
  %664 = vrot.lane.b32.xlu0 %v168, 122
  %v665 = vpop.permute.xlu0 %664
  %666 = vrot.lane.b32.xlu0 %v169, 122
  %v667 = vpop.permute.xlu0 %666
  %668 = vrot.lane.b32.xlu0 %v176, 122
  %v669 = vpop.permute.xlu0 %668
  %670 = vrot.lane.b32.xlu0 %v177, 122
  %v671 = vpop.permute.xlu0 %670
  %672 = vrot.lane.b32.xlu0 %v184, 122
  %v673 = vpop.permute.xlu0 %672
  %674 = vrot.lane.b32.xlu0 %v185, 122
  %v675 = vpop.permute.xlu0 %674
  %676 = vrot.lane.b32.xlu0 %v192, 122
  %v677 = vpop.permute.xlu0 %676
  %678 = vrot.lane.b32.xlu0 %v193, 122
  %v679 = vpop.permute.xlu0 %678
  %680 = vrot.lane.b32.xlu0 %v200, 122
  %v681 = vpop.permute.xlu0 %680
  %682 = vrot.lane.b32.xlu0 %v201, 122
  %v683 = vpop.permute.xlu0 %682
  %684 = vrot.lane.b32.xlu0 %v208, 122
  %v685 = vpop.permute.xlu0 %684
  %686 = vrot.lane.b32.xlu0 %v209, 122
  %v687 = vpop.permute.xlu0 %686
  %688 = vrot.lane.b32.xlu0 %v216, 122
  %v689 = vpop.permute.xlu0 %688
  %690 = vrot.lane.b32.xlu0 %v217, 122
  %v691 = vpop.permute.xlu0 %690
  %692 = vrot.lane.b32.xlu0 %v224, 122
  %v693 = vpop.permute.xlu0 %692
  %694 = vrot.lane.b32.xlu0 %v225, 122
  %v695 = vpop.permute.xlu0 %694
  %696 = vrot.lane.b32.xlu0 %v232, 122
  %v697 = vpop.permute.xlu0 %696
  %698 = vrot.lane.b32.xlu0 %v233, 122
  %v699 = vpop.permute.xlu0 %698
  %700 = vrot.lane.b32.xlu0 %v240, 122
  %v701 = vpop.permute.xlu0 %700
  %702 = vrot.lane.b32.xlu0 %v241, 122
  %v703 = vpop.permute.xlu0 %702
  %704 = vrot.lane.b32.xlu0 %v248, 122
  %v705 = vpop.permute.xlu0 %704
  %706 = vrot.lane.b32.xlu0 %v249, 122
  %v707 = vpop.permute.xlu0 %706
  %708 = vrot.lane.b32.xlu0 %v256, 122
  %v709 = vpop.permute.xlu0 %708
  %710 = vrot.lane.b32.xlu0 %v257, 122
  %v711 = vpop.permute.xlu0 %710
  %v776 = vadd.f32 %v520, %v585
  %v777 = vadd.f32 %v521, %v587
  %v778 = vadd.f32 %v522, %v589
  %v779 = vadd.f32 %v523, %v591
  %v780 = vadd.f32 %v524, %v593
  %v781 = vadd.f32 %v525, %v595
  %v782 = vadd.f32 %v526, %v597
  %v783 = vadd.f32 %v527, %v599
  %v784 = vadd.f32 %v528, %v601
  %v785 = vadd.f32 %v529, %v603
  %v786 = vadd.f32 %v530, %v605
  %v787 = vadd.f32 %v531, %v607
  %v788 = vadd.f32 %v532, %v609
  %v789 = vadd.f32 %v533, %v611
  %v790 = vadd.f32 %v534, %v613
  %v791 = vadd.f32 %v535, %v615
  %v792 = vadd.f32 %v536, %v617
  %v793 = vadd.f32 %v537, %v619
  %v794 = vadd.f32 %v538, %v621
  %v795 = vadd.f32 %v539, %v623
  %v796 = vadd.f32 %v540, %v625
  %v797 = vadd.f32 %v541, %v627
  %v798 = vadd.f32 %v542, %v629
  %v799 = vadd.f32 %v543, %v631
  %v800 = vadd.f32 %v544, %v633
  %v801 = vadd.f32 %v545, %v635
  %v802 = vadd.f32 %v546, %v637
  %v803 = vadd.f32 %v547, %v639
  %v804 = vadd.f32 %v548, %v641
  %v805 = vadd.f32 %v549, %v643
  %v806 = vadd.f32 %v550, %v645
  %v807 = vadd.f32 %v551, %v647
  %v808 = vadd.f32 %v552, %v649
  %v809 = vadd.f32 %v553, %v651
  %v810 = vadd.f32 %v554, %v653
  %v811 = vadd.f32 %v555, %v655
  %v812 = vadd.f32 %v556, %v657
  %v813 = vadd.f32 %v557, %v659
  %v814 = vadd.f32 %v558, %v661
  %v815 = vadd.f32 %v559, %v663
  %v816 = vadd.f32 %v560, %v665
  %v817 = vadd.f32 %v561, %v667
  %v818 = vadd.f32 %v562, %v669
  %v819 = vadd.f32 %v563, %v671
  %v820 = vadd.f32 %v564, %v673
  %v821 = vadd.f32 %v565, %v675
  %v822 = vadd.f32 %v566, %v677
  %v823 = vadd.f32 %v567, %v679
  %v824 = vadd.f32 %v568, %v681
  %v825 = vadd.f32 %v569, %v683
  %v826 = vadd.f32 %v570, %v685
  %v827 = vadd.f32 %v571, %v687
  %v828 = vadd.f32 %v572, %v689
  %v829 = vadd.f32 %v573, %v691
  %v830 = vadd.f32 %v574, %v693
  %v831 = vadd.f32 %v575, %v695
  %v832 = vadd.f32 %v576, %v697
  %v833 = vadd.f32 %v577, %v699
  %v834 = vadd.f32 %v578, %v701
  %v835 = vadd.f32 %v579, %v703
  %v836 = vadd.f32 %v580, %v705
  %v837 = vadd.f32 %v581, %v707
  %v838 = vadd.f32 %v582, %v709
  %v839 = vadd.f32 %v583, %v711
  %840 = vrot.lane.b32.xlu0 %v8, 119
  %v841 = vpop.permute.xlu0 %840
  %842 = vrot.lane.b32.xlu0 %v9, 119
  %v843 = vpop.permute.xlu0 %842
  %844 = vrot.lane.b32.xlu0 %v16, 119
  %v845 = vpop.permute.xlu0 %844
  %846 = vrot.lane.b32.xlu0 %v17, 119
  %v847 = vpop.permute.xlu0 %846
  %848 = vrot.lane.b32.xlu0 %v24, 119
  %v849 = vpop.permute.xlu0 %848
  %850 = vrot.lane.b32.xlu0 %v25, 119
  %v851 = vpop.permute.xlu0 %850
  %852 = vrot.lane.b32.xlu0 %v32, 119
  %v853 = vpop.permute.xlu0 %852
  %854 = vrot.lane.b32.xlu0 %v33, 119
  %v855 = vpop.permute.xlu0 %854
  %856 = vrot.lane.b32.xlu0 %v40, 119
  %v857 = vpop.permute.xlu0 %856
  %858 = vrot.lane.b32.xlu0 %v41, 119
  %v859 = vpop.permute.xlu0 %858
  %860 = vrot.lane.b32.xlu0 %v48, 119
  %v861 = vpop.permute.xlu0 %860
  %862 = vrot.lane.b32.xlu0 %v49, 119
  %v863 = vpop.permute.xlu0 %862
  %864 = vrot.lane.b32.xlu0 %v56, 119
  %v865 = vpop.permute.xlu0 %864
  %866 = vrot.lane.b32.xlu0 %v57, 119
  %v867 = vpop.permute.xlu0 %866
  %868 = vrot.lane.b32.xlu0 %v64, 119
  %v869 = vpop.permute.xlu0 %868
  %870 = vrot.lane.b32.xlu0 %v65, 119
  %v871 = vpop.permute.xlu0 %870
  %872 = vrot.lane.b32.xlu0 %v72, 119
  %v873 = vpop.permute.xlu0 %872
  %874 = vrot.lane.b32.xlu0 %v73, 119
  %v875 = vpop.permute.xlu0 %874
  %876 = vrot.lane.b32.xlu0 %v80, 119
  %v877 = vpop.permute.xlu0 %876
  %878 = vrot.lane.b32.xlu0 %v81, 119
  %v879 = vpop.permute.xlu0 %878
  %880 = vrot.lane.b32.xlu0 %v88, 119
  %v881 = vpop.permute.xlu0 %880
  %882 = vrot.lane.b32.xlu0 %v89, 119
  %v883 = vpop.permute.xlu0 %882
  %884 = vrot.lane.b32.xlu0 %v96, 119
  %v885 = vpop.permute.xlu0 %884
  %886 = vrot.lane.b32.xlu0 %v97, 119
  %v887 = vpop.permute.xlu0 %886
  %888 = vrot.lane.b32.xlu0 %v104, 119
  %v889 = vpop.permute.xlu0 %888
  %890 = vrot.lane.b32.xlu0 %v105, 119
  %v891 = vpop.permute.xlu0 %890
  %892 = vrot.lane.b32.xlu0 %v112, 119
  %v893 = vpop.permute.xlu0 %892
  %894 = vrot.lane.b32.xlu0 %v113, 119
  %v895 = vpop.permute.xlu0 %894
  %896 = vrot.lane.b32.xlu0 %v120, 119
  %v897 = vpop.permute.xlu0 %896
  %898 = vrot.lane.b32.xlu0 %v121, 119
  %v899 = vpop.permute.xlu0 %898
  %900 = vrot.lane.b32.xlu0 %v128, 119
  %v901 = vpop.permute.xlu0 %900
  %902 = vrot.lane.b32.xlu0 %v129, 119
  %v903 = vpop.permute.xlu0 %902
  %904 = vrot.lane.b32.xlu0 %v136, 119
  %v905 = vpop.permute.xlu0 %904
  %906 = vrot.lane.b32.xlu0 %v137, 119
  %v907 = vpop.permute.xlu0 %906
  %908 = vrot.lane.b32.xlu0 %v144, 119
  %v909 = vpop.permute.xlu0 %908
  %910 = vrot.lane.b32.xlu0 %v145, 119
  %v911 = vpop.permute.xlu0 %910
  %912 = vrot.lane.b32.xlu0 %v152, 119
  %v913 = vpop.permute.xlu0 %912
  %914 = vrot.lane.b32.xlu0 %v153, 119
  %v915 = vpop.permute.xlu0 %914
  %916 = vrot.lane.b32.xlu0 %v160, 119
  %v917 = vpop.permute.xlu0 %916
  %918 = vrot.lane.b32.xlu0 %v161, 119
  %v919 = vpop.permute.xlu0 %918
  %920 = vrot.lane.b32.xlu0 %v168, 119
  %v921 = vpop.permute.xlu0 %920
  %922 = vrot.lane.b32.xlu0 %v169, 119
  %v923 = vpop.permute.xlu0 %922
  %924 = vrot.lane.b32.xlu0 %v176, 119
  %v925 = vpop.permute.xlu0 %924
  %926 = vrot.lane.b32.xlu0 %v177, 119
  %v927 = vpop.permute.xlu0 %926
  %928 = vrot.lane.b32.xlu0 %v184, 119
  %v929 = vpop.permute.xlu0 %928
  %930 = vrot.lane.b32.xlu0 %v185, 119
  %v931 = vpop.permute.xlu0 %930
  %932 = vrot.lane.b32.xlu0 %v192, 119
  %v933 = vpop.permute.xlu0 %932
  %934 = vrot.lane.b32.xlu0 %v193, 119
  %v935 = vpop.permute.xlu0 %934
  %936 = vrot.lane.b32.xlu0 %v200, 119
  %v937 = vpop.permute.xlu0 %936
  %938 = vrot.lane.b32.xlu0 %v201, 119
  %v939 = vpop.permute.xlu0 %938
  %940 = vrot.lane.b32.xlu0 %v208, 119
  %v941 = vpop.permute.xlu0 %940
  %942 = vrot.lane.b32.xlu0 %v209, 119
  %v943 = vpop.permute.xlu0 %942
  %944 = vrot.lane.b32.xlu0 %v216, 119
  %v945 = vpop.permute.xlu0 %944
  %946 = vrot.lane.b32.xlu0 %v217, 119
  %v947 = vpop.permute.xlu0 %946
  %948 = vrot.lane.b32.xlu0 %v224, 119
  %v949 = vpop.permute.xlu0 %948
  %950 = vrot.lane.b32.xlu0 %v225, 119
  %v951 = vpop.permute.xlu0 %950
  %952 = vrot.lane.b32.xlu0 %v232, 119
  %v953 = vpop.permute.xlu0 %952
  %954 = vrot.lane.b32.xlu0 %v233, 119
  %v955 = vpop.permute.xlu0 %954
  %956 = vrot.lane.b32.xlu0 %v240, 119
  %v957 = vpop.permute.xlu0 %956
  %958 = vrot.lane.b32.xlu0 %v241, 119
  %v959 = vpop.permute.xlu0 %958
  %960 = vrot.lane.b32.xlu0 %v248, 119
  %v961 = vpop.permute.xlu0 %960
  %962 = vrot.lane.b32.xlu0 %v249, 119
  %v963 = vpop.permute.xlu0 %962
  %964 = vrot.lane.b32.xlu0 %v256, 119
  %v965 = vpop.permute.xlu0 %964
  %966 = vrot.lane.b32.xlu0 %v257, 119
  %v967 = vpop.permute.xlu0 %966
  %v1032 = vadd.f32 %v776, %v841
  %v1033 = vadd.f32 %v777, %v843
  %v1034 = vadd.f32 %v778, %v845
  %v1035 = vadd.f32 %v779, %v847
  %v1036 = vadd.f32 %v780, %v849
  %v1037 = vadd.f32 %v781, %v851
  %v1038 = vadd.f32 %v782, %v853
  %v1039 = vadd.f32 %v783, %v855
  %v1040 = vadd.f32 %v784, %v857
  %v1041 = vadd.f32 %v785, %v859
  %v1042 = vadd.f32 %v786, %v861
  %v1043 = vadd.f32 %v787, %v863
  %v1044 = vadd.f32 %v788, %v865
  %v1045 = vadd.f32 %v789, %v867
  %v1046 = vadd.f32 %v790, %v869
  %v1047 = vadd.f32 %v791, %v871
  %v1048 = vadd.f32 %v792, %v873
  %v1049 = vadd.f32 %v793, %v875
  %v1050 = vadd.f32 %v794, %v877
  %v1051 = vadd.f32 %v795, %v879
  %v1052 = vadd.f32 %v796, %v881
  %v1053 = vadd.f32 %v797, %v883
  %v1054 = vadd.f32 %v798, %v885
  %v1055 = vadd.f32 %v799, %v887
  %v1056 = vadd.f32 %v800, %v889
  %v1057 = vadd.f32 %v801, %v891
  %v1058 = vadd.f32 %v802, %v893
  %v1059 = vadd.f32 %v803, %v895
  %v1060 = vadd.f32 %v804, %v897
  %v1061 = vadd.f32 %v805, %v899
  %v1062 = vadd.f32 %v806, %v901
  %v1063 = vadd.f32 %v807, %v903
  %v1064 = vadd.f32 %v808, %v905
  %v1065 = vadd.f32 %v809, %v907
  %v1066 = vadd.f32 %v810, %v909
  %v1067 = vadd.f32 %v811, %v911
  %v1068 = vadd.f32 %v812, %v913
  %v1069 = vadd.f32 %v813, %v915
  %v1070 = vadd.f32 %v814, %v917
  %v1071 = vadd.f32 %v815, %v919
  %v1072 = vadd.f32 %v816, %v921
  %v1073 = vadd.f32 %v817, %v923
  %v1074 = vadd.f32 %v818, %v925
  %v1075 = vadd.f32 %v819, %v927
  %v1076 = vadd.f32 %v820, %v929
  %v1077 = vadd.f32 %v821, %v931
  %v1078 = vadd.f32 %v822, %v933
  %v1079 = vadd.f32 %v823, %v935
  %v1080 = vadd.f32 %v824, %v937
  %v1081 = vadd.f32 %v825, %v939
  %v1082 = vadd.f32 %v826, %v941
  %v1083 = vadd.f32 %v827, %v943
  %v1084 = vadd.f32 %v828, %v945
  %v1085 = vadd.f32 %v829, %v947
  %v1086 = vadd.f32 %v830, %v949
  %v1087 = vadd.f32 %v831, %v951
  %v1088 = vadd.f32 %v832, %v953
  %v1089 = vadd.f32 %v833, %v955
  %v1090 = vadd.f32 %v834, %v957
  %v1091 = vadd.f32 %v835, %v959
  %v1092 = vadd.f32 %v836, %v961
  %v1093 = vadd.f32 %v837, %v963
  %v1094 = vadd.f32 %v838, %v965
  %v1095 = vadd.f32 %v839, %v967
  %v1096 = vadd.f32 %v1032, %v10
  %v1097 = vadd.f32 %v1033, %v11
  %v1098 = vadd.f32 %v1034, %v18
  %v1099 = vadd.f32 %v1035, %v19
  %v1100 = vadd.f32 %v1036, %v26
  %v1101 = vadd.f32 %v1037, %v27
  %v1102 = vadd.f32 %v1038, %v34
  %v1103 = vadd.f32 %v1039, %v35
  %v1104 = vadd.f32 %v1040, %v42
  %v1105 = vadd.f32 %v1041, %v43
  %v1106 = vadd.f32 %v1042, %v50
  %v1107 = vadd.f32 %v1043, %v51
  %v1108 = vadd.f32 %v1044, %v58
  %v1109 = vadd.f32 %v1045, %v59
  %v1110 = vadd.f32 %v1046, %v66
  %v1111 = vadd.f32 %v1047, %v67
  %v1112 = vadd.f32 %v1048, %v74
  %v1113 = vadd.f32 %v1049, %v75
  %v1114 = vadd.f32 %v1050, %v82
  %v1115 = vadd.f32 %v1051, %v83
  %v1116 = vadd.f32 %v1052, %v90
  %v1117 = vadd.f32 %v1053, %v91
  %v1118 = vadd.f32 %v1054, %v98
  %v1119 = vadd.f32 %v1055, %v99
  %v1120 = vadd.f32 %v1056, %v106
  %v1121 = vadd.f32 %v1057, %v107
  %v1122 = vadd.f32 %v1058, %v114
  %v1123 = vadd.f32 %v1059, %v115
  %v1124 = vadd.f32 %v1060, %v122
  %v1125 = vadd.f32 %v1061, %v123
  %v1126 = vadd.f32 %v1062, %v130
  %v1127 = vadd.f32 %v1063, %v131
  %v1128 = vadd.f32 %v1064, %v138
  %v1129 = vadd.f32 %v1065, %v139
  %v1130 = vadd.f32 %v1066, %v146
  %v1131 = vadd.f32 %v1067, %v147
  %v1132 = vadd.f32 %v1068, %v154
  %v1133 = vadd.f32 %v1069, %v155
  %v1134 = vadd.f32 %v1070, %v162
  %v1135 = vadd.f32 %v1071, %v163
  %v1136 = vadd.f32 %v1072, %v170
  %v1137 = vadd.f32 %v1073, %v171
  %v1138 = vadd.f32 %v1074, %v178
  %v1139 = vadd.f32 %v1075, %v179
  %v1140 = vadd.f32 %v1076, %v186
  %v1141 = vadd.f32 %v1077, %v187
  %v1142 = vadd.f32 %v1078, %v194
  %v1143 = vadd.f32 %v1079, %v195
  %v1144 = vadd.f32 %v1080, %v202
  %v1145 = vadd.f32 %v1081, %v203
  %v1146 = vadd.f32 %v1082, %v210
  %v1147 = vadd.f32 %v1083, %v211
  %v1148 = vadd.f32 %v1084, %v218
  %v1149 = vadd.f32 %v1085, %v219
  %v1150 = vadd.f32 %v1086, %v226
  %v1151 = vadd.f32 %v1087, %v227
  %v1152 = vadd.f32 %v1088, %v234
  %v1153 = vadd.f32 %v1089, %v235
  %v1154 = vadd.f32 %v1090, %v242
  %v1155 = vadd.f32 %v1091, %v243
  %v1156 = vadd.f32 %v1092, %v250
  %v1157 = vadd.f32 %v1093, %v251
  %v1158 = vadd.f32 %v1094, %v258
  %v1159 = vadd.f32 %v1095, %v259
  %1224 = vrot.lane.b32.xlu0 %v10, 125
  %v1225 = vpop.permute.xlu0 %1224
  %1226 = vrot.lane.b32.xlu0 %v11, 125
  %v1227 = vpop.permute.xlu0 %1226
  %1228 = vrot.lane.b32.xlu0 %v18, 125
  %v1229 = vpop.permute.xlu0 %1228
  %1230 = vrot.lane.b32.xlu0 %v19, 125
  %v1231 = vpop.permute.xlu0 %1230
  %1232 = vrot.lane.b32.xlu0 %v26, 125
  %v1233 = vpop.permute.xlu0 %1232
  %1234 = vrot.lane.b32.xlu0 %v27, 125
  %v1235 = vpop.permute.xlu0 %1234
  %1236 = vrot.lane.b32.xlu0 %v34, 125
  %v1237 = vpop.permute.xlu0 %1236
  %1238 = vrot.lane.b32.xlu0 %v35, 125
  %v1239 = vpop.permute.xlu0 %1238
  %1240 = vrot.lane.b32.xlu0 %v42, 125
  %v1241 = vpop.permute.xlu0 %1240
  %1242 = vrot.lane.b32.xlu0 %v43, 125
  %v1243 = vpop.permute.xlu0 %1242
  %1244 = vrot.lane.b32.xlu0 %v50, 125
  %v1245 = vpop.permute.xlu0 %1244
  %1246 = vrot.lane.b32.xlu0 %v51, 125
  %v1247 = vpop.permute.xlu0 %1246
  %1248 = vrot.lane.b32.xlu0 %v58, 125
  %v1249 = vpop.permute.xlu0 %1248
  %1250 = vrot.lane.b32.xlu0 %v59, 125
  %v1251 = vpop.permute.xlu0 %1250
  %1252 = vrot.lane.b32.xlu0 %v66, 125
  %v1253 = vpop.permute.xlu0 %1252
  %1254 = vrot.lane.b32.xlu0 %v67, 125
  %v1255 = vpop.permute.xlu0 %1254
  %1256 = vrot.lane.b32.xlu0 %v74, 125
  %v1257 = vpop.permute.xlu0 %1256
  %1258 = vrot.lane.b32.xlu0 %v75, 125
  %v1259 = vpop.permute.xlu0 %1258
  %1260 = vrot.lane.b32.xlu0 %v82, 125
  %v1261 = vpop.permute.xlu0 %1260
  %1262 = vrot.lane.b32.xlu0 %v83, 125
  %v1263 = vpop.permute.xlu0 %1262
  %1264 = vrot.lane.b32.xlu0 %v90, 125
  %v1265 = vpop.permute.xlu0 %1264
  %1266 = vrot.lane.b32.xlu0 %v91, 125
  %v1267 = vpop.permute.xlu0 %1266
  %1268 = vrot.lane.b32.xlu0 %v98, 125
  %v1269 = vpop.permute.xlu0 %1268
  %1270 = vrot.lane.b32.xlu0 %v99, 125
  %v1271 = vpop.permute.xlu0 %1270
  %1272 = vrot.lane.b32.xlu0 %v106, 125
  %v1273 = vpop.permute.xlu0 %1272
  %1274 = vrot.lane.b32.xlu0 %v107, 125
  %v1275 = vpop.permute.xlu0 %1274
  %1276 = vrot.lane.b32.xlu0 %v114, 125
  %v1277 = vpop.permute.xlu0 %1276
  %1278 = vrot.lane.b32.xlu0 %v115, 125
  %v1279 = vpop.permute.xlu0 %1278
  %1280 = vrot.lane.b32.xlu0 %v122, 125
  %v1281 = vpop.permute.xlu0 %1280
  %1282 = vrot.lane.b32.xlu0 %v123, 125
  %v1283 = vpop.permute.xlu0 %1282
  %1284 = vrot.lane.b32.xlu0 %v130, 125
  %v1285 = vpop.permute.xlu0 %1284
  %1286 = vrot.lane.b32.xlu0 %v131, 125
  %v1287 = vpop.permute.xlu0 %1286
  %1288 = vrot.lane.b32.xlu0 %v138, 125
  %v1289 = vpop.permute.xlu0 %1288
  %1290 = vrot.lane.b32.xlu0 %v139, 125
  %v1291 = vpop.permute.xlu0 %1290
  %1292 = vrot.lane.b32.xlu0 %v146, 125
  %v1293 = vpop.permute.xlu0 %1292
  %1294 = vrot.lane.b32.xlu0 %v147, 125
  %v1295 = vpop.permute.xlu0 %1294
  %1296 = vrot.lane.b32.xlu0 %v154, 125
  %v1297 = vpop.permute.xlu0 %1296
  %1298 = vrot.lane.b32.xlu0 %v155, 125
  %v1299 = vpop.permute.xlu0 %1298
  %1300 = vrot.lane.b32.xlu0 %v162, 125
  %v1301 = vpop.permute.xlu0 %1300
  %1302 = vrot.lane.b32.xlu0 %v163, 125
  %v1303 = vpop.permute.xlu0 %1302
  %1304 = vrot.lane.b32.xlu0 %v170, 125
  %v1305 = vpop.permute.xlu0 %1304
  %1306 = vrot.lane.b32.xlu0 %v171, 125
  %v1307 = vpop.permute.xlu0 %1306
  %1308 = vrot.lane.b32.xlu0 %v178, 125
  %v1309 = vpop.permute.xlu0 %1308
  %1310 = vrot.lane.b32.xlu0 %v179, 125
  %v1311 = vpop.permute.xlu0 %1310
  %1312 = vrot.lane.b32.xlu0 %v186, 125
  %v1313 = vpop.permute.xlu0 %1312
  %1314 = vrot.lane.b32.xlu0 %v187, 125
  %v1315 = vpop.permute.xlu0 %1314
  %1316 = vrot.lane.b32.xlu0 %v194, 125
  %v1317 = vpop.permute.xlu0 %1316
  %1318 = vrot.lane.b32.xlu0 %v195, 125
  %v1319 = vpop.permute.xlu0 %1318
  %1320 = vrot.lane.b32.xlu0 %v202, 125
  %v1321 = vpop.permute.xlu0 %1320
  %1322 = vrot.lane.b32.xlu0 %v203, 125
  %v1323 = vpop.permute.xlu0 %1322
  %1324 = vrot.lane.b32.xlu0 %v210, 125
  %v1325 = vpop.permute.xlu0 %1324
  %1326 = vrot.lane.b32.xlu0 %v211, 125
  %v1327 = vpop.permute.xlu0 %1326
  %1328 = vrot.lane.b32.xlu0 %v218, 125
  %v1329 = vpop.permute.xlu0 %1328
  %1330 = vrot.lane.b32.xlu0 %v219, 125
  %v1331 = vpop.permute.xlu0 %1330
  %1332 = vrot.lane.b32.xlu0 %v226, 125
  %v1333 = vpop.permute.xlu0 %1332
  %1334 = vrot.lane.b32.xlu0 %v227, 125
  %v1335 = vpop.permute.xlu0 %1334
  %1336 = vrot.lane.b32.xlu0 %v234, 125
  %v1337 = vpop.permute.xlu0 %1336
  %1338 = vrot.lane.b32.xlu0 %v235, 125
  %v1339 = vpop.permute.xlu0 %1338
  %1340 = vrot.lane.b32.xlu0 %v242, 125
  %v1341 = vpop.permute.xlu0 %1340
  %1342 = vrot.lane.b32.xlu0 %v243, 125
  %v1343 = vpop.permute.xlu0 %1342
  %1344 = vrot.lane.b32.xlu0 %v250, 125
  %v1345 = vpop.permute.xlu0 %1344
  %1346 = vrot.lane.b32.xlu0 %v251, 125
  %v1347 = vpop.permute.xlu0 %1346
  %1348 = vrot.lane.b32.xlu0 %v258, 125
  %v1349 = vpop.permute.xlu0 %1348
  %1350 = vrot.lane.b32.xlu0 %v259, 125
  %v1351 = vpop.permute.xlu0 %1350
  %v1416 = vadd.f32 %v1096, %v1225
  %v1417 = vadd.f32 %v1097, %v1227
  %v1418 = vadd.f32 %v1098, %v1229
  %v1419 = vadd.f32 %v1099, %v1231
  %v1420 = vadd.f32 %v1100, %v1233
  %v1421 = vadd.f32 %v1101, %v1235
  %v1422 = vadd.f32 %v1102, %v1237
  %v1423 = vadd.f32 %v1103, %v1239
  %v1424 = vadd.f32 %v1104, %v1241
  %v1425 = vadd.f32 %v1105, %v1243
  %v1426 = vadd.f32 %v1106, %v1245
  %v1427 = vadd.f32 %v1107, %v1247
  %v1428 = vadd.f32 %v1108, %v1249
  %v1429 = vadd.f32 %v1109, %v1251
  %v1430 = vadd.f32 %v1110, %v1253
  %v1431 = vadd.f32 %v1111, %v1255
  %v1432 = vadd.f32 %v1112, %v1257
  %v1433 = vadd.f32 %v1113, %v1259
  %v1434 = vadd.f32 %v1114, %v1261
  %v1435 = vadd.f32 %v1115, %v1263
  %v1436 = vadd.f32 %v1116, %v1265
  %v1437 = vadd.f32 %v1117, %v1267
  %v1438 = vadd.f32 %v1118, %v1269
  %v1439 = vadd.f32 %v1119, %v1271
  %v1440 = vadd.f32 %v1120, %v1273
  %v1441 = vadd.f32 %v1121, %v1275
  %v1442 = vadd.f32 %v1122, %v1277
  %v1443 = vadd.f32 %v1123, %v1279
  %v1444 = vadd.f32 %v1124, %v1281
  %v1445 = vadd.f32 %v1125, %v1283
  %v1446 = vadd.f32 %v1126, %v1285
  %v1447 = vadd.f32 %v1127, %v1287
  %v1448 = vadd.f32 %v1128, %v1289
  %v1449 = vadd.f32 %v1129, %v1291
  %v1450 = vadd.f32 %v1130, %v1293
  %v1451 = vadd.f32 %v1131, %v1295
  %v1452 = vadd.f32 %v1132, %v1297
  %v1453 = vadd.f32 %v1133, %v1299
  %v1454 = vadd.f32 %v1134, %v1301
  %v1455 = vadd.f32 %v1135, %v1303
  %v1456 = vadd.f32 %v1136, %v1305
  %v1457 = vadd.f32 %v1137, %v1307
  %v1458 = vadd.f32 %v1138, %v1309
  %v1459 = vadd.f32 %v1139, %v1311
  %v1460 = vadd.f32 %v1140, %v1313
  %v1461 = vadd.f32 %v1141, %v1315
  %v1462 = vadd.f32 %v1142, %v1317
  %v1463 = vadd.f32 %v1143, %v1319
  %v1464 = vadd.f32 %v1144, %v1321
  %v1465 = vadd.f32 %v1145, %v1323
  %v1466 = vadd.f32 %v1146, %v1325
  %v1467 = vadd.f32 %v1147, %v1327
  %v1468 = vadd.f32 %v1148, %v1329
  %v1469 = vadd.f32 %v1149, %v1331
  %v1470 = vadd.f32 %v1150, %v1333
  %v1471 = vadd.f32 %v1151, %v1335
  %v1472 = vadd.f32 %v1152, %v1337
  %v1473 = vadd.f32 %v1153, %v1339
  %v1474 = vadd.f32 %v1154, %v1341
  %v1475 = vadd.f32 %v1155, %v1343
  %v1476 = vadd.f32 %v1156, %v1345
  %v1477 = vadd.f32 %v1157, %v1347
  %v1478 = vadd.f32 %v1158, %v1349
  %v1479 = vadd.f32 %v1159, %v1351
  %1480 = vrot.lane.b32.xlu0 %v10, 122
  %v1481 = vpop.permute.xlu0 %1480
  %1482 = vrot.lane.b32.xlu0 %v11, 122
  %v1483 = vpop.permute.xlu0 %1482
  %1484 = vrot.lane.b32.xlu0 %v18, 122
  %v1485 = vpop.permute.xlu0 %1484
  %1486 = vrot.lane.b32.xlu0 %v19, 122
  %v1487 = vpop.permute.xlu0 %1486
  %1488 = vrot.lane.b32.xlu0 %v26, 122
  %v1489 = vpop.permute.xlu0 %1488
  %1490 = vrot.lane.b32.xlu0 %v27, 122
  %v1491 = vpop.permute.xlu0 %1490
  %1492 = vrot.lane.b32.xlu0 %v34, 122
  %v1493 = vpop.permute.xlu0 %1492
  %1494 = vrot.lane.b32.xlu0 %v35, 122
  %v1495 = vpop.permute.xlu0 %1494
  %1496 = vrot.lane.b32.xlu0 %v42, 122
  %v1497 = vpop.permute.xlu0 %1496
  %1498 = vrot.lane.b32.xlu0 %v43, 122
  %v1499 = vpop.permute.xlu0 %1498
  %1500 = vrot.lane.b32.xlu0 %v50, 122
  %v1501 = vpop.permute.xlu0 %1500
  %1502 = vrot.lane.b32.xlu0 %v51, 122
  %v1503 = vpop.permute.xlu0 %1502
  %1504 = vrot.lane.b32.xlu0 %v58, 122
  %v1505 = vpop.permute.xlu0 %1504
  %1506 = vrot.lane.b32.xlu0 %v59, 122
  %v1507 = vpop.permute.xlu0 %1506
  %1508 = vrot.lane.b32.xlu0 %v66, 122
  %v1509 = vpop.permute.xlu0 %1508
  %1510 = vrot.lane.b32.xlu0 %v67, 122
  %v1511 = vpop.permute.xlu0 %1510
  %1512 = vrot.lane.b32.xlu0 %v74, 122
  %v1513 = vpop.permute.xlu0 %1512
  %1514 = vrot.lane.b32.xlu0 %v75, 122
  %v1515 = vpop.permute.xlu0 %1514
  %1516 = vrot.lane.b32.xlu0 %v82, 122
  %v1517 = vpop.permute.xlu0 %1516
  %1518 = vrot.lane.b32.xlu0 %v83, 122
  %v1519 = vpop.permute.xlu0 %1518
  %1520 = vrot.lane.b32.xlu0 %v90, 122
  %v1521 = vpop.permute.xlu0 %1520
  %1522 = vrot.lane.b32.xlu0 %v91, 122
  %v1523 = vpop.permute.xlu0 %1522
  %1524 = vrot.lane.b32.xlu0 %v98, 122
  %v1525 = vpop.permute.xlu0 %1524
  %1526 = vrot.lane.b32.xlu0 %v99, 122
  %v1527 = vpop.permute.xlu0 %1526
  %1528 = vrot.lane.b32.xlu0 %v106, 122
  %v1529 = vpop.permute.xlu0 %1528
  %1530 = vrot.lane.b32.xlu0 %v107, 122
  %v1531 = vpop.permute.xlu0 %1530
  %1532 = vrot.lane.b32.xlu0 %v114, 122
  %v1533 = vpop.permute.xlu0 %1532
  %1534 = vrot.lane.b32.xlu0 %v115, 122
  %v1535 = vpop.permute.xlu0 %1534
  %1536 = vrot.lane.b32.xlu0 %v122, 122
  %v1537 = vpop.permute.xlu0 %1536
  %1538 = vrot.lane.b32.xlu0 %v123, 122
  %v1539 = vpop.permute.xlu0 %1538
  %1540 = vrot.lane.b32.xlu0 %v130, 122
  %v1541 = vpop.permute.xlu0 %1540
  %1542 = vrot.lane.b32.xlu0 %v131, 122
  %v1543 = vpop.permute.xlu0 %1542
  %1544 = vrot.lane.b32.xlu0 %v138, 122
  %v1545 = vpop.permute.xlu0 %1544
  %1546 = vrot.lane.b32.xlu0 %v139, 122
  %v1547 = vpop.permute.xlu0 %1546
  %1548 = vrot.lane.b32.xlu0 %v146, 122
  %v1549 = vpop.permute.xlu0 %1548
  %1550 = vrot.lane.b32.xlu0 %v147, 122
  %v1551 = vpop.permute.xlu0 %1550
  %1552 = vrot.lane.b32.xlu0 %v154, 122
  %v1553 = vpop.permute.xlu0 %1552
  %1554 = vrot.lane.b32.xlu0 %v155, 122
  %v1555 = vpop.permute.xlu0 %1554
  %1556 = vrot.lane.b32.xlu0 %v162, 122
  %v1557 = vpop.permute.xlu0 %1556
  %1558 = vrot.lane.b32.xlu0 %v163, 122
  %v1559 = vpop.permute.xlu0 %1558
  %1560 = vrot.lane.b32.xlu0 %v170, 122
  %v1561 = vpop.permute.xlu0 %1560
  %1562 = vrot.lane.b32.xlu0 %v171, 122
  %v1563 = vpop.permute.xlu0 %1562
  %1564 = vrot.lane.b32.xlu0 %v178, 122
  %v1565 = vpop.permute.xlu0 %1564
  %1566 = vrot.lane.b32.xlu0 %v179, 122
  %v1567 = vpop.permute.xlu0 %1566
  %1568 = vrot.lane.b32.xlu0 %v186, 122
  %v1569 = vpop.permute.xlu0 %1568
  %1570 = vrot.lane.b32.xlu0 %v187, 122
  %v1571 = vpop.permute.xlu0 %1570
  %1572 = vrot.lane.b32.xlu0 %v194, 122
  %v1573 = vpop.permute.xlu0 %1572
  %1574 = vrot.lane.b32.xlu0 %v195, 122
  %v1575 = vpop.permute.xlu0 %1574
  %1576 = vrot.lane.b32.xlu0 %v202, 122
  %v1577 = vpop.permute.xlu0 %1576
  %1578 = vrot.lane.b32.xlu0 %v203, 122
  %v1579 = vpop.permute.xlu0 %1578
  %1580 = vrot.lane.b32.xlu0 %v210, 122
  %v1581 = vpop.permute.xlu0 %1580
  %1582 = vrot.lane.b32.xlu0 %v211, 122
  %v1583 = vpop.permute.xlu0 %1582
  %1584 = vrot.lane.b32.xlu0 %v218, 122
  %v1585 = vpop.permute.xlu0 %1584
  %1586 = vrot.lane.b32.xlu0 %v219, 122
  %v1587 = vpop.permute.xlu0 %1586
  %1588 = vrot.lane.b32.xlu0 %v226, 122
  %v1589 = vpop.permute.xlu0 %1588
  %1590 = vrot.lane.b32.xlu0 %v227, 122
  %v1591 = vpop.permute.xlu0 %1590
  %1592 = vrot.lane.b32.xlu0 %v234, 122
  %v1593 = vpop.permute.xlu0 %1592
  %1594 = vrot.lane.b32.xlu0 %v235, 122
  %v1595 = vpop.permute.xlu0 %1594
  %1596 = vrot.lane.b32.xlu0 %v242, 122
  %v1597 = vpop.permute.xlu0 %1596
  %1598 = vrot.lane.b32.xlu0 %v243, 122
  %v1599 = vpop.permute.xlu0 %1598
  %1600 = vrot.lane.b32.xlu0 %v250, 122
  %v1601 = vpop.permute.xlu0 %1600
  %1602 = vrot.lane.b32.xlu0 %v251, 122
  %v1603 = vpop.permute.xlu0 %1602
  %1604 = vrot.lane.b32.xlu0 %v258, 122
  %v1605 = vpop.permute.xlu0 %1604
  %1606 = vrot.lane.b32.xlu0 %v259, 122
  %v1607 = vpop.permute.xlu0 %1606
  %v1672 = vadd.f32 %v1416, %v1481
  %v1673 = vadd.f32 %v1417, %v1483
  %v1674 = vadd.f32 %v1418, %v1485
  %v1675 = vadd.f32 %v1419, %v1487
  %v1676 = vadd.f32 %v1420, %v1489
  %v1677 = vadd.f32 %v1421, %v1491
  %v1678 = vadd.f32 %v1422, %v1493
  %v1679 = vadd.f32 %v1423, %v1495
  %v1680 = vadd.f32 %v1424, %v1497
  %v1681 = vadd.f32 %v1425, %v1499
  %v1682 = vadd.f32 %v1426, %v1501
  %v1683 = vadd.f32 %v1427, %v1503
  %v1684 = vadd.f32 %v1428, %v1505
  %v1685 = vadd.f32 %v1429, %v1507
  %v1686 = vadd.f32 %v1430, %v1509
  %v1687 = vadd.f32 %v1431, %v1511
  %v1688 = vadd.f32 %v1432, %v1513
  %v1689 = vadd.f32 %v1433, %v1515
  %v1690 = vadd.f32 %v1434, %v1517
  %v1691 = vadd.f32 %v1435, %v1519
  %v1692 = vadd.f32 %v1436, %v1521
  %v1693 = vadd.f32 %v1437, %v1523
  %v1694 = vadd.f32 %v1438, %v1525
  %v1695 = vadd.f32 %v1439, %v1527
  %v1696 = vadd.f32 %v1440, %v1529
  %v1697 = vadd.f32 %v1441, %v1531
  %v1698 = vadd.f32 %v1442, %v1533
  %v1699 = vadd.f32 %v1443, %v1535
  %v1700 = vadd.f32 %v1444, %v1537
  %v1701 = vadd.f32 %v1445, %v1539
  %v1702 = vadd.f32 %v1446, %v1541
  %v1703 = vadd.f32 %v1447, %v1543
  %v1704 = vadd.f32 %v1448, %v1545
  %v1705 = vadd.f32 %v1449, %v1547
  %v1706 = vadd.f32 %v1450, %v1549
  %v1707 = vadd.f32 %v1451, %v1551
  %v1708 = vadd.f32 %v1452, %v1553
  %v1709 = vadd.f32 %v1453, %v1555
  %v1710 = vadd.f32 %v1454, %v1557
  %v1711 = vadd.f32 %v1455, %v1559
  %v1712 = vadd.f32 %v1456, %v1561
  %v1713 = vadd.f32 %v1457, %v1563
  %v1714 = vadd.f32 %v1458, %v1565
  %v1715 = vadd.f32 %v1459, %v1567
  %v1716 = vadd.f32 %v1460, %v1569
  %v1717 = vadd.f32 %v1461, %v1571
  %v1718 = vadd.f32 %v1462, %v1573
  %v1719 = vadd.f32 %v1463, %v1575
  %v1720 = vadd.f32 %v1464, %v1577
  %v1721 = vadd.f32 %v1465, %v1579
  %v1722 = vadd.f32 %v1466, %v1581
  %v1723 = vadd.f32 %v1467, %v1583
  %v1724 = vadd.f32 %v1468, %v1585
  %v1725 = vadd.f32 %v1469, %v1587
  %v1726 = vadd.f32 %v1470, %v1589
  %v1727 = vadd.f32 %v1471, %v1591
  %v1728 = vadd.f32 %v1472, %v1593
  %v1729 = vadd.f32 %v1473, %v1595
  %v1730 = vadd.f32 %v1474, %v1597
  %v1731 = vadd.f32 %v1475, %v1599
  %v1732 = vadd.f32 %v1476, %v1601
  %v1733 = vadd.f32 %v1477, %v1603
  %v1734 = vadd.f32 %v1478, %v1605
  %v1735 = vadd.f32 %v1479, %v1607
  %1736 = vrot.lane.b32.xlu0 %v10, 119
  %v1737 = vpop.permute.xlu0 %1736
  %1738 = vrot.lane.b32.xlu0 %v11, 119
  %v1739 = vpop.permute.xlu0 %1738
  %1740 = vrot.lane.b32.xlu0 %v18, 119
  %v1741 = vpop.permute.xlu0 %1740
  %1742 = vrot.lane.b32.xlu0 %v19, 119
  %v1743 = vpop.permute.xlu0 %1742
  %1744 = vrot.lane.b32.xlu0 %v26, 119
  %v1745 = vpop.permute.xlu0 %1744
  %1746 = vrot.lane.b32.xlu0 %v27, 119
  %v1747 = vpop.permute.xlu0 %1746
  %1748 = vrot.lane.b32.xlu0 %v34, 119
  %v1749 = vpop.permute.xlu0 %1748
  %1750 = vrot.lane.b32.xlu0 %v35, 119
  %v1751 = vpop.permute.xlu0 %1750
  %1752 = vrot.lane.b32.xlu0 %v42, 119
  %v1753 = vpop.permute.xlu0 %1752
  %1754 = vrot.lane.b32.xlu0 %v43, 119
  %v1755 = vpop.permute.xlu0 %1754
  %1756 = vrot.lane.b32.xlu0 %v50, 119
  %v1757 = vpop.permute.xlu0 %1756
  %1758 = vrot.lane.b32.xlu0 %v51, 119
  %v1759 = vpop.permute.xlu0 %1758
  %1760 = vrot.lane.b32.xlu0 %v58, 119
  %v1761 = vpop.permute.xlu0 %1760
  %1762 = vrot.lane.b32.xlu0 %v59, 119
  %v1763 = vpop.permute.xlu0 %1762
  %1764 = vrot.lane.b32.xlu0 %v66, 119
  %v1765 = vpop.permute.xlu0 %1764
  %1766 = vrot.lane.b32.xlu0 %v67, 119
  %v1767 = vpop.permute.xlu0 %1766
  %1768 = vrot.lane.b32.xlu0 %v74, 119
  %v1769 = vpop.permute.xlu0 %1768
  %1770 = vrot.lane.b32.xlu0 %v75, 119
  %v1771 = vpop.permute.xlu0 %1770
  %1772 = vrot.lane.b32.xlu0 %v82, 119
  %v1773 = vpop.permute.xlu0 %1772
  %1774 = vrot.lane.b32.xlu0 %v83, 119
  %v1775 = vpop.permute.xlu0 %1774
  %1776 = vrot.lane.b32.xlu0 %v90, 119
  %v1777 = vpop.permute.xlu0 %1776
  %1778 = vrot.lane.b32.xlu0 %v91, 119
  %v1779 = vpop.permute.xlu0 %1778
  %1780 = vrot.lane.b32.xlu0 %v98, 119
  %v1781 = vpop.permute.xlu0 %1780
  %1782 = vrot.lane.b32.xlu0 %v99, 119
  %v1783 = vpop.permute.xlu0 %1782
  %1784 = vrot.lane.b32.xlu0 %v106, 119
  %v1785 = vpop.permute.xlu0 %1784
  %1786 = vrot.lane.b32.xlu0 %v107, 119
  %v1787 = vpop.permute.xlu0 %1786
  %1788 = vrot.lane.b32.xlu0 %v114, 119
  %v1789 = vpop.permute.xlu0 %1788
  %1790 = vrot.lane.b32.xlu0 %v115, 119
  %v1791 = vpop.permute.xlu0 %1790
  %1792 = vrot.lane.b32.xlu0 %v122, 119
  %v1793 = vpop.permute.xlu0 %1792
  %1794 = vrot.lane.b32.xlu0 %v123, 119
  %v1795 = vpop.permute.xlu0 %1794
  %1796 = vrot.lane.b32.xlu0 %v130, 119
  %v1797 = vpop.permute.xlu0 %1796
  %1798 = vrot.lane.b32.xlu0 %v131, 119
  %v1799 = vpop.permute.xlu0 %1798
  %1800 = vrot.lane.b32.xlu0 %v138, 119
  %v1801 = vpop.permute.xlu0 %1800
  %1802 = vrot.lane.b32.xlu0 %v139, 119
  %v1803 = vpop.permute.xlu0 %1802
  %1804 = vrot.lane.b32.xlu0 %v146, 119
  %v1805 = vpop.permute.xlu0 %1804
  %1806 = vrot.lane.b32.xlu0 %v147, 119
  %v1807 = vpop.permute.xlu0 %1806
  %1808 = vrot.lane.b32.xlu0 %v154, 119
  %v1809 = vpop.permute.xlu0 %1808
  %1810 = vrot.lane.b32.xlu0 %v155, 119
  %v1811 = vpop.permute.xlu0 %1810
  %1812 = vrot.lane.b32.xlu0 %v162, 119
  %v1813 = vpop.permute.xlu0 %1812
  %1814 = vrot.lane.b32.xlu0 %v163, 119
  %v1815 = vpop.permute.xlu0 %1814
  %1816 = vrot.lane.b32.xlu0 %v170, 119
  %v1817 = vpop.permute.xlu0 %1816
  %1818 = vrot.lane.b32.xlu0 %v171, 119
  %v1819 = vpop.permute.xlu0 %1818
  %1820 = vrot.lane.b32.xlu0 %v178, 119
  %v1821 = vpop.permute.xlu0 %1820
  %1822 = vrot.lane.b32.xlu0 %v179, 119
  %v1823 = vpop.permute.xlu0 %1822
  %1824 = vrot.lane.b32.xlu0 %v186, 119
  %v1825 = vpop.permute.xlu0 %1824
  %1826 = vrot.lane.b32.xlu0 %v187, 119
  %v1827 = vpop.permute.xlu0 %1826
  %1828 = vrot.lane.b32.xlu0 %v194, 119
  %v1829 = vpop.permute.xlu0 %1828
  %1830 = vrot.lane.b32.xlu0 %v195, 119
  %v1831 = vpop.permute.xlu0 %1830
  %1832 = vrot.lane.b32.xlu0 %v202, 119
  %v1833 = vpop.permute.xlu0 %1832
  %1834 = vrot.lane.b32.xlu0 %v203, 119
  %v1835 = vpop.permute.xlu0 %1834
  %1836 = vrot.lane.b32.xlu0 %v210, 119
  %v1837 = vpop.permute.xlu0 %1836
  %1838 = vrot.lane.b32.xlu0 %v211, 119
  %v1839 = vpop.permute.xlu0 %1838
  %1840 = vrot.lane.b32.xlu0 %v218, 119
  %v1841 = vpop.permute.xlu0 %1840
  %1842 = vrot.lane.b32.xlu0 %v219, 119
  %v1843 = vpop.permute.xlu0 %1842
  %1844 = vrot.lane.b32.xlu0 %v226, 119
  %v1845 = vpop.permute.xlu0 %1844
  %1846 = vrot.lane.b32.xlu0 %v227, 119
  %v1847 = vpop.permute.xlu0 %1846
  %1848 = vrot.lane.b32.xlu0 %v234, 119
  %v1849 = vpop.permute.xlu0 %1848
  %1850 = vrot.lane.b32.xlu0 %v235, 119
  %v1851 = vpop.permute.xlu0 %1850
  %1852 = vrot.lane.b32.xlu0 %v242, 119
  %v1853 = vpop.permute.xlu0 %1852
  %1854 = vrot.lane.b32.xlu0 %v243, 119
  %v1855 = vpop.permute.xlu0 %1854
  %1856 = vrot.lane.b32.xlu0 %v250, 119
  %v1857 = vpop.permute.xlu0 %1856
  %1858 = vrot.lane.b32.xlu0 %v251, 119
  %v1859 = vpop.permute.xlu0 %1858
  %1860 = vrot.lane.b32.xlu0 %v258, 119
  %v1861 = vpop.permute.xlu0 %1860
  %1862 = vrot.lane.b32.xlu0 %v259, 119
  %v1863 = vpop.permute.xlu0 %1862
  %v1928 = vadd.f32 %v1672, %v1737
  %v1929 = vadd.f32 %v1673, %v1739
  %v1930 = vadd.f32 %v1674, %v1741
  %v1931 = vadd.f32 %v1675, %v1743
  %v1932 = vadd.f32 %v1676, %v1745
  %v1933 = vadd.f32 %v1677, %v1747
  %v1934 = vadd.f32 %v1678, %v1749
  %v1935 = vadd.f32 %v1679, %v1751
  %v1936 = vadd.f32 %v1680, %v1753
  %v1937 = vadd.f32 %v1681, %v1755
  %v1938 = vadd.f32 %v1682, %v1757
  %v1939 = vadd.f32 %v1683, %v1759
  %v1940 = vadd.f32 %v1684, %v1761
  %v1941 = vadd.f32 %v1685, %v1763
  %v1942 = vadd.f32 %v1686, %v1765
  %v1943 = vadd.f32 %v1687, %v1767
  %v1944 = vadd.f32 %v1688, %v1769
  %v1945 = vadd.f32 %v1689, %v1771
  %v1946 = vadd.f32 %v1690, %v1773
  %v1947 = vadd.f32 %v1691, %v1775
  %v1948 = vadd.f32 %v1692, %v1777
  %v1949 = vadd.f32 %v1693, %v1779
  %v1950 = vadd.f32 %v1694, %v1781
  %v1951 = vadd.f32 %v1695, %v1783
  %v1952 = vadd.f32 %v1696, %v1785
  %v1953 = vadd.f32 %v1697, %v1787
  %v1954 = vadd.f32 %v1698, %v1789
  %v1955 = vadd.f32 %v1699, %v1791
  %v1956 = vadd.f32 %v1700, %v1793
  %v1957 = vadd.f32 %v1701, %v1795
  %v1958 = vadd.f32 %v1702, %v1797
  %v1959 = vadd.f32 %v1703, %v1799
  %v1960 = vadd.f32 %v1704, %v1801
  %v1961 = vadd.f32 %v1705, %v1803
  %v1962 = vadd.f32 %v1706, %v1805
  %v1963 = vadd.f32 %v1707, %v1807
  %v1964 = vadd.f32 %v1708, %v1809
  %v1965 = vadd.f32 %v1709, %v1811
  %v1966 = vadd.f32 %v1710, %v1813
  %v1967 = vadd.f32 %v1711, %v1815
  %v1968 = vadd.f32 %v1712, %v1817
  %v1969 = vadd.f32 %v1713, %v1819
  %v1970 = vadd.f32 %v1714, %v1821
  %v1971 = vadd.f32 %v1715, %v1823
  %v1972 = vadd.f32 %v1716, %v1825
  %v1973 = vadd.f32 %v1717, %v1827
  %v1974 = vadd.f32 %v1718, %v1829
  %v1975 = vadd.f32 %v1719, %v1831
  %v1976 = vadd.f32 %v1720, %v1833
  %v1977 = vadd.f32 %v1721, %v1835
  %v1978 = vadd.f32 %v1722, %v1837
  %v1979 = vadd.f32 %v1723, %v1839
  %v1980 = vadd.f32 %v1724, %v1841
  %v1981 = vadd.f32 %v1725, %v1843
  %v1982 = vadd.f32 %v1726, %v1845
  %v1983 = vadd.f32 %v1727, %v1847
  %v1984 = vadd.f32 %v1728, %v1849
  %v1985 = vadd.f32 %v1729, %v1851
  %v1986 = vadd.f32 %v1730, %v1853
  %v1987 = vadd.f32 %v1731, %v1855
  %v1988 = vadd.f32 %v1732, %v1857
  %v1989 = vadd.f32 %v1733, %v1859
  %v1990 = vadd.f32 %v1734, %v1861
  %v1991 = vadd.f32 %v1735, %v1863
  %v1992 = vadd.f32 %v1928, %v12
  %v1993 = vadd.f32 %v1929, %v13
  %v1994 = vadd.f32 %v1930, %v20
  %v1995 = vadd.f32 %v1931, %v21
  %v1996 = vadd.f32 %v1932, %v28
  %v1997 = vadd.f32 %v1933, %v29
  %v1998 = vadd.f32 %v1934, %v36
  %v1999 = vadd.f32 %v1935, %v37
  %v2000 = vadd.f32 %v1936, %v44
  %v2001 = vadd.f32 %v1937, %v45
  %v2002 = vadd.f32 %v1938, %v52
  %v2003 = vadd.f32 %v1939, %v53
  %v2004 = vadd.f32 %v1940, %v60
  %v2005 = vadd.f32 %v1941, %v61
  %v2006 = vadd.f32 %v1942, %v68
  %v2007 = vadd.f32 %v1943, %v69
  %v2008 = vadd.f32 %v1944, %v76
  %v2009 = vadd.f32 %v1945, %v77
  %v2010 = vadd.f32 %v1946, %v84
  %v2011 = vadd.f32 %v1947, %v85
  %v2012 = vadd.f32 %v1948, %v92
  %v2013 = vadd.f32 %v1949, %v93
  %v2014 = vadd.f32 %v1950, %v100
  %v2015 = vadd.f32 %v1951, %v101
  %v2016 = vadd.f32 %v1952, %v108
  %v2017 = vadd.f32 %v1953, %v109
  %v2018 = vadd.f32 %v1954, %v116
  %v2019 = vadd.f32 %v1955, %v117
  %v2020 = vadd.f32 %v1956, %v124
  %v2021 = vadd.f32 %v1957, %v125
  %v2022 = vadd.f32 %v1958, %v132
  %v2023 = vadd.f32 %v1959, %v133
  %v2024 = vadd.f32 %v1960, %v140
  %v2025 = vadd.f32 %v1961, %v141
  %v2026 = vadd.f32 %v1962, %v148
  %v2027 = vadd.f32 %v1963, %v149
  %v2028 = vadd.f32 %v1964, %v156
  %v2029 = vadd.f32 %v1965, %v157
  %v2030 = vadd.f32 %v1966, %v164
  %v2031 = vadd.f32 %v1967, %v165
  %v2032 = vadd.f32 %v1968, %v172
  %v2033 = vadd.f32 %v1969, %v173
  %v2034 = vadd.f32 %v1970, %v180
  %v2035 = vadd.f32 %v1971, %v181
  %v2036 = vadd.f32 %v1972, %v188
  %v2037 = vadd.f32 %v1973, %v189
  %v2038 = vadd.f32 %v1974, %v196
  %v2039 = vadd.f32 %v1975, %v197
  %v2040 = vadd.f32 %v1976, %v204
  %v2041 = vadd.f32 %v1977, %v205
  %v2042 = vadd.f32 %v1978, %v212
  %v2043 = vadd.f32 %v1979, %v213
  %v2044 = vadd.f32 %v1980, %v220
  %v2045 = vadd.f32 %v1981, %v221
  %v2046 = vadd.f32 %v1982, %v228
  %v2047 = vadd.f32 %v1983, %v229
  %v2048 = vadd.f32 %v1984, %v236
  %v2049 = vadd.f32 %v1985, %v237
  %v2050 = vadd.f32 %v1986, %v244
  %v2051 = vadd.f32 %v1987, %v245
  %v2052 = vadd.f32 %v1988, %v252
  %v2053 = vadd.f32 %v1989, %v253
  %v2054 = vadd.f32 %v1990, %v260
  %v2055 = vadd.f32 %v1991, %v261
  %2120 = vrot.lane.b32.xlu0 %v12, 125
  %v2121 = vpop.permute.xlu0 %2120
  %2122 = vrot.lane.b32.xlu0 %v13, 125
  %v2123 = vpop.permute.xlu0 %2122
  %2124 = vrot.lane.b32.xlu0 %v20, 125
  %v2125 = vpop.permute.xlu0 %2124
  %2126 = vrot.lane.b32.xlu0 %v21, 125
  %v2127 = vpop.permute.xlu0 %2126
  %2128 = vrot.lane.b32.xlu0 %v28, 125
  %v2129 = vpop.permute.xlu0 %2128
  %2130 = vrot.lane.b32.xlu0 %v29, 125
  %v2131 = vpop.permute.xlu0 %2130
  %2132 = vrot.lane.b32.xlu0 %v36, 125
  %v2133 = vpop.permute.xlu0 %2132
  %2134 = vrot.lane.b32.xlu0 %v37, 125
  %v2135 = vpop.permute.xlu0 %2134
  %2136 = vrot.lane.b32.xlu0 %v44, 125
  %v2137 = vpop.permute.xlu0 %2136
  %2138 = vrot.lane.b32.xlu0 %v45, 125
  %v2139 = vpop.permute.xlu0 %2138
  %2140 = vrot.lane.b32.xlu0 %v52, 125
  %v2141 = vpop.permute.xlu0 %2140
  %2142 = vrot.lane.b32.xlu0 %v53, 125
  %v2143 = vpop.permute.xlu0 %2142
  %2144 = vrot.lane.b32.xlu0 %v60, 125
  %v2145 = vpop.permute.xlu0 %2144
  %2146 = vrot.lane.b32.xlu0 %v61, 125
  %v2147 = vpop.permute.xlu0 %2146
  %2148 = vrot.lane.b32.xlu0 %v68, 125
  %v2149 = vpop.permute.xlu0 %2148
  %2150 = vrot.lane.b32.xlu0 %v69, 125
  %v2151 = vpop.permute.xlu0 %2150
  %2152 = vrot.lane.b32.xlu0 %v76, 125
  %v2153 = vpop.permute.xlu0 %2152
  %2154 = vrot.lane.b32.xlu0 %v77, 125
  %v2155 = vpop.permute.xlu0 %2154
  %2156 = vrot.lane.b32.xlu0 %v84, 125
  %v2157 = vpop.permute.xlu0 %2156
  %2158 = vrot.lane.b32.xlu0 %v85, 125
  %v2159 = vpop.permute.xlu0 %2158
  %2160 = vrot.lane.b32.xlu0 %v92, 125
  %v2161 = vpop.permute.xlu0 %2160
  %2162 = vrot.lane.b32.xlu0 %v93, 125
  %v2163 = vpop.permute.xlu0 %2162
  %2164 = vrot.lane.b32.xlu0 %v100, 125
  %v2165 = vpop.permute.xlu0 %2164
  %2166 = vrot.lane.b32.xlu0 %v101, 125
  %v2167 = vpop.permute.xlu0 %2166
  %2168 = vrot.lane.b32.xlu0 %v108, 125
  %v2169 = vpop.permute.xlu0 %2168
  %2170 = vrot.lane.b32.xlu0 %v109, 125
  %v2171 = vpop.permute.xlu0 %2170
  %2172 = vrot.lane.b32.xlu0 %v116, 125
  %v2173 = vpop.permute.xlu0 %2172
  %2174 = vrot.lane.b32.xlu0 %v117, 125
  %v2175 = vpop.permute.xlu0 %2174
  %2176 = vrot.lane.b32.xlu0 %v124, 125
  %v2177 = vpop.permute.xlu0 %2176
  %2178 = vrot.lane.b32.xlu0 %v125, 125
  %v2179 = vpop.permute.xlu0 %2178
  %2180 = vrot.lane.b32.xlu0 %v132, 125
  %v2181 = vpop.permute.xlu0 %2180
  %2182 = vrot.lane.b32.xlu0 %v133, 125
  %v2183 = vpop.permute.xlu0 %2182
  %2184 = vrot.lane.b32.xlu0 %v140, 125
  %v2185 = vpop.permute.xlu0 %2184
  %2186 = vrot.lane.b32.xlu0 %v141, 125
  %v2187 = vpop.permute.xlu0 %2186
  %2188 = vrot.lane.b32.xlu0 %v148, 125
  %v2189 = vpop.permute.xlu0 %2188
  %2190 = vrot.lane.b32.xlu0 %v149, 125
  %v2191 = vpop.permute.xlu0 %2190
  %2192 = vrot.lane.b32.xlu0 %v156, 125
  %v2193 = vpop.permute.xlu0 %2192
  %2194 = vrot.lane.b32.xlu0 %v157, 125
  %v2195 = vpop.permute.xlu0 %2194
  %2196 = vrot.lane.b32.xlu0 %v164, 125
  %v2197 = vpop.permute.xlu0 %2196
  %2198 = vrot.lane.b32.xlu0 %v165, 125
  %v2199 = vpop.permute.xlu0 %2198
  %2200 = vrot.lane.b32.xlu0 %v172, 125
  %v2201 = vpop.permute.xlu0 %2200
  %2202 = vrot.lane.b32.xlu0 %v173, 125
  %v2203 = vpop.permute.xlu0 %2202
  %2204 = vrot.lane.b32.xlu0 %v180, 125
  %v2205 = vpop.permute.xlu0 %2204
  %2206 = vrot.lane.b32.xlu0 %v181, 125
  %v2207 = vpop.permute.xlu0 %2206
  %2208 = vrot.lane.b32.xlu0 %v188, 125
  %v2209 = vpop.permute.xlu0 %2208
  %2210 = vrot.lane.b32.xlu0 %v189, 125
  %v2211 = vpop.permute.xlu0 %2210
  %2212 = vrot.lane.b32.xlu0 %v196, 125
  %v2213 = vpop.permute.xlu0 %2212
  %2214 = vrot.lane.b32.xlu0 %v197, 125
  %v2215 = vpop.permute.xlu0 %2214
  %2216 = vrot.lane.b32.xlu0 %v204, 125
  %v2217 = vpop.permute.xlu0 %2216
  %2218 = vrot.lane.b32.xlu0 %v205, 125
  %v2219 = vpop.permute.xlu0 %2218
  %2220 = vrot.lane.b32.xlu0 %v212, 125
  %v2221 = vpop.permute.xlu0 %2220
  %2222 = vrot.lane.b32.xlu0 %v213, 125
  %v2223 = vpop.permute.xlu0 %2222
  %2224 = vrot.lane.b32.xlu0 %v220, 125
  %v2225 = vpop.permute.xlu0 %2224
  %2226 = vrot.lane.b32.xlu0 %v221, 125
  %v2227 = vpop.permute.xlu0 %2226
  %2228 = vrot.lane.b32.xlu0 %v228, 125
  %v2229 = vpop.permute.xlu0 %2228
  %2230 = vrot.lane.b32.xlu0 %v229, 125
  %v2231 = vpop.permute.xlu0 %2230
  %2232 = vrot.lane.b32.xlu0 %v236, 125
  %v2233 = vpop.permute.xlu0 %2232
  %2234 = vrot.lane.b32.xlu0 %v237, 125
  %v2235 = vpop.permute.xlu0 %2234
  %2236 = vrot.lane.b32.xlu0 %v244, 125
  %v2237 = vpop.permute.xlu0 %2236
  %2238 = vrot.lane.b32.xlu0 %v245, 125
  %v2239 = vpop.permute.xlu0 %2238
  %2240 = vrot.lane.b32.xlu0 %v252, 125
  %v2241 = vpop.permute.xlu0 %2240
  %2242 = vrot.lane.b32.xlu0 %v253, 125
  %v2243 = vpop.permute.xlu0 %2242
  %2244 = vrot.lane.b32.xlu0 %v260, 125
  %v2245 = vpop.permute.xlu0 %2244
  %2246 = vrot.lane.b32.xlu0 %v261, 125
  %v2247 = vpop.permute.xlu0 %2246
  %v2312 = vadd.f32 %v1992, %v2121
  %v2313 = vadd.f32 %v1993, %v2123
  %v2314 = vadd.f32 %v1994, %v2125
  %v2315 = vadd.f32 %v1995, %v2127
  %v2316 = vadd.f32 %v1996, %v2129
  %v2317 = vadd.f32 %v1997, %v2131
  %v2318 = vadd.f32 %v1998, %v2133
  %v2319 = vadd.f32 %v1999, %v2135
  %v2320 = vadd.f32 %v2000, %v2137
  %v2321 = vadd.f32 %v2001, %v2139
  %v2322 = vadd.f32 %v2002, %v2141
  %v2323 = vadd.f32 %v2003, %v2143
  %v2324 = vadd.f32 %v2004, %v2145
  %v2325 = vadd.f32 %v2005, %v2147
  %v2326 = vadd.f32 %v2006, %v2149
  %v2327 = vadd.f32 %v2007, %v2151
  %v2328 = vadd.f32 %v2008, %v2153
  %v2329 = vadd.f32 %v2009, %v2155
  %v2330 = vadd.f32 %v2010, %v2157
  %v2331 = vadd.f32 %v2011, %v2159
  %v2332 = vadd.f32 %v2012, %v2161
  %v2333 = vadd.f32 %v2013, %v2163
  %v2334 = vadd.f32 %v2014, %v2165
  %v2335 = vadd.f32 %v2015, %v2167
  %v2336 = vadd.f32 %v2016, %v2169
  %v2337 = vadd.f32 %v2017, %v2171
  %v2338 = vadd.f32 %v2018, %v2173
  %v2339 = vadd.f32 %v2019, %v2175
  %v2340 = vadd.f32 %v2020, %v2177
  %v2341 = vadd.f32 %v2021, %v2179
  %v2342 = vadd.f32 %v2022, %v2181
  %v2343 = vadd.f32 %v2023, %v2183
  %v2344 = vadd.f32 %v2024, %v2185
  %v2345 = vadd.f32 %v2025, %v2187
  %v2346 = vadd.f32 %v2026, %v2189
  %v2347 = vadd.f32 %v2027, %v2191
  %v2348 = vadd.f32 %v2028, %v2193
  %v2349 = vadd.f32 %v2029, %v2195
  %v2350 = vadd.f32 %v2030, %v2197
  %v2351 = vadd.f32 %v2031, %v2199
  %v2352 = vadd.f32 %v2032, %v2201
  %v2353 = vadd.f32 %v2033, %v2203
  %v2354 = vadd.f32 %v2034, %v2205
  %v2355 = vadd.f32 %v2035, %v2207
  %v2356 = vadd.f32 %v2036, %v2209
  %v2357 = vadd.f32 %v2037, %v2211
  %v2358 = vadd.f32 %v2038, %v2213
  %v2359 = vadd.f32 %v2039, %v2215
  %v2360 = vadd.f32 %v2040, %v2217
  %v2361 = vadd.f32 %v2041, %v2219
  %v2362 = vadd.f32 %v2042, %v2221
  %v2363 = vadd.f32 %v2043, %v2223
  %v2364 = vadd.f32 %v2044, %v2225
  %v2365 = vadd.f32 %v2045, %v2227
  %v2366 = vadd.f32 %v2046, %v2229
  %v2367 = vadd.f32 %v2047, %v2231
  %v2368 = vadd.f32 %v2048, %v2233
  %v2369 = vadd.f32 %v2049, %v2235
  %v2370 = vadd.f32 %v2050, %v2237
  %v2371 = vadd.f32 %v2051, %v2239
  %v2372 = vadd.f32 %v2052, %v2241
  %v2373 = vadd.f32 %v2053, %v2243
  %v2374 = vadd.f32 %v2054, %v2245
  %v2375 = vadd.f32 %v2055, %v2247
  %2376 = vrot.lane.b32.xlu0 %v12, 122
  %v2377 = vpop.permute.xlu0 %2376
  %2378 = vrot.lane.b32.xlu0 %v13, 122
  %v2379 = vpop.permute.xlu0 %2378
  %2380 = vrot.lane.b32.xlu0 %v20, 122
  %v2381 = vpop.permute.xlu0 %2380
  %2382 = vrot.lane.b32.xlu0 %v21, 122
  %v2383 = vpop.permute.xlu0 %2382
  %2384 = vrot.lane.b32.xlu0 %v28, 122
  %v2385 = vpop.permute.xlu0 %2384
  %2386 = vrot.lane.b32.xlu0 %v29, 122
  %v2387 = vpop.permute.xlu0 %2386
  %2388 = vrot.lane.b32.xlu0 %v36, 122
  %v2389 = vpop.permute.xlu0 %2388
  %2390 = vrot.lane.b32.xlu0 %v37, 122
  %v2391 = vpop.permute.xlu0 %2390
  %2392 = vrot.lane.b32.xlu0 %v44, 122
  %v2393 = vpop.permute.xlu0 %2392
  %2394 = vrot.lane.b32.xlu0 %v45, 122
  %v2395 = vpop.permute.xlu0 %2394
  %2396 = vrot.lane.b32.xlu0 %v52, 122
  %v2397 = vpop.permute.xlu0 %2396
  %2398 = vrot.lane.b32.xlu0 %v53, 122
  %v2399 = vpop.permute.xlu0 %2398
  %2400 = vrot.lane.b32.xlu0 %v60, 122
  %v2401 = vpop.permute.xlu0 %2400
  %2402 = vrot.lane.b32.xlu0 %v61, 122
  %v2403 = vpop.permute.xlu0 %2402
  %2404 = vrot.lane.b32.xlu0 %v68, 122
  %v2405 = vpop.permute.xlu0 %2404
  %2406 = vrot.lane.b32.xlu0 %v69, 122
  %v2407 = vpop.permute.xlu0 %2406
  %2408 = vrot.lane.b32.xlu0 %v76, 122
  %v2409 = vpop.permute.xlu0 %2408
  %2410 = vrot.lane.b32.xlu0 %v77, 122
  %v2411 = vpop.permute.xlu0 %2410
  %2412 = vrot.lane.b32.xlu0 %v84, 122
  %v2413 = vpop.permute.xlu0 %2412
  %2414 = vrot.lane.b32.xlu0 %v85, 122
  %v2415 = vpop.permute.xlu0 %2414
  %2416 = vrot.lane.b32.xlu0 %v92, 122
  %v2417 = vpop.permute.xlu0 %2416
  %2418 = vrot.lane.b32.xlu0 %v93, 122
  %v2419 = vpop.permute.xlu0 %2418
  %2420 = vrot.lane.b32.xlu0 %v100, 122
  %v2421 = vpop.permute.xlu0 %2420
  %2422 = vrot.lane.b32.xlu0 %v101, 122
  %v2423 = vpop.permute.xlu0 %2422
  %2424 = vrot.lane.b32.xlu0 %v108, 122
  %v2425 = vpop.permute.xlu0 %2424
  %2426 = vrot.lane.b32.xlu0 %v109, 122
  %v2427 = vpop.permute.xlu0 %2426
  %2428 = vrot.lane.b32.xlu0 %v116, 122
  %v2429 = vpop.permute.xlu0 %2428
  %2430 = vrot.lane.b32.xlu0 %v117, 122
  %v2431 = vpop.permute.xlu0 %2430
  %2432 = vrot.lane.b32.xlu0 %v124, 122
  %v2433 = vpop.permute.xlu0 %2432
  %2434 = vrot.lane.b32.xlu0 %v125, 122
  %v2435 = vpop.permute.xlu0 %2434
  %2436 = vrot.lane.b32.xlu0 %v132, 122
  %v2437 = vpop.permute.xlu0 %2436
  %2438 = vrot.lane.b32.xlu0 %v133, 122
  %v2439 = vpop.permute.xlu0 %2438
  %2440 = vrot.lane.b32.xlu0 %v140, 122
  %v2441 = vpop.permute.xlu0 %2440
  %2442 = vrot.lane.b32.xlu0 %v141, 122
  %v2443 = vpop.permute.xlu0 %2442
  %2444 = vrot.lane.b32.xlu0 %v148, 122
  %v2445 = vpop.permute.xlu0 %2444
  %2446 = vrot.lane.b32.xlu0 %v149, 122
  %v2447 = vpop.permute.xlu0 %2446
  %2448 = vrot.lane.b32.xlu0 %v156, 122
  %v2449 = vpop.permute.xlu0 %2448
  %2450 = vrot.lane.b32.xlu0 %v157, 122
  %v2451 = vpop.permute.xlu0 %2450
  %2452 = vrot.lane.b32.xlu0 %v164, 122
  %v2453 = vpop.permute.xlu0 %2452
  %2454 = vrot.lane.b32.xlu0 %v165, 122
  %v2455 = vpop.permute.xlu0 %2454
  %2456 = vrot.lane.b32.xlu0 %v172, 122
  %v2457 = vpop.permute.xlu0 %2456
  %2458 = vrot.lane.b32.xlu0 %v173, 122
  %v2459 = vpop.permute.xlu0 %2458
  %2460 = vrot.lane.b32.xlu0 %v180, 122
  %v2461 = vpop.permute.xlu0 %2460
  %2462 = vrot.lane.b32.xlu0 %v181, 122
  %v2463 = vpop.permute.xlu0 %2462
  %2464 = vrot.lane.b32.xlu0 %v188, 122
  %v2465 = vpop.permute.xlu0 %2464
  %2466 = vrot.lane.b32.xlu0 %v189, 122
  %v2467 = vpop.permute.xlu0 %2466
  %2468 = vrot.lane.b32.xlu0 %v196, 122
  %v2469 = vpop.permute.xlu0 %2468
  %2470 = vrot.lane.b32.xlu0 %v197, 122
  %v2471 = vpop.permute.xlu0 %2470
  %2472 = vrot.lane.b32.xlu0 %v204, 122
  %v2473 = vpop.permute.xlu0 %2472
  %2474 = vrot.lane.b32.xlu0 %v205, 122
  %v2475 = vpop.permute.xlu0 %2474
  %2476 = vrot.lane.b32.xlu0 %v212, 122
  %v2477 = vpop.permute.xlu0 %2476
  %2478 = vrot.lane.b32.xlu0 %v213, 122
  %v2479 = vpop.permute.xlu0 %2478
  %2480 = vrot.lane.b32.xlu0 %v220, 122
  %v2481 = vpop.permute.xlu0 %2480
  %2482 = vrot.lane.b32.xlu0 %v221, 122
  %v2483 = vpop.permute.xlu0 %2482
  %2484 = vrot.lane.b32.xlu0 %v228, 122
  %v2485 = vpop.permute.xlu0 %2484
  %2486 = vrot.lane.b32.xlu0 %v229, 122
  %v2487 = vpop.permute.xlu0 %2486
  %2488 = vrot.lane.b32.xlu0 %v236, 122
  %v2489 = vpop.permute.xlu0 %2488
  %2490 = vrot.lane.b32.xlu0 %v237, 122
  %v2491 = vpop.permute.xlu0 %2490
  %2492 = vrot.lane.b32.xlu0 %v244, 122
  %v2493 = vpop.permute.xlu0 %2492
  %2494 = vrot.lane.b32.xlu0 %v245, 122
  %v2495 = vpop.permute.xlu0 %2494
  %2496 = vrot.lane.b32.xlu0 %v252, 122
  %v2497 = vpop.permute.xlu0 %2496
  %2498 = vrot.lane.b32.xlu0 %v253, 122
  %v2499 = vpop.permute.xlu0 %2498
  %2500 = vrot.lane.b32.xlu0 %v260, 122
  %v2501 = vpop.permute.xlu0 %2500
  %2502 = vrot.lane.b32.xlu0 %v261, 122
  %v2503 = vpop.permute.xlu0 %2502
  %v2568 = vadd.f32 %v2312, %v2377
  %v2569 = vadd.f32 %v2313, %v2379
  %v2570 = vadd.f32 %v2314, %v2381
  %v2571 = vadd.f32 %v2315, %v2383
  %v2572 = vadd.f32 %v2316, %v2385
  %v2573 = vadd.f32 %v2317, %v2387
  %v2574 = vadd.f32 %v2318, %v2389
  %v2575 = vadd.f32 %v2319, %v2391
  %v2576 = vadd.f32 %v2320, %v2393
  %v2577 = vadd.f32 %v2321, %v2395
  %v2578 = vadd.f32 %v2322, %v2397
  %v2579 = vadd.f32 %v2323, %v2399
  %v2580 = vadd.f32 %v2324, %v2401
  %v2581 = vadd.f32 %v2325, %v2403
  %v2582 = vadd.f32 %v2326, %v2405
  %v2583 = vadd.f32 %v2327, %v2407
  %v2584 = vadd.f32 %v2328, %v2409
  %v2585 = vadd.f32 %v2329, %v2411
  %v2586 = vadd.f32 %v2330, %v2413
  %v2587 = vadd.f32 %v2331, %v2415
  %v2588 = vadd.f32 %v2332, %v2417
  %v2589 = vadd.f32 %v2333, %v2419
  %v2590 = vadd.f32 %v2334, %v2421
  %v2591 = vadd.f32 %v2335, %v2423
  %v2592 = vadd.f32 %v2336, %v2425
  %v2593 = vadd.f32 %v2337, %v2427
  %v2594 = vadd.f32 %v2338, %v2429
  %v2595 = vadd.f32 %v2339, %v2431
  %v2596 = vadd.f32 %v2340, %v2433
  %v2597 = vadd.f32 %v2341, %v2435
  %v2598 = vadd.f32 %v2342, %v2437
  %v2599 = vadd.f32 %v2343, %v2439
  %v2600 = vadd.f32 %v2344, %v2441
  %v2601 = vadd.f32 %v2345, %v2443
  %v2602 = vadd.f32 %v2346, %v2445
  %v2603 = vadd.f32 %v2347, %v2447
  %v2604 = vadd.f32 %v2348, %v2449
  %v2605 = vadd.f32 %v2349, %v2451
  %v2606 = vadd.f32 %v2350, %v2453
  %v2607 = vadd.f32 %v2351, %v2455
  %v2608 = vadd.f32 %v2352, %v2457
  %v2609 = vadd.f32 %v2353, %v2459
  %v2610 = vadd.f32 %v2354, %v2461
  %v2611 = vadd.f32 %v2355, %v2463
  %v2612 = vadd.f32 %v2356, %v2465
  %v2613 = vadd.f32 %v2357, %v2467
  %v2614 = vadd.f32 %v2358, %v2469
  %v2615 = vadd.f32 %v2359, %v2471
  %v2616 = vadd.f32 %v2360, %v2473
  %v2617 = vadd.f32 %v2361, %v2475
  %v2618 = vadd.f32 %v2362, %v2477
  %v2619 = vadd.f32 %v2363, %v2479
  %v2620 = vadd.f32 %v2364, %v2481
  %v2621 = vadd.f32 %v2365, %v2483
  %v2622 = vadd.f32 %v2366, %v2485
  %v2623 = vadd.f32 %v2367, %v2487
  %v2624 = vadd.f32 %v2368, %v2489
  %v2625 = vadd.f32 %v2369, %v2491
  %v2626 = vadd.f32 %v2370, %v2493
  %v2627 = vadd.f32 %v2371, %v2495
  %v2628 = vadd.f32 %v2372, %v2497
  %v2629 = vadd.f32 %v2373, %v2499
  %v2630 = vadd.f32 %v2374, %v2501
  %v2631 = vadd.f32 %v2375, %v2503
  %2632 = vrot.lane.b32.xlu0 %v12, 119
  %v2633 = vpop.permute.xlu0 %2632
  %2634 = vrot.lane.b32.xlu0 %v13, 119
  %v2635 = vpop.permute.xlu0 %2634
  %2636 = vrot.lane.b32.xlu0 %v20, 119
  %v2637 = vpop.permute.xlu0 %2636
  %2638 = vrot.lane.b32.xlu0 %v21, 119
  %v2639 = vpop.permute.xlu0 %2638
  %2640 = vrot.lane.b32.xlu0 %v28, 119
  %v2641 = vpop.permute.xlu0 %2640
  %2642 = vrot.lane.b32.xlu0 %v29, 119
  %v2643 = vpop.permute.xlu0 %2642
  %2644 = vrot.lane.b32.xlu0 %v36, 119
  %v2645 = vpop.permute.xlu0 %2644
  %2646 = vrot.lane.b32.xlu0 %v37, 119
  %v2647 = vpop.permute.xlu0 %2646
  %2648 = vrot.lane.b32.xlu0 %v44, 119
  %v2649 = vpop.permute.xlu0 %2648
  %2650 = vrot.lane.b32.xlu0 %v45, 119
  %v2651 = vpop.permute.xlu0 %2650
  %2652 = vrot.lane.b32.xlu0 %v52, 119
  %v2653 = vpop.permute.xlu0 %2652
  %2654 = vrot.lane.b32.xlu0 %v53, 119
  %v2655 = vpop.permute.xlu0 %2654
  %2656 = vrot.lane.b32.xlu0 %v60, 119
  %v2657 = vpop.permute.xlu0 %2656
  %2658 = vrot.lane.b32.xlu0 %v61, 119
  %v2659 = vpop.permute.xlu0 %2658
  %2660 = vrot.lane.b32.xlu0 %v68, 119
  %v2661 = vpop.permute.xlu0 %2660
  %2662 = vrot.lane.b32.xlu0 %v69, 119
  %v2663 = vpop.permute.xlu0 %2662
  %2664 = vrot.lane.b32.xlu0 %v76, 119
  %v2665 = vpop.permute.xlu0 %2664
  %2666 = vrot.lane.b32.xlu0 %v77, 119
  %v2667 = vpop.permute.xlu0 %2666
  %2668 = vrot.lane.b32.xlu0 %v84, 119
  %v2669 = vpop.permute.xlu0 %2668
  %2670 = vrot.lane.b32.xlu0 %v85, 119
  %v2671 = vpop.permute.xlu0 %2670
  %2672 = vrot.lane.b32.xlu0 %v92, 119
  %v2673 = vpop.permute.xlu0 %2672
  %2674 = vrot.lane.b32.xlu0 %v93, 119
  %v2675 = vpop.permute.xlu0 %2674
  %2676 = vrot.lane.b32.xlu0 %v100, 119
  %v2677 = vpop.permute.xlu0 %2676
  %2678 = vrot.lane.b32.xlu0 %v101, 119
  %v2679 = vpop.permute.xlu0 %2678
  %2680 = vrot.lane.b32.xlu0 %v108, 119
  %v2681 = vpop.permute.xlu0 %2680
  %2682 = vrot.lane.b32.xlu0 %v109, 119
  %v2683 = vpop.permute.xlu0 %2682
  %2684 = vrot.lane.b32.xlu0 %v116, 119
  %v2685 = vpop.permute.xlu0 %2684
  %2686 = vrot.lane.b32.xlu0 %v117, 119
  %v2687 = vpop.permute.xlu0 %2686
  %2688 = vrot.lane.b32.xlu0 %v124, 119
  %v2689 = vpop.permute.xlu0 %2688
  %2690 = vrot.lane.b32.xlu0 %v125, 119
  %v2691 = vpop.permute.xlu0 %2690
  %2692 = vrot.lane.b32.xlu0 %v132, 119
  %v2693 = vpop.permute.xlu0 %2692
  %2694 = vrot.lane.b32.xlu0 %v133, 119
  %v2695 = vpop.permute.xlu0 %2694
  %2696 = vrot.lane.b32.xlu0 %v140, 119
  %v2697 = vpop.permute.xlu0 %2696
  %2698 = vrot.lane.b32.xlu0 %v141, 119
  %v2699 = vpop.permute.xlu0 %2698
  %2700 = vrot.lane.b32.xlu0 %v148, 119
  %v2701 = vpop.permute.xlu0 %2700
  %2702 = vrot.lane.b32.xlu0 %v149, 119
  %v2703 = vpop.permute.xlu0 %2702
  %2704 = vrot.lane.b32.xlu0 %v156, 119
  %v2705 = vpop.permute.xlu0 %2704
  %2706 = vrot.lane.b32.xlu0 %v157, 119
  %v2707 = vpop.permute.xlu0 %2706
  %2708 = vrot.lane.b32.xlu0 %v164, 119
  %v2709 = vpop.permute.xlu0 %2708
  %2710 = vrot.lane.b32.xlu0 %v165, 119
  %v2711 = vpop.permute.xlu0 %2710
  %2712 = vrot.lane.b32.xlu0 %v172, 119
  %v2713 = vpop.permute.xlu0 %2712
  %2714 = vrot.lane.b32.xlu0 %v173, 119
  %v2715 = vpop.permute.xlu0 %2714
  %2716 = vrot.lane.b32.xlu0 %v180, 119
  %v2717 = vpop.permute.xlu0 %2716
  %2718 = vrot.lane.b32.xlu0 %v181, 119
  %v2719 = vpop.permute.xlu0 %2718
  %2720 = vrot.lane.b32.xlu0 %v188, 119
  %v2721 = vpop.permute.xlu0 %2720
  %2722 = vrot.lane.b32.xlu0 %v189, 119
  %v2723 = vpop.permute.xlu0 %2722
  %2724 = vrot.lane.b32.xlu0 %v196, 119
  %v2725 = vpop.permute.xlu0 %2724
  %2726 = vrot.lane.b32.xlu0 %v197, 119
  %v2727 = vpop.permute.xlu0 %2726
  %2728 = vrot.lane.b32.xlu0 %v204, 119
  %v2729 = vpop.permute.xlu0 %2728
  %2730 = vrot.lane.b32.xlu0 %v205, 119
  %v2731 = vpop.permute.xlu0 %2730
  %2732 = vrot.lane.b32.xlu0 %v212, 119
  %v2733 = vpop.permute.xlu0 %2732
  %2734 = vrot.lane.b32.xlu0 %v213, 119
  %v2735 = vpop.permute.xlu0 %2734
  %2736 = vrot.lane.b32.xlu0 %v220, 119
  %v2737 = vpop.permute.xlu0 %2736
  %2738 = vrot.lane.b32.xlu0 %v221, 119
  %v2739 = vpop.permute.xlu0 %2738
  %2740 = vrot.lane.b32.xlu0 %v228, 119
  %v2741 = vpop.permute.xlu0 %2740
  %2742 = vrot.lane.b32.xlu0 %v229, 119
  %v2743 = vpop.permute.xlu0 %2742
  %2744 = vrot.lane.b32.xlu0 %v236, 119
  %v2745 = vpop.permute.xlu0 %2744
  %2746 = vrot.lane.b32.xlu0 %v237, 119
  %v2747 = vpop.permute.xlu0 %2746
  %2748 = vrot.lane.b32.xlu0 %v244, 119
  %v2749 = vpop.permute.xlu0 %2748
  %2750 = vrot.lane.b32.xlu0 %v245, 119
  %v2751 = vpop.permute.xlu0 %2750
  %2752 = vrot.lane.b32.xlu0 %v252, 119
  %v2753 = vpop.permute.xlu0 %2752
  %2754 = vrot.lane.b32.xlu0 %v253, 119
  %v2755 = vpop.permute.xlu0 %2754
  %2756 = vrot.lane.b32.xlu0 %v260, 119
  %v2757 = vpop.permute.xlu0 %2756
  %2758 = vrot.lane.b32.xlu0 %v261, 119
  %v2759 = vpop.permute.xlu0 %2758
  %v2824 = vadd.f32 %v2568, %v2633
  %v2825 = vadd.f32 %v2569, %v2635
  %v2826 = vadd.f32 %v2570, %v2637
  %v2827 = vadd.f32 %v2571, %v2639
  %v2828 = vadd.f32 %v2572, %v2641
  %v2829 = vadd.f32 %v2573, %v2643
  %v2830 = vadd.f32 %v2574, %v2645
  %v2831 = vadd.f32 %v2575, %v2647
  %v2832 = vadd.f32 %v2576, %v2649
  %v2833 = vadd.f32 %v2577, %v2651
  %v2834 = vadd.f32 %v2578, %v2653
  %v2835 = vadd.f32 %v2579, %v2655
  %v2836 = vadd.f32 %v2580, %v2657
  %v2837 = vadd.f32 %v2581, %v2659
  %v2838 = vadd.f32 %v2582, %v2661
  %v2839 = vadd.f32 %v2583, %v2663
  %v2840 = vadd.f32 %v2584, %v2665
  %v2841 = vadd.f32 %v2585, %v2667
  %v2842 = vadd.f32 %v2586, %v2669
  %v2843 = vadd.f32 %v2587, %v2671
  %v2844 = vadd.f32 %v2588, %v2673
  %v2845 = vadd.f32 %v2589, %v2675
  %v2846 = vadd.f32 %v2590, %v2677
  %v2847 = vadd.f32 %v2591, %v2679
  %v2848 = vadd.f32 %v2592, %v2681
  %v2849 = vadd.f32 %v2593, %v2683
  %v2850 = vadd.f32 %v2594, %v2685
  %v2851 = vadd.f32 %v2595, %v2687
  %v2852 = vadd.f32 %v2596, %v2689
  %v2853 = vadd.f32 %v2597, %v2691
  %v2854 = vadd.f32 %v2598, %v2693
  %v2855 = vadd.f32 %v2599, %v2695
  %v2856 = vadd.f32 %v2600, %v2697
  %v2857 = vadd.f32 %v2601, %v2699
  %v2858 = vadd.f32 %v2602, %v2701
  %v2859 = vadd.f32 %v2603, %v2703
  %v2860 = vadd.f32 %v2604, %v2705
  %v2861 = vadd.f32 %v2605, %v2707
  %v2862 = vadd.f32 %v2606, %v2709
  %v2863 = vadd.f32 %v2607, %v2711
  %v2864 = vadd.f32 %v2608, %v2713
  %v2865 = vadd.f32 %v2609, %v2715
  %v2866 = vadd.f32 %v2610, %v2717
  %v2867 = vadd.f32 %v2611, %v2719
  %v2868 = vadd.f32 %v2612, %v2721
  %v2869 = vadd.f32 %v2613, %v2723
  %v2870 = vadd.f32 %v2614, %v2725
  %v2871 = vadd.f32 %v2615, %v2727
  %v2872 = vadd.f32 %v2616, %v2729
  %v2873 = vadd.f32 %v2617, %v2731
  %v2874 = vadd.f32 %v2618, %v2733
  %v2875 = vadd.f32 %v2619, %v2735
  %v2876 = vadd.f32 %v2620, %v2737
  %v2877 = vadd.f32 %v2621, %v2739
  %v2878 = vadd.f32 %v2622, %v2741
  %v2879 = vadd.f32 %v2623, %v2743
  %v2880 = vadd.f32 %v2624, %v2745
  %v2881 = vadd.f32 %v2625, %v2747
  %v2882 = vadd.f32 %v2626, %v2749
  %v2883 = vadd.f32 %v2627, %v2751
  %v2884 = vadd.f32 %v2628, %v2753
  %v2885 = vadd.f32 %v2629, %v2755
  %v2886 = vadd.f32 %v2630, %v2757
  %v2887 = vadd.f32 %v2631, %v2759
  %v2888 = vadd.f32 %v2824, %v14
  %v2889 = vadd.f32 %v2825, %v15
  %v2890 = vadd.f32 %v2826, %v22
  %v2891 = vadd.f32 %v2827, %v23
  %v2892 = vadd.f32 %v2828, %v30
  %v2893 = vadd.f32 %v2829, %v31
  %v2894 = vadd.f32 %v2830, %v38
  %v2895 = vadd.f32 %v2831, %v39
  %v2896 = vadd.f32 %v2832, %v46
  %v2897 = vadd.f32 %v2833, %v47
  %v2898 = vadd.f32 %v2834, %v54
  %v2899 = vadd.f32 %v2835, %v55
  %v2900 = vadd.f32 %v2836, %v62
  %v2901 = vadd.f32 %v2837, %v63
  %v2902 = vadd.f32 %v2838, %v70
  %v2903 = vadd.f32 %v2839, %v71
  %v2904 = vadd.f32 %v2840, %v78
  %v2905 = vadd.f32 %v2841, %v79
  %v2906 = vadd.f32 %v2842, %v86
  %v2907 = vadd.f32 %v2843, %v87
  %v2908 = vadd.f32 %v2844, %v94
  %v2909 = vadd.f32 %v2845, %v95
  %v2910 = vadd.f32 %v2846, %v102
  %v2911 = vadd.f32 %v2847, %v103
  %v2912 = vadd.f32 %v2848, %v110
  %v2913 = vadd.f32 %v2849, %v111
  %v2914 = vadd.f32 %v2850, %v118
  %v2915 = vadd.f32 %v2851, %v119
  %v2916 = vadd.f32 %v2852, %v126
  %v2917 = vadd.f32 %v2853, %v127
  %v2918 = vadd.f32 %v2854, %v134
  %v2919 = vadd.f32 %v2855, %v135
  %v2920 = vadd.f32 %v2856, %v142
  %v2921 = vadd.f32 %v2857, %v143
  %v2922 = vadd.f32 %v2858, %v150
  %v2923 = vadd.f32 %v2859, %v151
  %v2924 = vadd.f32 %v2860, %v158
  %v2925 = vadd.f32 %v2861, %v159
  %v2926 = vadd.f32 %v2862, %v166
  %v2927 = vadd.f32 %v2863, %v167
  %v2928 = vadd.f32 %v2864, %v174
  %v2929 = vadd.f32 %v2865, %v175
  %v2930 = vadd.f32 %v2866, %v182
  %v2931 = vadd.f32 %v2867, %v183
  %v2932 = vadd.f32 %v2868, %v190
  %v2933 = vadd.f32 %v2869, %v191
  %v2934 = vadd.f32 %v2870, %v198
  %v2935 = vadd.f32 %v2871, %v199
  %v2936 = vadd.f32 %v2872, %v206
  %v2937 = vadd.f32 %v2873, %v207
  %v2938 = vadd.f32 %v2874, %v214
  %v2939 = vadd.f32 %v2875, %v215
  %v2940 = vadd.f32 %v2876, %v222
  %v2941 = vadd.f32 %v2877, %v223
  %v2942 = vadd.f32 %v2878, %v230
  %v2943 = vadd.f32 %v2879, %v231
  %v2944 = vadd.f32 %v2880, %v238
  %v2945 = vadd.f32 %v2881, %v239
  %v2946 = vadd.f32 %v2882, %v246
  %v2947 = vadd.f32 %v2883, %v247
  %v2948 = vadd.f32 %v2884, %v254
  %v2949 = vadd.f32 %v2885, %v255
  %v2950 = vadd.f32 %v2886, %v262
  %v2951 = vadd.f32 %v2887, %v263
  %3016 = vrot.lane.b32.xlu0 %v14, 125
  %v3017 = vpop.permute.xlu0 %3016
  %3018 = vrot.lane.b32.xlu0 %v15, 125
  %v3019 = vpop.permute.xlu0 %3018
  %3020 = vrot.lane.b32.xlu0 %v22, 125
  %v3021 = vpop.permute.xlu0 %3020
  %3022 = vrot.lane.b32.xlu0 %v23, 125
  %v3023 = vpop.permute.xlu0 %3022
  %3024 = vrot.lane.b32.xlu0 %v30, 125
  %v3025 = vpop.permute.xlu0 %3024
  %3026 = vrot.lane.b32.xlu0 %v31, 125
  %v3027 = vpop.permute.xlu0 %3026
  %3028 = vrot.lane.b32.xlu0 %v38, 125
  %v3029 = vpop.permute.xlu0 %3028
  %3030 = vrot.lane.b32.xlu0 %v39, 125
  %v3031 = vpop.permute.xlu0 %3030
  %3032 = vrot.lane.b32.xlu0 %v46, 125
  %v3033 = vpop.permute.xlu0 %3032
  %3034 = vrot.lane.b32.xlu0 %v47, 125
  %v3035 = vpop.permute.xlu0 %3034
  %3036 = vrot.lane.b32.xlu0 %v54, 125
  %v3037 = vpop.permute.xlu0 %3036
  %3038 = vrot.lane.b32.xlu0 %v55, 125
  %v3039 = vpop.permute.xlu0 %3038
  %3040 = vrot.lane.b32.xlu0 %v62, 125
  %v3041 = vpop.permute.xlu0 %3040
  %3042 = vrot.lane.b32.xlu0 %v63, 125
  %v3043 = vpop.permute.xlu0 %3042
  %3044 = vrot.lane.b32.xlu0 %v70, 125
  %v3045 = vpop.permute.xlu0 %3044
  %3046 = vrot.lane.b32.xlu0 %v71, 125
  %v3047 = vpop.permute.xlu0 %3046
  %3048 = vrot.lane.b32.xlu0 %v78, 125
  %v3049 = vpop.permute.xlu0 %3048
  %3050 = vrot.lane.b32.xlu0 %v79, 125
  %v3051 = vpop.permute.xlu0 %3050
  %3052 = vrot.lane.b32.xlu0 %v86, 125
  %v3053 = vpop.permute.xlu0 %3052
  %3054 = vrot.lane.b32.xlu0 %v87, 125
  %v3055 = vpop.permute.xlu0 %3054
  %3056 = vrot.lane.b32.xlu0 %v94, 125
  %v3057 = vpop.permute.xlu0 %3056
  %3058 = vrot.lane.b32.xlu0 %v95, 125
  %v3059 = vpop.permute.xlu0 %3058
  %3060 = vrot.lane.b32.xlu0 %v102, 125
  %v3061 = vpop.permute.xlu0 %3060
  %3062 = vrot.lane.b32.xlu0 %v103, 125
  %v3063 = vpop.permute.xlu0 %3062
  %3064 = vrot.lane.b32.xlu0 %v110, 125
  %v3065 = vpop.permute.xlu0 %3064
  %3066 = vrot.lane.b32.xlu0 %v111, 125
  %v3067 = vpop.permute.xlu0 %3066
  %3068 = vrot.lane.b32.xlu0 %v118, 125
  %v3069 = vpop.permute.xlu0 %3068
  %3070 = vrot.lane.b32.xlu0 %v119, 125
  %v3071 = vpop.permute.xlu0 %3070
  %3072 = vrot.lane.b32.xlu0 %v126, 125
  %v3073 = vpop.permute.xlu0 %3072
  %3074 = vrot.lane.b32.xlu0 %v127, 125
  %v3075 = vpop.permute.xlu0 %3074
  %3076 = vrot.lane.b32.xlu0 %v134, 125
  %v3077 = vpop.permute.xlu0 %3076
  %3078 = vrot.lane.b32.xlu0 %v135, 125
  %v3079 = vpop.permute.xlu0 %3078
  %3080 = vrot.lane.b32.xlu0 %v142, 125
  %v3081 = vpop.permute.xlu0 %3080
  %3082 = vrot.lane.b32.xlu0 %v143, 125
  %v3083 = vpop.permute.xlu0 %3082
  %3084 = vrot.lane.b32.xlu0 %v150, 125
  %v3085 = vpop.permute.xlu0 %3084
  %3086 = vrot.lane.b32.xlu0 %v151, 125
  %v3087 = vpop.permute.xlu0 %3086
  %3088 = vrot.lane.b32.xlu0 %v158, 125
  %v3089 = vpop.permute.xlu0 %3088
  %3090 = vrot.lane.b32.xlu0 %v159, 125
  %v3091 = vpop.permute.xlu0 %3090
  %3092 = vrot.lane.b32.xlu0 %v166, 125
  %v3093 = vpop.permute.xlu0 %3092
  %3094 = vrot.lane.b32.xlu0 %v167, 125
  %v3095 = vpop.permute.xlu0 %3094
  %3096 = vrot.lane.b32.xlu0 %v174, 125
  %v3097 = vpop.permute.xlu0 %3096
  %3098 = vrot.lane.b32.xlu0 %v175, 125
  %v3099 = vpop.permute.xlu0 %3098
  %3100 = vrot.lane.b32.xlu0 %v182, 125
  %v3101 = vpop.permute.xlu0 %3100
  %3102 = vrot.lane.b32.xlu0 %v183, 125
  %v3103 = vpop.permute.xlu0 %3102
  %3104 = vrot.lane.b32.xlu0 %v190, 125
  %v3105 = vpop.permute.xlu0 %3104
  %3106 = vrot.lane.b32.xlu0 %v191, 125
  %v3107 = vpop.permute.xlu0 %3106
  %3108 = vrot.lane.b32.xlu0 %v198, 125
  %v3109 = vpop.permute.xlu0 %3108
  %3110 = vrot.lane.b32.xlu0 %v199, 125
  %v3111 = vpop.permute.xlu0 %3110
  %3112 = vrot.lane.b32.xlu0 %v206, 125
  %v3113 = vpop.permute.xlu0 %3112
  %3114 = vrot.lane.b32.xlu0 %v207, 125
  %v3115 = vpop.permute.xlu0 %3114
  %3116 = vrot.lane.b32.xlu0 %v214, 125
  %v3117 = vpop.permute.xlu0 %3116
  %3118 = vrot.lane.b32.xlu0 %v215, 125
  %v3119 = vpop.permute.xlu0 %3118
  %3120 = vrot.lane.b32.xlu0 %v222, 125
  %v3121 = vpop.permute.xlu0 %3120
  %3122 = vrot.lane.b32.xlu0 %v223, 125
  %v3123 = vpop.permute.xlu0 %3122
  %3124 = vrot.lane.b32.xlu0 %v230, 125
  %v3125 = vpop.permute.xlu0 %3124
  %3126 = vrot.lane.b32.xlu0 %v231, 125
  %v3127 = vpop.permute.xlu0 %3126
  %3128 = vrot.lane.b32.xlu0 %v238, 125
  %v3129 = vpop.permute.xlu0 %3128
  %3130 = vrot.lane.b32.xlu0 %v239, 125
  %v3131 = vpop.permute.xlu0 %3130
  %3132 = vrot.lane.b32.xlu0 %v246, 125
  %v3133 = vpop.permute.xlu0 %3132
  %3134 = vrot.lane.b32.xlu0 %v247, 125
  %v3135 = vpop.permute.xlu0 %3134
  %3136 = vrot.lane.b32.xlu0 %v254, 125
  %v3137 = vpop.permute.xlu0 %3136
  %3138 = vrot.lane.b32.xlu0 %v255, 125
  %v3139 = vpop.permute.xlu0 %3138
  %3140 = vrot.lane.b32.xlu0 %v262, 125
  %v3141 = vpop.permute.xlu0 %3140
  %3142 = vrot.lane.b32.xlu0 %v263, 125
  %v3143 = vpop.permute.xlu0 %3142
  %v3208 = vadd.f32 %v2888, %v3017
  %v3209 = vadd.f32 %v2889, %v3019
  %v3210 = vadd.f32 %v2890, %v3021
  %v3211 = vadd.f32 %v2891, %v3023
  %v3212 = vadd.f32 %v2892, %v3025
  %v3213 = vadd.f32 %v2893, %v3027
  %v3214 = vadd.f32 %v2894, %v3029
  %v3215 = vadd.f32 %v2895, %v3031
  %v3216 = vadd.f32 %v2896, %v3033
  %v3217 = vadd.f32 %v2897, %v3035
  %v3218 = vadd.f32 %v2898, %v3037
  %v3219 = vadd.f32 %v2899, %v3039
  %v3220 = vadd.f32 %v2900, %v3041
  %v3221 = vadd.f32 %v2901, %v3043
  %v3222 = vadd.f32 %v2902, %v3045
  %v3223 = vadd.f32 %v2903, %v3047
  %v3224 = vadd.f32 %v2904, %v3049
  %v3225 = vadd.f32 %v2905, %v3051
  %v3226 = vadd.f32 %v2906, %v3053
  %v3227 = vadd.f32 %v2907, %v3055
  %v3228 = vadd.f32 %v2908, %v3057
  %v3229 = vadd.f32 %v2909, %v3059
  %v3230 = vadd.f32 %v2910, %v3061
  %v3231 = vadd.f32 %v2911, %v3063
  %v3232 = vadd.f32 %v2912, %v3065
  %v3233 = vadd.f32 %v2913, %v3067
  %v3234 = vadd.f32 %v2914, %v3069
  %v3235 = vadd.f32 %v2915, %v3071
  %v3236 = vadd.f32 %v2916, %v3073
  %v3237 = vadd.f32 %v2917, %v3075
  %v3238 = vadd.f32 %v2918, %v3077
  %v3239 = vadd.f32 %v2919, %v3079
  %v3240 = vadd.f32 %v2920, %v3081
  %v3241 = vadd.f32 %v2921, %v3083
  %v3242 = vadd.f32 %v2922, %v3085
  %v3243 = vadd.f32 %v2923, %v3087
  %v3244 = vadd.f32 %v2924, %v3089
  %v3245 = vadd.f32 %v2925, %v3091
  %v3246 = vadd.f32 %v2926, %v3093
  %v3247 = vadd.f32 %v2927, %v3095
  %v3248 = vadd.f32 %v2928, %v3097
  %v3249 = vadd.f32 %v2929, %v3099
  %v3250 = vadd.f32 %v2930, %v3101
  %v3251 = vadd.f32 %v2931, %v3103
  %v3252 = vadd.f32 %v2932, %v3105
  %v3253 = vadd.f32 %v2933, %v3107
  %v3254 = vadd.f32 %v2934, %v3109
  %v3255 = vadd.f32 %v2935, %v3111
  %v3256 = vadd.f32 %v2936, %v3113
  %v3257 = vadd.f32 %v2937, %v3115
  %v3258 = vadd.f32 %v2938, %v3117
  %v3259 = vadd.f32 %v2939, %v3119
  %v3260 = vadd.f32 %v2940, %v3121
  %v3261 = vadd.f32 %v2941, %v3123
  %v3262 = vadd.f32 %v2942, %v3125
  %v3263 = vadd.f32 %v2943, %v3127
  %v3264 = vadd.f32 %v2944, %v3129
  %v3265 = vadd.f32 %v2945, %v3131
  %v3266 = vadd.f32 %v2946, %v3133
  %v3267 = vadd.f32 %v2947, %v3135
  %v3268 = vadd.f32 %v2948, %v3137
  %v3269 = vadd.f32 %v2949, %v3139
  %v3270 = vadd.f32 %v2950, %v3141
  %v3271 = vadd.f32 %v2951, %v3143
  %3272 = vrot.lane.b32.xlu0 %v14, 122
  %v3273 = vpop.permute.xlu0 %3272
  %3274 = vrot.lane.b32.xlu0 %v15, 122
  %v3275 = vpop.permute.xlu0 %3274
  %3276 = vrot.lane.b32.xlu0 %v22, 122
  %v3277 = vpop.permute.xlu0 %3276
  %3278 = vrot.lane.b32.xlu0 %v23, 122
  %v3279 = vpop.permute.xlu0 %3278
  %3280 = vrot.lane.b32.xlu0 %v30, 122
  %v3281 = vpop.permute.xlu0 %3280
  %3282 = vrot.lane.b32.xlu0 %v31, 122
  %v3283 = vpop.permute.xlu0 %3282
  %3284 = vrot.lane.b32.xlu0 %v38, 122
  %v3285 = vpop.permute.xlu0 %3284
  %3286 = vrot.lane.b32.xlu0 %v39, 122
  %v3287 = vpop.permute.xlu0 %3286
  %3288 = vrot.lane.b32.xlu0 %v46, 122
  %v3289 = vpop.permute.xlu0 %3288
  %3290 = vrot.lane.b32.xlu0 %v47, 122
  %v3291 = vpop.permute.xlu0 %3290
  %3292 = vrot.lane.b32.xlu0 %v54, 122
  %v3293 = vpop.permute.xlu0 %3292
  %3294 = vrot.lane.b32.xlu0 %v55, 122
  %v3295 = vpop.permute.xlu0 %3294
  %3296 = vrot.lane.b32.xlu0 %v62, 122
  %v3297 = vpop.permute.xlu0 %3296
  %3298 = vrot.lane.b32.xlu0 %v63, 122
  %v3299 = vpop.permute.xlu0 %3298
  %3300 = vrot.lane.b32.xlu0 %v70, 122
  %v3301 = vpop.permute.xlu0 %3300
  %3302 = vrot.lane.b32.xlu0 %v71, 122
  %v3303 = vpop.permute.xlu0 %3302
  %3304 = vrot.lane.b32.xlu0 %v78, 122
  %v3305 = vpop.permute.xlu0 %3304
  %3306 = vrot.lane.b32.xlu0 %v79, 122
  %v3307 = vpop.permute.xlu0 %3306
  %3308 = vrot.lane.b32.xlu0 %v86, 122
  %v3309 = vpop.permute.xlu0 %3308
  %3310 = vrot.lane.b32.xlu0 %v87, 122
  %v3311 = vpop.permute.xlu0 %3310
  %3312 = vrot.lane.b32.xlu0 %v94, 122
  %v3313 = vpop.permute.xlu0 %3312
  %3314 = vrot.lane.b32.xlu0 %v95, 122
  %v3315 = vpop.permute.xlu0 %3314
  %3316 = vrot.lane.b32.xlu0 %v102, 122
  %v3317 = vpop.permute.xlu0 %3316
  %3318 = vrot.lane.b32.xlu0 %v103, 122
  %v3319 = vpop.permute.xlu0 %3318
  %3320 = vrot.lane.b32.xlu0 %v110, 122
  %v3321 = vpop.permute.xlu0 %3320
  %3322 = vrot.lane.b32.xlu0 %v111, 122
  %v3323 = vpop.permute.xlu0 %3322
  %3324 = vrot.lane.b32.xlu0 %v118, 122
  %v3325 = vpop.permute.xlu0 %3324
  %3326 = vrot.lane.b32.xlu0 %v119, 122
  %v3327 = vpop.permute.xlu0 %3326
  %3328 = vrot.lane.b32.xlu0 %v126, 122
  %v3329 = vpop.permute.xlu0 %3328
  %3330 = vrot.lane.b32.xlu0 %v127, 122
  %v3331 = vpop.permute.xlu0 %3330
  %3332 = vrot.lane.b32.xlu0 %v134, 122
  %v3333 = vpop.permute.xlu0 %3332
  %3334 = vrot.lane.b32.xlu0 %v135, 122
  %v3335 = vpop.permute.xlu0 %3334
  %3336 = vrot.lane.b32.xlu0 %v142, 122
  %v3337 = vpop.permute.xlu0 %3336
  %3338 = vrot.lane.b32.xlu0 %v143, 122
  %v3339 = vpop.permute.xlu0 %3338
  %3340 = vrot.lane.b32.xlu0 %v150, 122
  %v3341 = vpop.permute.xlu0 %3340
  %3342 = vrot.lane.b32.xlu0 %v151, 122
  %v3343 = vpop.permute.xlu0 %3342
  %3344 = vrot.lane.b32.xlu0 %v158, 122
  %v3345 = vpop.permute.xlu0 %3344
  %3346 = vrot.lane.b32.xlu0 %v159, 122
  %v3347 = vpop.permute.xlu0 %3346
  %3348 = vrot.lane.b32.xlu0 %v166, 122
  %v3349 = vpop.permute.xlu0 %3348
  %3350 = vrot.lane.b32.xlu0 %v167, 122
  %v3351 = vpop.permute.xlu0 %3350
  %3352 = vrot.lane.b32.xlu0 %v174, 122
  %v3353 = vpop.permute.xlu0 %3352
  %3354 = vrot.lane.b32.xlu0 %v175, 122
  %v3355 = vpop.permute.xlu0 %3354
  %3356 = vrot.lane.b32.xlu0 %v182, 122
  %v3357 = vpop.permute.xlu0 %3356
  %3358 = vrot.lane.b32.xlu0 %v183, 122
  %v3359 = vpop.permute.xlu0 %3358
  %3360 = vrot.lane.b32.xlu0 %v190, 122
  %v3361 = vpop.permute.xlu0 %3360
  %3362 = vrot.lane.b32.xlu0 %v191, 122
  %v3363 = vpop.permute.xlu0 %3362
  %3364 = vrot.lane.b32.xlu0 %v198, 122
  %v3365 = vpop.permute.xlu0 %3364
  %3366 = vrot.lane.b32.xlu0 %v199, 122
  %v3367 = vpop.permute.xlu0 %3366
  %3368 = vrot.lane.b32.xlu0 %v206, 122
  %v3369 = vpop.permute.xlu0 %3368
  %3370 = vrot.lane.b32.xlu0 %v207, 122
  %v3371 = vpop.permute.xlu0 %3370
  %3372 = vrot.lane.b32.xlu0 %v214, 122
  %v3373 = vpop.permute.xlu0 %3372
  %3374 = vrot.lane.b32.xlu0 %v215, 122
  %v3375 = vpop.permute.xlu0 %3374
  %3376 = vrot.lane.b32.xlu0 %v222, 122
  %v3377 = vpop.permute.xlu0 %3376
  %3378 = vrot.lane.b32.xlu0 %v223, 122
  %v3379 = vpop.permute.xlu0 %3378
  %3380 = vrot.lane.b32.xlu0 %v230, 122
  %v3381 = vpop.permute.xlu0 %3380
  %3382 = vrot.lane.b32.xlu0 %v231, 122
  %v3383 = vpop.permute.xlu0 %3382
  %3384 = vrot.lane.b32.xlu0 %v238, 122
  %v3385 = vpop.permute.xlu0 %3384
  %3386 = vrot.lane.b32.xlu0 %v239, 122
  %v3387 = vpop.permute.xlu0 %3386
  %3388 = vrot.lane.b32.xlu0 %v246, 122
  %v3389 = vpop.permute.xlu0 %3388
  %3390 = vrot.lane.b32.xlu0 %v247, 122
  %v3391 = vpop.permute.xlu0 %3390
  %3392 = vrot.lane.b32.xlu0 %v254, 122
  %v3393 = vpop.permute.xlu0 %3392
  %3394 = vrot.lane.b32.xlu0 %v255, 122
  %v3395 = vpop.permute.xlu0 %3394
  %3396 = vrot.lane.b32.xlu0 %v262, 122
  %v3397 = vpop.permute.xlu0 %3396
  %3398 = vrot.lane.b32.xlu0 %v263, 122
  %v3399 = vpop.permute.xlu0 %3398
  %v3464 = vadd.f32 %v3208, %v3273
  %v3465 = vadd.f32 %v3209, %v3275
  %v3466 = vadd.f32 %v3210, %v3277
  %v3467 = vadd.f32 %v3211, %v3279
  %v3468 = vadd.f32 %v3212, %v3281
  %v3469 = vadd.f32 %v3213, %v3283
  %v3470 = vadd.f32 %v3214, %v3285
  %v3471 = vadd.f32 %v3215, %v3287
  %v3472 = vadd.f32 %v3216, %v3289
  %v3473 = vadd.f32 %v3217, %v3291
  %v3474 = vadd.f32 %v3218, %v3293
  %v3475 = vadd.f32 %v3219, %v3295
  %v3476 = vadd.f32 %v3220, %v3297
  %v3477 = vadd.f32 %v3221, %v3299
  %v3478 = vadd.f32 %v3222, %v3301
  %v3479 = vadd.f32 %v3223, %v3303
  %v3480 = vadd.f32 %v3224, %v3305
  %v3481 = vadd.f32 %v3225, %v3307
  %v3482 = vadd.f32 %v3226, %v3309
  %v3483 = vadd.f32 %v3227, %v3311
  %v3484 = vadd.f32 %v3228, %v3313
  %v3485 = vadd.f32 %v3229, %v3315
  %v3486 = vadd.f32 %v3230, %v3317
  %v3487 = vadd.f32 %v3231, %v3319
  %v3488 = vadd.f32 %v3232, %v3321
  %v3489 = vadd.f32 %v3233, %v3323
  %v3490 = vadd.f32 %v3234, %v3325
  %v3491 = vadd.f32 %v3235, %v3327
  %v3492 = vadd.f32 %v3236, %v3329
  %v3493 = vadd.f32 %v3237, %v3331
  %v3494 = vadd.f32 %v3238, %v3333
  %v3495 = vadd.f32 %v3239, %v3335
  %v3496 = vadd.f32 %v3240, %v3337
  %v3497 = vadd.f32 %v3241, %v3339
  %v3498 = vadd.f32 %v3242, %v3341
  %v3499 = vadd.f32 %v3243, %v3343
  %v3500 = vadd.f32 %v3244, %v3345
  %v3501 = vadd.f32 %v3245, %v3347
  %v3502 = vadd.f32 %v3246, %v3349
  %v3503 = vadd.f32 %v3247, %v3351
  %v3504 = vadd.f32 %v3248, %v3353
  %v3505 = vadd.f32 %v3249, %v3355
  %v3506 = vadd.f32 %v3250, %v3357
  %v3507 = vadd.f32 %v3251, %v3359
  %v3508 = vadd.f32 %v3252, %v3361
  %v3509 = vadd.f32 %v3253, %v3363
  %v3510 = vadd.f32 %v3254, %v3365
  %v3511 = vadd.f32 %v3255, %v3367
  %v3512 = vadd.f32 %v3256, %v3369
  %v3513 = vadd.f32 %v3257, %v3371
  %v3514 = vadd.f32 %v3258, %v3373
  %v3515 = vadd.f32 %v3259, %v3375
  %v3516 = vadd.f32 %v3260, %v3377
  %v3517 = vadd.f32 %v3261, %v3379
  %v3518 = vadd.f32 %v3262, %v3381
  %v3519 = vadd.f32 %v3263, %v3383
  %v3520 = vadd.f32 %v3264, %v3385
  %v3521 = vadd.f32 %v3265, %v3387
  %v3522 = vadd.f32 %v3266, %v3389
  %v3523 = vadd.f32 %v3267, %v3391
  %v3524 = vadd.f32 %v3268, %v3393
  %v3525 = vadd.f32 %v3269, %v3395
  %v3526 = vadd.f32 %v3270, %v3397
  %v3527 = vadd.f32 %v3271, %v3399
  %3528 = vrot.lane.b32.xlu0 %v14, 119
  %v3529 = vpop.permute.xlu0 %3528
  %3530 = vrot.lane.b32.xlu0 %v15, 119
  %v3531 = vpop.permute.xlu0 %3530
  %3532 = vrot.lane.b32.xlu0 %v22, 119
  %v3533 = vpop.permute.xlu0 %3532
  %3534 = vrot.lane.b32.xlu0 %v23, 119
  %v3535 = vpop.permute.xlu0 %3534
  %3536 = vrot.lane.b32.xlu0 %v30, 119
  %v3537 = vpop.permute.xlu0 %3536
  %3538 = vrot.lane.b32.xlu0 %v31, 119
  %v3539 = vpop.permute.xlu0 %3538
  %3540 = vrot.lane.b32.xlu0 %v38, 119
  %v3541 = vpop.permute.xlu0 %3540
  %3542 = vrot.lane.b32.xlu0 %v39, 119
  %v3543 = vpop.permute.xlu0 %3542
  %3544 = vrot.lane.b32.xlu0 %v46, 119
  %v3545 = vpop.permute.xlu0 %3544
  %3546 = vrot.lane.b32.xlu0 %v47, 119
  %v3547 = vpop.permute.xlu0 %3546
  %3548 = vrot.lane.b32.xlu0 %v54, 119
  %v3549 = vpop.permute.xlu0 %3548
  %3550 = vrot.lane.b32.xlu0 %v55, 119
  %v3551 = vpop.permute.xlu0 %3550
  %3552 = vrot.lane.b32.xlu0 %v62, 119
  %v3553 = vpop.permute.xlu0 %3552
  %3554 = vrot.lane.b32.xlu0 %v63, 119
  %v3555 = vpop.permute.xlu0 %3554
  %3556 = vrot.lane.b32.xlu0 %v70, 119
  %v3557 = vpop.permute.xlu0 %3556
  %3558 = vrot.lane.b32.xlu0 %v71, 119
  %v3559 = vpop.permute.xlu0 %3558
  %3560 = vrot.lane.b32.xlu0 %v78, 119
  %v3561 = vpop.permute.xlu0 %3560
  %3562 = vrot.lane.b32.xlu0 %v79, 119
  %v3563 = vpop.permute.xlu0 %3562
  %3564 = vrot.lane.b32.xlu0 %v86, 119
  %v3565 = vpop.permute.xlu0 %3564
  %3566 = vrot.lane.b32.xlu0 %v87, 119
  %v3567 = vpop.permute.xlu0 %3566
  %3568 = vrot.lane.b32.xlu0 %v94, 119
  %v3569 = vpop.permute.xlu0 %3568
  %3570 = vrot.lane.b32.xlu0 %v95, 119
  %v3571 = vpop.permute.xlu0 %3570
  %3572 = vrot.lane.b32.xlu0 %v102, 119
  %v3573 = vpop.permute.xlu0 %3572
  %3574 = vrot.lane.b32.xlu0 %v103, 119
  %v3575 = vpop.permute.xlu0 %3574
  %3576 = vrot.lane.b32.xlu0 %v110, 119
  %v3577 = vpop.permute.xlu0 %3576
  %3578 = vrot.lane.b32.xlu0 %v111, 119
  %v3579 = vpop.permute.xlu0 %3578
  %3580 = vrot.lane.b32.xlu0 %v118, 119
  %v3581 = vpop.permute.xlu0 %3580
  %3582 = vrot.lane.b32.xlu0 %v119, 119
  %v3583 = vpop.permute.xlu0 %3582
  %3584 = vrot.lane.b32.xlu0 %v126, 119
  %v3585 = vpop.permute.xlu0 %3584
  %3586 = vrot.lane.b32.xlu0 %v127, 119
  %v3587 = vpop.permute.xlu0 %3586
  %3588 = vrot.lane.b32.xlu0 %v134, 119
  %v3589 = vpop.permute.xlu0 %3588
  %3590 = vrot.lane.b32.xlu0 %v135, 119
  %v3591 = vpop.permute.xlu0 %3590
  %3592 = vrot.lane.b32.xlu0 %v142, 119
  %v3593 = vpop.permute.xlu0 %3592
  %3594 = vrot.lane.b32.xlu0 %v143, 119
  %v3595 = vpop.permute.xlu0 %3594
  %3596 = vrot.lane.b32.xlu0 %v150, 119
  %v3597 = vpop.permute.xlu0 %3596
  %3598 = vrot.lane.b32.xlu0 %v151, 119
  %v3599 = vpop.permute.xlu0 %3598
  %3600 = vrot.lane.b32.xlu0 %v158, 119
  %v3601 = vpop.permute.xlu0 %3600
  %3602 = vrot.lane.b32.xlu0 %v159, 119
  %v3603 = vpop.permute.xlu0 %3602
  %3604 = vrot.lane.b32.xlu0 %v166, 119
  %v3605 = vpop.permute.xlu0 %3604
  %3606 = vrot.lane.b32.xlu0 %v167, 119
  %v3607 = vpop.permute.xlu0 %3606
  %3608 = vrot.lane.b32.xlu0 %v174, 119
  %v3609 = vpop.permute.xlu0 %3608
  %3610 = vrot.lane.b32.xlu0 %v175, 119
  %v3611 = vpop.permute.xlu0 %3610
  %3612 = vrot.lane.b32.xlu0 %v182, 119
  %v3613 = vpop.permute.xlu0 %3612
  %3614 = vrot.lane.b32.xlu0 %v183, 119
  %v3615 = vpop.permute.xlu0 %3614
  %3616 = vrot.lane.b32.xlu0 %v190, 119
  %v3617 = vpop.permute.xlu0 %3616
  %3618 = vrot.lane.b32.xlu0 %v191, 119
  %v3619 = vpop.permute.xlu0 %3618
  %3620 = vrot.lane.b32.xlu0 %v198, 119
  %v3621 = vpop.permute.xlu0 %3620
  %3622 = vrot.lane.b32.xlu0 %v199, 119
  %v3623 = vpop.permute.xlu0 %3622
  %3624 = vrot.lane.b32.xlu0 %v206, 119
  %v3625 = vpop.permute.xlu0 %3624
  %3626 = vrot.lane.b32.xlu0 %v207, 119
  %v3627 = vpop.permute.xlu0 %3626
  %3628 = vrot.lane.b32.xlu0 %v214, 119
  %v3629 = vpop.permute.xlu0 %3628
  %3630 = vrot.lane.b32.xlu0 %v215, 119
  %v3631 = vpop.permute.xlu0 %3630
  %3632 = vrot.lane.b32.xlu0 %v222, 119
  %v3633 = vpop.permute.xlu0 %3632
  %3634 = vrot.lane.b32.xlu0 %v223, 119
  %v3635 = vpop.permute.xlu0 %3634
  %3636 = vrot.lane.b32.xlu0 %v230, 119
  %v3637 = vpop.permute.xlu0 %3636
  %3638 = vrot.lane.b32.xlu0 %v231, 119
  %v3639 = vpop.permute.xlu0 %3638
  %3640 = vrot.lane.b32.xlu0 %v238, 119
  %v3641 = vpop.permute.xlu0 %3640
  %3642 = vrot.lane.b32.xlu0 %v239, 119
  %v3643 = vpop.permute.xlu0 %3642
  %3644 = vrot.lane.b32.xlu0 %v246, 119
  %v3645 = vpop.permute.xlu0 %3644
  %3646 = vrot.lane.b32.xlu0 %v247, 119
  %v3647 = vpop.permute.xlu0 %3646
  %3648 = vrot.lane.b32.xlu0 %v254, 119
  %v3649 = vpop.permute.xlu0 %3648
  %3650 = vrot.lane.b32.xlu0 %v255, 119
  %v3651 = vpop.permute.xlu0 %3650
  %3652 = vrot.lane.b32.xlu0 %v262, 119
  %v3653 = vpop.permute.xlu0 %3652
  %3654 = vrot.lane.b32.xlu0 %v263, 119
  %v3655 = vpop.permute.xlu0 %3654
  %v3720 = vadd.f32 %v3464, %v3529
  %v3721 = vadd.f32 %v3465, %v3531
  %v3722 = vadd.f32 %v3466, %v3533
  %v3723 = vadd.f32 %v3467, %v3535
  %v3724 = vadd.f32 %v3468, %v3537
  %v3725 = vadd.f32 %v3469, %v3539
  %v3726 = vadd.f32 %v3470, %v3541
  %v3727 = vadd.f32 %v3471, %v3543
  %v3728 = vadd.f32 %v3472, %v3545
  %v3729 = vadd.f32 %v3473, %v3547
  %v3730 = vadd.f32 %v3474, %v3549
  %v3731 = vadd.f32 %v3475, %v3551
  %v3732 = vadd.f32 %v3476, %v3553
  %v3733 = vadd.f32 %v3477, %v3555
  %v3734 = vadd.f32 %v3478, %v3557
  %v3735 = vadd.f32 %v3479, %v3559
  %v3736 = vadd.f32 %v3480, %v3561
  %v3737 = vadd.f32 %v3481, %v3563
  %v3738 = vadd.f32 %v3482, %v3565
  %v3739 = vadd.f32 %v3483, %v3567
  %v3740 = vadd.f32 %v3484, %v3569
  %v3741 = vadd.f32 %v3485, %v3571
  %v3742 = vadd.f32 %v3486, %v3573
  %v3743 = vadd.f32 %v3487, %v3575
  %v3744 = vadd.f32 %v3488, %v3577
  %v3745 = vadd.f32 %v3489, %v3579
  %v3746 = vadd.f32 %v3490, %v3581
  %v3747 = vadd.f32 %v3491, %v3583
  %v3748 = vadd.f32 %v3492, %v3585
  %v3749 = vadd.f32 %v3493, %v3587
  %v3750 = vadd.f32 %v3494, %v3589
  %v3751 = vadd.f32 %v3495, %v3591
  %v3752 = vadd.f32 %v3496, %v3593
  %v3753 = vadd.f32 %v3497, %v3595
  %v3754 = vadd.f32 %v3498, %v3597
  %v3755 = vadd.f32 %v3499, %v3599
  %v3756 = vadd.f32 %v3500, %v3601
  %v3757 = vadd.f32 %v3501, %v3603
  %v3758 = vadd.f32 %v3502, %v3605
  %v3759 = vadd.f32 %v3503, %v3607
  %v3760 = vadd.f32 %v3504, %v3609
  %v3761 = vadd.f32 %v3505, %v3611
  %v3762 = vadd.f32 %v3506, %v3613
  %v3763 = vadd.f32 %v3507, %v3615
  %v3764 = vadd.f32 %v3508, %v3617
  %v3765 = vadd.f32 %v3509, %v3619
  %v3766 = vadd.f32 %v3510, %v3621
  %v3767 = vadd.f32 %v3511, %v3623
  %v3768 = vadd.f32 %v3512, %v3625
  %v3769 = vadd.f32 %v3513, %v3627
  %v3770 = vadd.f32 %v3514, %v3629
  %v3771 = vadd.f32 %v3515, %v3631
  %v3772 = vadd.f32 %v3516, %v3633
  %v3773 = vadd.f32 %v3517, %v3635
  %v3774 = vadd.f32 %v3518, %v3637
  %v3775 = vadd.f32 %v3519, %v3639
  %v3776 = vadd.f32 %v3520, %v3641
  %v3777 = vadd.f32 %v3521, %v3643
  %v3778 = vadd.f32 %v3522, %v3645
  %v3779 = vadd.f32 %v3523, %v3647
  %v3780 = vadd.f32 %v3524, %v3649
  %v3781 = vadd.f32 %v3525, %v3651
  %v3782 = vadd.f32 %v3526, %v3653
  %v3783 = vadd.f32 %v3527, %v3655
  %v3784 = vmul.f32 %v3720, 0.0625
  %v3785 = vmul.f32 %v3721, 0.0625
  %v3786 = vmul.f32 %v3722, 0.0625
  %v3787 = vmul.f32 %v3723, 0.0625
  %v3788 = vmul.f32 %v3724, 0.0625
  %v3789 = vmul.f32 %v3725, 0.0625
  %v3790 = vmul.f32 %v3726, 0.0625
  %v3791 = vmul.f32 %v3727, 0.0625
  %v3792 = vmul.f32 %v3728, 0.0625
  %v3793 = vmul.f32 %v3729, 0.0625
  %v3794 = vmul.f32 %v3730, 0.0625
  %v3795 = vmul.f32 %v3731, 0.0625
  %v3796 = vmul.f32 %v3732, 0.0625
  %v3797 = vmul.f32 %v3733, 0.0625
  %v3798 = vmul.f32 %v3734, 0.0625
  %v3799 = vmul.f32 %v3735, 0.0625
  %v3800 = vmul.f32 %v3736, 0.0625
  %v3801 = vmul.f32 %v3737, 0.0625
  %v3802 = vmul.f32 %v3738, 0.0625
  %v3803 = vmul.f32 %v3739, 0.0625
  %v3804 = vmul.f32 %v3740, 0.0625
  %v3805 = vmul.f32 %v3741, 0.0625
  %v3806 = vmul.f32 %v3742, 0.0625
  %v3807 = vmul.f32 %v3743, 0.0625
  %v3808 = vmul.f32 %v3744, 0.0625
  %v3809 = vmul.f32 %v3745, 0.0625
  %v3810 = vmul.f32 %v3746, 0.0625
  %v3811 = vmul.f32 %v3747, 0.0625
  %v3812 = vmul.f32 %v3748, 0.0625
  %v3813 = vmul.f32 %v3749, 0.0625
  %v3814 = vmul.f32 %v3750, 0.0625
  %v3815 = vmul.f32 %v3751, 0.0625
  %v3816 = vmul.f32 %v3752, 0.0625
  %v3817 = vmul.f32 %v3753, 0.0625
  %v3818 = vmul.f32 %v3754, 0.0625
  %v3819 = vmul.f32 %v3755, 0.0625
  %v3820 = vmul.f32 %v3756, 0.0625
  %v3821 = vmul.f32 %v3757, 0.0625
  %v3822 = vmul.f32 %v3758, 0.0625
  %v3823 = vmul.f32 %v3759, 0.0625
  %v3824 = vmul.f32 %v3760, 0.0625
  %v3825 = vmul.f32 %v3761, 0.0625
  %v3826 = vmul.f32 %v3762, 0.0625
  %v3827 = vmul.f32 %v3763, 0.0625
  %v3828 = vmul.f32 %v3764, 0.0625
  %v3829 = vmul.f32 %v3765, 0.0625
  %v3830 = vmul.f32 %v3766, 0.0625
  %v3831 = vmul.f32 %v3767, 0.0625
  %v3832 = vmul.f32 %v3768, 0.0625
  %v3833 = vmul.f32 %v3769, 0.0625
  %v3834 = vmul.f32 %v3770, 0.0625
  %v3835 = vmul.f32 %v3771, 0.0625
  %v3836 = vmul.f32 %v3772, 0.0625
  %v3837 = vmul.f32 %v3773, 0.0625
  %v3838 = vmul.f32 %v3774, 0.0625
  %v3839 = vmul.f32 %v3775, 0.0625
  %v3840 = vmul.f32 %v3776, 0.0625
  %v3841 = vmul.f32 %v3777, 0.0625
  %v3842 = vmul.f32 %v3778, 0.0625
  %v3843 = vmul.f32 %v3779, 0.0625
  %v3844 = vmul.f32 %v3780, 0.0625
  %v3845 = vmul.f32 %v3781, 0.0625
  %v3846 = vmul.f32 %v3782, 0.0625
  %v3847 = vmul.f32 %v3783, 0.0625
  %vm3848 = vcmask 23552
  %3849 = vst.msk [vmem:[%s1] sm:$0xff] %vm3848, %v3784
  %3850 = vst.msk [vmem:[%s1 + $0x8] sm:$0xff] %vm3848, %v3785
  %3851 = vst.msk [vmem:[%s1 + $0x10] sm:$0xff] %vm3848, %v3786
  %3852 = vst.msk [vmem:[%s1 + $0x18] sm:$0xff] %vm3848, %v3787
  %3853 = vst.msk [vmem:[%s1 + $0x20] sm:$0xff] %vm3848, %v3788
  %3854 = vst.msk [vmem:[%s1 + $0x28] sm:$0xff] %vm3848, %v3789
  %3855 = vst.msk [vmem:[%s1 + $0x30] sm:$0xff] %vm3848, %v3790
  %3856 = vst.msk [vmem:[%s1 + $0x38] sm:$0xff] %vm3848, %v3791
  %3857 = vst.msk [vmem:[%s1 + $0x40] sm:$0xff] %vm3848, %v3792
  %3858 = vst.msk [vmem:[%s1 + $0x48] sm:$0xff] %vm3848, %v3793
  %3859 = vst.msk [vmem:[%s1 + $0x50] sm:$0xff] %vm3848, %v3794
  %3860 = vst.msk [vmem:[%s1 + $0x58] sm:$0xff] %vm3848, %v3795
  %3861 = vst.msk [vmem:[%s1 + $0x60] sm:$0xff] %vm3848, %v3796
  %3862 = vst.msk [vmem:[%s1 + $0x68] sm:$0xff] %vm3848, %v3797
  %3863 = vst.msk [vmem:[%s1 + $0x70] sm:$0xff] %vm3848, %v3798
  %3864 = vst.msk [vmem:[%s1 + $0x78] sm:$0xff] %vm3848, %v3799
  %3865 = vst.msk [vmem:[%s1 + $0x80] sm:$0xff] %vm3848, %v3800
  %3866 = vst.msk [vmem:[%s1 + $0x88] sm:$0xff] %vm3848, %v3801
  %3867 = vst.msk [vmem:[%s1 + $0x90] sm:$0xff] %vm3848, %v3802
  %3868 = vst.msk [vmem:[%s1 + $0x98] sm:$0xff] %vm3848, %v3803
  %3869 = vst.msk [vmem:[%s1 + $0xa0] sm:$0xff] %vm3848, %v3804
  %3870 = vst.msk [vmem:[%s1 + $0xa8] sm:$0xff] %vm3848, %v3805
  %3871 = vst.msk [vmem:[%s1 + $0xb0] sm:$0xff] %vm3848, %v3806
  %3872 = vst.msk [vmem:[%s1 + $0xb8] sm:$0xff] %vm3848, %v3807
  %3873 = vst.msk [vmem:[%s1 + $0xc0] sm:$0xff] %vm3848, %v3808
  %3874 = vst.msk [vmem:[%s1 + $0xc8] sm:$0xff] %vm3848, %v3809
  %3875 = vst.msk [vmem:[%s1 + $0xd0] sm:$0xff] %vm3848, %v3810
  %3876 = vst.msk [vmem:[%s1 + $0xd8] sm:$0xff] %vm3848, %v3811
  %3877 = vst.msk [vmem:[%s1 + $0xe0] sm:$0xff] %vm3848, %v3812
  %3878 = vst.msk [vmem:[%s1 + $0xe8] sm:$0xff] %vm3848, %v3813
  %3879 = vst.msk [vmem:[%s1 + $0xf0] sm:$0xff] %vm3848, %v3814
  %3880 = vst.msk [vmem:[%s1 + $0xf8] sm:$0xff] %vm3848, %v3815
  %3881 = vst.msk [vmem:[%s1 + $0x100] sm:$0xff] %vm3848, %v3816
  %3882 = vst.msk [vmem:[%s1 + $0x108] sm:$0xff] %vm3848, %v3817
  %3883 = vst.msk [vmem:[%s1 + $0x110] sm:$0xff] %vm3848, %v3818
  %3884 = vst.msk [vmem:[%s1 + $0x118] sm:$0xff] %vm3848, %v3819
  %3885 = vst.msk [vmem:[%s1 + $0x120] sm:$0xff] %vm3848, %v3820
  %3886 = vst.msk [vmem:[%s1 + $0x128] sm:$0xff] %vm3848, %v3821
  %3887 = vst.msk [vmem:[%s1 + $0x130] sm:$0xff] %vm3848, %v3822
  %3888 = vst.msk [vmem:[%s1 + $0x138] sm:$0xff] %vm3848, %v3823
  %3889 = vst.msk [vmem:[%s1 + $0x140] sm:$0xff] %vm3848, %v3824
  %3890 = vst.msk [vmem:[%s1 + $0x148] sm:$0xff] %vm3848, %v3825
  %3891 = vst.msk [vmem:[%s1 + $0x150] sm:$0xff] %vm3848, %v3826
  %3892 = vst.msk [vmem:[%s1 + $0x158] sm:$0xff] %vm3848, %v3827
  %3893 = vst.msk [vmem:[%s1 + $0x160] sm:$0xff] %vm3848, %v3828
  %3894 = vst.msk [vmem:[%s1 + $0x168] sm:$0xff] %vm3848, %v3829
  %3895 = vst.msk [vmem:[%s1 + $0x170] sm:$0xff] %vm3848, %v3830
  %3896 = vst.msk [vmem:[%s1 + $0x178] sm:$0xff] %vm3848, %v3831
  %3897 = vst.msk [vmem:[%s1 + $0x180] sm:$0xff] %vm3848, %v3832
  %3898 = vst.msk [vmem:[%s1 + $0x188] sm:$0xff] %vm3848, %v3833
  %3899 = vst.msk [vmem:[%s1 + $0x190] sm:$0xff] %vm3848, %v3834
  %3900 = vst.msk [vmem:[%s1 + $0x198] sm:$0xff] %vm3848, %v3835
  %3901 = vst.msk [vmem:[%s1 + $0x1a0] sm:$0xff] %vm3848, %v3836
  %3902 = vst.msk [vmem:[%s1 + $0x1a8] sm:$0xff] %vm3848, %v3837
  %3903 = vst.msk [vmem:[%s1 + $0x1b0] sm:$0xff] %vm3848, %v3838
  %3904 = vst.msk [vmem:[%s1 + $0x1b8] sm:$0xff] %vm3848, %v3839
  %3905 = vst.msk [vmem:[%s1 + $0x1c0] sm:$0xff] %vm3848, %v3840
  %3906 = vst.msk [vmem:[%s1 + $0x1c8] sm:$0xff] %vm3848, %v3841
  %3907 = vst.msk [vmem:[%s1 + $0x1d0] sm:$0xff] %vm3848, %v3842
  %3908 = vst.msk [vmem:[%s1 + $0x1d8] sm:$0xff] %vm3848, %v3843
  %3909 = vst.msk [vmem:[%s1 + $0x1e0] sm:$0xff] %vm3848, %v3844
  %3910 = vst.msk [vmem:[%s1 + $0x1e8] sm:$0xff] %vm3848, %v3845
  %3911 = vst.msk [vmem:[%s1 + $0x1f0] sm:$0xff] %vm3848, %v3846
  %3912 = vst.msk [vmem:[%s1 + $0x1f8] sm:$0xff] %vm3848, %v3847
  // Predicated region
  $region6: #{unet_forward.14} parent=0 // pred_check
    _
  $region7: #{unet_forward.14} parent=0 // pred_check_branch
    %3914 = sbr.rel (0) target = $region9
  $region8: #{unet_forward.14} parent=0 // pred_region
    _
  $region9: #{unet_forward.14} parent=0 // pred_fallthru
    _
  // Predicated region
  $region10: #{unet_forward.14} parent=0 // pred_check
    _
  $region11: #{unet_forward.14} parent=0 // pred_check_branch
    %3916 = sbr.rel (0) target = $region13
  $region12: #{unet_forward.14} parent=0 // pred_region
    _
  $region13: #{unet_forward.14} parent=0 // pred_fallthru
    _

// kernel: unet_forward.15
$region0: #{unet_forward.15}
  #allocation0 [shape = 'u32[]', space=smem, size = 0x4, offset = 0x4, fixed_abs, tag = 'smem constant byte address 0x4 - core index']
  #allocation1 [shape = 'u32[144,128]{1,0:T(1,128)}', space=vmem, size = 0x12000, scoped, tag = 'internal scratch']
  %s0 = inlined_call_operand.vmem [shape: bf16[2048,27], index: 0, kind: input, shape index: {}]
  %s1 = inlined_call_operand.vmem [shape: bf16[27,16], index: 1, kind: input, shape index: {}]
  %s2 = inlined_call_operand.vmem [shape: f32[1,16], index: 2, kind: input, shape index: {}]
  %s3 = inlined_call_operand.vmem [shape: f32[2048,16], index: 3, kind: output, shape index: {}]
  %s4 = sld [smem:[#allocation0]]
  $region45: #{unet_forward.15} parent=0
    _
  %s6 = ssub.s32 1, %s4
  %s7 = scalar_select 0, %s6, %s4
  loop: start=0, step=1, limit=4
  $region2: #{unet_forward.15} parent=0 // loop_pre_header
    _
  $region3: #{unet_forward.15} parent=0 // loop_header
    %s9 = sphi 0, %s13
    %p10 = scmp.ge.s32.totalorder %s9, 4
    %s19 = sphi 0, %s21
    %s22 = sphi 0, %s19
    %s23 = sphi 0, %s22
    %s39 = sphi 0, %s23
    %s43 = sphi 0, %s43
    %s45 = sphi 0, %s43
    %s46 = sphi 0, %s45
    %s60 = sphi 0, %s46
    %s64 = sphi 0, %s64
    %s66 = sphi 0, %s64
    %s67 = sphi 0, %s66
    %s81 = sphi 0, %s67
    %s87 = sphi 0, %s89
    %s90 = sphi 0, %s87
    %s91 = sphi 0, %s90
    %s107 = sphi 0, %s91
  $region4: #{unet_forward.15} parent=0 // loop_header_branch
    %12 = sbr.rel (%p10) target = $region8
  $region5: #{unet_forward.15} parent=0 // loop_body
    %s14 = ssub.s32 %s9, 1
    %s15 = ssub.s32 %s9, 2
    %s16 = sadd.s32 %s9, 1
    %s17 = ssub.s32 %s9, %s16
    %p18 = scmp.eq.s32.totalorder %s17, 0
    %s20 = sadd.s32 %s19, 1
    %s21 = scalar_select %p18, %s19, %s20
    %p24 = pneg %p18
    %p25 = scmp.eq.s32.totalorder %s9, 1
    %p26 = por %p24, %p25
    %p27 = scmp.ne.s32.totalorder %s19, %s22
    %p28 = scmp.eq.s32.totalorder %s9, 0
    %p29 = por %p27, %p28
    %p30 = scmp.ne.s32.totalorder %s19, %s22
    %p31 = scmp.eq.s32.totalorder %s14, 1
    %p32 = por %p30, %p31
    %p33 = scmp.ne.s32.totalorder %s22, %s23
    %p34 = scmp.eq.s32.totalorder %s14, 0
    %p35 = por %p33, %p34
    %p36 = scmp.ne.s32.totalorder %s22, %s23
    %p37 = scmp.eq.s32.totalorder %s15, 1
    %p38 = por %p36, %p37
    %p40 = scmp.ne.s32.totalorder %s23, %s39
    %p41 = scmp.eq.s32.totalorder %s15, 0
    %p42 = por %p40, %p41
    %s44 = sadd.s32 %s43, 1
    %p47 = scmp.eq.s32.totalorder %s9, 1
    %p48 = scmp.ne.s32.totalorder %s43, %s45
    %p49 = scmp.eq.s32.totalorder %s9, 0
    %p50 = por %p48, %p49
    %p51 = scmp.ne.s32.totalorder %s43, %s45
    %p52 = scmp.eq.s32.totalorder %s14, 1
    %p53 = por %p51, %p52
    %p54 = scmp.ne.s32.totalorder %s45, %s46
    %p55 = scmp.eq.s32.totalorder %s14, 0
    %p56 = por %p54, %p55
    %p57 = scmp.ne.s32.totalorder %s45, %s46
    %p58 = scmp.eq.s32.totalorder %s15, 1
    %p59 = por %p57, %p58
    %p61 = scmp.ne.s32.totalorder %s46, %s60
    %p62 = scmp.eq.s32.totalorder %s15, 0
    %p63 = por %p61, %p62
    %s65 = sadd.s32 %s64, 1
    %p68 = scmp.eq.s32.totalorder %s9, 1
    %p69 = scmp.ne.s32.totalorder %s64, %s66
    %p70 = scmp.eq.s32.totalorder %s9, 0
    %p71 = por %p69, %p70
    %p72 = scmp.ne.s32.totalorder %s64, %s66
    %p73 = scmp.eq.s32.totalorder %s14, 1
    %p74 = por %p72, %p73
    %p75 = scmp.ne.s32.totalorder %s66, %s67
    %p76 = scmp.eq.s32.totalorder %s14, 0
    %p77 = por %p75, %p76
    %p78 = scmp.ne.s32.totalorder %s66, %s67
    %p79 = scmp.eq.s32.totalorder %s15, 1
    %p80 = por %p78, %p79
    %p82 = scmp.ne.s32.totalorder %s67, %s81
    %p83 = scmp.eq.s32.totalorder %s15, 0
    %p84 = por %p82, %p83
    %s85 = ssub.s32 %s9, %s16
    %p86 = scmp.eq.s32.totalorder %s85, 0
    %s88 = sadd.s32 %s87, 1
    %s89 = scalar_select %p86, %s87, %s88
    %p92 = pneg %p86
    %p93 = scmp.eq.s32.totalorder %s9, 1
    %p94 = por %p92, %p93
    %p95 = scmp.ne.s32.totalorder %s87, %s90
    %p96 = scmp.eq.s32.totalorder %s9, 0
    %p97 = por %p95, %p96
    %p98 = scmp.ne.s32.totalorder %s87, %s90
    %p99 = scmp.eq.s32.totalorder %s14, 1
    %p100 = por %p98, %p99
    %p101 = scmp.ne.s32.totalorder %s90, %s91
    %p102 = scmp.eq.s32.totalorder %s14, 0
    %p103 = por %p101, %p102
    %p104 = scmp.ne.s32.totalorder %s90, %s91
    %p105 = scmp.eq.s32.totalorder %s15, 1
    %p106 = por %p104, %p105
    %p108 = scmp.ne.s32.totalorder %s91, %s107
    %p109 = scmp.eq.s32.totalorder %s15, 0
    %p110 = por %p108, %p109
    %p111 = scmp.le.s32.totalorder 1, %s9
    %p112 = scmp.lt.s32.totalorder %s9, 3
    %p113 = pnand %p111, %p112
    %p114 = pneg %p113
    // Predicated region
    $region9: #{unet_forward.15} parent=5 // pred_check
      _
    $region10: #{unet_forward.15} parent=5 // pred_check_branch
      %116 = sbr.rel (%p113) target = $region12
    $region11: #{unet_forward.15} parent=5 // pred_region
      %s117 = ssub.s32 %s9, 1
      // Predicated region
      $region13: #{unet_forward.15} parent=11 // pred_check
        %p118 = pneg %p56
      $region14: #{unet_forward.15} parent=11 // pred_check_branch
        %120 = sbr.rel (%p118) target = $region16
      $region15: #{unet_forward.15} parent=11 // pred_region
        _
      $region16: #{unet_forward.15} parent=11 // pred_fallthru
        _
      // Predicated region
      $region17: #{unet_forward.15} parent=11 // pred_check
        %p121 = pneg %p77
      $region18: #{unet_forward.15} parent=11 // pred_check_branch
        %123 = sbr.rel (%p121) target = $region20
      $region19: #{unet_forward.15} parent=11 // pred_region
        _
      $region20: #{unet_forward.15} parent=11 // pred_fallthru
        _
    $region12: #{unet_forward.15} parent=5 // pred_fallthru
      _
    %p124 = scmp.lt.s32.totalorder %s9, 2
    // Predicated region
    $region21: #{unet_forward.15} parent=5 // pred_check
      %p125 = pneg %p124
    $region22: #{unet_forward.15} parent=5 // pred_check_branch
      %127 = sbr.rel (%p125) target = $region24
    $region23: #{unet_forward.15} parent=5 // pred_region
      // Predicated region
      $region25: #{unet_forward.15} parent=23 // pred_check
        %p128 = pneg %p29
      $region26: #{unet_forward.15} parent=23 // pred_check_branch
        %130 = sbr.rel (%p128) target = $region28
      $region27: #{unet_forward.15} parent=23 // pred_region
        %s131 = smul.u32 128, %s9
        %p132 = scmp.lt.s32.totalorder %s131, 255
        %s133 = scalar_select %p132, %s131, 255
        %s134 = smul.addr %s133, 4
        %s135 = scalar_lea.vmem %s0, %s134
        %s136 = smul.u32 128, %s9
      $region28: #{unet_forward.15} parent=23 // pred_fallthru
        _
    $region24: #{unet_forward.15} parent=5 // pred_fallthru
      _
    %p137 = scmp.le.s32.totalorder 1, %s9
    %p138 = scmp.lt.s32.totalorder %s9, 3
    %p139 = pnand %p137, %p138
    %p140 = pneg %p139
    // Predicated region
    $region29: #{unet_forward.15} parent=5 // pred_check
      _
    $region30: #{unet_forward.15} parent=5 // pred_check_branch
      %142 = sbr.rel (%p139) target = $region32
    $region31: #{unet_forward.15} parent=5 // pred_region
      %s143 = ssub.s32 %s9, 1
      %s144 = smul.u32 128, %s14
      %p145 = scmp.lt.s32.totalorder %s144, 255
      %s146 = scalar_select %p145, %s144, 255
      %s147 = smul.addr %s146, 4
      %s148 = scalar_lea.vmem %s0, %s147
      %p149 = pneg %p35
      %p150 = pneg %p32
      %p151 = pneg %p56
      %p152 = pneg %p53
      %p153 = pneg %p77
      %p154 = pneg %p74
      %p155 = pneg %p103
      %p156 = pneg %p100
      %s157 = smul.u32 128, %s14
      %p158 = scmp.lt.s32.totalorder %s157, 255
      %s159 = scalar_select %p158, %s157, 255
      %s160 = smul.addr %s159, 8
      %s161 = scalar_lea.vmem %s3, %s160
      %s162 = smul.u32 128, %s14
      %p163 = scmp.lt.s32.totalorder %s162, 255
      %s164 = scalar_select %p163, %s162, 255
      %s165 = smul.addr %s164, 4
      %s166 = scalar_lea.vmem %s0, %s165
      %s167 = smul.u32 128, %s14
      %s168 = smul.u32 128, %s14
      %p169 = scmp.lt.s32.totalorder %s168, 255
      %s170 = scalar_select %p169, %s168, 255
      %s171 = smul.addr %s170, 8
      %s172 = scalar_lea.vmem %s3, %s171
      %s173 = smul.u32 128, %s14
      %v175 = vld [vmem:[%s166] sm:$0xf]
      %v176 = vld [vmem:[%s166 + $0x4] sm:$0xf]
      %v177 = vld [vmem:[%s166 + $0x8] sm:$0xf]
      %v178 = vld [vmem:[%s166 + $0xc] sm:$0xf]
      %v179 = vld [vmem:[%s166 + $0x10] sm:$0xf]
      %v180 = vld [vmem:[%s166 + $0x14] sm:$0xf]
      %v181 = vld [vmem:[%s166 + $0x18] sm:$0xf]
      %v182 = vld [vmem:[%s166 + $0x1c] sm:$0xf]
      %v183 = vld [vmem:[%s166 + $0x20] sm:$0xf]
      %v184 = vld [vmem:[%s166 + $0x24] sm:$0xf]
      %v185 = vld [vmem:[%s166 + $0x28] sm:$0xf]
      %v186 = vld [vmem:[%s166 + $0x2c] sm:$0xf]
      %v187 = vld [vmem:[%s166 + $0x30] sm:$0xf]
      %v188 = vld [vmem:[%s166 + $0x34] sm:$0xf]
      %v189 = vld [vmem:[%s166 + $0x38] sm:$0xf]
      %v190 = vld [vmem:[%s166 + $0x3c] sm:$0xf]
      %v191 = vld [vmem:[%s166 + $0x40] sm:$0xf]
      %v192 = vld [vmem:[%s166 + $0x44] sm:$0xf]
      %v193 = vld [vmem:[%s166 + $0x48] sm:$0xf]
      %v194 = vld [vmem:[%s166 + $0x4c] sm:$0xf]
      %v195 = vld [vmem:[%s166 + $0x50] sm:$0xf]
      %v196 = vld [vmem:[%s166 + $0x54] sm:$0xf]
      %v197 = vld [vmem:[%s166 + $0x58] sm:$0xf]
      %v198 = vld [vmem:[%s166 + $0x5c] sm:$0xf]
      %v199 = vld [vmem:[%s166 + $0x60] sm:$0xf]
      %v200 = vld [vmem:[%s166 + $0x64] sm:$0xf]
      %v201 = vld [vmem:[%s166 + $0x68] sm:$0xf]
      %v202 = vld [vmem:[%s166 + $0x6c] sm:$0xf]
      %v203 = vld [vmem:[%s166 + $0x70] sm:$0xf]
      %v204 = vld [vmem:[%s166 + $0x74] sm:$0xf]
      %v205 = vld [vmem:[%s166 + $0x78] sm:$0xf]
      %v206 = vld [vmem:[%s166 + $0x7c] sm:$0xf]
      %v207 = vld [vmem:[%s166 + $0x80] sm:$0xf]
      %v208 = vld [vmem:[%s166 + $0x84] sm:$0xf]
      %v209 = vld [vmem:[%s166 + $0x88] sm:$0xf]
      %v210 = vld [vmem:[%s166 + $0x8c] sm:$0xf]
      %v211 = vld [vmem:[%s166 + $0x90] sm:$0xf]
      %v212 = vld [vmem:[%s166 + $0x94] sm:$0xf]
      %v213 = vld [vmem:[%s166 + $0x98] sm:$0xf]
      %v214 = vld [vmem:[%s166 + $0x9c] sm:$0xf]
      %v215 = vld [vmem:[%s166 + $0xa0] sm:$0xf]
      %v216 = vld [vmem:[%s166 + $0xa4] sm:$0xf]
      %v217 = vld [vmem:[%s166 + $0xa8] sm:$0xf]
      %v218 = vld [vmem:[%s166 + $0xac] sm:$0xf]
      %v219 = vld [vmem:[%s166 + $0xb0] sm:$0xf]
      %v220 = vld [vmem:[%s166 + $0xb4] sm:$0xf]
      %v221 = vld [vmem:[%s166 + $0xb8] sm:$0xf]
      %v222 = vld [vmem:[%s166 + $0xbc] sm:$0xf]
      %v223 = vld [vmem:[%s166 + $0xc0] sm:$0xf]
      %v224 = vld [vmem:[%s166 + $0xc4] sm:$0xf]
      %v225 = vld [vmem:[%s166 + $0xc8] sm:$0xf]
      %v226 = vld [vmem:[%s166 + $0xcc] sm:$0xf]
      %v227 = vld [vmem:[%s166 + $0xd0] sm:$0xf]
      %v228 = vld [vmem:[%s166 + $0xd4] sm:$0xf]
      %v229 = vld [vmem:[%s166 + $0xd8] sm:$0xf]
      %v230 = vld [vmem:[%s166 + $0xdc] sm:$0xf]
      %v231 = vld [vmem:[%s166 + $0xe0] sm:$0xf]
      %v232 = vld [vmem:[%s166 + $0xe4] sm:$0xf]
      %v233 = vld [vmem:[%s166 + $0xe8] sm:$0xf]
      %v234 = vld [vmem:[%s166 + $0xec] sm:$0xf]
      %v235 = vld [vmem:[%s166 + $0xf0] sm:$0xf]
      %v236 = vld [vmem:[%s166 + $0xf4] sm:$0xf]
      %v237 = vld [vmem:[%s166 + $0xf8] sm:$0xf]
      %v238 = vld [vmem:[%s166 + $0xfc] sm:$0xf]
      %v239 = vld [vmem:[%s166 + $0x100] sm:$0xf]
      %v240 = vld [vmem:[%s166 + $0x104] sm:$0xf]
      %v241 = vld [vmem:[%s166 + $0x108] sm:$0xf]
      %v242 = vld [vmem:[%s166 + $0x10c] sm:$0xf]
      %v243 = vld [vmem:[%s166 + $0x110] sm:$0xf]
      %v244 = vld [vmem:[%s166 + $0x114] sm:$0xf]
      %v245 = vld [vmem:[%s166 + $0x118] sm:$0xf]
      %v246 = vld [vmem:[%s166 + $0x11c] sm:$0xf]
      %v247 = vld [vmem:[%s166 + $0x120] sm:$0xf]
      %v248 = vld [vmem:[%s166 + $0x124] sm:$0xf]
      %v249 = vld [vmem:[%s166 + $0x128] sm:$0xf]
      %v250 = vld [vmem:[%s166 + $0x12c] sm:$0xf]
      %v251 = vld [vmem:[%s166 + $0x130] sm:$0xf]
      %v252 = vld [vmem:[%s166 + $0x134] sm:$0xf]
      %v253 = vld [vmem:[%s166 + $0x138] sm:$0xf]
      %v254 = vld [vmem:[%s166 + $0x13c] sm:$0xf]
      %v255 = vld [vmem:[%s166 + $0x140] sm:$0xf]
      %v256 = vld [vmem:[%s166 + $0x144] sm:$0xf]
      %v257 = vld [vmem:[%s166 + $0x148] sm:$0xf]
      %v258 = vld [vmem:[%s166 + $0x14c] sm:$0xf]
      %v259 = vld [vmem:[%s166 + $0x150] sm:$0xf]
      %v260 = vld [vmem:[%s166 + $0x154] sm:$0xf]
      %v261 = vld [vmem:[%s166 + $0x158] sm:$0xf]
      %v262 = vld [vmem:[%s166 + $0x15c] sm:$0xf]
      %v263 = vld [vmem:[%s166 + $0x160] sm:$0xf]
      %v264 = vld [vmem:[%s166 + $0x164] sm:$0xf]
      %v265 = vld [vmem:[%s166 + $0x168] sm:$0xf]
      %v266 = vld [vmem:[%s166 + $0x16c] sm:$0xf]
      %v267 = vld [vmem:[%s166 + $0x170] sm:$0xf]
      %v268 = vld [vmem:[%s166 + $0x174] sm:$0xf]
      %v269 = vld [vmem:[%s166 + $0x178] sm:$0xf]
      %v270 = vld [vmem:[%s166 + $0x17c] sm:$0xf]
      %v271 = vld [vmem:[%s166 + $0x180] sm:$0xf]
      %v272 = vld [vmem:[%s166 + $0x184] sm:$0xf]
      %v273 = vld [vmem:[%s166 + $0x188] sm:$0xf]
      %v274 = vld [vmem:[%s166 + $0x18c] sm:$0xf]
      %v275 = vld [vmem:[%s166 + $0x190] sm:$0xf]
      %v276 = vld [vmem:[%s166 + $0x194] sm:$0xf]
      %v277 = vld [vmem:[%s166 + $0x198] sm:$0xf]
      %v278 = vld [vmem:[%s166 + $0x19c] sm:$0xf]
      %v279 = vld [vmem:[%s166 + $0x1a0] sm:$0xf]
      %v280 = vld [vmem:[%s166 + $0x1a4] sm:$0xf]
      %v281 = vld [vmem:[%s166 + $0x1a8] sm:$0xf]
      %v282 = vld [vmem:[%s166 + $0x1ac] sm:$0xf]
      %v283 = vld [vmem:[%s166 + $0x1b0] sm:$0xf]
      %v284 = vld [vmem:[%s166 + $0x1b4] sm:$0xf]
      %v285 = vld [vmem:[%s166 + $0x1b8] sm:$0xf]
      %v286 = vld [vmem:[%s166 + $0x1bc] sm:$0xf]
      %v287 = vld [vmem:[%s166 + $0x1c0] sm:$0xf]
      %v288 = vld [vmem:[%s166 + $0x1c4] sm:$0xf]
      %v289 = vld [vmem:[%s166 + $0x1c8] sm:$0xf]
      %v290 = vld [vmem:[%s166 + $0x1cc] sm:$0xf]
      %v291 = vld [vmem:[%s166 + $0x1d0] sm:$0xf]
      %v292 = vld [vmem:[%s166 + $0x1d4] sm:$0xf]
      %v293 = vld [vmem:[%s166 + $0x1d8] sm:$0xf]
      %v294 = vld [vmem:[%s166 + $0x1dc] sm:$0xf]
      %v295 = vld [vmem:[%s166 + $0x1e0] sm:$0xf]
      %v296 = vld [vmem:[%s166 + $0x1e4] sm:$0xf]
      %v297 = vld [vmem:[%s166 + $0x1e8] sm:$0xf]
      %v298 = vld [vmem:[%s166 + $0x1ec] sm:$0xf]
      %v299 = vld [vmem:[%s166 + $0x1f0] sm:$0xf]
      %v300 = vld [vmem:[%s166 + $0x1f4] sm:$0xf]
      %v301 = vld [vmem:[%s166 + $0x1f8] sm:$0xf]
      %v302 = vld [vmem:[%s166 + $0x1fc] sm:$0xf]
      %v303 = vld [vmem:[%s1] sm:$0xf]
      %v304 = vld [vmem:[%s1 + $0x4] sm:$0xf]
      %v305 = vld [vmem:[%s1 + $0x8] sm:$0xf]
      %v306 = vld [vmem:[%s1 + $0xc] sm:$0x3]
      %v307 = vld [vmem:[%s2] sm:$0x1]
      %v309 = vlaneseq
      %v310 = vshrl.u32 %v309, 7
      %v311 = vsub.s32 0, %v310
      %v312 = vrot.slane %v307, %v311
      %v442 = vunpack.c.l.b16 %v175
      %v443 = vunpack.c.l.b16 %v176
      %v444 = vunpack.c.l.b16 %v177
      %v445 = vunpack.c.l.b16 %v178
      %v446 = vunpack.c.l.b16 %v179
      %v447 = vunpack.c.l.b16 %v180
      %v448 = vunpack.c.l.b16 %v181
      %v449 = vunpack.c.l.b16 %v182
      %v450 = vunpack.c.l.b16 %v183
      %v451 = vunpack.c.l.b16 %v184
      %v452 = vunpack.c.l.b16 %v185
      %v453 = vunpack.c.l.b16 %v186
      %v454 = vunpack.c.l.b16 %v187
      %v455 = vunpack.c.l.b16 %v188
      %v456 = vunpack.c.l.b16 %v189
      %v457 = vunpack.c.l.b16 %v190
      %v458 = vunpack.c.l.b16 %v191
      %v459 = vunpack.c.l.b16 %v192
      %v460 = vunpack.c.l.b16 %v193
      %v461 = vunpack.c.l.b16 %v194
      %v462 = vunpack.c.l.b16 %v195
      %v463 = vunpack.c.l.b16 %v196
      %v464 = vunpack.c.l.b16 %v197
      %v465 = vunpack.c.l.b16 %v198
      %v466 = vunpack.c.l.b16 %v199
      %v467 = vunpack.c.l.b16 %v200
      %v468 = vunpack.c.l.b16 %v201
      %v469 = vunpack.c.l.b16 %v202
      %v470 = vunpack.c.l.b16 %v203
      %v471 = vunpack.c.l.b16 %v204
      %v472 = vunpack.c.l.b16 %v205
      %v473 = vunpack.c.l.b16 %v206
      %v474 = vunpack.c.l.b16 %v207
      %v475 = vunpack.c.l.b16 %v208
      %v476 = vunpack.c.l.b16 %v209
      %v477 = vunpack.c.l.b16 %v210
      %v478 = vunpack.c.l.b16 %v211
      %v479 = vunpack.c.l.b16 %v212
      %v480 = vunpack.c.l.b16 %v213
      %v481 = vunpack.c.l.b16 %v214
      %v482 = vunpack.c.l.b16 %v215
      %v483 = vunpack.c.l.b16 %v216
      %v484 = vunpack.c.l.b16 %v217
      %v485 = vunpack.c.l.b16 %v218
      %v486 = vunpack.c.l.b16 %v219
      %v487 = vunpack.c.l.b16 %v220
      %v488 = vunpack.c.l.b16 %v221
      %v489 = vunpack.c.l.b16 %v222
      %v490 = vunpack.c.l.b16 %v223
      %v491 = vunpack.c.l.b16 %v224
      %v492 = vunpack.c.l.b16 %v225
      %v493 = vunpack.c.l.b16 %v226
      %v494 = vunpack.c.l.b16 %v227
      %v495 = vunpack.c.l.b16 %v228
      %v496 = vunpack.c.l.b16 %v229
      %v497 = vunpack.c.l.b16 %v230
      %v498 = vunpack.c.l.b16 %v231
      %v499 = vunpack.c.l.b16 %v232
      %v500 = vunpack.c.l.b16 %v233
      %v501 = vunpack.c.l.b16 %v234
      %v502 = vunpack.c.l.b16 %v235
      %v503 = vunpack.c.l.b16 %v236
      %v504 = vunpack.c.l.b16 %v237
      %v505 = vunpack.c.l.b16 %v238
      %v506 = vunpack.c.l.b16 %v239
      %v507 = vunpack.c.l.b16 %v240
      %v508 = vunpack.c.l.b16 %v241
      %v509 = vunpack.c.l.b16 %v242
      %v510 = vunpack.c.l.b16 %v243
      %v511 = vunpack.c.l.b16 %v244
      %v512 = vunpack.c.l.b16 %v245
      %v513 = vunpack.c.l.b16 %v246
      %v514 = vunpack.c.l.b16 %v247
      %v515 = vunpack.c.l.b16 %v248
      %v516 = vunpack.c.l.b16 %v249
      %v517 = vunpack.c.l.b16 %v250
      %v518 = vunpack.c.l.b16 %v251
      %v519 = vunpack.c.l.b16 %v252
      %v520 = vunpack.c.l.b16 %v253
      %v521 = vunpack.c.l.b16 %v254
      %v522 = vunpack.c.l.b16 %v255
      %v523 = vunpack.c.l.b16 %v256
      %v524 = vunpack.c.l.b16 %v257
      %v525 = vunpack.c.l.b16 %v258
      %v526 = vunpack.c.l.b16 %v259
      %v527 = vunpack.c.l.b16 %v260
      %v528 = vunpack.c.l.b16 %v261
      %v529 = vunpack.c.l.b16 %v262
      %v530 = vunpack.c.l.b16 %v263
      %v531 = vunpack.c.l.b16 %v264
      %v532 = vunpack.c.l.b16 %v265
      %v533 = vunpack.c.l.b16 %v266
      %v534 = vunpack.c.l.b16 %v267
      %v535 = vunpack.c.l.b16 %v268
      %v536 = vunpack.c.l.b16 %v269
      %v537 = vunpack.c.l.b16 %v270
      %v538 = vunpack.c.l.b16 %v271
      %v539 = vunpack.c.l.b16 %v272
      %v540 = vunpack.c.l.b16 %v273
      %v541 = vunpack.c.l.b16 %v274
      %v542 = vunpack.c.l.b16 %v275
      %v543 = vunpack.c.l.b16 %v276
      %v544 = vunpack.c.l.b16 %v277
      %v545 = vunpack.c.l.b16 %v278
      %v546 = vunpack.c.l.b16 %v279
      %v547 = vunpack.c.l.b16 %v280
      %v548 = vunpack.c.l.b16 %v281
      %v549 = vunpack.c.l.b16 %v282
      %v550 = vunpack.c.l.b16 %v283
      %v551 = vunpack.c.l.b16 %v284
      %v552 = vunpack.c.l.b16 %v285
      %v553 = vunpack.c.l.b16 %v286
      %v554 = vunpack.c.l.b16 %v287
      %v555 = vunpack.c.l.b16 %v288
      %v556 = vunpack.c.l.b16 %v289
      %v557 = vunpack.c.l.b16 %v290
      %v558 = vunpack.c.l.b16 %v291
      %v559 = vunpack.c.l.b16 %v292
      %v560 = vunpack.c.l.b16 %v293
      %v561 = vunpack.c.l.b16 %v294
      %v562 = vunpack.c.l.b16 %v295
      %v563 = vunpack.c.l.b16 %v296
      %v564 = vunpack.c.l.b16 %v297
      %v565 = vunpack.c.l.b16 %v298
      %v566 = vunpack.c.l.b16 %v299
      %v567 = vunpack.c.l.b16 %v300
      %v568 = vunpack.c.l.b16 %v301
      %v569 = vunpack.c.l.b16 %v302
      %v570 = vpack.c.b16 %v443, %v442
      %v571 = vpack.c.b16 %v445, %v444
      %v572 = vpack.c.b16 %v447, %v446
      %v573 = vpack.c.b16 %v449, %v448
      %v574 = vpack.c.b16 %v451, %v450
      %v575 = vpack.c.b16 %v453, %v452
      %v576 = vpack.c.b16 %v455, %v454
      %v577 = vpack.c.b16 %v457, %v456
      %v578 = vpack.c.b16 %v459, %v458
      %v579 = vpack.c.b16 %v461, %v460
      %v580 = vpack.c.b16 %v463, %v462
      %v581 = vpack.c.b16 %v465, %v464
      %v582 = vpack.c.b16 %v467, %v466
      %v583 = vpack.c.b16 %v469, %v468
      %v584 = vpack.c.b16 %v471, %v470
      %v585 = vpack.c.b16 %v473, %v472
      %v586 = vpack.c.b16 %v475, %v474
      %v587 = vpack.c.b16 %v477, %v476
      %v588 = vpack.c.b16 %v479, %v478
      %v589 = vpack.c.b16 %v481, %v480
      %v590 = vpack.c.b16 %v483, %v482
      %v591 = vpack.c.b16 %v485, %v484
      %v592 = vpack.c.b16 %v487, %v486
      %v593 = vpack.c.b16 %v489, %v488
      %v594 = vpack.c.b16 %v491, %v490
      %v595 = vpack.c.b16 %v493, %v492
      %v596 = vpack.c.b16 %v495, %v494
      %v597 = vpack.c.b16 %v497, %v496
      %v598 = vpack.c.b16 %v499, %v498
      %v599 = vpack.c.b16 %v501, %v500
      %v600 = vpack.c.b16 %v503, %v502
      %v601 = vpack.c.b16 %v505, %v504
      %v602 = vpack.c.b16 %v507, %v506
      %v603 = vpack.c.b16 %v509, %v508
      %v604 = vpack.c.b16 %v511, %v510
      %v605 = vpack.c.b16 %v513, %v512
      %v606 = vpack.c.b16 %v515, %v514
      %v607 = vpack.c.b16 %v517, %v516
      %v608 = vpack.c.b16 %v519, %v518
      %v609 = vpack.c.b16 %v521, %v520
      %v610 = vpack.c.b16 %v523, %v522
      %v611 = vpack.c.b16 %v525, %v524
      %v612 = vpack.c.b16 %v527, %v526
      %v613 = vpack.c.b16 %v529, %v528
      %v614 = vpack.c.b16 %v531, %v530
      %v615 = vpack.c.b16 %v533, %v532
      %v616 = vpack.c.b16 %v535, %v534
      %v617 = vpack.c.b16 %v537, %v536
      %v618 = vpack.c.b16 %v539, %v538
      %v619 = vpack.c.b16 %v541, %v540
      %v620 = vpack.c.b16 %v543, %v542
      %v621 = vpack.c.b16 %v545, %v544
      %v622 = vpack.c.b16 %v547, %v546
      %v623 = vpack.c.b16 %v549, %v548
      %v624 = vpack.c.b16 %v551, %v550
      %v625 = vpack.c.b16 %v553, %v552
      %v626 = vpack.c.b16 %v555, %v554
      %v627 = vpack.c.b16 %v557, %v556
      %v628 = vpack.c.b16 %v559, %v558
      %v629 = vpack.c.b16 %v561, %v560
      %v630 = vpack.c.b16 %v563, %v562
      %v631 = vpack.c.b16 %v565, %v564
      %v632 = vpack.c.b16 %v567, %v566
      %v633 = vpack.c.b16 %v569, %v568
      %v638 = vunpack.c.l.b16 %v303
      %v639 = vunpack.c.l.b16 %v304
      %v640 = vunpack.c.l.b16 %v305
      %v641 = vunpack.c.l.b16 %v306
      %v642 = vpack.c.b16 %v639, %v638
      %v643 = vpack.c.b16 %v641, %v640
      %vm645 = vcmask 220160
      %v647 = vsel %vm645, %v570, 0
      %v650 = vsel %vm645, %v571, 0
      %v653 = vsel %vm645, %v572, 0
      %v656 = vsel %vm645, %v573, 0
      %v659 = vsel %vm645, %v574, 0
      %v662 = vsel %vm645, %v575, 0
      %v665 = vsel %vm645, %v576, 0
      %v668 = vsel %vm645, %v577, 0
      %v671 = vsel %vm645, %v578, 0
      %v674 = vsel %vm645, %v579, 0
      %v677 = vsel %vm645, %v580, 0
      %v680 = vsel %vm645, %v581, 0
      %v683 = vsel %vm645, %v582, 0
      %v686 = vsel %vm645, %v583, 0
      %v689 = vsel %vm645, %v584, 0
      %v692 = vsel %vm645, %v585, 0
      %v695 = vsel %vm645, %v586, 0
      %v698 = vsel %vm645, %v587, 0
      %v701 = vsel %vm645, %v588, 0
      %v704 = vsel %vm645, %v589, 0
      %v707 = vsel %vm645, %v590, 0
      %v710 = vsel %vm645, %v591, 0
      %v713 = vsel %vm645, %v592, 0
      %v716 = vsel %vm645, %v593, 0
      %v719 = vsel %vm645, %v594, 0
      %v722 = vsel %vm645, %v595, 0
      %v725 = vsel %vm645, %v596, 0
      %v728 = vsel %vm645, %v597, 0
      %v731 = vsel %vm645, %v598, 0
      %v734 = vsel %vm645, %v599, 0
      %v737 = vsel %vm645, %v600, 0
      %v740 = vsel %vm645, %v601, 0
      %v743 = vsel %vm645, %v602, 0
      %v746 = vsel %vm645, %v603, 0
      %v749 = vsel %vm645, %v604, 0
      %v752 = vsel %vm645, %v605, 0
      %v755 = vsel %vm645, %v606, 0
      %v758 = vsel %vm645, %v607, 0
      %v761 = vsel %vm645, %v608, 0
      %v764 = vsel %vm645, %v609, 0
      %v767 = vsel %vm645, %v610, 0
      %v770 = vsel %vm645, %v611, 0
      %v773 = vsel %vm645, %v612, 0
      %v776 = vsel %vm645, %v613, 0
      %v779 = vsel %vm645, %v614, 0
      %v782 = vsel %vm645, %v615, 0
      %v785 = vsel %vm645, %v616, 0
      %v788 = vsel %vm645, %v617, 0
      %v791 = vsel %vm645, %v618, 0
      %v794 = vsel %vm645, %v619, 0
      %v797 = vsel %vm645, %v620, 0
      %v800 = vsel %vm645, %v621, 0
      %v803 = vsel %vm645, %v622, 0
      %v806 = vsel %vm645, %v623, 0
      %v809 = vsel %vm645, %v624, 0
      %v812 = vsel %vm645, %v625, 0
      %v815 = vsel %vm645, %v626, 0
      %v818 = vsel %vm645, %v627, 0
      %v821 = vsel %vm645, %v628, 0
      %v824 = vsel %vm645, %v629, 0
      %v827 = vsel %vm645, %v630, 0
      %v830 = vsel %vm645, %v631, 0
      %v833 = vsel %vm645, %v632, 0
      %v836 = vsel %vm645, %v633, 0
      %vm838 = vcmask 1044480
      %vm839 = vcmask 1045504
      %v840 = vsel %vm838, 4294967295, 65535
      %v841 = vsel %vm839, %v840, 0
      %v843 = vand.u32 %v643, %v841
      %845 = vmatprep.subr.bf16.mxu0 0
      %846 = vmatpush1.bf16.msra.mxu0 0
      %847 = vmatprep.subr.bf16.mxu0 0
      %848 = vmatpush1.bf16.msra.mxu0 0
      %849 = vmatprep.subr.bf16.mxu0 0
      %850 = vmatpush1.bf16.msra.mxu0 0
      %851 = vmatprep.subr.bf16.mxu0 0
      %852 = vmatpush1.bf16.msra.mxu0 0
      %853 = vmatprep.subr.bf16.mxu0 0
      %854 = vmatpush1.bf16.msra.mxu0 0
      %855 = vmatprep.subr.bf16.mxu0 0
      %856 = vmatpush1.bf16.msra.mxu0 0
      %857 = vmatprep.subr.bf16.mxu0 0
      %858 = vmatpush1.bf16.msra.mxu0 %v843
      %859 = vmatprep.subr.bf16.mxu0 0
      %860 = vmatpush1.bf16.msra.mxu0 %v642
      %861 = vmatprep.subr.bf16.mxu0 0
      %862 = vmatpush2.bf16.msra.mxu0 0
      %863 = vmatprep.subr.bf16.mxu0 0
      %864 = vmatpush2.bf16.msra.mxu0 0
      %865 = vmatprep.subr.bf16.mxu0 0
      %866 = vmatpush2.bf16.msra.mxu0 0
      %867 = vmatprep.subr.bf16.mxu0 0
      %868 = vmatpush2.bf16.msra.mxu0 0
      %869 = vmatprep.subr.bf16.mxu0 0
      %870 = vmatpush2.bf16.msra.mxu0 0
      %871 = vmatprep.subr.bf16.mxu0 0
      %872 = vmatpush2.bf16.msra.mxu0 0
      %873 = vmatprep.subr.bf16.mxu0 0
      %874 = vmatpush2.bf16.msra.mxu0 0
      %875 = vmatprep.subr.bf16.mxu0 0
      %876 = vmatpush2.bf16.msra.mxu0 0
      %877 = vmatprep.mubr.bf16.mxu0 0
      %878 = vmatmul.mubr.bf16.gmra.mxu0 %v647
      %v879 = vpop.f32.mrf.mxu0
      %v880 = vadd.f32 %v312, %v879
      %v881 = vpop.f32.mrf.mxu0
      %v882 = vpop.f32.mrf.mxu0
      %v883 = vadd.f32 %v312, %v882
      %v884 = vpop.f32.mrf.mxu0
      %885 = vmatprep.mubr.bf16.mxu0 0
      %886 = vmatmul.mubr.bf16.gmra.mxu0 %v650
      %v887 = vpop.f32.mrf.mxu0
      %v888 = vadd.f32 %v312, %v887
      %v889 = vpop.f32.mrf.mxu0
      %v890 = vpop.f32.mrf.mxu0
      %v891 = vadd.f32 %v312, %v890
      %v892 = vpop.f32.mrf.mxu0
      %893 = vmatprep.mubr.bf16.mxu0 0
      %894 = vmatmul.mubr.bf16.gmra.mxu0 %v653
      %v895 = vpop.f32.mrf.mxu0
      %v896 = vadd.f32 %v312, %v895
      %v897 = vpop.f32.mrf.mxu0
      %v898 = vpop.f32.mrf.mxu0
      %v899 = vadd.f32 %v312, %v898
      %v900 = vpop.f32.mrf.mxu0
      %901 = vmatprep.mubr.bf16.mxu0 0
      %902 = vmatmul.mubr.bf16.gmra.mxu0 %v656
      %v903 = vpop.f32.mrf.mxu0
      %v904 = vadd.f32 %v312, %v903
      %v905 = vpop.f32.mrf.mxu0
      %v906 = vpop.f32.mrf.mxu0
      %v907 = vadd.f32 %v312, %v906
      %v908 = vpop.f32.mrf.mxu0
      %909 = vmatprep.mubr.bf16.mxu0 0
      %910 = vmatmul.mubr.bf16.gmra.mxu0 %v659
      %v911 = vpop.f32.mrf.mxu0
      %v912 = vadd.f32 %v312, %v911
      %v913 = vpop.f32.mrf.mxu0
      %v914 = vpop.f32.mrf.mxu0
      %v915 = vadd.f32 %v312, %v914
      %v916 = vpop.f32.mrf.mxu0
      %917 = vmatprep.mubr.bf16.mxu0 0
      %918 = vmatmul.mubr.bf16.gmra.mxu0 %v662
      %v919 = vpop.f32.mrf.mxu0
      %v920 = vadd.f32 %v312, %v919
      %v921 = vpop.f32.mrf.mxu0
      %v922 = vpop.f32.mrf.mxu0
      %v923 = vadd.f32 %v312, %v922
      %v924 = vpop.f32.mrf.mxu0
      %925 = vmatprep.mubr.bf16.mxu0 0
      %926 = vmatmul.mubr.bf16.gmra.mxu0 %v665
      %v927 = vpop.f32.mrf.mxu0
      %v928 = vadd.f32 %v312, %v927
      %v929 = vpop.f32.mrf.mxu0
      %v930 = vpop.f32.mrf.mxu0
      %v931 = vadd.f32 %v312, %v930
      %v932 = vpop.f32.mrf.mxu0
      %933 = vmatprep.mubr.bf16.mxu0 0
      %934 = vmatmul.mubr.bf16.gmra.mxu0 %v668
      %v935 = vpop.f32.mrf.mxu0
      %v936 = vadd.f32 %v312, %v935
      %v937 = vpop.f32.mrf.mxu0
      %v938 = vpop.f32.mrf.mxu0
      %v939 = vadd.f32 %v312, %v938
      %v940 = vpop.f32.mrf.mxu0
      %941 = vmatprep.mubr.bf16.mxu0 0
      %942 = vmatmul.mubr.bf16.gmra.mxu0 %v671
      %v943 = vpop.f32.mrf.mxu0
      %v944 = vadd.f32 %v312, %v943
      %v945 = vpop.f32.mrf.mxu0
      %v946 = vpop.f32.mrf.mxu0
      %v947 = vadd.f32 %v312, %v946
      %v948 = vpop.f32.mrf.mxu0
      %949 = vmatprep.mubr.bf16.mxu0 0
      %950 = vmatmul.mubr.bf16.gmra.mxu0 %v674
      %v951 = vpop.f32.mrf.mxu0
      %v952 = vadd.f32 %v312, %v951
      %v953 = vpop.f32.mrf.mxu0
      %v954 = vpop.f32.mrf.mxu0
      %v955 = vadd.f32 %v312, %v954
      %v956 = vpop.f32.mrf.mxu0
      %957 = vmatprep.mubr.bf16.mxu0 0
      %958 = vmatmul.mubr.bf16.gmra.mxu0 %v677
      %v959 = vpop.f32.mrf.mxu0
      %v960 = vadd.f32 %v312, %v959
      %v961 = vpop.f32.mrf.mxu0
      %v962 = vpop.f32.mrf.mxu0
      %v963 = vadd.f32 %v312, %v962
      %v964 = vpop.f32.mrf.mxu0
      %965 = vmatprep.mubr.bf16.mxu0 0
      %966 = vmatmul.mubr.bf16.gmra.mxu0 %v680
      %v967 = vpop.f32.mrf.mxu0
      %v968 = vadd.f32 %v312, %v967
      %v969 = vpop.f32.mrf.mxu0
      %v970 = vpop.f32.mrf.mxu0
      %v971 = vadd.f32 %v312, %v970
      %v972 = vpop.f32.mrf.mxu0
      %973 = vmatprep.mubr.bf16.mxu0 0
      %974 = vmatmul.mubr.bf16.gmra.mxu0 %v683
      %v975 = vpop.f32.mrf.mxu0
      %v976 = vadd.f32 %v312, %v975
      %v977 = vpop.f32.mrf.mxu0
      %v978 = vpop.f32.mrf.mxu0
      %v979 = vadd.f32 %v312, %v978
      %v980 = vpop.f32.mrf.mxu0
      %981 = vmatprep.mubr.bf16.mxu0 0
      %982 = vmatmul.mubr.bf16.gmra.mxu0 %v686
      %v983 = vpop.f32.mrf.mxu0
      %v984 = vadd.f32 %v312, %v983
      %v985 = vpop.f32.mrf.mxu0
      %v986 = vpop.f32.mrf.mxu0
      %v987 = vadd.f32 %v312, %v986
      %v988 = vpop.f32.mrf.mxu0
      %989 = vmatprep.mubr.bf16.mxu0 0
      %990 = vmatmul.mubr.bf16.gmra.mxu0 %v689
      %v991 = vpop.f32.mrf.mxu0
      %v992 = vadd.f32 %v312, %v991
      %v993 = vpop.f32.mrf.mxu0
      %v994 = vpop.f32.mrf.mxu0
      %v995 = vadd.f32 %v312, %v994
      %v996 = vpop.f32.mrf.mxu0
      %997 = vmatprep.mubr.bf16.mxu0 0
      %998 = vmatmul.mubr.bf16.gmra.mxu0 %v692
      %v999 = vpop.f32.mrf.mxu0
      %v1000 = vadd.f32 %v312, %v999
      %v1001 = vpop.f32.mrf.mxu0
      %v1002 = vpop.f32.mrf.mxu0
      %v1003 = vadd.f32 %v312, %v1002
      %v1004 = vpop.f32.mrf.mxu0
      %1005 = vmatprep.mubr.bf16.mxu0 0
      %1006 = vmatmul.mubr.bf16.gmra.mxu0 %v695
      %v1007 = vpop.f32.mrf.mxu0
      %v1008 = vadd.f32 %v312, %v1007
      %v1009 = vpop.f32.mrf.mxu0
      %v1010 = vpop.f32.mrf.mxu0
      %v1011 = vadd.f32 %v312, %v1010
      %v1012 = vpop.f32.mrf.mxu0
      %1013 = vmatprep.mubr.bf16.mxu0 0
      %1014 = vmatmul.mubr.bf16.gmra.mxu0 %v698
      %v1015 = vpop.f32.mrf.mxu0
      %v1016 = vadd.f32 %v312, %v1015
      %v1017 = vpop.f32.mrf.mxu0
      %v1018 = vpop.f32.mrf.mxu0
      %v1019 = vadd.f32 %v312, %v1018
      %v1020 = vpop.f32.mrf.mxu0
      %1021 = vmatprep.mubr.bf16.mxu0 0
      %1022 = vmatmul.mubr.bf16.gmra.mxu0 %v701
      %v1023 = vpop.f32.mrf.mxu0
      %v1024 = vadd.f32 %v312, %v1023
      %v1025 = vpop.f32.mrf.mxu0
      %v1026 = vpop.f32.mrf.mxu0
      %v1027 = vadd.f32 %v312, %v1026
      %v1028 = vpop.f32.mrf.mxu0
      %1029 = vmatprep.mubr.bf16.mxu0 0
      %1030 = vmatmul.mubr.bf16.gmra.mxu0 %v704
      %v1031 = vpop.f32.mrf.mxu0
      %v1032 = vadd.f32 %v312, %v1031
      %v1033 = vpop.f32.mrf.mxu0
      %v1034 = vpop.f32.mrf.mxu0
      %v1035 = vadd.f32 %v312, %v1034
      %v1036 = vpop.f32.mrf.mxu0
      %1037 = vmatprep.mubr.bf16.mxu0 0
      %1038 = vmatmul.mubr.bf16.gmra.mxu0 %v707
      %v1039 = vpop.f32.mrf.mxu0
      %v1040 = vadd.f32 %v312, %v1039
      %v1041 = vpop.f32.mrf.mxu0
      %v1042 = vpop.f32.mrf.mxu0
      %v1043 = vadd.f32 %v312, %v1042
      %v1044 = vpop.f32.mrf.mxu0
      %1045 = vmatprep.mubr.bf16.mxu0 0
      %1046 = vmatmul.mubr.bf16.gmra.mxu0 %v710
      %v1047 = vpop.f32.mrf.mxu0
      %v1048 = vadd.f32 %v312, %v1047
      %v1049 = vpop.f32.mrf.mxu0
      %v1050 = vpop.f32.mrf.mxu0
      %v1051 = vadd.f32 %v312, %v1050
      %v1052 = vpop.f32.mrf.mxu0
      %1053 = vmatprep.mubr.bf16.mxu0 0
      %1054 = vmatmul.mubr.bf16.gmra.mxu0 %v713
      %v1055 = vpop.f32.mrf.mxu0
      %v1056 = vadd.f32 %v312, %v1055
      %v1057 = vpop.f32.mrf.mxu0
      %v1058 = vpop.f32.mrf.mxu0
      %v1059 = vadd.f32 %v312, %v1058
      %v1060 = vpop.f32.mrf.mxu0
      %1061 = vmatprep.mubr.bf16.mxu0 0
      %1062 = vmatmul.mubr.bf16.gmra.mxu0 %v716
      %v1063 = vpop.f32.mrf.mxu0
      %v1064 = vadd.f32 %v312, %v1063
      %v1065 = vpop.f32.mrf.mxu0
      %v1066 = vpop.f32.mrf.mxu0
      %v1067 = vadd.f32 %v312, %v1066
      %v1068 = vpop.f32.mrf.mxu0
      %1069 = vmatprep.mubr.bf16.mxu0 0
      %1070 = vmatmul.mubr.bf16.gmra.mxu0 %v719
      %v1071 = vpop.f32.mrf.mxu0
      %v1072 = vadd.f32 %v312, %v1071
      %v1073 = vpop.f32.mrf.mxu0
      %v1074 = vpop.f32.mrf.mxu0
      %v1075 = vadd.f32 %v312, %v1074
      %v1076 = vpop.f32.mrf.mxu0
      %1077 = vmatprep.mubr.bf16.mxu0 0
      %1078 = vmatmul.mubr.bf16.gmra.mxu0 %v722
      %v1079 = vpop.f32.mrf.mxu0
      %v1080 = vadd.f32 %v312, %v1079
      %v1081 = vpop.f32.mrf.mxu0
      %v1082 = vpop.f32.mrf.mxu0
      %v1083 = vadd.f32 %v312, %v1082
      %v1084 = vpop.f32.mrf.mxu0
      %1085 = vmatprep.mubr.bf16.mxu0 0
      %1086 = vmatmul.mubr.bf16.gmra.mxu0 %v725
      %v1087 = vpop.f32.mrf.mxu0
      %v1088 = vadd.f32 %v312, %v1087
      %v1089 = vpop.f32.mrf.mxu0
      %v1090 = vpop.f32.mrf.mxu0
      %v1091 = vadd.f32 %v312, %v1090
      %v1092 = vpop.f32.mrf.mxu0
      %1093 = vmatprep.mubr.bf16.mxu0 0
      %1094 = vmatmul.mubr.bf16.gmra.mxu0 %v728
      %v1095 = vpop.f32.mrf.mxu0
      %v1096 = vadd.f32 %v312, %v1095
      %v1097 = vpop.f32.mrf.mxu0
      %v1098 = vpop.f32.mrf.mxu0
      %v1099 = vadd.f32 %v312, %v1098
      %v1100 = vpop.f32.mrf.mxu0
      %1101 = vmatprep.mubr.bf16.mxu0 0
      %1102 = vmatmul.mubr.bf16.gmra.mxu0 %v731
      %v1103 = vpop.f32.mrf.mxu0
      %v1104 = vadd.f32 %v312, %v1103
      %v1105 = vpop.f32.mrf.mxu0
      %v1106 = vpop.f32.mrf.mxu0
      %v1107 = vadd.f32 %v312, %v1106
      %v1108 = vpop.f32.mrf.mxu0
      %1109 = vmatprep.mubr.bf16.mxu0 0
      %1110 = vmatmul.mubr.bf16.gmra.mxu0 %v734
      %v1111 = vpop.f32.mrf.mxu0
      %v1112 = vadd.f32 %v312, %v1111
      %v1113 = vpop.f32.mrf.mxu0
      %v1114 = vpop.f32.mrf.mxu0
      %v1115 = vadd.f32 %v312, %v1114
      %v1116 = vpop.f32.mrf.mxu0
      %1117 = vmatprep.mubr.bf16.mxu0 0
      %1118 = vmatmul.mubr.bf16.gmra.mxu0 %v737
      %v1119 = vpop.f32.mrf.mxu0
      %v1120 = vadd.f32 %v312, %v1119
      %v1121 = vpop.f32.mrf.mxu0
      %v1122 = vpop.f32.mrf.mxu0
      %v1123 = vadd.f32 %v312, %v1122
      %v1124 = vpop.f32.mrf.mxu0
      %1125 = vmatprep.mubr.bf16.mxu0 0
      %1126 = vmatmul.mubr.bf16.gmra.mxu0 %v740
      %v1127 = vpop.f32.mrf.mxu0
      %v1128 = vadd.f32 %v312, %v1127
      %v1129 = vpop.f32.mrf.mxu0
      %v1130 = vpop.f32.mrf.mxu0
      %v1131 = vadd.f32 %v312, %v1130
      %v1132 = vpop.f32.mrf.mxu0
      %1133 = vmatprep.mubr.bf16.mxu0 0
      %1134 = vmatmul.mubr.bf16.gmra.mxu0 %v743
      %v1135 = vpop.f32.mrf.mxu0
      %v1136 = vadd.f32 %v312, %v1135
      %v1137 = vpop.f32.mrf.mxu0
      %v1138 = vpop.f32.mrf.mxu0
      %v1139 = vadd.f32 %v312, %v1138
      %v1140 = vpop.f32.mrf.mxu0
      %1141 = vmatprep.mubr.bf16.mxu0 0
      %1142 = vmatmul.mubr.bf16.gmra.mxu0 %v746
      %v1143 = vpop.f32.mrf.mxu0
      %v1144 = vadd.f32 %v312, %v1143
      %v1145 = vpop.f32.mrf.mxu0
      %v1146 = vpop.f32.mrf.mxu0
      %v1147 = vadd.f32 %v312, %v1146
      %v1148 = vpop.f32.mrf.mxu0
      %1149 = vmatprep.mubr.bf16.mxu0 0
      %1150 = vmatmul.mubr.bf16.gmra.mxu0 %v749
      %v1151 = vpop.f32.mrf.mxu0
      %v1152 = vadd.f32 %v312, %v1151
      %v1153 = vpop.f32.mrf.mxu0
      %v1154 = vpop.f32.mrf.mxu0
      %v1155 = vadd.f32 %v312, %v1154
      %v1156 = vpop.f32.mrf.mxu0
      %1157 = vmatprep.mubr.bf16.mxu0 0
      %1158 = vmatmul.mubr.bf16.gmra.mxu0 %v752
      %v1159 = vpop.f32.mrf.mxu0
      %v1160 = vadd.f32 %v312, %v1159
      %v1161 = vpop.f32.mrf.mxu0
      %v1162 = vpop.f32.mrf.mxu0
      %v1163 = vadd.f32 %v312, %v1162
      %v1164 = vpop.f32.mrf.mxu0
      %1165 = vmatprep.mubr.bf16.mxu0 0
      %1166 = vmatmul.mubr.bf16.gmra.mxu0 %v755
      %v1167 = vpop.f32.mrf.mxu0
      %v1168 = vadd.f32 %v312, %v1167
      %v1169 = vpop.f32.mrf.mxu0
      %v1170 = vpop.f32.mrf.mxu0
      %v1171 = vadd.f32 %v312, %v1170
      %v1172 = vpop.f32.mrf.mxu0
      %1173 = vmatprep.mubr.bf16.mxu0 0
      %1174 = vmatmul.mubr.bf16.gmra.mxu0 %v758
      %v1175 = vpop.f32.mrf.mxu0
      %v1176 = vadd.f32 %v312, %v1175
      %v1177 = vpop.f32.mrf.mxu0
      %v1178 = vpop.f32.mrf.mxu0
      %v1179 = vadd.f32 %v312, %v1178
      %v1180 = vpop.f32.mrf.mxu0
      %1181 = vmatprep.mubr.bf16.mxu0 0
      %1182 = vmatmul.mubr.bf16.gmra.mxu0 %v761
      %v1183 = vpop.f32.mrf.mxu0
      %v1184 = vadd.f32 %v312, %v1183
      %v1185 = vpop.f32.mrf.mxu0
      %v1186 = vpop.f32.mrf.mxu0
      %v1187 = vadd.f32 %v312, %v1186
      %v1188 = vpop.f32.mrf.mxu0
      %1189 = vmatprep.mubr.bf16.mxu0 0
      %1190 = vmatmul.mubr.bf16.gmra.mxu0 %v764
      %v1191 = vpop.f32.mrf.mxu0
      %v1192 = vadd.f32 %v312, %v1191
      %v1193 = vpop.f32.mrf.mxu0
      %v1194 = vpop.f32.mrf.mxu0
      %v1195 = vadd.f32 %v312, %v1194
      %v1196 = vpop.f32.mrf.mxu0
      %1197 = vmatprep.mubr.bf16.mxu0 0
      %1198 = vmatmul.mubr.bf16.gmra.mxu0 %v767
      %v1199 = vpop.f32.mrf.mxu0
      %v1200 = vadd.f32 %v312, %v1199
      %v1201 = vpop.f32.mrf.mxu0
      %v1202 = vpop.f32.mrf.mxu0
      %v1203 = vadd.f32 %v312, %v1202
      %v1204 = vpop.f32.mrf.mxu0
      %1205 = vmatprep.mubr.bf16.mxu0 0
      %1206 = vmatmul.mubr.bf16.gmra.mxu0 %v770
      %v1207 = vpop.f32.mrf.mxu0
      %v1208 = vadd.f32 %v312, %v1207
      %v1209 = vpop.f32.mrf.mxu0
      %v1210 = vpop.f32.mrf.mxu0
      %v1211 = vadd.f32 %v312, %v1210
      %v1212 = vpop.f32.mrf.mxu0
      %1213 = vmatprep.mubr.bf16.mxu0 0
      %1214 = vmatmul.mubr.bf16.gmra.mxu0 %v773
      %v1215 = vpop.f32.mrf.mxu0
      %v1216 = vadd.f32 %v312, %v1215
      %v1217 = vpop.f32.mrf.mxu0
      %v1218 = vpop.f32.mrf.mxu0
      %v1219 = vadd.f32 %v312, %v1218
      %v1220 = vpop.f32.mrf.mxu0
      %1221 = vmatprep.mubr.bf16.mxu0 0
      %1222 = vmatmul.mubr.bf16.gmra.mxu0 %v776
      %v1223 = vpop.f32.mrf.mxu0
      %v1224 = vadd.f32 %v312, %v1223
      %v1225 = vpop.f32.mrf.mxu0
      %v1226 = vpop.f32.mrf.mxu0
      %v1227 = vadd.f32 %v312, %v1226
      %v1228 = vpop.f32.mrf.mxu0
      %1229 = vmatprep.mubr.bf16.mxu0 0
      %1230 = vmatmul.mubr.bf16.gmra.mxu0 %v779
      %v1231 = vpop.f32.mrf.mxu0
      %v1232 = vadd.f32 %v312, %v1231
      %v1233 = vpop.f32.mrf.mxu0
      %v1234 = vpop.f32.mrf.mxu0
      %v1235 = vadd.f32 %v312, %v1234
      %v1236 = vpop.f32.mrf.mxu0
      %1237 = vmatprep.mubr.bf16.mxu0 0
      %1238 = vmatmul.mubr.bf16.gmra.mxu0 %v782
      %v1239 = vpop.f32.mrf.mxu0
      %v1240 = vadd.f32 %v312, %v1239
      %v1241 = vpop.f32.mrf.mxu0
      %v1242 = vpop.f32.mrf.mxu0
      %v1243 = vadd.f32 %v312, %v1242
      %v1244 = vpop.f32.mrf.mxu0
      %1245 = vmatprep.mubr.bf16.mxu0 0
      %1246 = vmatmul.mubr.bf16.gmra.mxu0 %v785
      %v1247 = vpop.f32.mrf.mxu0
      %v1248 = vadd.f32 %v312, %v1247
      %v1249 = vpop.f32.mrf.mxu0
      %v1250 = vpop.f32.mrf.mxu0
      %v1251 = vadd.f32 %v312, %v1250
      %v1252 = vpop.f32.mrf.mxu0
      %1253 = vmatprep.mubr.bf16.mxu0 0
      %1254 = vmatmul.mubr.bf16.gmra.mxu0 %v788
      %v1255 = vpop.f32.mrf.mxu0
      %v1256 = vadd.f32 %v312, %v1255
      %v1257 = vpop.f32.mrf.mxu0
      %v1258 = vpop.f32.mrf.mxu0
      %v1259 = vadd.f32 %v312, %v1258
      %v1260 = vpop.f32.mrf.mxu0
      %1261 = vmatprep.mubr.bf16.mxu0 0
      %1262 = vmatmul.mubr.bf16.gmra.mxu0 %v791
      %v1263 = vpop.f32.mrf.mxu0
      %v1264 = vadd.f32 %v312, %v1263
      %v1265 = vpop.f32.mrf.mxu0
      %v1266 = vpop.f32.mrf.mxu0
      %v1267 = vadd.f32 %v312, %v1266
      %v1268 = vpop.f32.mrf.mxu0
      %1269 = vmatprep.mubr.bf16.mxu0 0
      %1270 = vmatmul.mubr.bf16.gmra.mxu0 %v794
      %v1271 = vpop.f32.mrf.mxu0
      %v1272 = vadd.f32 %v312, %v1271
      %v1273 = vpop.f32.mrf.mxu0
      %v1274 = vpop.f32.mrf.mxu0
      %v1275 = vadd.f32 %v312, %v1274
      %v1276 = vpop.f32.mrf.mxu0
      %1277 = vmatprep.mubr.bf16.mxu0 0
      %1278 = vmatmul.mubr.bf16.gmra.mxu0 %v797
      %v1279 = vpop.f32.mrf.mxu0
      %v1280 = vadd.f32 %v312, %v1279
      %v1281 = vpop.f32.mrf.mxu0
      %v1282 = vpop.f32.mrf.mxu0
      %v1283 = vadd.f32 %v312, %v1282
      %v1284 = vpop.f32.mrf.mxu0
      %1285 = vmatprep.mubr.bf16.mxu0 0
      %1286 = vmatmul.mubr.bf16.gmra.mxu0 %v800
      %v1287 = vpop.f32.mrf.mxu0
      %v1288 = vadd.f32 %v312, %v1287
      %v1289 = vpop.f32.mrf.mxu0
      %v1290 = vpop.f32.mrf.mxu0
      %v1291 = vadd.f32 %v312, %v1290
      %v1292 = vpop.f32.mrf.mxu0
      %1293 = vmatprep.mubr.bf16.mxu0 0
      %1294 = vmatmul.mubr.bf16.gmra.mxu0 %v803
      %v1295 = vpop.f32.mrf.mxu0
      %v1296 = vadd.f32 %v312, %v1295
      %v1297 = vpop.f32.mrf.mxu0
      %v1298 = vpop.f32.mrf.mxu0
      %v1299 = vadd.f32 %v312, %v1298
      %v1300 = vpop.f32.mrf.mxu0
      %1301 = vmatprep.mubr.bf16.mxu0 0
      %1302 = vmatmul.mubr.bf16.gmra.mxu0 %v806
      %v1303 = vpop.f32.mrf.mxu0
      %v1304 = vadd.f32 %v312, %v1303
      %v1305 = vpop.f32.mrf.mxu0
      %v1306 = vpop.f32.mrf.mxu0
      %v1307 = vadd.f32 %v312, %v1306
      %v1308 = vpop.f32.mrf.mxu0
      %1309 = vmatprep.mubr.bf16.mxu0 0
      %1310 = vmatmul.mubr.bf16.gmra.mxu0 %v809
      %v1311 = vpop.f32.mrf.mxu0
      %v1312 = vadd.f32 %v312, %v1311
      %v1313 = vpop.f32.mrf.mxu0
      %v1314 = vpop.f32.mrf.mxu0
      %v1315 = vadd.f32 %v312, %v1314
      %v1316 = vpop.f32.mrf.mxu0
      %1317 = vmatprep.mubr.bf16.mxu0 0
      %1318 = vmatmul.mubr.bf16.gmra.mxu0 %v812
      %v1319 = vpop.f32.mrf.mxu0
      %v1320 = vadd.f32 %v312, %v1319
      %v1321 = vpop.f32.mrf.mxu0
      %v1322 = vpop.f32.mrf.mxu0
      %v1323 = vadd.f32 %v312, %v1322
      %v1324 = vpop.f32.mrf.mxu0
      %1325 = vmatprep.mubr.bf16.mxu0 0
      %1326 = vmatmul.mubr.bf16.gmra.mxu0 %v815
      %v1327 = vpop.f32.mrf.mxu0
      %v1328 = vadd.f32 %v312, %v1327
      %v1329 = vpop.f32.mrf.mxu0
      %v1330 = vpop.f32.mrf.mxu0
      %v1331 = vadd.f32 %v312, %v1330
      %v1332 = vpop.f32.mrf.mxu0
      %1333 = vmatprep.mubr.bf16.mxu0 0
      %1334 = vmatmul.mubr.bf16.gmra.mxu0 %v818
      %v1335 = vpop.f32.mrf.mxu0
      %v1336 = vadd.f32 %v312, %v1335
      %v1337 = vpop.f32.mrf.mxu0
      %v1338 = vpop.f32.mrf.mxu0
      %v1339 = vadd.f32 %v312, %v1338
      %v1340 = vpop.f32.mrf.mxu0
      %1341 = vmatprep.mubr.bf16.mxu0 0
      %1342 = vmatmul.mubr.bf16.gmra.mxu0 %v821
      %v1343 = vpop.f32.mrf.mxu0
      %v1344 = vadd.f32 %v312, %v1343
      %v1345 = vpop.f32.mrf.mxu0
      %v1346 = vpop.f32.mrf.mxu0
      %v1347 = vadd.f32 %v312, %v1346
      %v1348 = vpop.f32.mrf.mxu0
      %1349 = vmatprep.mubr.bf16.mxu0 0
      %1350 = vmatmul.mubr.bf16.gmra.mxu0 %v824
      %v1351 = vpop.f32.mrf.mxu0
      %v1352 = vadd.f32 %v312, %v1351
      %v1353 = vpop.f32.mrf.mxu0
      %v1354 = vpop.f32.mrf.mxu0
      %v1355 = vadd.f32 %v312, %v1354
      %v1356 = vpop.f32.mrf.mxu0
      %1357 = vmatprep.mubr.bf16.mxu0 0
      %1358 = vmatmul.mubr.bf16.gmra.mxu0 %v827
      %v1359 = vpop.f32.mrf.mxu0
      %v1360 = vadd.f32 %v312, %v1359
      %v1361 = vpop.f32.mrf.mxu0
      %v1362 = vpop.f32.mrf.mxu0
      %v1363 = vadd.f32 %v312, %v1362
      %v1364 = vpop.f32.mrf.mxu0
      %1365 = vmatprep.mubr.bf16.mxu0 0
      %1366 = vmatmul.mubr.bf16.gmra.mxu0 %v830
      %v1367 = vpop.f32.mrf.mxu0
      %v1368 = vadd.f32 %v312, %v1367
      %v1369 = vpop.f32.mrf.mxu0
      %v1370 = vpop.f32.mrf.mxu0
      %v1371 = vadd.f32 %v312, %v1370
      %v1372 = vpop.f32.mrf.mxu0
      %1373 = vmatprep.mubr.bf16.mxu0 0
      %1374 = vmatmul.mubr.bf16.gmra.mxu0 %v833
      %v1375 = vpop.f32.mrf.mxu0
      %v1376 = vadd.f32 %v312, %v1375
      %v1377 = vpop.f32.mrf.mxu0
      %v1378 = vpop.f32.mrf.mxu0
      %v1379 = vadd.f32 %v312, %v1378
      %v1380 = vpop.f32.mrf.mxu0
      %1381 = vmatprep.mubr.bf16.mxu0 0
      %1382 = vmatmul.mubr.bf16.gmra.mxu0 %v836
      %v1383 = vpop.f32.mrf.mxu0
      %v1384 = vadd.f32 %v312, %v1383
      %v1385 = vpop.f32.mrf.mxu0
      %v1386 = vpop.f32.mrf.mxu0
      %v1387 = vadd.f32 %v312, %v1386
      %v1388 = vpop.f32.mrf.mxu0
      %1389 = vdwg.mxu0
      %v1390 = vmax.f32 %v880, 0.0
      %v1391 = vmax.f32 %v883, 0.0
      %v1392 = vmax.f32 %v888, 0.0
      %v1393 = vmax.f32 %v891, 0.0
      %v1394 = vmax.f32 %v896, 0.0
      %v1395 = vmax.f32 %v899, 0.0
      %v1396 = vmax.f32 %v904, 0.0
      %v1397 = vmax.f32 %v907, 0.0
      %v1398 = vmax.f32 %v912, 0.0
      %v1399 = vmax.f32 %v915, 0.0
      %v1400 = vmax.f32 %v920, 0.0
      %v1401 = vmax.f32 %v923, 0.0
      %v1402 = vmax.f32 %v928, 0.0
      %v1403 = vmax.f32 %v931, 0.0
      %v1404 = vmax.f32 %v936, 0.0
      %v1405 = vmax.f32 %v939, 0.0
      %v1406 = vmax.f32 %v944, 0.0
      %v1407 = vmax.f32 %v947, 0.0
      %v1408 = vmax.f32 %v952, 0.0
      %v1409 = vmax.f32 %v955, 0.0
      %v1410 = vmax.f32 %v960, 0.0
      %v1411 = vmax.f32 %v963, 0.0
      %v1412 = vmax.f32 %v968, 0.0
      %v1413 = vmax.f32 %v971, 0.0
      %v1414 = vmax.f32 %v976, 0.0
      %v1415 = vmax.f32 %v979, 0.0
      %v1416 = vmax.f32 %v984, 0.0
      %v1417 = vmax.f32 %v987, 0.0
      %v1418 = vmax.f32 %v992, 0.0
      %v1419 = vmax.f32 %v995, 0.0
      %v1420 = vmax.f32 %v1000, 0.0
      %v1421 = vmax.f32 %v1003, 0.0
      %v1422 = vmax.f32 %v1008, 0.0
      %v1423 = vmax.f32 %v1011, 0.0
      %v1424 = vmax.f32 %v1016, 0.0
      %v1425 = vmax.f32 %v1019, 0.0
      %v1426 = vmax.f32 %v1024, 0.0
      %v1427 = vmax.f32 %v1027, 0.0
      %v1428 = vmax.f32 %v1032, 0.0
      %v1429 = vmax.f32 %v1035, 0.0
      %v1430 = vmax.f32 %v1040, 0.0
      %v1431 = vmax.f32 %v1043, 0.0
      %v1432 = vmax.f32 %v1048, 0.0
      %v1433 = vmax.f32 %v1051, 0.0
      %v1434 = vmax.f32 %v1056, 0.0
      %v1435 = vmax.f32 %v1059, 0.0
      %v1436 = vmax.f32 %v1064, 0.0
      %v1437 = vmax.f32 %v1067, 0.0
      %v1438 = vmax.f32 %v1072, 0.0
      %v1439 = vmax.f32 %v1075, 0.0
      %v1440 = vmax.f32 %v1080, 0.0
      %v1441 = vmax.f32 %v1083, 0.0
      %v1442 = vmax.f32 %v1088, 0.0
      %v1443 = vmax.f32 %v1091, 0.0
      %v1444 = vmax.f32 %v1096, 0.0
      %v1445 = vmax.f32 %v1099, 0.0
      %v1446 = vmax.f32 %v1104, 0.0
      %v1447 = vmax.f32 %v1107, 0.0
      %v1448 = vmax.f32 %v1112, 0.0
      %v1449 = vmax.f32 %v1115, 0.0
      %v1450 = vmax.f32 %v1120, 0.0
      %v1451 = vmax.f32 %v1123, 0.0
      %v1452 = vmax.f32 %v1128, 0.0
      %v1453 = vmax.f32 %v1131, 0.0
      %v1454 = vmax.f32 %v1136, 0.0
      %v1455 = vmax.f32 %v1139, 0.0
      %v1456 = vmax.f32 %v1144, 0.0
      %v1457 = vmax.f32 %v1147, 0.0
      %v1458 = vmax.f32 %v1152, 0.0
      %v1459 = vmax.f32 %v1155, 0.0
      %v1460 = vmax.f32 %v1160, 0.0
      %v1461 = vmax.f32 %v1163, 0.0
      %v1462 = vmax.f32 %v1168, 0.0
      %v1463 = vmax.f32 %v1171, 0.0
      %v1464 = vmax.f32 %v1176, 0.0
      %v1465 = vmax.f32 %v1179, 0.0
      %v1466 = vmax.f32 %v1184, 0.0
      %v1467 = vmax.f32 %v1187, 0.0
      %v1468 = vmax.f32 %v1192, 0.0
      %v1469 = vmax.f32 %v1195, 0.0
      %v1470 = vmax.f32 %v1200, 0.0
      %v1471 = vmax.f32 %v1203, 0.0
      %v1472 = vmax.f32 %v1208, 0.0
      %v1473 = vmax.f32 %v1211, 0.0
      %v1474 = vmax.f32 %v1216, 0.0
      %v1475 = vmax.f32 %v1219, 0.0
      %v1476 = vmax.f32 %v1224, 0.0
      %v1477 = vmax.f32 %v1227, 0.0
      %v1478 = vmax.f32 %v1232, 0.0
      %v1479 = vmax.f32 %v1235, 0.0
      %v1480 = vmax.f32 %v1240, 0.0
      %v1481 = vmax.f32 %v1243, 0.0
      %v1482 = vmax.f32 %v1248, 0.0
      %v1483 = vmax.f32 %v1251, 0.0
      %v1484 = vmax.f32 %v1256, 0.0
      %v1485 = vmax.f32 %v1259, 0.0
      %v1486 = vmax.f32 %v1264, 0.0
      %v1487 = vmax.f32 %v1267, 0.0
      %v1488 = vmax.f32 %v1272, 0.0
      %v1489 = vmax.f32 %v1275, 0.0
      %v1490 = vmax.f32 %v1280, 0.0
      %v1491 = vmax.f32 %v1283, 0.0
      %v1492 = vmax.f32 %v1288, 0.0
      %v1493 = vmax.f32 %v1291, 0.0
      %v1494 = vmax.f32 %v1296, 0.0
      %v1495 = vmax.f32 %v1299, 0.0
      %v1496 = vmax.f32 %v1304, 0.0
      %v1497 = vmax.f32 %v1307, 0.0
      %v1498 = vmax.f32 %v1312, 0.0
      %v1499 = vmax.f32 %v1315, 0.0
      %v1500 = vmax.f32 %v1320, 0.0
      %v1501 = vmax.f32 %v1323, 0.0
      %v1502 = vmax.f32 %v1328, 0.0
      %v1503 = vmax.f32 %v1331, 0.0
      %v1504 = vmax.f32 %v1336, 0.0
      %v1505 = vmax.f32 %v1339, 0.0
      %v1506 = vmax.f32 %v1344, 0.0
      %v1507 = vmax.f32 %v1347, 0.0
      %v1508 = vmax.f32 %v1352, 0.0
      %v1509 = vmax.f32 %v1355, 0.0
      %v1510 = vmax.f32 %v1360, 0.0
      %v1511 = vmax.f32 %v1363, 0.0
      %v1512 = vmax.f32 %v1368, 0.0
      %v1513 = vmax.f32 %v1371, 0.0
      %v1514 = vmax.f32 %v1376, 0.0
      %v1515 = vmax.f32 %v1379, 0.0
      %v1516 = vmax.f32 %v1384, 0.0
      %v1517 = vmax.f32 %v1387, 0.0
      %vm1518 = vcmask 130048
      %1519 = vst.msk [vmem:[%s172] sm:$0xff] %vm1518, %v1390
      %1520 = vst.msk [vmem:[%s172 + $0x8] sm:$0xff] %vm1518, %v1391
      %1521 = vst.msk [vmem:[%s172 + $0x10] sm:$0xff] %vm1518, %v1392
      %1522 = vst.msk [vmem:[%s172 + $0x18] sm:$0xff] %vm1518, %v1393
      %1523 = vst.msk [vmem:[%s172 + $0x20] sm:$0xff] %vm1518, %v1394
      %1524 = vst.msk [vmem:[%s172 + $0x28] sm:$0xff] %vm1518, %v1395
      %1525 = vst.msk [vmem:[%s172 + $0x30] sm:$0xff] %vm1518, %v1396
      %1526 = vst.msk [vmem:[%s172 + $0x38] sm:$0xff] %vm1518, %v1397
      %1527 = vst.msk [vmem:[%s172 + $0x40] sm:$0xff] %vm1518, %v1398
      %1528 = vst.msk [vmem:[%s172 + $0x48] sm:$0xff] %vm1518, %v1399
      %1529 = vst.msk [vmem:[%s172 + $0x50] sm:$0xff] %vm1518, %v1400
      %1530 = vst.msk [vmem:[%s172 + $0x58] sm:$0xff] %vm1518, %v1401
      %1531 = vst.msk [vmem:[%s172 + $0x60] sm:$0xff] %vm1518, %v1402
      %1532 = vst.msk [vmem:[%s172 + $0x68] sm:$0xff] %vm1518, %v1403
      %1533 = vst.msk [vmem:[%s172 + $0x70] sm:$0xff] %vm1518, %v1404
      %1534 = vst.msk [vmem:[%s172 + $0x78] sm:$0xff] %vm1518, %v1405
      %1535 = vst.msk [vmem:[%s172 + $0x80] sm:$0xff] %vm1518, %v1406
      %1536 = vst.msk [vmem:[%s172 + $0x88] sm:$0xff] %vm1518, %v1407
      %1537 = vst.msk [vmem:[%s172 + $0x90] sm:$0xff] %vm1518, %v1408
      %1538 = vst.msk [vmem:[%s172 + $0x98] sm:$0xff] %vm1518, %v1409
      %1539 = vst.msk [vmem:[%s172 + $0xa0] sm:$0xff] %vm1518, %v1410
      %1540 = vst.msk [vmem:[%s172 + $0xa8] sm:$0xff] %vm1518, %v1411
      %1541 = vst.msk [vmem:[%s172 + $0xb0] sm:$0xff] %vm1518, %v1412
      %1542 = vst.msk [vmem:[%s172 + $0xb8] sm:$0xff] %vm1518, %v1413
      %1543 = vst.msk [vmem:[%s172 + $0xc0] sm:$0xff] %vm1518, %v1414
      %1544 = vst.msk [vmem:[%s172 + $0xc8] sm:$0xff] %vm1518, %v1415
      %1545 = vst.msk [vmem:[%s172 + $0xd0] sm:$0xff] %vm1518, %v1416
      %1546 = vst.msk [vmem:[%s172 + $0xd8] sm:$0xff] %vm1518, %v1417
      %1547 = vst.msk [vmem:[%s172 + $0xe0] sm:$0xff] %vm1518, %v1418
      %1548 = vst.msk [vmem:[%s172 + $0xe8] sm:$0xff] %vm1518, %v1419
      %1549 = vst.msk [vmem:[%s172 + $0xf0] sm:$0xff] %vm1518, %v1420
      %1550 = vst.msk [vmem:[%s172 + $0xf8] sm:$0xff] %vm1518, %v1421
      %1551 = vst.msk [vmem:[%s172 + $0x100] sm:$0xff] %vm1518, %v1422
      %1552 = vst.msk [vmem:[%s172 + $0x108] sm:$0xff] %vm1518, %v1423
      %1553 = vst.msk [vmem:[%s172 + $0x110] sm:$0xff] %vm1518, %v1424
      %1554 = vst.msk [vmem:[%s172 + $0x118] sm:$0xff] %vm1518, %v1425
      %1555 = vst.msk [vmem:[%s172 + $0x120] sm:$0xff] %vm1518, %v1426
      %1556 = vst.msk [vmem:[%s172 + $0x128] sm:$0xff] %vm1518, %v1427
      %1557 = vst.msk [vmem:[%s172 + $0x130] sm:$0xff] %vm1518, %v1428
      %1558 = vst.msk [vmem:[%s172 + $0x138] sm:$0xff] %vm1518, %v1429
      %1559 = vst.msk [vmem:[%s172 + $0x140] sm:$0xff] %vm1518, %v1430
      %1560 = vst.msk [vmem:[%s172 + $0x148] sm:$0xff] %vm1518, %v1431
      %1561 = vst.msk [vmem:[%s172 + $0x150] sm:$0xff] %vm1518, %v1432
      %1562 = vst.msk [vmem:[%s172 + $0x158] sm:$0xff] %vm1518, %v1433
      %1563 = vst.msk [vmem:[%s172 + $0x160] sm:$0xff] %vm1518, %v1434
      %1564 = vst.msk [vmem:[%s172 + $0x168] sm:$0xff] %vm1518, %v1435
      %1565 = vst.msk [vmem:[%s172 + $0x170] sm:$0xff] %vm1518, %v1436
      %1566 = vst.msk [vmem:[%s172 + $0x178] sm:$0xff] %vm1518, %v1437
      %1567 = vst.msk [vmem:[%s172 + $0x180] sm:$0xff] %vm1518, %v1438
      %1568 = vst.msk [vmem:[%s172 + $0x188] sm:$0xff] %vm1518, %v1439
      %1569 = vst.msk [vmem:[%s172 + $0x190] sm:$0xff] %vm1518, %v1440
      %1570 = vst.msk [vmem:[%s172 + $0x198] sm:$0xff] %vm1518, %v1441
      %1571 = vst.msk [vmem:[%s172 + $0x1a0] sm:$0xff] %vm1518, %v1442
      %1572 = vst.msk [vmem:[%s172 + $0x1a8] sm:$0xff] %vm1518, %v1443
      %1573 = vst.msk [vmem:[%s172 + $0x1b0] sm:$0xff] %vm1518, %v1444
      %1574 = vst.msk [vmem:[%s172 + $0x1b8] sm:$0xff] %vm1518, %v1445
      %1575 = vst.msk [vmem:[%s172 + $0x1c0] sm:$0xff] %vm1518, %v1446
      %1576 = vst.msk [vmem:[%s172 + $0x1c8] sm:$0xff] %vm1518, %v1447
      %1577 = vst.msk [vmem:[%s172 + $0x1d0] sm:$0xff] %vm1518, %v1448
      %1578 = vst.msk [vmem:[%s172 + $0x1d8] sm:$0xff] %vm1518, %v1449
      %1579 = vst.msk [vmem:[%s172 + $0x1e0] sm:$0xff] %vm1518, %v1450
      %1580 = vst.msk [vmem:[%s172 + $0x1e8] sm:$0xff] %vm1518, %v1451
      %1581 = vst.msk [vmem:[%s172 + $0x1f0] sm:$0xff] %vm1518, %v1452
      %1582 = vst.msk [vmem:[%s172 + $0x1f8] sm:$0xff] %vm1518, %v1453
      %1583 = vst.msk [vmem:[%s172 + $0x200] sm:$0xff] %vm1518, %v1454
      %1584 = vst.msk [vmem:[%s172 + $0x208] sm:$0xff] %vm1518, %v1455
      %1585 = vst.msk [vmem:[%s172 + $0x210] sm:$0xff] %vm1518, %v1456
      %1586 = vst.msk [vmem:[%s172 + $0x218] sm:$0xff] %vm1518, %v1457
      %1587 = vst.msk [vmem:[%s172 + $0x220] sm:$0xff] %vm1518, %v1458
      %1588 = vst.msk [vmem:[%s172 + $0x228] sm:$0xff] %vm1518, %v1459
      %1589 = vst.msk [vmem:[%s172 + $0x230] sm:$0xff] %vm1518, %v1460
      %1590 = vst.msk [vmem:[%s172 + $0x238] sm:$0xff] %vm1518, %v1461
      %1591 = vst.msk [vmem:[%s172 + $0x240] sm:$0xff] %vm1518, %v1462
      %1592 = vst.msk [vmem:[%s172 + $0x248] sm:$0xff] %vm1518, %v1463
      %1593 = vst.msk [vmem:[%s172 + $0x250] sm:$0xff] %vm1518, %v1464
      %1594 = vst.msk [vmem:[%s172 + $0x258] sm:$0xff] %vm1518, %v1465
      %1595 = vst.msk [vmem:[%s172 + $0x260] sm:$0xff] %vm1518, %v1466
      %1596 = vst.msk [vmem:[%s172 + $0x268] sm:$0xff] %vm1518, %v1467
      %1597 = vst.msk [vmem:[%s172 + $0x270] sm:$0xff] %vm1518, %v1468
      %1598 = vst.msk [vmem:[%s172 + $0x278] sm:$0xff] %vm1518, %v1469
      %1599 = vst.msk [vmem:[%s172 + $0x280] sm:$0xff] %vm1518, %v1470
      %1600 = vst.msk [vmem:[%s172 + $0x288] sm:$0xff] %vm1518, %v1471
      %1601 = vst.msk [vmem:[%s172 + $0x290] sm:$0xff] %vm1518, %v1472
      %1602 = vst.msk [vmem:[%s172 + $0x298] sm:$0xff] %vm1518, %v1473
      %1603 = vst.msk [vmem:[%s172 + $0x2a0] sm:$0xff] %vm1518, %v1474
      %1604 = vst.msk [vmem:[%s172 + $0x2a8] sm:$0xff] %vm1518, %v1475
      %1605 = vst.msk [vmem:[%s172 + $0x2b0] sm:$0xff] %vm1518, %v1476
      %1606 = vst.msk [vmem:[%s172 + $0x2b8] sm:$0xff] %vm1518, %v1477
      %1607 = vst.msk [vmem:[%s172 + $0x2c0] sm:$0xff] %vm1518, %v1478
      %1608 = vst.msk [vmem:[%s172 + $0x2c8] sm:$0xff] %vm1518, %v1479
      %1609 = vst.msk [vmem:[%s172 + $0x2d0] sm:$0xff] %vm1518, %v1480
      %1610 = vst.msk [vmem:[%s172 + $0x2d8] sm:$0xff] %vm1518, %v1481
      %1611 = vst.msk [vmem:[%s172 + $0x2e0] sm:$0xff] %vm1518, %v1482
      %1612 = vst.msk [vmem:[%s172 + $0x2e8] sm:$0xff] %vm1518, %v1483
      %1613 = vst.msk [vmem:[%s172 + $0x2f0] sm:$0xff] %vm1518, %v1484
      %1614 = vst.msk [vmem:[%s172 + $0x2f8] sm:$0xff] %vm1518, %v1485
      %1615 = vst.msk [vmem:[%s172 + $0x300] sm:$0xff] %vm1518, %v1486
      %1616 = vst.msk [vmem:[%s172 + $0x308] sm:$0xff] %vm1518, %v1487
      %1617 = vst.msk [vmem:[%s172 + $0x310] sm:$0xff] %vm1518, %v1488
      %1618 = vst.msk [vmem:[%s172 + $0x318] sm:$0xff] %vm1518, %v1489
      %1619 = vst.msk [vmem:[%s172 + $0x320] sm:$0xff] %vm1518, %v1490
      %1620 = vst.msk [vmem:[%s172 + $0x328] sm:$0xff] %vm1518, %v1491
      %1621 = vst.msk [vmem:[%s172 + $0x330] sm:$0xff] %vm1518, %v1492
      %1622 = vst.msk [vmem:[%s172 + $0x338] sm:$0xff] %vm1518, %v1493
      %1623 = vst.msk [vmem:[%s172 + $0x340] sm:$0xff] %vm1518, %v1494
      %1624 = vst.msk [vmem:[%s172 + $0x348] sm:$0xff] %vm1518, %v1495
      %1625 = vst.msk [vmem:[%s172 + $0x350] sm:$0xff] %vm1518, %v1496
      %1626 = vst.msk [vmem:[%s172 + $0x358] sm:$0xff] %vm1518, %v1497
      %1627 = vst.msk [vmem:[%s172 + $0x360] sm:$0xff] %vm1518, %v1498
      %1628 = vst.msk [vmem:[%s172 + $0x368] sm:$0xff] %vm1518, %v1499
      %1629 = vst.msk [vmem:[%s172 + $0x370] sm:$0xff] %vm1518, %v1500
      %1630 = vst.msk [vmem:[%s172 + $0x378] sm:$0xff] %vm1518, %v1501
      %1631 = vst.msk [vmem:[%s172 + $0x380] sm:$0xff] %vm1518, %v1502
      %1632 = vst.msk [vmem:[%s172 + $0x388] sm:$0xff] %vm1518, %v1503
      %1633 = vst.msk [vmem:[%s172 + $0x390] sm:$0xff] %vm1518, %v1504
      %1634 = vst.msk [vmem:[%s172 + $0x398] sm:$0xff] %vm1518, %v1505
      %1635 = vst.msk [vmem:[%s172 + $0x3a0] sm:$0xff] %vm1518, %v1506
      %1636 = vst.msk [vmem:[%s172 + $0x3a8] sm:$0xff] %vm1518, %v1507
      %1637 = vst.msk [vmem:[%s172 + $0x3b0] sm:$0xff] %vm1518, %v1508
      %1638 = vst.msk [vmem:[%s172 + $0x3b8] sm:$0xff] %vm1518, %v1509
      %1639 = vst.msk [vmem:[%s172 + $0x3c0] sm:$0xff] %vm1518, %v1510
      %1640 = vst.msk [vmem:[%s172 + $0x3c8] sm:$0xff] %vm1518, %v1511
      %1641 = vst.msk [vmem:[%s172 + $0x3d0] sm:$0xff] %vm1518, %v1512
      %1642 = vst.msk [vmem:[%s172 + $0x3d8] sm:$0xff] %vm1518, %v1513
      %1643 = vst.msk [vmem:[%s172 + $0x3e0] sm:$0xff] %vm1518, %v1514
      %1644 = vst.msk [vmem:[%s172 + $0x3e8] sm:$0xff] %vm1518, %v1515
      %1645 = vst.msk [vmem:[%s172 + $0x3f0] sm:$0xff] %vm1518, %v1516
      %1646 = vst.msk [vmem:[%s172 + $0x3f8] sm:$0xff] %vm1518, %v1517
      %s1647 = smul.u32 128, %s14
      %p1648 = scmp.lt.s32.totalorder %s1647, 255
      %s1649 = scalar_select %p1648, %s1647, 255
      %s1650 = smul.addr %s1649, 8
      %s1651 = scalar_lea.vmem %s3, %s1650
      // Predicated region
      $region33: #{unet_forward.15} parent=31 // pred_check
        %p1652 = pneg %p100
      $region34: #{unet_forward.15} parent=31 // pred_check_branch
        %1654 = sbr.rel (%p1652) target = $region36
      $region35: #{unet_forward.15} parent=31 // pred_region
        %s1655 = smul.u32 128, %s14
      $region36: #{unet_forward.15} parent=31 // pred_fallthru
        _
    $region32: #{unet_forward.15} parent=5 // pred_fallthru
      _
    %p1656 = scmp.le.s32.totalorder 2, %s9
    // Predicated region
    $region37: #{unet_forward.15} parent=5 // pred_check
      %p1657 = pneg %p1656
    $region38: #{unet_forward.15} parent=5 // pred_check_branch
      %1659 = sbr.rel (%p1657) target = $region40
    $region39: #{unet_forward.15} parent=5 // pred_region
      %s1660 = ssub.s32 %s9, 2
      // Predicated region
      $region41: #{unet_forward.15} parent=39 // pred_check
        %p1661 = pneg %p106
      $region42: #{unet_forward.15} parent=39 // pred_check_branch
        %1663 = sbr.rel (%p1661) target = $region44
      $region43: #{unet_forward.15} parent=39 // pred_region
        %s1664 = smul.u32 128, %s15
        %p1665 = scmp.lt.s32.totalorder %s1664, 255
        %s1666 = scalar_select %p1665, %s1664, 255
        %s1667 = smul.addr %s1666, 8
        %s1668 = scalar_lea.vmem %s3, %s1667
      $region44: #{unet_forward.15} parent=39 // pred_fallthru
        _
    $region40: #{unet_forward.15} parent=5 // pred_fallthru
      _
  $region6: #{unet_forward.15} parent=0 // loop_footer
    %s13 = sadd.s32 1, %s9
  $region7: #{unet_forward.15} parent=0 // loop_footer_branch
    %8 = sbr.rel target = $region3
  $region8: #{unet_forward.15} parent=0 // loop_exit
    _

// kernel: unet_forward.16
$region0: #{unet_forward.16}
  #allocation0 [shape = 'u32[]', space=smem, size = 0x4, offset = 0x4, fixed_abs, tag = 'smem constant byte address 0x4 - core index']
  #allocation1 [shape = 'u32[144,128]{1,0:T(1,128)}', space=vmem, size = 0x12000, scoped, tag = 'internal scratch']
  %s0 = inlined_call_operand.vmem [shape: f32[32,2,16,32], index: 0, kind: input, shape index: {}]
  %s1 = inlined_call_operand.vmem [shape: f32[32,16,16], index: 1, kind: output, shape index: {}]
  %s2 = sld [smem:[#allocation0]]
  $region14: #{unet_forward.16} parent=0
    _
  %s4 = ssub.s32 1, %s2
  %s5 = scalar_select 0, %s4, %s2
  // Predicated region
  $region2: #{unet_forward.16} parent=0 // pred_check
    _
  $region3: #{unet_forward.16} parent=0 // pred_check_branch
    %7 = sbr.rel (0) target = $region5
  $region4: #{unet_forward.16} parent=0 // pred_region
    _
  $region5: #{unet_forward.16} parent=0 // pred_fallthru
    _
  %v8 = vld [vmem:[%s0] sm:$0xff]
  %v9 = vld [vmem:[%s0 + $0x8] sm:$0xff]
  %v10 = vld [vmem:[%s0 + $0x10] sm:$0xff]
  %v11 = vld [vmem:[%s0 + $0x18] sm:$0xff]
  %v12 = vld [vmem:[%s0 + $0x20] sm:$0xff]
  %v13 = vld [vmem:[%s0 + $0x28] sm:$0xff]
  %v14 = vld [vmem:[%s0 + $0x30] sm:$0xff]
  %v15 = vld [vmem:[%s0 + $0x38] sm:$0xff]
  %v16 = vld [vmem:[%s0 + $0x40] sm:$0xff]
  %v17 = vld [vmem:[%s0 + $0x48] sm:$0xff]
  %v18 = vld [vmem:[%s0 + $0x50] sm:$0xff]
  %v19 = vld [vmem:[%s0 + $0x58] sm:$0xff]
  %v20 = vld [vmem:[%s0 + $0x60] sm:$0xff]
  %v21 = vld [vmem:[%s0 + $0x68] sm:$0xff]
  %v22 = vld [vmem:[%s0 + $0x70] sm:$0xff]
  %v23 = vld [vmem:[%s0 + $0x78] sm:$0xff]
  %v24 = vld [vmem:[%s0 + $0x80] sm:$0xff]
  %v25 = vld [vmem:[%s0 + $0x88] sm:$0xff]
  %v26 = vld [vmem:[%s0 + $0x90] sm:$0xff]
  %v27 = vld [vmem:[%s0 + $0x98] sm:$0xff]
  %v28 = vld [vmem:[%s0 + $0xa0] sm:$0xff]
  %v29 = vld [vmem:[%s0 + $0xa8] sm:$0xff]
  %v30 = vld [vmem:[%s0 + $0xb0] sm:$0xff]
  %v31 = vld [vmem:[%s0 + $0xb8] sm:$0xff]
  %v32 = vld [vmem:[%s0 + $0xc0] sm:$0xff]
  %v33 = vld [vmem:[%s0 + $0xc8] sm:$0xff]
  %v34 = vld [vmem:[%s0 + $0xd0] sm:$0xff]
  %v35 = vld [vmem:[%s0 + $0xd8] sm:$0xff]
  %v36 = vld [vmem:[%s0 + $0xe0] sm:$0xff]
  %v37 = vld [vmem:[%s0 + $0xe8] sm:$0xff]
  %v38 = vld [vmem:[%s0 + $0xf0] sm:$0xff]
  %v39 = vld [vmem:[%s0 + $0xf8] sm:$0xff]
  %v40 = vld [vmem:[%s0 + $0x100] sm:$0xff]
  %v41 = vld [vmem:[%s0 + $0x108] sm:$0xff]
  %v42 = vld [vmem:[%s0 + $0x110] sm:$0xff]
  %v43 = vld [vmem:[%s0 + $0x118] sm:$0xff]
  %v44 = vld [vmem:[%s0 + $0x120] sm:$0xff]
  %v45 = vld [vmem:[%s0 + $0x128] sm:$0xff]
  %v46 = vld [vmem:[%s0 + $0x130] sm:$0xff]
  %v47 = vld [vmem:[%s0 + $0x138] sm:$0xff]
  %v48 = vld [vmem:[%s0 + $0x140] sm:$0xff]
  %v49 = vld [vmem:[%s0 + $0x148] sm:$0xff]
  %v50 = vld [vmem:[%s0 + $0x150] sm:$0xff]
  %v51 = vld [vmem:[%s0 + $0x158] sm:$0xff]
  %v52 = vld [vmem:[%s0 + $0x160] sm:$0xff]
  %v53 = vld [vmem:[%s0 + $0x168] sm:$0xff]
  %v54 = vld [vmem:[%s0 + $0x170] sm:$0xff]
  %v55 = vld [vmem:[%s0 + $0x178] sm:$0xff]
  %v56 = vld [vmem:[%s0 + $0x180] sm:$0xff]
  %v57 = vld [vmem:[%s0 + $0x188] sm:$0xff]
  %v58 = vld [vmem:[%s0 + $0x190] sm:$0xff]
  %v59 = vld [vmem:[%s0 + $0x198] sm:$0xff]
  %v60 = vld [vmem:[%s0 + $0x1a0] sm:$0xff]
  %v61 = vld [vmem:[%s0 + $0x1a8] sm:$0xff]
  %v62 = vld [vmem:[%s0 + $0x1b0] sm:$0xff]
  %v63 = vld [vmem:[%s0 + $0x1b8] sm:$0xff]
  %v64 = vld [vmem:[%s0 + $0x1c0] sm:$0xff]
  %v65 = vld [vmem:[%s0 + $0x1c8] sm:$0xff]
  %v66 = vld [vmem:[%s0 + $0x1d0] sm:$0xff]
  %v67 = vld [vmem:[%s0 + $0x1d8] sm:$0xff]
  %v68 = vld [vmem:[%s0 + $0x1e0] sm:$0xff]
  %v69 = vld [vmem:[%s0 + $0x1e8] sm:$0xff]
  %v70 = vld [vmem:[%s0 + $0x1f0] sm:$0xff]
  %v71 = vld [vmem:[%s0 + $0x1f8] sm:$0xff]
  %v72 = vld [vmem:[%s0 + $0x200] sm:$0xff]
  %v73 = vld [vmem:[%s0 + $0x208] sm:$0xff]
  %v74 = vld [vmem:[%s0 + $0x210] sm:$0xff]
  %v75 = vld [vmem:[%s0 + $0x218] sm:$0xff]
  %v76 = vld [vmem:[%s0 + $0x220] sm:$0xff]
  %v77 = vld [vmem:[%s0 + $0x228] sm:$0xff]
  %v78 = vld [vmem:[%s0 + $0x230] sm:$0xff]
  %v79 = vld [vmem:[%s0 + $0x238] sm:$0xff]
  %v80 = vld [vmem:[%s0 + $0x240] sm:$0xff]
  %v81 = vld [vmem:[%s0 + $0x248] sm:$0xff]
  %v82 = vld [vmem:[%s0 + $0x250] sm:$0xff]
  %v83 = vld [vmem:[%s0 + $0x258] sm:$0xff]
  %v84 = vld [vmem:[%s0 + $0x260] sm:$0xff]
  %v85 = vld [vmem:[%s0 + $0x268] sm:$0xff]
  %v86 = vld [vmem:[%s0 + $0x270] sm:$0xff]
  %v87 = vld [vmem:[%s0 + $0x278] sm:$0xff]
  %v88 = vld [vmem:[%s0 + $0x280] sm:$0xff]
  %v89 = vld [vmem:[%s0 + $0x288] sm:$0xff]
  %v90 = vld [vmem:[%s0 + $0x290] sm:$0xff]
  %v91 = vld [vmem:[%s0 + $0x298] sm:$0xff]
  %v92 = vld [vmem:[%s0 + $0x2a0] sm:$0xff]
  %v93 = vld [vmem:[%s0 + $0x2a8] sm:$0xff]
  %v94 = vld [vmem:[%s0 + $0x2b0] sm:$0xff]
  %v95 = vld [vmem:[%s0 + $0x2b8] sm:$0xff]
  %v96 = vld [vmem:[%s0 + $0x2c0] sm:$0xff]
  %v97 = vld [vmem:[%s0 + $0x2c8] sm:$0xff]
  %v98 = vld [vmem:[%s0 + $0x2d0] sm:$0xff]
  %v99 = vld [vmem:[%s0 + $0x2d8] sm:$0xff]
  %v100 = vld [vmem:[%s0 + $0x2e0] sm:$0xff]
  %v101 = vld [vmem:[%s0 + $0x2e8] sm:$0xff]
  %v102 = vld [vmem:[%s0 + $0x2f0] sm:$0xff]
  %v103 = vld [vmem:[%s0 + $0x2f8] sm:$0xff]
  %v104 = vld [vmem:[%s0 + $0x300] sm:$0xff]
  %v105 = vld [vmem:[%s0 + $0x308] sm:$0xff]
  %v106 = vld [vmem:[%s0 + $0x310] sm:$0xff]
  %v107 = vld [vmem:[%s0 + $0x318] sm:$0xff]
  %v108 = vld [vmem:[%s0 + $0x320] sm:$0xff]
  %v109 = vld [vmem:[%s0 + $0x328] sm:$0xff]
  %v110 = vld [vmem:[%s0 + $0x330] sm:$0xff]
  %v111 = vld [vmem:[%s0 + $0x338] sm:$0xff]
  %v112 = vld [vmem:[%s0 + $0x340] sm:$0xff]
  %v113 = vld [vmem:[%s0 + $0x348] sm:$0xff]
  %v114 = vld [vmem:[%s0 + $0x350] sm:$0xff]
  %v115 = vld [vmem:[%s0 + $0x358] sm:$0xff]
  %v116 = vld [vmem:[%s0 + $0x360] sm:$0xff]
  %v117 = vld [vmem:[%s0 + $0x368] sm:$0xff]
  %v118 = vld [vmem:[%s0 + $0x370] sm:$0xff]
  %v119 = vld [vmem:[%s0 + $0x378] sm:$0xff]
  %v120 = vld [vmem:[%s0 + $0x380] sm:$0xff]
  %v121 = vld [vmem:[%s0 + $0x388] sm:$0xff]
  %v122 = vld [vmem:[%s0 + $0x390] sm:$0xff]
  %v123 = vld [vmem:[%s0 + $0x398] sm:$0xff]
  %v124 = vld [vmem:[%s0 + $0x3a0] sm:$0xff]
  %v125 = vld [vmem:[%s0 + $0x3a8] sm:$0xff]
  %v126 = vld [vmem:[%s0 + $0x3b0] sm:$0xff]
  %v127 = vld [vmem:[%s0 + $0x3b8] sm:$0xff]
  %v128 = vld [vmem:[%s0 + $0x3c0] sm:$0xff]
  %v129 = vld [vmem:[%s0 + $0x3c8] sm:$0xff]
  %v130 = vld [vmem:[%s0 + $0x3d0] sm:$0xff]
  %v131 = vld [vmem:[%s0 + $0x3d8] sm:$0xff]
  %v132 = vld [vmem:[%s0 + $0x3e0] sm:$0xff]
  %v133 = vld [vmem:[%s0 + $0x3e8] sm:$0xff]
  %v134 = vld [vmem:[%s0 + $0x3f0] sm:$0xff]
  %v135 = vld [vmem:[%s0 + $0x3f8] sm:$0xff]
  %200 = vrot.lane.b32.xlu0 %v8, 112
  %v201 = vpop.permute.xlu0 %200
  %202 = vrot.lane.b32.xlu0 %v9, 112
  %v203 = vpop.permute.xlu0 %202
  %204 = vrot.lane.b32.xlu0 %v12, 112
  %v205 = vpop.permute.xlu0 %204
  %206 = vrot.lane.b32.xlu0 %v13, 112
  %v207 = vpop.permute.xlu0 %206
  %208 = vrot.lane.b32.xlu0 %v16, 112
  %v209 = vpop.permute.xlu0 %208
  %210 = vrot.lane.b32.xlu0 %v17, 112
  %v211 = vpop.permute.xlu0 %210
  %212 = vrot.lane.b32.xlu0 %v20, 112
  %v213 = vpop.permute.xlu0 %212
  %214 = vrot.lane.b32.xlu0 %v21, 112
  %v215 = vpop.permute.xlu0 %214
  %216 = vrot.lane.b32.xlu0 %v24, 112
  %v217 = vpop.permute.xlu0 %216
  %218 = vrot.lane.b32.xlu0 %v25, 112
  %v219 = vpop.permute.xlu0 %218
  %220 = vrot.lane.b32.xlu0 %v28, 112
  %v221 = vpop.permute.xlu0 %220
  %222 = vrot.lane.b32.xlu0 %v29, 112
  %v223 = vpop.permute.xlu0 %222
  %224 = vrot.lane.b32.xlu0 %v32, 112
  %v225 = vpop.permute.xlu0 %224
  %226 = vrot.lane.b32.xlu0 %v33, 112
  %v227 = vpop.permute.xlu0 %226
  %228 = vrot.lane.b32.xlu0 %v36, 112
  %v229 = vpop.permute.xlu0 %228
  %230 = vrot.lane.b32.xlu0 %v37, 112
  %v231 = vpop.permute.xlu0 %230
  %232 = vrot.lane.b32.xlu0 %v40, 112
  %v233 = vpop.permute.xlu0 %232
  %234 = vrot.lane.b32.xlu0 %v41, 112
  %v235 = vpop.permute.xlu0 %234
  %236 = vrot.lane.b32.xlu0 %v44, 112
  %v237 = vpop.permute.xlu0 %236
  %238 = vrot.lane.b32.xlu0 %v45, 112
  %v239 = vpop.permute.xlu0 %238
  %240 = vrot.lane.b32.xlu0 %v48, 112
  %v241 = vpop.permute.xlu0 %240
  %242 = vrot.lane.b32.xlu0 %v49, 112
  %v243 = vpop.permute.xlu0 %242
  %244 = vrot.lane.b32.xlu0 %v52, 112
  %v245 = vpop.permute.xlu0 %244
  %246 = vrot.lane.b32.xlu0 %v53, 112
  %v247 = vpop.permute.xlu0 %246
  %248 = vrot.lane.b32.xlu0 %v56, 112
  %v249 = vpop.permute.xlu0 %248
  %250 = vrot.lane.b32.xlu0 %v57, 112
  %v251 = vpop.permute.xlu0 %250
  %252 = vrot.lane.b32.xlu0 %v60, 112
  %v253 = vpop.permute.xlu0 %252
  %254 = vrot.lane.b32.xlu0 %v61, 112
  %v255 = vpop.permute.xlu0 %254
  %256 = vrot.lane.b32.xlu0 %v64, 112
  %v257 = vpop.permute.xlu0 %256
  %258 = vrot.lane.b32.xlu0 %v65, 112
  %v259 = vpop.permute.xlu0 %258
  %260 = vrot.lane.b32.xlu0 %v68, 112
  %v261 = vpop.permute.xlu0 %260
  %262 = vrot.lane.b32.xlu0 %v69, 112
  %v263 = vpop.permute.xlu0 %262
  %264 = vrot.lane.b32.xlu0 %v72, 112
  %v265 = vpop.permute.xlu0 %264
  %266 = vrot.lane.b32.xlu0 %v73, 112
  %v267 = vpop.permute.xlu0 %266
  %268 = vrot.lane.b32.xlu0 %v76, 112
  %v269 = vpop.permute.xlu0 %268
  %270 = vrot.lane.b32.xlu0 %v77, 112
  %v271 = vpop.permute.xlu0 %270
  %272 = vrot.lane.b32.xlu0 %v80, 112
  %v273 = vpop.permute.xlu0 %272
  %274 = vrot.lane.b32.xlu0 %v81, 112
  %v275 = vpop.permute.xlu0 %274
  %276 = vrot.lane.b32.xlu0 %v84, 112
  %v277 = vpop.permute.xlu0 %276
  %278 = vrot.lane.b32.xlu0 %v85, 112
  %v279 = vpop.permute.xlu0 %278
  %280 = vrot.lane.b32.xlu0 %v88, 112
  %v281 = vpop.permute.xlu0 %280
  %282 = vrot.lane.b32.xlu0 %v89, 112
  %v283 = vpop.permute.xlu0 %282
  %284 = vrot.lane.b32.xlu0 %v92, 112
  %v285 = vpop.permute.xlu0 %284
  %286 = vrot.lane.b32.xlu0 %v93, 112
  %v287 = vpop.permute.xlu0 %286
  %288 = vrot.lane.b32.xlu0 %v96, 112
  %v289 = vpop.permute.xlu0 %288
  %290 = vrot.lane.b32.xlu0 %v97, 112
  %v291 = vpop.permute.xlu0 %290
  %292 = vrot.lane.b32.xlu0 %v100, 112
  %v293 = vpop.permute.xlu0 %292
  %294 = vrot.lane.b32.xlu0 %v101, 112
  %v295 = vpop.permute.xlu0 %294
  %296 = vrot.lane.b32.xlu0 %v104, 112
  %v297 = vpop.permute.xlu0 %296
  %298 = vrot.lane.b32.xlu0 %v105, 112
  %v299 = vpop.permute.xlu0 %298
  %300 = vrot.lane.b32.xlu0 %v108, 112
  %v301 = vpop.permute.xlu0 %300
  %302 = vrot.lane.b32.xlu0 %v109, 112
  %v303 = vpop.permute.xlu0 %302
  %304 = vrot.lane.b32.xlu0 %v112, 112
  %v305 = vpop.permute.xlu0 %304
  %306 = vrot.lane.b32.xlu0 %v113, 112
  %v307 = vpop.permute.xlu0 %306
  %308 = vrot.lane.b32.xlu0 %v116, 112
  %v309 = vpop.permute.xlu0 %308
  %310 = vrot.lane.b32.xlu0 %v117, 112
  %v311 = vpop.permute.xlu0 %310
  %312 = vrot.lane.b32.xlu0 %v120, 112
  %v313 = vpop.permute.xlu0 %312
  %314 = vrot.lane.b32.xlu0 %v121, 112
  %v315 = vpop.permute.xlu0 %314
  %316 = vrot.lane.b32.xlu0 %v124, 112
  %v317 = vpop.permute.xlu0 %316
  %318 = vrot.lane.b32.xlu0 %v125, 112
  %v319 = vpop.permute.xlu0 %318
  %320 = vrot.lane.b32.xlu0 %v128, 112
  %v321 = vpop.permute.xlu0 %320
  %322 = vrot.lane.b32.xlu0 %v129, 112
  %v323 = vpop.permute.xlu0 %322
  %324 = vrot.lane.b32.xlu0 %v132, 112
  %v325 = vpop.permute.xlu0 %324
  %326 = vrot.lane.b32.xlu0 %v133, 112
  %v327 = vpop.permute.xlu0 %326
  %v392 = vmax.f32 %v8, %v201
  %v393 = vmax.f32 %v9, %v203
  %v394 = vmax.f32 %v12, %v205
  %v395 = vmax.f32 %v13, %v207
  %v396 = vmax.f32 %v16, %v209
  %v397 = vmax.f32 %v17, %v211
  %v398 = vmax.f32 %v20, %v213
  %v399 = vmax.f32 %v21, %v215
  %v400 = vmax.f32 %v24, %v217
  %v401 = vmax.f32 %v25, %v219
  %v402 = vmax.f32 %v28, %v221
  %v403 = vmax.f32 %v29, %v223
  %v404 = vmax.f32 %v32, %v225
  %v405 = vmax.f32 %v33, %v227
  %v406 = vmax.f32 %v36, %v229
  %v407 = vmax.f32 %v37, %v231
  %v408 = vmax.f32 %v40, %v233
  %v409 = vmax.f32 %v41, %v235
  %v410 = vmax.f32 %v44, %v237
  %v411 = vmax.f32 %v45, %v239
  %v412 = vmax.f32 %v48, %v241
  %v413 = vmax.f32 %v49, %v243
  %v414 = vmax.f32 %v52, %v245
  %v415 = vmax.f32 %v53, %v247
  %v416 = vmax.f32 %v56, %v249
  %v417 = vmax.f32 %v57, %v251
  %v418 = vmax.f32 %v60, %v253
  %v419 = vmax.f32 %v61, %v255
  %v420 = vmax.f32 %v64, %v257
  %v421 = vmax.f32 %v65, %v259
  %v422 = vmax.f32 %v68, %v261
  %v423 = vmax.f32 %v69, %v263
  %v424 = vmax.f32 %v72, %v265
  %v425 = vmax.f32 %v73, %v267
  %v426 = vmax.f32 %v76, %v269
  %v427 = vmax.f32 %v77, %v271
  %v428 = vmax.f32 %v80, %v273
  %v429 = vmax.f32 %v81, %v275
  %v430 = vmax.f32 %v84, %v277
  %v431 = vmax.f32 %v85, %v279
  %v432 = vmax.f32 %v88, %v281
  %v433 = vmax.f32 %v89, %v283
  %v434 = vmax.f32 %v92, %v285
  %v435 = vmax.f32 %v93, %v287
  %v436 = vmax.f32 %v96, %v289
  %v437 = vmax.f32 %v97, %v291
  %v438 = vmax.f32 %v100, %v293
  %v439 = vmax.f32 %v101, %v295
  %v440 = vmax.f32 %v104, %v297
  %v441 = vmax.f32 %v105, %v299
  %v442 = vmax.f32 %v108, %v301
  %v443 = vmax.f32 %v109, %v303
  %v444 = vmax.f32 %v112, %v305
  %v445 = vmax.f32 %v113, %v307
  %v446 = vmax.f32 %v116, %v309
  %v447 = vmax.f32 %v117, %v311
  %v448 = vmax.f32 %v120, %v313
  %v449 = vmax.f32 %v121, %v315
  %v450 = vmax.f32 %v124, %v317
  %v451 = vmax.f32 %v125, %v319
  %v452 = vmax.f32 %v128, %v321
  %v453 = vmax.f32 %v129, %v323
  %v454 = vmax.f32 %v132, %v325
  %v455 = vmax.f32 %v133, %v327
  %v456 = vmax.f32 %v392, %v10
  %v457 = vmax.f32 %v393, %v11
  %v458 = vmax.f32 %v394, %v14
  %v459 = vmax.f32 %v395, %v15
  %v460 = vmax.f32 %v396, %v18
  %v461 = vmax.f32 %v397, %v19
  %v462 = vmax.f32 %v398, %v22
  %v463 = vmax.f32 %v399, %v23
  %v464 = vmax.f32 %v400, %v26
  %v465 = vmax.f32 %v401, %v27
  %v466 = vmax.f32 %v402, %v30
  %v467 = vmax.f32 %v403, %v31
  %v468 = vmax.f32 %v404, %v34
  %v469 = vmax.f32 %v405, %v35
  %v470 = vmax.f32 %v406, %v38
  %v471 = vmax.f32 %v407, %v39
  %v472 = vmax.f32 %v408, %v42
  %v473 = vmax.f32 %v409, %v43
  %v474 = vmax.f32 %v410, %v46
  %v475 = vmax.f32 %v411, %v47
  %v476 = vmax.f32 %v412, %v50
  %v477 = vmax.f32 %v413, %v51
  %v478 = vmax.f32 %v414, %v54
  %v479 = vmax.f32 %v415, %v55
  %v480 = vmax.f32 %v416, %v58
  %v481 = vmax.f32 %v417, %v59
  %v482 = vmax.f32 %v418, %v62
  %v483 = vmax.f32 %v419, %v63
  %v484 = vmax.f32 %v420, %v66
  %v485 = vmax.f32 %v421, %v67
  %v486 = vmax.f32 %v422, %v70
  %v487 = vmax.f32 %v423, %v71
  %v488 = vmax.f32 %v424, %v74
  %v489 = vmax.f32 %v425, %v75
  %v490 = vmax.f32 %v426, %v78
  %v491 = vmax.f32 %v427, %v79
  %v492 = vmax.f32 %v428, %v82
  %v493 = vmax.f32 %v429, %v83
  %v494 = vmax.f32 %v430, %v86
  %v495 = vmax.f32 %v431, %v87
  %v496 = vmax.f32 %v432, %v90
  %v497 = vmax.f32 %v433, %v91
  %v498 = vmax.f32 %v434, %v94
  %v499 = vmax.f32 %v435, %v95
  %v500 = vmax.f32 %v436, %v98
  %v501 = vmax.f32 %v437, %v99
  %v502 = vmax.f32 %v438, %v102
  %v503 = vmax.f32 %v439, %v103
  %v504 = vmax.f32 %v440, %v106
  %v505 = vmax.f32 %v441, %v107
  %v506 = vmax.f32 %v442, %v110
  %v507 = vmax.f32 %v443, %v111
  %v508 = vmax.f32 %v444, %v114
  %v509 = vmax.f32 %v445, %v115
  %v510 = vmax.f32 %v446, %v118
  %v511 = vmax.f32 %v447, %v119
  %v512 = vmax.f32 %v448, %v122
  %v513 = vmax.f32 %v449, %v123
  %v514 = vmax.f32 %v450, %v126
  %v515 = vmax.f32 %v451, %v127
  %v516 = vmax.f32 %v452, %v130
  %v517 = vmax.f32 %v453, %v131
  %v518 = vmax.f32 %v454, %v134
  %v519 = vmax.f32 %v455, %v135
  %584 = vrot.lane.b32.xlu0 %v10, 112
  %v585 = vpop.permute.xlu0 %584
  %586 = vrot.lane.b32.xlu0 %v11, 112
  %v587 = vpop.permute.xlu0 %586
  %588 = vrot.lane.b32.xlu0 %v14, 112
  %v589 = vpop.permute.xlu0 %588
  %590 = vrot.lane.b32.xlu0 %v15, 112
  %v591 = vpop.permute.xlu0 %590
  %592 = vrot.lane.b32.xlu0 %v18, 112
  %v593 = vpop.permute.xlu0 %592
  %594 = vrot.lane.b32.xlu0 %v19, 112
  %v595 = vpop.permute.xlu0 %594
  %596 = vrot.lane.b32.xlu0 %v22, 112
  %v597 = vpop.permute.xlu0 %596
  %598 = vrot.lane.b32.xlu0 %v23, 112
  %v599 = vpop.permute.xlu0 %598
  %600 = vrot.lane.b32.xlu0 %v26, 112
  %v601 = vpop.permute.xlu0 %600
  %602 = vrot.lane.b32.xlu0 %v27, 112
  %v603 = vpop.permute.xlu0 %602
  %604 = vrot.lane.b32.xlu0 %v30, 112
  %v605 = vpop.permute.xlu0 %604
  %606 = vrot.lane.b32.xlu0 %v31, 112
  %v607 = vpop.permute.xlu0 %606
  %608 = vrot.lane.b32.xlu0 %v34, 112
  %v609 = vpop.permute.xlu0 %608
  %610 = vrot.lane.b32.xlu0 %v35, 112
  %v611 = vpop.permute.xlu0 %610
  %612 = vrot.lane.b32.xlu0 %v38, 112
  %v613 = vpop.permute.xlu0 %612
  %614 = vrot.lane.b32.xlu0 %v39, 112
  %v615 = vpop.permute.xlu0 %614
  %616 = vrot.lane.b32.xlu0 %v42, 112
  %v617 = vpop.permute.xlu0 %616
  %618 = vrot.lane.b32.xlu0 %v43, 112
  %v619 = vpop.permute.xlu0 %618
  %620 = vrot.lane.b32.xlu0 %v46, 112
  %v621 = vpop.permute.xlu0 %620
  %622 = vrot.lane.b32.xlu0 %v47, 112
  %v623 = vpop.permute.xlu0 %622
  %624 = vrot.lane.b32.xlu0 %v50, 112
  %v625 = vpop.permute.xlu0 %624
  %626 = vrot.lane.b32.xlu0 %v51, 112
  %v627 = vpop.permute.xlu0 %626
  %628 = vrot.lane.b32.xlu0 %v54, 112
  %v629 = vpop.permute.xlu0 %628
  %630 = vrot.lane.b32.xlu0 %v55, 112
  %v631 = vpop.permute.xlu0 %630
  %632 = vrot.lane.b32.xlu0 %v58, 112
  %v633 = vpop.permute.xlu0 %632
  %634 = vrot.lane.b32.xlu0 %v59, 112
  %v635 = vpop.permute.xlu0 %634
  %636 = vrot.lane.b32.xlu0 %v62, 112
  %v637 = vpop.permute.xlu0 %636
  %638 = vrot.lane.b32.xlu0 %v63, 112
  %v639 = vpop.permute.xlu0 %638
  %640 = vrot.lane.b32.xlu0 %v66, 112
  %v641 = vpop.permute.xlu0 %640
  %642 = vrot.lane.b32.xlu0 %v67, 112
  %v643 = vpop.permute.xlu0 %642
  %644 = vrot.lane.b32.xlu0 %v70, 112
  %v645 = vpop.permute.xlu0 %644
  %646 = vrot.lane.b32.xlu0 %v71, 112
  %v647 = vpop.permute.xlu0 %646
  %648 = vrot.lane.b32.xlu0 %v74, 112
  %v649 = vpop.permute.xlu0 %648
  %650 = vrot.lane.b32.xlu0 %v75, 112
  %v651 = vpop.permute.xlu0 %650
  %652 = vrot.lane.b32.xlu0 %v78, 112
  %v653 = vpop.permute.xlu0 %652
  %654 = vrot.lane.b32.xlu0 %v79, 112
  %v655 = vpop.permute.xlu0 %654
  %656 = vrot.lane.b32.xlu0 %v82, 112
  %v657 = vpop.permute.xlu0 %656
  %658 = vrot.lane.b32.xlu0 %v83, 112
  %v659 = vpop.permute.xlu0 %658
  %660 = vrot.lane.b32.xlu0 %v86, 112
  %v661 = vpop.permute.xlu0 %660
  %662 = vrot.lane.b32.xlu0 %v87, 112
  %v663 = vpop.permute.xlu0 %662
  %664 = vrot.lane.b32.xlu0 %v90, 112
  %v665 = vpop.permute.xlu0 %664
  %666 = vrot.lane.b32.xlu0 %v91, 112
  %v667 = vpop.permute.xlu0 %666
  %668 = vrot.lane.b32.xlu0 %v94, 112
  %v669 = vpop.permute.xlu0 %668
  %670 = vrot.lane.b32.xlu0 %v95, 112
  %v671 = vpop.permute.xlu0 %670
  %672 = vrot.lane.b32.xlu0 %v98, 112
  %v673 = vpop.permute.xlu0 %672
  %674 = vrot.lane.b32.xlu0 %v99, 112
  %v675 = vpop.permute.xlu0 %674
  %676 = vrot.lane.b32.xlu0 %v102, 112
  %v677 = vpop.permute.xlu0 %676
  %678 = vrot.lane.b32.xlu0 %v103, 112
  %v679 = vpop.permute.xlu0 %678
  %680 = vrot.lane.b32.xlu0 %v106, 112
  %v681 = vpop.permute.xlu0 %680
  %682 = vrot.lane.b32.xlu0 %v107, 112
  %v683 = vpop.permute.xlu0 %682
  %684 = vrot.lane.b32.xlu0 %v110, 112
  %v685 = vpop.permute.xlu0 %684
  %686 = vrot.lane.b32.xlu0 %v111, 112
  %v687 = vpop.permute.xlu0 %686
  %688 = vrot.lane.b32.xlu0 %v114, 112
  %v689 = vpop.permute.xlu0 %688
  %690 = vrot.lane.b32.xlu0 %v115, 112
  %v691 = vpop.permute.xlu0 %690
  %692 = vrot.lane.b32.xlu0 %v118, 112
  %v693 = vpop.permute.xlu0 %692
  %694 = vrot.lane.b32.xlu0 %v119, 112
  %v695 = vpop.permute.xlu0 %694
  %696 = vrot.lane.b32.xlu0 %v122, 112
  %v697 = vpop.permute.xlu0 %696
  %698 = vrot.lane.b32.xlu0 %v123, 112
  %v699 = vpop.permute.xlu0 %698
  %700 = vrot.lane.b32.xlu0 %v126, 112
  %v701 = vpop.permute.xlu0 %700
  %702 = vrot.lane.b32.xlu0 %v127, 112
  %v703 = vpop.permute.xlu0 %702
  %704 = vrot.lane.b32.xlu0 %v130, 112
  %v705 = vpop.permute.xlu0 %704
  %706 = vrot.lane.b32.xlu0 %v131, 112
  %v707 = vpop.permute.xlu0 %706
  %708 = vrot.lane.b32.xlu0 %v134, 112
  %v709 = vpop.permute.xlu0 %708
  %710 = vrot.lane.b32.xlu0 %v135, 112
  %v711 = vpop.permute.xlu0 %710
  %v776 = vmax.f32 %v456, %v585
  %v777 = vmax.f32 %v457, %v587
  %v778 = vmax.f32 %v458, %v589
  %v779 = vmax.f32 %v459, %v591
  %v780 = vmax.f32 %v460, %v593
  %v781 = vmax.f32 %v461, %v595
  %v782 = vmax.f32 %v462, %v597
  %v783 = vmax.f32 %v463, %v599
  %v784 = vmax.f32 %v464, %v601
  %v785 = vmax.f32 %v465, %v603
  %v786 = vmax.f32 %v466, %v605
  %v787 = vmax.f32 %v467, %v607
  %v788 = vmax.f32 %v468, %v609
  %v789 = vmax.f32 %v469, %v611
  %v790 = vmax.f32 %v470, %v613
  %v791 = vmax.f32 %v471, %v615
  %v792 = vmax.f32 %v472, %v617
  %v793 = vmax.f32 %v473, %v619
  %v794 = vmax.f32 %v474, %v621
  %v795 = vmax.f32 %v475, %v623
  %v796 = vmax.f32 %v476, %v625
  %v797 = vmax.f32 %v477, %v627
  %v798 = vmax.f32 %v478, %v629
  %v799 = vmax.f32 %v479, %v631
  %v800 = vmax.f32 %v480, %v633
  %v801 = vmax.f32 %v481, %v635
  %v802 = vmax.f32 %v482, %v637
  %v803 = vmax.f32 %v483, %v639
  %v804 = vmax.f32 %v484, %v641
  %v805 = vmax.f32 %v485, %v643
  %v806 = vmax.f32 %v486, %v645
  %v807 = vmax.f32 %v487, %v647
  %v808 = vmax.f32 %v488, %v649
  %v809 = vmax.f32 %v489, %v651
  %v810 = vmax.f32 %v490, %v653
  %v811 = vmax.f32 %v491, %v655
  %v812 = vmax.f32 %v492, %v657
  %v813 = vmax.f32 %v493, %v659
  %v814 = vmax.f32 %v494, %v661
  %v815 = vmax.f32 %v495, %v663
  %v816 = vmax.f32 %v496, %v665
  %v817 = vmax.f32 %v497, %v667
  %v818 = vmax.f32 %v498, %v669
  %v819 = vmax.f32 %v499, %v671
  %v820 = vmax.f32 %v500, %v673
  %v821 = vmax.f32 %v501, %v675
  %v822 = vmax.f32 %v502, %v677
  %v823 = vmax.f32 %v503, %v679
  %v824 = vmax.f32 %v504, %v681
  %v825 = vmax.f32 %v505, %v683
  %v826 = vmax.f32 %v506, %v685
  %v827 = vmax.f32 %v507, %v687
  %v828 = vmax.f32 %v508, %v689
  %v829 = vmax.f32 %v509, %v691
  %v830 = vmax.f32 %v510, %v693
  %v831 = vmax.f32 %v511, %v695
  %v832 = vmax.f32 %v512, %v697
  %v833 = vmax.f32 %v513, %v699
  %v834 = vmax.f32 %v514, %v701
  %v835 = vmax.f32 %v515, %v703
  %v836 = vmax.f32 %v516, %v705
  %v837 = vmax.f32 %v517, %v707
  %v838 = vmax.f32 %v518, %v709
  %v839 = vmax.f32 %v519, %v711
  %vm840 = vcmask 130048
  %841 = vst.msk [vmem:[%s1] sm:$0xff] %vm840, %v776
  %842 = vst.msk [vmem:[%s1 + $0x8] sm:$0xff] %vm840, %v777
  %843 = vst.msk [vmem:[%s1 + $0x10] sm:$0xff] %vm840, %v778
  %844 = vst.msk [vmem:[%s1 + $0x18] sm:$0xff] %vm840, %v779
  %845 = vst.msk [vmem:[%s1 + $0x20] sm:$0xff] %vm840, %v780
  %846 = vst.msk [vmem:[%s1 + $0x28] sm:$0xff] %vm840, %v781
  %847 = vst.msk [vmem:[%s1 + $0x30] sm:$0xff] %vm840, %v782
  %848 = vst.msk [vmem:[%s1 + $0x38] sm:$0xff] %vm840, %v783
  %849 = vst.msk [vmem:[%s1 + $0x40] sm:$0xff] %vm840, %v784
  %850 = vst.msk [vmem:[%s1 + $0x48] sm:$0xff] %vm840, %v785
  %851 = vst.msk [vmem:[%s1 + $0x50] sm:$0xff] %vm840, %v786
  %852 = vst.msk [vmem:[%s1 + $0x58] sm:$0xff] %vm840, %v787
  %853 = vst.msk [vmem:[%s1 + $0x60] sm:$0xff] %vm840, %v788
  %854 = vst.msk [vmem:[%s1 + $0x68] sm:$0xff] %vm840, %v789
  %855 = vst.msk [vmem:[%s1 + $0x70] sm:$0xff] %vm840, %v790
  %856 = vst.msk [vmem:[%s1 + $0x78] sm:$0xff] %vm840, %v791
  %857 = vst.msk [vmem:[%s1 + $0x80] sm:$0xff] %vm840, %v792
  %858 = vst.msk [vmem:[%s1 + $0x88] sm:$0xff] %vm840, %v793
  %859 = vst.msk [vmem:[%s1 + $0x90] sm:$0xff] %vm840, %v794
  %860 = vst.msk [vmem:[%s1 + $0x98] sm:$0xff] %vm840, %v795
  %861 = vst.msk [vmem:[%s1 + $0xa0] sm:$0xff] %vm840, %v796
  %862 = vst.msk [vmem:[%s1 + $0xa8] sm:$0xff] %vm840, %v797
  %863 = vst.msk [vmem:[%s1 + $0xb0] sm:$0xff] %vm840, %v798
  %864 = vst.msk [vmem:[%s1 + $0xb8] sm:$0xff] %vm840, %v799
  %865 = vst.msk [vmem:[%s1 + $0xc0] sm:$0xff] %vm840, %v800
  %866 = vst.msk [vmem:[%s1 + $0xc8] sm:$0xff] %vm840, %v801
  %867 = vst.msk [vmem:[%s1 + $0xd0] sm:$0xff] %vm840, %v802
  %868 = vst.msk [vmem:[%s1 + $0xd8] sm:$0xff] %vm840, %v803
  %869 = vst.msk [vmem:[%s1 + $0xe0] sm:$0xff] %vm840, %v804
  %870 = vst.msk [vmem:[%s1 + $0xe8] sm:$0xff] %vm840, %v805
  %871 = vst.msk [vmem:[%s1 + $0xf0] sm:$0xff] %vm840, %v806
  %872 = vst.msk [vmem:[%s1 + $0xf8] sm:$0xff] %vm840, %v807
  %873 = vst.msk [vmem:[%s1 + $0x100] sm:$0xff] %vm840, %v808
  %874 = vst.msk [vmem:[%s1 + $0x108] sm:$0xff] %vm840, %v809
  %875 = vst.msk [vmem:[%s1 + $0x110] sm:$0xff] %vm840, %v810
  %876 = vst.msk [vmem:[%s1 + $0x118] sm:$0xff] %vm840, %v811
  %877 = vst.msk [vmem:[%s1 + $0x120] sm:$0xff] %vm840, %v812
  %878 = vst.msk [vmem:[%s1 + $0x128] sm:$0xff] %vm840, %v813
  %879 = vst.msk [vmem:[%s1 + $0x130] sm:$0xff] %vm840, %v814
  %880 = vst.msk [vmem:[%s1 + $0x138] sm:$0xff] %vm840, %v815
  %881 = vst.msk [vmem:[%s1 + $0x140] sm:$0xff] %vm840, %v816
  %882 = vst.msk [vmem:[%s1 + $0x148] sm:$0xff] %vm840, %v817
  %883 = vst.msk [vmem:[%s1 + $0x150] sm:$0xff] %vm840, %v818
  %884 = vst.msk [vmem:[%s1 + $0x158] sm:$0xff] %vm840, %v819
  %885 = vst.msk [vmem:[%s1 + $0x160] sm:$0xff] %vm840, %v820
  %886 = vst.msk [vmem:[%s1 + $0x168] sm:$0xff] %vm840, %v821
  %887 = vst.msk [vmem:[%s1 + $0x170] sm:$0xff] %vm840, %v822
  %888 = vst.msk [vmem:[%s1 + $0x178] sm:$0xff] %vm840, %v823
  %889 = vst.msk [vmem:[%s1 + $0x180] sm:$0xff] %vm840, %v824
  %890 = vst.msk [vmem:[%s1 + $0x188] sm:$0xff] %vm840, %v825
  %891 = vst.msk [vmem:[%s1 + $0x190] sm:$0xff] %vm840, %v826
  %892 = vst.msk [vmem:[%s1 + $0x198] sm:$0xff] %vm840, %v827
  %893 = vst.msk [vmem:[%s1 + $0x1a0] sm:$0xff] %vm840, %v828
  %894 = vst.msk [vmem:[%s1 + $0x1a8] sm:$0xff] %vm840, %v829
  %895 = vst.msk [vmem:[%s1 + $0x1b0] sm:$0xff] %vm840, %v830
  %896 = vst.msk [vmem:[%s1 + $0x1b8] sm:$0xff] %vm840, %v831
  %897 = vst.msk [vmem:[%s1 + $0x1c0] sm:$0xff] %vm840, %v832
  %898 = vst.msk [vmem:[%s1 + $0x1c8] sm:$0xff] %vm840, %v833
  %899 = vst.msk [vmem:[%s1 + $0x1d0] sm:$0xff] %vm840, %v834
  %900 = vst.msk [vmem:[%s1 + $0x1d8] sm:$0xff] %vm840, %v835
  %901 = vst.msk [vmem:[%s1 + $0x1e0] sm:$0xff] %vm840, %v836
  %902 = vst.msk [vmem:[%s1 + $0x1e8] sm:$0xff] %vm840, %v837
  %903 = vst.msk [vmem:[%s1 + $0x1f0] sm:$0xff] %vm840, %v838
  %904 = vst.msk [vmem:[%s1 + $0x1f8] sm:$0xff] %vm840, %v839
  // Predicated region
  $region6: #{unet_forward.16} parent=0 // pred_check
    _
  $region7: #{unet_forward.16} parent=0 // pred_check_branch
    %906 = sbr.rel (0) target = $region9
  $region8: #{unet_forward.16} parent=0 // pred_region
    _
  $region9: #{unet_forward.16} parent=0 // pred_fallthru
    _
  // Predicated region
  $region10: #{unet_forward.16} parent=0 // pred_check
    _
  $region11: #{unet_forward.16} parent=0 // pred_check_branch
    %908 = sbr.rel (0) target = $region13
  $region12: #{unet_forward.16} parent=0 // pred_region
    _
  $region13: #{unet_forward.16} parent=0 // pred_fallthru
    _

// kernel: unet_forward.17
$region0: #{unet_forward.17}
  #allocation0 [shape = 'u32[]', space=smem, size = 0x4, offset = 0x4, fixed_abs, tag = 'smem constant byte address 0x4 - core index']
  #allocation1 [shape = 'u32[144,128]{1,0:T(1,128)}', space=vmem, size = 0x12000, scoped, tag = 'internal scratch']
  %s0 = inlined_call_operand.vmem [shape: f32[16,2,8,38], index: 0, kind: input, shape index: {}]
  %s1 = inlined_call_operand.vmem [shape: f32[16,8,19], index: 1, kind: output, shape index: {}]
  %s2 = sld [smem:[#allocation0]]
  $region14: #{unet_forward.17} parent=0
    _
  %s4 = ssub.s32 1, %s2
  %s5 = scalar_select 0, %s4, %s2
  // Predicated region
  $region2: #{unet_forward.17} parent=0 // pred_check
    _
  $region3: #{unet_forward.17} parent=0 // pred_check_branch
    %7 = sbr.rel (0) target = $region5
  $region4: #{unet_forward.17} parent=0 // pred_region
    _
  $region5: #{unet_forward.17} parent=0 // pred_fallthru
    _
  %v8 = vld [vmem:[%s0] sm:$0xff]
  %v9 = vld [vmem:[%s0 + $0x8] sm:$0xff]
  %v10 = vld [vmem:[%s0 + $0x10] sm:$0xff]
  %v11 = vld [vmem:[%s0 + $0x18] sm:$0xff]
  %v12 = vld [vmem:[%s0 + $0x20] sm:$0xff]
  %v13 = vld [vmem:[%s0 + $0x28] sm:$0xff]
  %v14 = vld [vmem:[%s0 + $0x30] sm:$0xff]
  %v15 = vld [vmem:[%s0 + $0x38] sm:$0xff]
  %v16 = vld [vmem:[%s0 + $0x40] sm:$0xff]
  %v17 = vld [vmem:[%s0 + $0x48] sm:$0xff]
  %v18 = vld [vmem:[%s0 + $0x50] sm:$0xff]
  %v19 = vld [vmem:[%s0 + $0x58] sm:$0xff]
  %v20 = vld [vmem:[%s0 + $0x60] sm:$0xff]
  %v21 = vld [vmem:[%s0 + $0x68] sm:$0xff]
  %v22 = vld [vmem:[%s0 + $0x70] sm:$0xff]
  %v23 = vld [vmem:[%s0 + $0x78] sm:$0xff]
  %v24 = vld [vmem:[%s0 + $0x80] sm:$0xff]
  %v25 = vld [vmem:[%s0 + $0x88] sm:$0xff]
  %v26 = vld [vmem:[%s0 + $0x90] sm:$0xff]
  %v27 = vld [vmem:[%s0 + $0x98] sm:$0xff]
  %v28 = vld [vmem:[%s0 + $0xa0] sm:$0xff]
  %v29 = vld [vmem:[%s0 + $0xa8] sm:$0xff]
  %v30 = vld [vmem:[%s0 + $0xb0] sm:$0xff]
  %v31 = vld [vmem:[%s0 + $0xb8] sm:$0xff]
  %v32 = vld [vmem:[%s0 + $0xc0] sm:$0xff]
  %v33 = vld [vmem:[%s0 + $0xc8] sm:$0xff]
  %v34 = vld [vmem:[%s0 + $0xd0] sm:$0xff]
  %v35 = vld [vmem:[%s0 + $0xd8] sm:$0xff]
  %v36 = vld [vmem:[%s0 + $0xe0] sm:$0xff]
  %v37 = vld [vmem:[%s0 + $0xe8] sm:$0xff]
  %v38 = vld [vmem:[%s0 + $0xf0] sm:$0xff]
  %v39 = vld [vmem:[%s0 + $0xf8] sm:$0xff]
  %56 = vrot.lane.b32.xlu0 %v8, 109
  %v57 = vpop.permute.xlu0 %56
  %58 = vrot.lane.b32.xlu0 %v10, 109
  %v59 = vpop.permute.xlu0 %58
  %60 = vrot.lane.b32.xlu0 %v12, 109
  %v61 = vpop.permute.xlu0 %60
  %62 = vrot.lane.b32.xlu0 %v14, 109
  %v63 = vpop.permute.xlu0 %62
  %64 = vrot.lane.b32.xlu0 %v16, 109
  %v65 = vpop.permute.xlu0 %64
  %66 = vrot.lane.b32.xlu0 %v18, 109
  %v67 = vpop.permute.xlu0 %66
  %68 = vrot.lane.b32.xlu0 %v20, 109
  %v69 = vpop.permute.xlu0 %68
  %70 = vrot.lane.b32.xlu0 %v22, 109
  %v71 = vpop.permute.xlu0 %70
  %72 = vrot.lane.b32.xlu0 %v24, 109
  %v73 = vpop.permute.xlu0 %72
  %74 = vrot.lane.b32.xlu0 %v26, 109
  %v75 = vpop.permute.xlu0 %74
  %76 = vrot.lane.b32.xlu0 %v28, 109
  %v77 = vpop.permute.xlu0 %76
  %78 = vrot.lane.b32.xlu0 %v30, 109
  %v79 = vpop.permute.xlu0 %78
  %80 = vrot.lane.b32.xlu0 %v32, 109
  %v81 = vpop.permute.xlu0 %80
  %82 = vrot.lane.b32.xlu0 %v34, 109
  %v83 = vpop.permute.xlu0 %82
  %84 = vrot.lane.b32.xlu0 %v36, 109
  %v85 = vpop.permute.xlu0 %84
  %86 = vrot.lane.b32.xlu0 %v38, 109
  %v87 = vpop.permute.xlu0 %86
  %v104 = vadd.f32 %v8, %v57
  %v105 = vadd.f32 %v10, %v59
  %v106 = vadd.f32 %v12, %v61
  %v107 = vadd.f32 %v14, %v63
  %v108 = vadd.f32 %v16, %v65
  %v109 = vadd.f32 %v18, %v67
  %v110 = vadd.f32 %v20, %v69
  %v111 = vadd.f32 %v22, %v71
  %v112 = vadd.f32 %v24, %v73
  %v113 = vadd.f32 %v26, %v75
  %v114 = vadd.f32 %v28, %v77
  %v115 = vadd.f32 %v30, %v79
  %v116 = vadd.f32 %v32, %v81
  %v117 = vadd.f32 %v34, %v83
  %v118 = vadd.f32 %v36, %v85
  %v119 = vadd.f32 %v38, %v87
  %v120 = vadd.f32 %v104, %v9
  %v121 = vadd.f32 %v105, %v11
  %v122 = vadd.f32 %v106, %v13
  %v123 = vadd.f32 %v107, %v15
  %v124 = vadd.f32 %v108, %v17
  %v125 = vadd.f32 %v109, %v19
  %v126 = vadd.f32 %v110, %v21
  %v127 = vadd.f32 %v111, %v23
  %v128 = vadd.f32 %v112, %v25
  %v129 = vadd.f32 %v113, %v27
  %v130 = vadd.f32 %v114, %v29
  %v131 = vadd.f32 %v115, %v31
  %v132 = vadd.f32 %v116, %v33
  %v133 = vadd.f32 %v117, %v35
  %v134 = vadd.f32 %v118, %v37
  %v135 = vadd.f32 %v119, %v39
  %152 = vrot.lane.b32.xlu0 %v9, 109
  %v153 = vpop.permute.xlu0 %152
  %154 = vrot.lane.b32.xlu0 %v11, 109
  %v155 = vpop.permute.xlu0 %154
  %156 = vrot.lane.b32.xlu0 %v13, 109
  %v157 = vpop.permute.xlu0 %156
  %158 = vrot.lane.b32.xlu0 %v15, 109
  %v159 = vpop.permute.xlu0 %158
  %160 = vrot.lane.b32.xlu0 %v17, 109
  %v161 = vpop.permute.xlu0 %160
  %162 = vrot.lane.b32.xlu0 %v19, 109
  %v163 = vpop.permute.xlu0 %162
  %164 = vrot.lane.b32.xlu0 %v21, 109
  %v165 = vpop.permute.xlu0 %164
  %166 = vrot.lane.b32.xlu0 %v23, 109
  %v167 = vpop.permute.xlu0 %166
  %168 = vrot.lane.b32.xlu0 %v25, 109
  %v169 = vpop.permute.xlu0 %168
  %170 = vrot.lane.b32.xlu0 %v27, 109
  %v171 = vpop.permute.xlu0 %170
  %172 = vrot.lane.b32.xlu0 %v29, 109
  %v173 = vpop.permute.xlu0 %172
  %174 = vrot.lane.b32.xlu0 %v31, 109
  %v175 = vpop.permute.xlu0 %174
  %176 = vrot.lane.b32.xlu0 %v33, 109
  %v177 = vpop.permute.xlu0 %176
  %178 = vrot.lane.b32.xlu0 %v35, 109
  %v179 = vpop.permute.xlu0 %178
  %180 = vrot.lane.b32.xlu0 %v37, 109
  %v181 = vpop.permute.xlu0 %180
  %182 = vrot.lane.b32.xlu0 %v39, 109
  %v183 = vpop.permute.xlu0 %182
  %v200 = vadd.f32 %v120, %v153
  %v201 = vadd.f32 %v121, %v155
  %v202 = vadd.f32 %v122, %v157
  %v203 = vadd.f32 %v123, %v159
  %v204 = vadd.f32 %v124, %v161
  %v205 = vadd.f32 %v125, %v163
  %v206 = vadd.f32 %v126, %v165
  %v207 = vadd.f32 %v127, %v167
  %v208 = vadd.f32 %v128, %v169
  %v209 = vadd.f32 %v129, %v171
  %v210 = vadd.f32 %v130, %v173
  %v211 = vadd.f32 %v131, %v175
  %v212 = vadd.f32 %v132, %v177
  %v213 = vadd.f32 %v133, %v179
  %v214 = vadd.f32 %v134, %v181
  %v215 = vadd.f32 %v135, %v183
  %v216 = vmul.f32 %v200, 0.25
  %v217 = vmul.f32 %v201, 0.25
  %v218 = vmul.f32 %v202, 0.25
  %v219 = vmul.f32 %v203, 0.25
  %v220 = vmul.f32 %v204, 0.25
  %v221 = vmul.f32 %v205, 0.25
  %v222 = vmul.f32 %v206, 0.25
  %v223 = vmul.f32 %v207, 0.25
  %v224 = vmul.f32 %v208, 0.25
  %v225 = vmul.f32 %v209, 0.25
  %v226 = vmul.f32 %v210, 0.25
  %v227 = vmul.f32 %v211, 0.25
  %v228 = vmul.f32 %v212, 0.25
  %v229 = vmul.f32 %v213, 0.25
  %v230 = vmul.f32 %v214, 0.25
  %v231 = vmul.f32 %v215, 0.25
  %vm232 = vcmask 154624
  %233 = vst.msk [vmem:[%s1] sm:$0xff] %vm232, %v216
  %234 = vst.msk [vmem:[%s1 + $0x8] sm:$0xff] %vm232, %v217
  %235 = vst.msk [vmem:[%s1 + $0x10] sm:$0xff] %vm232, %v218
  %236 = vst.msk [vmem:[%s1 + $0x18] sm:$0xff] %vm232, %v219
  %237 = vst.msk [vmem:[%s1 + $0x20] sm:$0xff] %vm232, %v220
  %238 = vst.msk [vmem:[%s1 + $0x28] sm:$0xff] %vm232, %v221
  %239 = vst.msk [vmem:[%s1 + $0x30] sm:$0xff] %vm232, %v222
  %240 = vst.msk [vmem:[%s1 + $0x38] sm:$0xff] %vm232, %v223
  %241 = vst.msk [vmem:[%s1 + $0x40] sm:$0xff] %vm232, %v224
  %242 = vst.msk [vmem:[%s1 + $0x48] sm:$0xff] %vm232, %v225
  %243 = vst.msk [vmem:[%s1 + $0x50] sm:$0xff] %vm232, %v226
  %244 = vst.msk [vmem:[%s1 + $0x58] sm:$0xff] %vm232, %v227
  %245 = vst.msk [vmem:[%s1 + $0x60] sm:$0xff] %vm232, %v228
  %246 = vst.msk [vmem:[%s1 + $0x68] sm:$0xff] %vm232, %v229
  %247 = vst.msk [vmem:[%s1 + $0x70] sm:$0xff] %vm232, %v230
  %248 = vst.msk [vmem:[%s1 + $0x78] sm:$0xff] %vm232, %v231
  // Predicated region
  $region6: #{unet_forward.17} parent=0 // pred_check
    _
  $region7: #{unet_forward.17} parent=0 // pred_check_branch
    %250 = sbr.rel (0) target = $region9
  $region8: #{unet_forward.17} parent=0 // pred_region
    _
  $region9: #{unet_forward.17} parent=0 // pred_fallthru
    _
  // Predicated region
  $region10: #{unet_forward.17} parent=0 // pred_check
    _
  $region11: #{unet_forward.17} parent=0 // pred_check_branch
    %252 = sbr.rel (0) target = $region13
  $region12: #{unet_forward.17} parent=0 // pred_region
    _
  $region13: #{unet_forward.17} parent=0 // pred_fallthru
    _

// kernel: unet_forward.19
$region0: #{unet_forward.19}
  #allocation0 [shape = 'u32[]', space=smem, size = 0x4, offset = 0x4, fixed_abs, tag = 'smem constant byte address 0x4 - core index']
  #allocation1 [shape = 'u32[144,128]{1,0:T(1,128)}', space=vmem, size = 0x12000, scoped, tag = 'internal scratch']
  %s0 = inlined_call_operand.vmem [shape: f32[16,2,8,64], index: 0, kind: input, shape index: {}]
  %s1 = inlined_call_operand.vmem [shape: f32[16,8,32], index: 1, kind: output, shape index: {}]
  %s2 = sld [smem:[#allocation0]]
  $region14: #{unet_forward.19} parent=0
    _
  %s4 = ssub.s32 1, %s2
  %s5 = scalar_select 0, %s4, %s2
  // Predicated region
  $region2: #{unet_forward.19} parent=0 // pred_check
    _
  $region3: #{unet_forward.19} parent=0 // pred_check_branch
    %7 = sbr.rel (0) target = $region5
  $region4: #{unet_forward.19} parent=0 // pred_region
    _
  $region5: #{unet_forward.19} parent=0 // pred_fallthru
    _
  %v8 = vld [vmem:[%s0] sm:$0xff]
  %v9 = vld [vmem:[%s0 + $0x8] sm:$0xff]
  %v10 = vld [vmem:[%s0 + $0x10] sm:$0xff]
  %v11 = vld [vmem:[%s0 + $0x18] sm:$0xff]
  %v12 = vld [vmem:[%s0 + $0x20] sm:$0xff]
  %v13 = vld [vmem:[%s0 + $0x28] sm:$0xff]
  %v14 = vld [vmem:[%s0 + $0x30] sm:$0xff]
  %v15 = vld [vmem:[%s0 + $0x38] sm:$0xff]
  %v16 = vld [vmem:[%s0 + $0x40] sm:$0xff]
  %v17 = vld [vmem:[%s0 + $0x48] sm:$0xff]
  %v18 = vld [vmem:[%s0 + $0x50] sm:$0xff]
  %v19 = vld [vmem:[%s0 + $0x58] sm:$0xff]
  %v20 = vld [vmem:[%s0 + $0x60] sm:$0xff]
  %v21 = vld [vmem:[%s0 + $0x68] sm:$0xff]
  %v22 = vld [vmem:[%s0 + $0x70] sm:$0xff]
  %v23 = vld [vmem:[%s0 + $0x78] sm:$0xff]
  %v24 = vld [vmem:[%s0 + $0x80] sm:$0xff]
  %v25 = vld [vmem:[%s0 + $0x88] sm:$0xff]
  %v26 = vld [vmem:[%s0 + $0x90] sm:$0xff]
  %v27 = vld [vmem:[%s0 + $0x98] sm:$0xff]
  %v28 = vld [vmem:[%s0 + $0xa0] sm:$0xff]
  %v29 = vld [vmem:[%s0 + $0xa8] sm:$0xff]
  %v30 = vld [vmem:[%s0 + $0xb0] sm:$0xff]
  %v31 = vld [vmem:[%s0 + $0xb8] sm:$0xff]
  %v32 = vld [vmem:[%s0 + $0xc0] sm:$0xff]
  %v33 = vld [vmem:[%s0 + $0xc8] sm:$0xff]
  %v34 = vld [vmem:[%s0 + $0xd0] sm:$0xff]
  %v35 = vld [vmem:[%s0 + $0xd8] sm:$0xff]
  %v36 = vld [vmem:[%s0 + $0xe0] sm:$0xff]
  %v37 = vld [vmem:[%s0 + $0xe8] sm:$0xff]
  %v38 = vld [vmem:[%s0 + $0xf0] sm:$0xff]
  %v39 = vld [vmem:[%s0 + $0xf8] sm:$0xff]
  %56 = vrot.lane.b32.xlu0 %v8, 96
  %v57 = vpop.permute.xlu0 %56
  %58 = vrot.lane.b32.xlu0 %v10, 96
  %v59 = vpop.permute.xlu0 %58
  %60 = vrot.lane.b32.xlu0 %v12, 96
  %v61 = vpop.permute.xlu0 %60
  %62 = vrot.lane.b32.xlu0 %v14, 96
  %v63 = vpop.permute.xlu0 %62
  %64 = vrot.lane.b32.xlu0 %v16, 96
  %v65 = vpop.permute.xlu0 %64
  %66 = vrot.lane.b32.xlu0 %v18, 96
  %v67 = vpop.permute.xlu0 %66
  %68 = vrot.lane.b32.xlu0 %v20, 96
  %v69 = vpop.permute.xlu0 %68
  %70 = vrot.lane.b32.xlu0 %v22, 96
  %v71 = vpop.permute.xlu0 %70
  %72 = vrot.lane.b32.xlu0 %v24, 96
  %v73 = vpop.permute.xlu0 %72
  %74 = vrot.lane.b32.xlu0 %v26, 96
  %v75 = vpop.permute.xlu0 %74
  %76 = vrot.lane.b32.xlu0 %v28, 96
  %v77 = vpop.permute.xlu0 %76
  %78 = vrot.lane.b32.xlu0 %v30, 96
  %v79 = vpop.permute.xlu0 %78
  %80 = vrot.lane.b32.xlu0 %v32, 96
  %v81 = vpop.permute.xlu0 %80
  %82 = vrot.lane.b32.xlu0 %v34, 96
  %v83 = vpop.permute.xlu0 %82
  %84 = vrot.lane.b32.xlu0 %v36, 96
  %v85 = vpop.permute.xlu0 %84
  %86 = vrot.lane.b32.xlu0 %v38, 96
  %v87 = vpop.permute.xlu0 %86
  %v104 = vmax.f32 %v8, %v57
  %v105 = vmax.f32 %v10, %v59
  %v106 = vmax.f32 %v12, %v61
  %v107 = vmax.f32 %v14, %v63
  %v108 = vmax.f32 %v16, %v65
  %v109 = vmax.f32 %v18, %v67
  %v110 = vmax.f32 %v20, %v69
  %v111 = vmax.f32 %v22, %v71
  %v112 = vmax.f32 %v24, %v73
  %v113 = vmax.f32 %v26, %v75
  %v114 = vmax.f32 %v28, %v77
  %v115 = vmax.f32 %v30, %v79
  %v116 = vmax.f32 %v32, %v81
  %v117 = vmax.f32 %v34, %v83
  %v118 = vmax.f32 %v36, %v85
  %v119 = vmax.f32 %v38, %v87
  %v120 = vmax.f32 %v104, %v9
  %v121 = vmax.f32 %v105, %v11
  %v122 = vmax.f32 %v106, %v13
  %v123 = vmax.f32 %v107, %v15
  %v124 = vmax.f32 %v108, %v17
  %v125 = vmax.f32 %v109, %v19
  %v126 = vmax.f32 %v110, %v21
  %v127 = vmax.f32 %v111, %v23
  %v128 = vmax.f32 %v112, %v25
  %v129 = vmax.f32 %v113, %v27
  %v130 = vmax.f32 %v114, %v29
  %v131 = vmax.f32 %v115, %v31
  %v132 = vmax.f32 %v116, %v33
  %v133 = vmax.f32 %v117, %v35
  %v134 = vmax.f32 %v118, %v37
  %v135 = vmax.f32 %v119, %v39
  %152 = vrot.lane.b32.xlu0 %v9, 96
  %v153 = vpop.permute.xlu0 %152
  %154 = vrot.lane.b32.xlu0 %v11, 96
  %v155 = vpop.permute.xlu0 %154
  %156 = vrot.lane.b32.xlu0 %v13, 96
  %v157 = vpop.permute.xlu0 %156
  %158 = vrot.lane.b32.xlu0 %v15, 96
  %v159 = vpop.permute.xlu0 %158
  %160 = vrot.lane.b32.xlu0 %v17, 96
  %v161 = vpop.permute.xlu0 %160
  %162 = vrot.lane.b32.xlu0 %v19, 96
  %v163 = vpop.permute.xlu0 %162
  %164 = vrot.lane.b32.xlu0 %v21, 96
  %v165 = vpop.permute.xlu0 %164
  %166 = vrot.lane.b32.xlu0 %v23, 96
  %v167 = vpop.permute.xlu0 %166
  %168 = vrot.lane.b32.xlu0 %v25, 96
  %v169 = vpop.permute.xlu0 %168
  %170 = vrot.lane.b32.xlu0 %v27, 96
  %v171 = vpop.permute.xlu0 %170
  %172 = vrot.lane.b32.xlu0 %v29, 96
  %v173 = vpop.permute.xlu0 %172
  %174 = vrot.lane.b32.xlu0 %v31, 96
  %v175 = vpop.permute.xlu0 %174
  %176 = vrot.lane.b32.xlu0 %v33, 96
  %v177 = vpop.permute.xlu0 %176
  %178 = vrot.lane.b32.xlu0 %v35, 96
  %v179 = vpop.permute.xlu0 %178
  %180 = vrot.lane.b32.xlu0 %v37, 96
  %v181 = vpop.permute.xlu0 %180
  %182 = vrot.lane.b32.xlu0 %v39, 96
  %v183 = vpop.permute.xlu0 %182
  %v200 = vmax.f32 %v120, %v153
  %v201 = vmax.f32 %v121, %v155
  %v202 = vmax.f32 %v122, %v157
  %v203 = vmax.f32 %v123, %v159
  %v204 = vmax.f32 %v124, %v161
  %v205 = vmax.f32 %v125, %v163
  %v206 = vmax.f32 %v126, %v165
  %v207 = vmax.f32 %v127, %v167
  %v208 = vmax.f32 %v128, %v169
  %v209 = vmax.f32 %v129, %v171
  %v210 = vmax.f32 %v130, %v173
  %v211 = vmax.f32 %v131, %v175
  %v212 = vmax.f32 %v132, %v177
  %v213 = vmax.f32 %v133, %v179
  %v214 = vmax.f32 %v134, %v181
  %v215 = vmax.f32 %v135, %v183
  %vm216 = vcmask 261120
  %217 = vst.msk [vmem:[%s1] sm:$0xff] %vm216, %v200
  %218 = vst.msk [vmem:[%s1 + $0x8] sm:$0xff] %vm216, %v201
  %219 = vst.msk [vmem:[%s1 + $0x10] sm:$0xff] %vm216, %v202
  %220 = vst.msk [vmem:[%s1 + $0x18] sm:$0xff] %vm216, %v203
  %221 = vst.msk [vmem:[%s1 + $0x20] sm:$0xff] %vm216, %v204
  %222 = vst.msk [vmem:[%s1 + $0x28] sm:$0xff] %vm216, %v205
  %223 = vst.msk [vmem:[%s1 + $0x30] sm:$0xff] %vm216, %v206
  %224 = vst.msk [vmem:[%s1 + $0x38] sm:$0xff] %vm216, %v207
  %225 = vst.msk [vmem:[%s1 + $0x40] sm:$0xff] %vm216, %v208
  %226 = vst.msk [vmem:[%s1 + $0x48] sm:$0xff] %vm216, %v209
  %227 = vst.msk [vmem:[%s1 + $0x50] sm:$0xff] %vm216, %v210
  %228 = vst.msk [vmem:[%s1 + $0x58] sm:$0xff] %vm216, %v211
  %229 = vst.msk [vmem:[%s1 + $0x60] sm:$0xff] %vm216, %v212
  %230 = vst.msk [vmem:[%s1 + $0x68] sm:$0xff] %vm216, %v213
  %231 = vst.msk [vmem:[%s1 + $0x70] sm:$0xff] %vm216, %v214
  %232 = vst.msk [vmem:[%s1 + $0x78] sm:$0xff] %vm216, %v215
  // Predicated region
  $region6: #{unet_forward.19} parent=0 // pred_check
    _
  $region7: #{unet_forward.19} parent=0 // pred_check_branch
    %234 = sbr.rel (0) target = $region9
  $region8: #{unet_forward.19} parent=0 // pred_region
    _
  $region9: #{unet_forward.19} parent=0 // pred_fallthru
    _
  // Predicated region
  $region10: #{unet_forward.19} parent=0 // pred_check
    _
  $region11: #{unet_forward.19} parent=0 // pred_check_branch
    %236 = sbr.rel (0) target = $region13
  $region12: #{unet_forward.19} parent=0 // pred_region
    _
  $region13: #{unet_forward.19} parent=0 // pred_fallthru
    _

// kernel: unet_forward.18
$region0: #{unet_forward.18}
  #allocation0 [shape = 'u32[]', space=smem, size = 0x4, offset = 0x4, fixed_abs, tag = 'smem constant byte address 0x4 - core index']
  #allocation1 [shape = 'u32[144,128]{1,0:T(1,128)}', space=vmem, size = 0x12000, scoped, tag = 'internal scratch']
  %s0 = inlined_call_operand.vmem [shape: bf16[512,171], index: 0, kind: input, shape index: {}]
  %s1 = inlined_call_operand.vmem [shape: bf16[171,32], index: 1, kind: input, shape index: {}]
  %s2 = inlined_call_operand.vmem [shape: f32[1,32], index: 2, kind: input, shape index: {}]
  %s3 = inlined_call_operand.vmem [shape: f32[512,32], index: 3, kind: output, shape index: {}]
  %s4 = sld [smem:[#allocation0]]
  $region45: #{unet_forward.18} parent=0
    _
  %s6 = ssub.s32 1, %s4
  %s7 = scalar_select 0, %s6, %s4
  loop: start=0, step=1, limit=4
  $region2: #{unet_forward.18} parent=0 // loop_pre_header
    _
  $region3: #{unet_forward.18} parent=0 // loop_header
    %s9 = sphi 0, %s13
    %p10 = scmp.ge.s32.totalorder %s9, 4
    %s19 = sphi 0, %s21
    %s22 = sphi 0, %s19
    %s23 = sphi 0, %s22
    %s39 = sphi 0, %s23
    %s43 = sphi 0, %s43
    %s45 = sphi 0, %s43
    %s46 = sphi 0, %s45
    %s60 = sphi 0, %s46
    %s64 = sphi 0, %s64
    %s66 = sphi 0, %s64
    %s67 = sphi 0, %s66
    %s81 = sphi 0, %s67
    %s87 = sphi 0, %s89
    %s90 = sphi 0, %s87
    %s91 = sphi 0, %s90
    %s107 = sphi 0, %s91
  $region4: #{unet_forward.18} parent=0 // loop_header_branch
    %12 = sbr.rel (%p10) target = $region8
  $region5: #{unet_forward.18} parent=0 // loop_body
    %s14 = ssub.s32 %s9, 1
    %s15 = ssub.s32 %s9, 2
    %s16 = sadd.s32 %s9, 1
    %s17 = ssub.s32 %s9, %s16
    %p18 = scmp.eq.s32.totalorder %s17, 0
    %s20 = sadd.s32 %s19, 1
    %s21 = scalar_select %p18, %s19, %s20
    %p24 = pneg %p18
    %p25 = scmp.eq.s32.totalorder %s9, 1
    %p26 = por %p24, %p25
    %p27 = scmp.ne.s32.totalorder %s19, %s22
    %p28 = scmp.eq.s32.totalorder %s9, 0
    %p29 = por %p27, %p28
    %p30 = scmp.ne.s32.totalorder %s19, %s22
    %p31 = scmp.eq.s32.totalorder %s14, 1
    %p32 = por %p30, %p31
    %p33 = scmp.ne.s32.totalorder %s22, %s23
    %p34 = scmp.eq.s32.totalorder %s14, 0
    %p35 = por %p33, %p34
    %p36 = scmp.ne.s32.totalorder %s22, %s23
    %p37 = scmp.eq.s32.totalorder %s15, 1
    %p38 = por %p36, %p37
    %p40 = scmp.ne.s32.totalorder %s23, %s39
    %p41 = scmp.eq.s32.totalorder %s15, 0
    %p42 = por %p40, %p41
    %s44 = sadd.s32 %s43, 1
    %p47 = scmp.eq.s32.totalorder %s9, 1
    %p48 = scmp.ne.s32.totalorder %s43, %s45
    %p49 = scmp.eq.s32.totalorder %s9, 0
    %p50 = por %p48, %p49
    %p51 = scmp.ne.s32.totalorder %s43, %s45
    %p52 = scmp.eq.s32.totalorder %s14, 1
    %p53 = por %p51, %p52
    %p54 = scmp.ne.s32.totalorder %s45, %s46
    %p55 = scmp.eq.s32.totalorder %s14, 0
    %p56 = por %p54, %p55
    %p57 = scmp.ne.s32.totalorder %s45, %s46
    %p58 = scmp.eq.s32.totalorder %s15, 1
    %p59 = por %p57, %p58
    %p61 = scmp.ne.s32.totalorder %s46, %s60
    %p62 = scmp.eq.s32.totalorder %s15, 0
    %p63 = por %p61, %p62
    %s65 = sadd.s32 %s64, 1
    %p68 = scmp.eq.s32.totalorder %s9, 1
    %p69 = scmp.ne.s32.totalorder %s64, %s66
    %p70 = scmp.eq.s32.totalorder %s9, 0
    %p71 = por %p69, %p70
    %p72 = scmp.ne.s32.totalorder %s64, %s66
    %p73 = scmp.eq.s32.totalorder %s14, 1
    %p74 = por %p72, %p73
    %p75 = scmp.ne.s32.totalorder %s66, %s67
    %p76 = scmp.eq.s32.totalorder %s14, 0
    %p77 = por %p75, %p76
    %p78 = scmp.ne.s32.totalorder %s66, %s67
    %p79 = scmp.eq.s32.totalorder %s15, 1
    %p80 = por %p78, %p79
    %p82 = scmp.ne.s32.totalorder %s67, %s81
    %p83 = scmp.eq.s32.totalorder %s15, 0
    %p84 = por %p82, %p83
    %s85 = ssub.s32 %s9, %s16
    %p86 = scmp.eq.s32.totalorder %s85, 0
    %s88 = sadd.s32 %s87, 1
    %s89 = scalar_select %p86, %s87, %s88
    %p92 = pneg %p86
    %p93 = scmp.eq.s32.totalorder %s9, 1
    %p94 = por %p92, %p93
    %p95 = scmp.ne.s32.totalorder %s87, %s90
    %p96 = scmp.eq.s32.totalorder %s9, 0
    %p97 = por %p95, %p96
    %p98 = scmp.ne.s32.totalorder %s87, %s90
    %p99 = scmp.eq.s32.totalorder %s14, 1
    %p100 = por %p98, %p99
    %p101 = scmp.ne.s32.totalorder %s90, %s91
    %p102 = scmp.eq.s32.totalorder %s14, 0
    %p103 = por %p101, %p102
    %p104 = scmp.ne.s32.totalorder %s90, %s91
    %p105 = scmp.eq.s32.totalorder %s15, 1
    %p106 = por %p104, %p105
    %p108 = scmp.ne.s32.totalorder %s91, %s107
    %p109 = scmp.eq.s32.totalorder %s15, 0
    %p110 = por %p108, %p109
    %p111 = scmp.le.s32.totalorder 1, %s9
    %p112 = scmp.lt.s32.totalorder %s9, 3
    %p113 = pnand %p111, %p112
    %p114 = pneg %p113
    // Predicated region
    $region9: #{unet_forward.18} parent=5 // pred_check
      _
    $region10: #{unet_forward.18} parent=5 // pred_check_branch
      %116 = sbr.rel (%p113) target = $region12
    $region11: #{unet_forward.18} parent=5 // pred_region
      %s117 = ssub.s32 %s9, 1
      // Predicated region
      $region13: #{unet_forward.18} parent=11 // pred_check
        %p118 = pneg %p56
      $region14: #{unet_forward.18} parent=11 // pred_check_branch
        %120 = sbr.rel (%p118) target = $region16
      $region15: #{unet_forward.18} parent=11 // pred_region
        _
      $region16: #{unet_forward.18} parent=11 // pred_fallthru
        _
      // Predicated region
      $region17: #{unet_forward.18} parent=11 // pred_check
        %p121 = pneg %p77
      $region18: #{unet_forward.18} parent=11 // pred_check_branch
        %123 = sbr.rel (%p121) target = $region20
      $region19: #{unet_forward.18} parent=11 // pred_region
        _
      $region20: #{unet_forward.18} parent=11 // pred_fallthru
        _
    $region12: #{unet_forward.18} parent=5 // pred_fallthru
      _
    %p124 = scmp.lt.s32.totalorder %s9, 2
    // Predicated region
    $region21: #{unet_forward.18} parent=5 // pred_check
      %p125 = pneg %p124
    $region22: #{unet_forward.18} parent=5 // pred_check_branch
      %127 = sbr.rel (%p125) target = $region24
    $region23: #{unet_forward.18} parent=5 // pred_region
      // Predicated region
      $region25: #{unet_forward.18} parent=23 // pred_check
        %p128 = pneg %p29
      $region26: #{unet_forward.18} parent=23 // pred_check_branch
        %130 = sbr.rel (%p128) target = $region28
      $region27: #{unet_forward.18} parent=23 // pred_region
        %s131 = smul.u32 32, %s9
        %p132 = scmp.lt.s32.totalorder %s131, 63
        %s133 = scalar_select %p132, %s131, 63
        %s134 = smul.addr %s133, 2
        %s135 = smul.addr %s134, 4
        %s136 = scalar_lea.vmem %s0, %s135
        %s137 = smul.u32 32, %s9
      $region28: #{unet_forward.18} parent=23 // pred_fallthru
        _
    $region24: #{unet_forward.18} parent=5 // pred_fallthru
      _
    %p138 = scmp.le.s32.totalorder 1, %s9
    %p139 = scmp.lt.s32.totalorder %s9, 3
    %p140 = pnand %p138, %p139
    %p141 = pneg %p140
    // Predicated region
    $region29: #{unet_forward.18} parent=5 // pred_check
      _
    $region30: #{unet_forward.18} parent=5 // pred_check_branch
      %143 = sbr.rel (%p140) target = $region32
    $region31: #{unet_forward.18} parent=5 // pred_region
      %s144 = ssub.s32 %s9, 1
      %s145 = smul.u32 32, %s14
      %p146 = scmp.lt.s32.totalorder %s145, 63
      %s147 = scalar_select %p146, %s145, 63
      %s148 = smul.addr %s147, 2
      %s149 = smul.addr %s148, 4
      %s150 = scalar_lea.vmem %s0, %s149
      %p151 = pneg %p35
      %p152 = pneg %p32
      %p153 = pneg %p56
      %p154 = pneg %p53
      %p155 = pneg %p77
      %p156 = pneg %p74
      %p157 = pneg %p103
      %p158 = pneg %p100
      %s159 = smul.u32 32, %s14
      %p160 = scmp.lt.s32.totalorder %s159, 63
      %s161 = scalar_select %p160, %s159, 63
      %s162 = smul.addr %s161, 8
      %s163 = scalar_lea.vmem %s3, %s162
      %s164 = smul.u32 32, %s14
      %p165 = scmp.lt.s32.totalorder %s164, 63
      %s166 = scalar_select %p165, %s164, 63
      %s167 = smul.addr %s166, 2
      %s168 = smul.addr %s167, 4
      %s169 = scalar_lea.vmem %s0, %s168
      %s170 = smul.u32 32, %s14
      %s171 = smul.u32 32, %s14
      %p172 = scmp.lt.s32.totalorder %s171, 63
      %s173 = scalar_select %p172, %s171, 63
      %s174 = smul.addr %s173, 8
      %s175 = scalar_lea.vmem %s3, %s174
      %s176 = smul.u32 32, %s14
      %v178 = vld [vmem:[%s169] sm:$0xff]
      %v179 = vld [vmem:[%s169 + $0x8] sm:$0xff]
      %v180 = vld [vmem:[%s169 + $0x10] sm:$0xff]
      %v181 = vld [vmem:[%s169 + $0x18] sm:$0xff]
      %v182 = vld [vmem:[%s169 + $0x20] sm:$0xff]
      %v183 = vld [vmem:[%s169 + $0x28] sm:$0xff]
      %v184 = vld [vmem:[%s169 + $0x30] sm:$0xff]
      %v185 = vld [vmem:[%s169 + $0x38] sm:$0xff]
      %v186 = vld [vmem:[%s169 + $0x40] sm:$0xff]
      %v187 = vld [vmem:[%s169 + $0x48] sm:$0xff]
      %v188 = vld [vmem:[%s169 + $0x50] sm:$0xff]
      %v189 = vld [vmem:[%s169 + $0x58] sm:$0xff]
      %v190 = vld [vmem:[%s169 + $0x60] sm:$0xff]
      %v191 = vld [vmem:[%s169 + $0x68] sm:$0xff]
      %v192 = vld [vmem:[%s169 + $0x70] sm:$0xff]
      %v193 = vld [vmem:[%s169 + $0x78] sm:$0xff]
      %v194 = vld [vmem:[%s169 + $0x80] sm:$0xff]
      %v195 = vld [vmem:[%s169 + $0x88] sm:$0xff]
      %v196 = vld [vmem:[%s169 + $0x90] sm:$0xff]
      %v197 = vld [vmem:[%s169 + $0x98] sm:$0xff]
      %v198 = vld [vmem:[%s169 + $0xa0] sm:$0xff]
      %v199 = vld [vmem:[%s169 + $0xa8] sm:$0xff]
      %v200 = vld [vmem:[%s169 + $0xb0] sm:$0xff]
      %v201 = vld [vmem:[%s169 + $0xb8] sm:$0xff]
      %v202 = vld [vmem:[%s169 + $0xc0] sm:$0xff]
      %v203 = vld [vmem:[%s169 + $0xc8] sm:$0xff]
      %v204 = vld [vmem:[%s169 + $0xd0] sm:$0xff]
      %v205 = vld [vmem:[%s169 + $0xd8] sm:$0xff]
      %v206 = vld [vmem:[%s169 + $0xe0] sm:$0xff]
      %v207 = vld [vmem:[%s169 + $0xe8] sm:$0xff]
      %v208 = vld [vmem:[%s169 + $0xf0] sm:$0xff]
      %v209 = vld [vmem:[%s169 + $0xf8] sm:$0xff]
      %v210 = vld [vmem:[%s1] sm:$0xf]
      %v211 = vld [vmem:[%s1 + $0x4] sm:$0xf]
      %v212 = vld [vmem:[%s1 + $0x8] sm:$0xf]
      %v213 = vld [vmem:[%s1 + $0xc] sm:$0xf]
      %v214 = vld [vmem:[%s1 + $0x10] sm:$0xf]
      %v215 = vld [vmem:[%s1 + $0x14] sm:$0xf]
      %v216 = vld [vmem:[%s1 + $0x18] sm:$0xf]
      %v217 = vld [vmem:[%s1 + $0x1c] sm:$0xf]
      %v218 = vld [vmem:[%s1 + $0x20] sm:$0xf]
      %v219 = vld [vmem:[%s1 + $0x24] sm:$0xf]
      %v220 = vld [vmem:[%s1 + $0x28] sm:$0xf]
      %v221 = vld [vmem:[%s1 + $0x2c] sm:$0xf]
      %v222 = vld [vmem:[%s1 + $0x30] sm:$0xf]
      %v223 = vld [vmem:[%s1 + $0x34] sm:$0xf]
      %v224 = vld [vmem:[%s1 + $0x38] sm:$0xf]
      %v225 = vld [vmem:[%s1 + $0x3c] sm:$0xf]
      %v226 = vld [vmem:[%s1 + $0x40] sm:$0xf]
      %v227 = vld [vmem:[%s1 + $0x44] sm:$0xf]
      %v228 = vld [vmem:[%s1 + $0x48] sm:$0xf]
      %v229 = vld [vmem:[%s1 + $0x4c] sm:$0xf]
      %v230 = vld [vmem:[%s1 + $0x50] sm:$0xf]
      %v231 = vld [vmem:[%s1 + $0x54] sm:$0x3]
      %v232 = vld [vmem:[%s2] sm:$0x1]
      %v234 = vlaneseq
      %v235 = vshrl.u32 %v234, 7
      %v236 = vsub.s32 0, %v235
      %v237 = vrot.slane %v232, %v236
      %v271 = vunpack.c.l.b16 %v178
      %v272 = vunpack.c.h.b16 %v178
      %v273 = vunpack.c.l.b16 %v179
      %v274 = vunpack.c.h.b16 %v179
      %v275 = vunpack.c.l.b16 %v180
      %v276 = vunpack.c.h.b16 %v180
      %v277 = vunpack.c.l.b16 %v181
      %v278 = vunpack.c.h.b16 %v181
      %v279 = vunpack.c.l.b16 %v182
      %v280 = vunpack.c.h.b16 %v182
      %v281 = vunpack.c.l.b16 %v183
      %v282 = vunpack.c.h.b16 %v183
      %v283 = vunpack.c.l.b16 %v184
      %v284 = vunpack.c.h.b16 %v184
      %v285 = vunpack.c.l.b16 %v185
      %v286 = vunpack.c.h.b16 %v185
      %v287 = vunpack.c.l.b16 %v186
      %v288 = vunpack.c.h.b16 %v186
      %v289 = vunpack.c.l.b16 %v187
      %v290 = vunpack.c.h.b16 %v187
      %v291 = vunpack.c.l.b16 %v188
      %v292 = vunpack.c.h.b16 %v188
      %v293 = vunpack.c.l.b16 %v189
      %v294 = vunpack.c.h.b16 %v189
      %v295 = vunpack.c.l.b16 %v190
      %v296 = vunpack.c.h.b16 %v190
      %v297 = vunpack.c.l.b16 %v191
      %v298 = vunpack.c.h.b16 %v191
      %v299 = vunpack.c.l.b16 %v192
      %v300 = vunpack.c.h.b16 %v192
      %v301 = vunpack.c.l.b16 %v193
      %v302 = vunpack.c.h.b16 %v193
      %v303 = vunpack.c.l.b16 %v194
      %v304 = vunpack.c.h.b16 %v194
      %v305 = vunpack.c.l.b16 %v195
      %v306 = vunpack.c.h.b16 %v195
      %v307 = vunpack.c.l.b16 %v196
      %v308 = vunpack.c.h.b16 %v196
      %v309 = vunpack.c.l.b16 %v197
      %v310 = vunpack.c.h.b16 %v197
      %v311 = vunpack.c.l.b16 %v198
      %v312 = vunpack.c.h.b16 %v198
      %v313 = vunpack.c.l.b16 %v199
      %v314 = vunpack.c.h.b16 %v199
      %v315 = vunpack.c.l.b16 %v200
      %v316 = vunpack.c.h.b16 %v200
      %v317 = vunpack.c.l.b16 %v201
      %v318 = vunpack.c.h.b16 %v201
      %v319 = vunpack.c.l.b16 %v202
      %v320 = vunpack.c.h.b16 %v202
      %v321 = vunpack.c.l.b16 %v203
      %v322 = vunpack.c.h.b16 %v203
      %v323 = vunpack.c.l.b16 %v204
      %v324 = vunpack.c.h.b16 %v204
      %v325 = vunpack.c.l.b16 %v205
      %v326 = vunpack.c.h.b16 %v205
      %v327 = vunpack.c.l.b16 %v206
      %v328 = vunpack.c.h.b16 %v206
      %v329 = vunpack.c.l.b16 %v207
      %v330 = vunpack.c.h.b16 %v207
      %v331 = vunpack.c.l.b16 %v208
      %v332 = vunpack.c.h.b16 %v208
      %v333 = vunpack.c.l.b16 %v209
      %v334 = vunpack.c.h.b16 %v209
      %v335 = vpack.c.b16 %v273, %v271
      %v336 = vpack.c.b16 %v274, %v272
      %v337 = vpack.c.b16 %v277, %v275
      %v338 = vpack.c.b16 %v278, %v276
      %v339 = vpack.c.b16 %v281, %v279
      %v340 = vpack.c.b16 %v282, %v280
      %v341 = vpack.c.b16 %v285, %v283
      %v342 = vpack.c.b16 %v286, %v284
      %v343 = vpack.c.b16 %v289, %v287
      %v344 = vpack.c.b16 %v290, %v288
      %v345 = vpack.c.b16 %v293, %v291
      %v346 = vpack.c.b16 %v294, %v292
      %v347 = vpack.c.b16 %v297, %v295
      %v348 = vpack.c.b16 %v298, %v296
      %v349 = vpack.c.b16 %v301, %v299
      %v350 = vpack.c.b16 %v302, %v300
      %v351 = vpack.c.b16 %v305, %v303
      %v352 = vpack.c.b16 %v306, %v304
      %v353 = vpack.c.b16 %v309, %v307
      %v354 = vpack.c.b16 %v310, %v308
      %v355 = vpack.c.b16 %v313, %v311
      %v356 = vpack.c.b16 %v314, %v312
      %v357 = vpack.c.b16 %v317, %v315
      %v358 = vpack.c.b16 %v318, %v316
      %v359 = vpack.c.b16 %v321, %v319
      %v360 = vpack.c.b16 %v322, %v320
      %v361 = vpack.c.b16 %v325, %v323
      %v362 = vpack.c.b16 %v326, %v324
      %v363 = vpack.c.b16 %v329, %v327
      %v364 = vpack.c.b16 %v330, %v328
      %v365 = vpack.c.b16 %v333, %v331
      %v366 = vpack.c.b16 %v334, %v332
      %v405 = vunpack.c.l.b16 %v210
      %v406 = vunpack.c.l.b16 %v211
      %v407 = vunpack.c.l.b16 %v212
      %v408 = vunpack.c.l.b16 %v213
      %v409 = vunpack.c.l.b16 %v214
      %v410 = vunpack.c.l.b16 %v215
      %v411 = vunpack.c.l.b16 %v216
      %v412 = vunpack.c.l.b16 %v217
      %v413 = vunpack.c.l.b16 %v218
      %v414 = vunpack.c.l.b16 %v219
      %v415 = vunpack.c.l.b16 %v220
      %v416 = vunpack.c.l.b16 %v221
      %v417 = vunpack.c.l.b16 %v222
      %v418 = vunpack.c.l.b16 %v223
      %v419 = vunpack.c.l.b16 %v224
      %v420 = vunpack.c.l.b16 %v225
      %v421 = vunpack.c.l.b16 %v226
      %v422 = vunpack.c.l.b16 %v227
      %v423 = vunpack.c.l.b16 %v228
      %v424 = vunpack.c.l.b16 %v229
      %v425 = vunpack.c.l.b16 %v230
      %v426 = vunpack.c.l.b16 %v231
      %v427 = vpack.c.b16 %v406, %v405
      %v428 = vpack.c.b16 %v408, %v407
      %v429 = vpack.c.b16 %v410, %v409
      %v430 = vpack.c.b16 %v412, %v411
      %v431 = vpack.c.b16 %v414, %v413
      %v432 = vpack.c.b16 %v416, %v415
      %v433 = vpack.c.b16 %v418, %v417
      %v434 = vpack.c.b16 %v420, %v419
      %v435 = vpack.c.b16 %v422, %v421
      %v436 = vpack.c.b16 %v424, %v423
      %v437 = vpack.c.b16 %v426, %v425
      %vm448 = vcmask 351232
      %v450 = vsel %vm448, %v336, 0
      %v453 = vsel %vm448, %v338, 0
      %v456 = vsel %vm448, %v340, 0
      %v459 = vsel %vm448, %v342, 0
      %v462 = vsel %vm448, %v344, 0
      %v465 = vsel %vm448, %v346, 0
      %v468 = vsel %vm448, %v348, 0
      %v471 = vsel %vm448, %v350, 0
      %v474 = vsel %vm448, %v352, 0
      %v477 = vsel %vm448, %v354, 0
      %v480 = vsel %vm448, %v356, 0
      %v483 = vsel %vm448, %v358, 0
      %v486 = vsel %vm448, %v360, 0
      %v489 = vsel %vm448, %v362, 0
      %v492 = vsel %vm448, %v364, 0
      %v495 = vsel %vm448, %v366, 0
      %vm497 = vcmask 1044480
      %vm498 = vcmask 1045504
      %v499 = vsel %vm497, 4294967295, 65535
      %v500 = vsel %vm498, %v499, 0
      %v502 = vand.u32 %v437, %v500
      %504 = vmatprep.subr.bf16.mxu0 0
      %505 = vmatpush1.bf16.msra.mxu0 %v434
      %506 = vmatprep.subr.bf16.mxu0 0
      %507 = vmatpush1.bf16.msra.mxu0 %v433
      %508 = vmatprep.subr.bf16.mxu0 0
      %509 = vmatpush1.bf16.msra.mxu0 %v432
      %510 = vmatprep.subr.bf16.mxu0 0
      %511 = vmatpush1.bf16.msra.mxu0 %v431
      %512 = vmatprep.subr.bf16.mxu0 0
      %513 = vmatpush1.bf16.msra.mxu0 %v430
      %514 = vmatprep.subr.bf16.mxu0 0
      %515 = vmatpush1.bf16.msra.mxu0 %v429
      %516 = vmatprep.subr.bf16.mxu0 0
      %517 = vmatpush1.bf16.msra.mxu0 %v428
      %518 = vmatprep.subr.bf16.mxu0 0
      %519 = vmatpush1.bf16.msra.mxu0 %v427
      %520 = vmatprep.subr.bf16.mxu0 0
      %521 = vmatpush2.bf16.msra.mxu0 0
      %522 = vmatprep.subr.bf16.mxu0 0
      %523 = vmatpush2.bf16.msra.mxu0 0
      %524 = vmatprep.subr.bf16.mxu0 0
      %525 = vmatpush2.bf16.msra.mxu0 0
      %526 = vmatprep.subr.bf16.mxu0 0
      %527 = vmatpush2.bf16.msra.mxu0 0
      %528 = vmatprep.subr.bf16.mxu0 0
      %529 = vmatpush2.bf16.msra.mxu0 0
      %530 = vmatprep.subr.bf16.mxu0 0
      %531 = vmatpush2.bf16.msra.mxu0 %v502
      %532 = vmatprep.subr.bf16.mxu0 0
      %533 = vmatpush2.bf16.msra.mxu0 %v436
      %534 = vmatprep.subr.bf16.mxu0 0
      %535 = vmatpush2.bf16.msra.mxu0 %v435
      %536 = vmatprep.mubr.bf16.mxu0 %v450
      %537 = vmatmul.mubr.bf16.gmra.mxu0 %v335
      %v538 = vpop.f32.mrf.mxu0
      %v539 = vadd.f32 %v237, %v538
      %v540 = vpop.f32.mrf.mxu0
      %v541 = vpop.f32.mrf.mxu0
      %v542 = vadd.f32 %v237, %v541
      %v543 = vpop.f32.mrf.mxu0
      %544 = vmatprep.mubr.bf16.mxu0 %v453
      %545 = vmatmul.mubr.bf16.gmra.mxu0 %v337
      %v546 = vpop.f32.mrf.mxu0
      %v547 = vadd.f32 %v237, %v546
      %v548 = vpop.f32.mrf.mxu0
      %v549 = vpop.f32.mrf.mxu0
      %v550 = vadd.f32 %v237, %v549
      %v551 = vpop.f32.mrf.mxu0
      %552 = vmatprep.mubr.bf16.mxu0 %v456
      %553 = vmatmul.mubr.bf16.gmra.mxu0 %v339
      %v554 = vpop.f32.mrf.mxu0
      %v555 = vadd.f32 %v237, %v554
      %v556 = vpop.f32.mrf.mxu0
      %v557 = vpop.f32.mrf.mxu0
      %v558 = vadd.f32 %v237, %v557
      %v559 = vpop.f32.mrf.mxu0
      %560 = vmatprep.mubr.bf16.mxu0 %v459
      %561 = vmatmul.mubr.bf16.gmra.mxu0 %v341
      %v562 = vpop.f32.mrf.mxu0
      %v563 = vadd.f32 %v237, %v562
      %v564 = vpop.f32.mrf.mxu0
      %v565 = vpop.f32.mrf.mxu0
      %v566 = vadd.f32 %v237, %v565
      %v567 = vpop.f32.mrf.mxu0
      %568 = vmatprep.mubr.bf16.mxu0 %v462
      %569 = vmatmul.mubr.bf16.gmra.mxu0 %v343
      %v570 = vpop.f32.mrf.mxu0
      %v571 = vadd.f32 %v237, %v570
      %v572 = vpop.f32.mrf.mxu0
      %v573 = vpop.f32.mrf.mxu0
      %v574 = vadd.f32 %v237, %v573
      %v575 = vpop.f32.mrf.mxu0
      %576 = vmatprep.mubr.bf16.mxu0 %v465
      %577 = vmatmul.mubr.bf16.gmra.mxu0 %v345
      %v578 = vpop.f32.mrf.mxu0
      %v579 = vadd.f32 %v237, %v578
      %v580 = vpop.f32.mrf.mxu0
      %v581 = vpop.f32.mrf.mxu0
      %v582 = vadd.f32 %v237, %v581
      %v583 = vpop.f32.mrf.mxu0
      %584 = vmatprep.mubr.bf16.mxu0 %v468
      %585 = vmatmul.mubr.bf16.gmra.mxu0 %v347
      %v586 = vpop.f32.mrf.mxu0
      %v587 = vadd.f32 %v237, %v586
      %v588 = vpop.f32.mrf.mxu0
      %v589 = vpop.f32.mrf.mxu0
      %v590 = vadd.f32 %v237, %v589
      %v591 = vpop.f32.mrf.mxu0
      %592 = vmatprep.mubr.bf16.mxu0 %v471
      %593 = vmatmul.mubr.bf16.gmra.mxu0 %v349
      %v594 = vpop.f32.mrf.mxu0
      %v595 = vadd.f32 %v237, %v594
      %v596 = vpop.f32.mrf.mxu0
      %v597 = vpop.f32.mrf.mxu0
      %v598 = vadd.f32 %v237, %v597
      %v599 = vpop.f32.mrf.mxu0
      %600 = vmatprep.mubr.bf16.mxu0 %v474
      %601 = vmatmul.mubr.bf16.gmra.mxu0 %v351
      %v602 = vpop.f32.mrf.mxu0
      %v603 = vadd.f32 %v237, %v602
      %v604 = vpop.f32.mrf.mxu0
      %v605 = vpop.f32.mrf.mxu0
      %v606 = vadd.f32 %v237, %v605
      %v607 = vpop.f32.mrf.mxu0
      %608 = vmatprep.mubr.bf16.mxu0 %v477
      %609 = vmatmul.mubr.bf16.gmra.mxu0 %v353
      %v610 = vpop.f32.mrf.mxu0
      %v611 = vadd.f32 %v237, %v610
      %v612 = vpop.f32.mrf.mxu0
      %v613 = vpop.f32.mrf.mxu0
      %v614 = vadd.f32 %v237, %v613
      %v615 = vpop.f32.mrf.mxu0
      %616 = vmatprep.mubr.bf16.mxu0 %v480
      %617 = vmatmul.mubr.bf16.gmra.mxu0 %v355
      %v618 = vpop.f32.mrf.mxu0
      %v619 = vadd.f32 %v237, %v618
      %v620 = vpop.f32.mrf.mxu0
      %v621 = vpop.f32.mrf.mxu0
      %v622 = vadd.f32 %v237, %v621
      %v623 = vpop.f32.mrf.mxu0
      %624 = vmatprep.mubr.bf16.mxu0 %v483
      %625 = vmatmul.mubr.bf16.gmra.mxu0 %v357
      %v626 = vpop.f32.mrf.mxu0
      %v627 = vadd.f32 %v237, %v626
      %v628 = vpop.f32.mrf.mxu0
      %v629 = vpop.f32.mrf.mxu0
      %v630 = vadd.f32 %v237, %v629
      %v631 = vpop.f32.mrf.mxu0
      %632 = vmatprep.mubr.bf16.mxu0 %v486
      %633 = vmatmul.mubr.bf16.gmra.mxu0 %v359
      %v634 = vpop.f32.mrf.mxu0
      %v635 = vadd.f32 %v237, %v634
      %v636 = vpop.f32.mrf.mxu0
      %v637 = vpop.f32.mrf.mxu0
      %v638 = vadd.f32 %v237, %v637
      %v639 = vpop.f32.mrf.mxu0
      %640 = vmatprep.mubr.bf16.mxu0 %v489
      %641 = vmatmul.mubr.bf16.gmra.mxu0 %v361
      %v642 = vpop.f32.mrf.mxu0
      %v643 = vadd.f32 %v237, %v642
      %v644 = vpop.f32.mrf.mxu0
      %v645 = vpop.f32.mrf.mxu0
      %v646 = vadd.f32 %v237, %v645
      %v647 = vpop.f32.mrf.mxu0
      %648 = vmatprep.mubr.bf16.mxu0 %v492
      %649 = vmatmul.mubr.bf16.gmra.mxu0 %v363
      %v650 = vpop.f32.mrf.mxu0
      %v651 = vadd.f32 %v237, %v650
      %v652 = vpop.f32.mrf.mxu0
      %v653 = vpop.f32.mrf.mxu0
      %v654 = vadd.f32 %v237, %v653
      %v655 = vpop.f32.mrf.mxu0
      %656 = vmatprep.mubr.bf16.mxu0 %v495
      %657 = vmatmul.mubr.bf16.gmra.mxu0 %v365
      %v658 = vpop.f32.mrf.mxu0
      %v659 = vadd.f32 %v237, %v658
      %v660 = vpop.f32.mrf.mxu0
      %v661 = vpop.f32.mrf.mxu0
      %v662 = vadd.f32 %v237, %v661
      %v663 = vpop.f32.mrf.mxu0
      %664 = vdwg.mxu0
      %v665 = vmax.f32 %v539, 0.0
      %v666 = vmax.f32 %v542, 0.0
      %v667 = vmax.f32 %v547, 0.0
      %v668 = vmax.f32 %v550, 0.0
      %v669 = vmax.f32 %v555, 0.0
      %v670 = vmax.f32 %v558, 0.0
      %v671 = vmax.f32 %v563, 0.0
      %v672 = vmax.f32 %v566, 0.0
      %v673 = vmax.f32 %v571, 0.0
      %v674 = vmax.f32 %v574, 0.0
      %v675 = vmax.f32 %v579, 0.0
      %v676 = vmax.f32 %v582, 0.0
      %v677 = vmax.f32 %v587, 0.0
      %v678 = vmax.f32 %v590, 0.0
      %v679 = vmax.f32 %v595, 0.0
      %v680 = vmax.f32 %v598, 0.0
      %v681 = vmax.f32 %v603, 0.0
      %v682 = vmax.f32 %v606, 0.0
      %v683 = vmax.f32 %v611, 0.0
      %v684 = vmax.f32 %v614, 0.0
      %v685 = vmax.f32 %v619, 0.0
      %v686 = vmax.f32 %v622, 0.0
      %v687 = vmax.f32 %v627, 0.0
      %v688 = vmax.f32 %v630, 0.0
      %v689 = vmax.f32 %v635, 0.0
      %v690 = vmax.f32 %v638, 0.0
      %v691 = vmax.f32 %v643, 0.0
      %v692 = vmax.f32 %v646, 0.0
      %v693 = vmax.f32 %v651, 0.0
      %v694 = vmax.f32 %v654, 0.0
      %v695 = vmax.f32 %v659, 0.0
      %v696 = vmax.f32 %v662, 0.0
      %vm697 = vcmask 261120
      %698 = vst.msk [vmem:[%s175] sm:$0xff] %vm697, %v665
      %699 = vst.msk [vmem:[%s175 + $0x8] sm:$0xff] %vm697, %v666
      %700 = vst.msk [vmem:[%s175 + $0x10] sm:$0xff] %vm697, %v667
      %701 = vst.msk [vmem:[%s175 + $0x18] sm:$0xff] %vm697, %v668
      %702 = vst.msk [vmem:[%s175 + $0x20] sm:$0xff] %vm697, %v669
      %703 = vst.msk [vmem:[%s175 + $0x28] sm:$0xff] %vm697, %v670
      %704 = vst.msk [vmem:[%s175 + $0x30] sm:$0xff] %vm697, %v671
      %705 = vst.msk [vmem:[%s175 + $0x38] sm:$0xff] %vm697, %v672
      %706 = vst.msk [vmem:[%s175 + $0x40] sm:$0xff] %vm697, %v673
      %707 = vst.msk [vmem:[%s175 + $0x48] sm:$0xff] %vm697, %v674
      %708 = vst.msk [vmem:[%s175 + $0x50] sm:$0xff] %vm697, %v675
      %709 = vst.msk [vmem:[%s175 + $0x58] sm:$0xff] %vm697, %v676
      %710 = vst.msk [vmem:[%s175 + $0x60] sm:$0xff] %vm697, %v677
      %711 = vst.msk [vmem:[%s175 + $0x68] sm:$0xff] %vm697, %v678
      %712 = vst.msk [vmem:[%s175 + $0x70] sm:$0xff] %vm697, %v679
      %713 = vst.msk [vmem:[%s175 + $0x78] sm:$0xff] %vm697, %v680
      %714 = vst.msk [vmem:[%s175 + $0x80] sm:$0xff] %vm697, %v681
      %715 = vst.msk [vmem:[%s175 + $0x88] sm:$0xff] %vm697, %v682
      %716 = vst.msk [vmem:[%s175 + $0x90] sm:$0xff] %vm697, %v683
      %717 = vst.msk [vmem:[%s175 + $0x98] sm:$0xff] %vm697, %v684
      %718 = vst.msk [vmem:[%s175 + $0xa0] sm:$0xff] %vm697, %v685
      %719 = vst.msk [vmem:[%s175 + $0xa8] sm:$0xff] %vm697, %v686
      %720 = vst.msk [vmem:[%s175 + $0xb0] sm:$0xff] %vm697, %v687
      %721 = vst.msk [vmem:[%s175 + $0xb8] sm:$0xff] %vm697, %v688
      %722 = vst.msk [vmem:[%s175 + $0xc0] sm:$0xff] %vm697, %v689
      %723 = vst.msk [vmem:[%s175 + $0xc8] sm:$0xff] %vm697, %v690
      %724 = vst.msk [vmem:[%s175 + $0xd0] sm:$0xff] %vm697, %v691
      %725 = vst.msk [vmem:[%s175 + $0xd8] sm:$0xff] %vm697, %v692
      %726 = vst.msk [vmem:[%s175 + $0xe0] sm:$0xff] %vm697, %v693
      %727 = vst.msk [vmem:[%s175 + $0xe8] sm:$0xff] %vm697, %v694
      %728 = vst.msk [vmem:[%s175 + $0xf0] sm:$0xff] %vm697, %v695
      %729 = vst.msk [vmem:[%s175 + $0xf8] sm:$0xff] %vm697, %v696
      %s730 = smul.u32 32, %s14
      %p731 = scmp.lt.s32.totalorder %s730, 63
      %s732 = scalar_select %p731, %s730, 63
      %s733 = smul.addr %s732, 8
      %s734 = scalar_lea.vmem %s3, %s733
      // Predicated region
      $region33: #{unet_forward.18} parent=31 // pred_check
        %p735 = pneg %p100
      $region34: #{unet_forward.18} parent=31 // pred_check_branch
        %737 = sbr.rel (%p735) target = $region36
      $region35: #{unet_forward.18} parent=31 // pred_region
        %s738 = smul.u32 32, %s14
      $region36: #{unet_forward.18} parent=31 // pred_fallthru
        _
    $region32: #{unet_forward.18} parent=5 // pred_fallthru
      _
    %p739 = scmp.le.s32.totalorder 2, %s9
    // Predicated region
    $region37: #{unet_forward.18} parent=5 // pred_check
      %p740 = pneg %p739
    $region38: #{unet_forward.18} parent=5 // pred_check_branch
      %742 = sbr.rel (%p740) target = $region40
    $region39: #{unet_forward.18} parent=5 // pred_region
      %s743 = ssub.s32 %s9, 2
      // Predicated region
      $region41: #{unet_forward.18} parent=39 // pred_check
        %p744 = pneg %p106
      $region42: #{unet_forward.18} parent=39 // pred_check_branch
        %746 = sbr.rel (%p744) target = $region44
      $region43: #{unet_forward.18} parent=39 // pred_region
        %s747 = smul.u32 32, %s15
        %p748 = scmp.lt.s32.totalorder %s747, 63
        %s749 = scalar_select %p748, %s747, 63
        %s750 = smul.addr %s749, 8
        %s751 = scalar_lea.vmem %s3, %s750
      $region44: #{unet_forward.18} parent=39 // pred_fallthru
        _
    $region40: #{unet_forward.18} parent=5 // pred_fallthru
      _
  $region6: #{unet_forward.18} parent=0 // loop_footer
    %s13 = sadd.s32 1, %s9
  $region7: #{unet_forward.18} parent=0 // loop_footer_branch
    %8 = sbr.rel target = $region3
  $region8: #{unet_forward.18} parent=0 // loop_exit
    _

// kernel: unet_forward.20
$region0: #{unet_forward.20}
  #allocation0 [shape = 'u32[]', space=smem, size = 0x4, offset = 0x4, fixed_abs, tag = 'smem constant byte address 0x4 - core index']
  #allocation1 [shape = 'u32[144,128]{1,0:T(1,128)}', space=vmem, size = 0x12000, scoped, tag = 'internal scratch']
  %s0 = inlined_call_operand.vmem [shape: f32[8,2,4,102], index: 0, kind: input, shape index: {}]
  %s1 = inlined_call_operand.vmem [shape: f32[8,4,51], index: 1, kind: output, shape index: {}]
  %s2 = sld [smem:[#allocation0]]
  $region14: #{unet_forward.20} parent=0
    _
  %s4 = ssub.s32 1, %s2
  %s5 = scalar_select 0, %s4, %s2
  // Predicated region
  $region2: #{unet_forward.20} parent=0 // pred_check
    _
  $region3: #{unet_forward.20} parent=0 // pred_check_branch
    %7 = sbr.rel (0) target = $region5
  $region4: #{unet_forward.20} parent=0 // pred_region
    _
  $region5: #{unet_forward.20} parent=0 // pred_fallthru
    _
  %v8 = vld [vmem:[%s0] sm:$0xf]
  %v9 = vld [vmem:[%s0 + $0x4] sm:$0xf]
  %v10 = vld [vmem:[%s0 + $0x8] sm:$0xf]
  %v11 = vld [vmem:[%s0 + $0xc] sm:$0xf]
  %v12 = vld [vmem:[%s0 + $0x10] sm:$0xf]
  %v13 = vld [vmem:[%s0 + $0x14] sm:$0xf]
  %v14 = vld [vmem:[%s0 + $0x18] sm:$0xf]
  %v15 = vld [vmem:[%s0 + $0x1c] sm:$0xf]
  %v16 = vld [vmem:[%s0 + $0x20] sm:$0xf]
  %v17 = vld [vmem:[%s0 + $0x24] sm:$0xf]
  %v18 = vld [vmem:[%s0 + $0x28] sm:$0xf]
  %v19 = vld [vmem:[%s0 + $0x2c] sm:$0xf]
  %v20 = vld [vmem:[%s0 + $0x30] sm:$0xf]
  %v21 = vld [vmem:[%s0 + $0x34] sm:$0xf]
  %v22 = vld [vmem:[%s0 + $0x38] sm:$0xf]
  %v23 = vld [vmem:[%s0 + $0x3c] sm:$0xf]
  %32 = vrot.lane.b32.xlu0 %v8, 77
  %v33 = vpop.permute.xlu0 %32
  %34 = vrot.lane.b32.xlu0 %v10, 77
  %v35 = vpop.permute.xlu0 %34
  %36 = vrot.lane.b32.xlu0 %v12, 77
  %v37 = vpop.permute.xlu0 %36
  %38 = vrot.lane.b32.xlu0 %v14, 77
  %v39 = vpop.permute.xlu0 %38
  %40 = vrot.lane.b32.xlu0 %v16, 77
  %v41 = vpop.permute.xlu0 %40
  %42 = vrot.lane.b32.xlu0 %v18, 77
  %v43 = vpop.permute.xlu0 %42
  %44 = vrot.lane.b32.xlu0 %v20, 77
  %v45 = vpop.permute.xlu0 %44
  %46 = vrot.lane.b32.xlu0 %v22, 77
  %v47 = vpop.permute.xlu0 %46
  %v56 = vadd.f32 %v8, %v33
  %v57 = vadd.f32 %v10, %v35
  %v58 = vadd.f32 %v12, %v37
  %v59 = vadd.f32 %v14, %v39
  %v60 = vadd.f32 %v16, %v41
  %v61 = vadd.f32 %v18, %v43
  %v62 = vadd.f32 %v20, %v45
  %v63 = vadd.f32 %v22, %v47
  %v64 = vadd.f32 %v56, %v9
  %v65 = vadd.f32 %v57, %v11
  %v66 = vadd.f32 %v58, %v13
  %v67 = vadd.f32 %v59, %v15
  %v68 = vadd.f32 %v60, %v17
  %v69 = vadd.f32 %v61, %v19
  %v70 = vadd.f32 %v62, %v21
  %v71 = vadd.f32 %v63, %v23
  %80 = vrot.lane.b32.xlu0 %v9, 77
  %v81 = vpop.permute.xlu0 %80
  %82 = vrot.lane.b32.xlu0 %v11, 77
  %v83 = vpop.permute.xlu0 %82
  %84 = vrot.lane.b32.xlu0 %v13, 77
  %v85 = vpop.permute.xlu0 %84
  %86 = vrot.lane.b32.xlu0 %v15, 77
  %v87 = vpop.permute.xlu0 %86
  %88 = vrot.lane.b32.xlu0 %v17, 77
  %v89 = vpop.permute.xlu0 %88
  %90 = vrot.lane.b32.xlu0 %v19, 77
  %v91 = vpop.permute.xlu0 %90
  %92 = vrot.lane.b32.xlu0 %v21, 77
  %v93 = vpop.permute.xlu0 %92
  %94 = vrot.lane.b32.xlu0 %v23, 77
  %v95 = vpop.permute.xlu0 %94
  %v104 = vadd.f32 %v64, %v81
  %v105 = vadd.f32 %v65, %v83
  %v106 = vadd.f32 %v66, %v85
  %v107 = vadd.f32 %v67, %v87
  %v108 = vadd.f32 %v68, %v89
  %v109 = vadd.f32 %v69, %v91
  %v110 = vadd.f32 %v70, %v93
  %v111 = vadd.f32 %v71, %v95
  %v112 = vmul.f32 %v104, 0.25
  %v113 = vmul.f32 %v105, 0.25
  %v114 = vmul.f32 %v106, 0.25
  %v115 = vmul.f32 %v107, 0.25
  %v116 = vmul.f32 %v108, 0.25
  %v117 = vmul.f32 %v109, 0.25
  %v118 = vmul.f32 %v110, 0.25
  %v119 = vmul.f32 %v111, 0.25
  %vm120 = vcmask 412672
  %121 = vst.msk [vmem:[%s1] sm:$0xf] %vm120, %v112
  %122 = vst.msk [vmem:[%s1 + $0x4] sm:$0xf] %vm120, %v113
  %123 = vst.msk [vmem:[%s1 + $0x8] sm:$0xf] %vm120, %v114
  %124 = vst.msk [vmem:[%s1 + $0xc] sm:$0xf] %vm120, %v115
  %125 = vst.msk [vmem:[%s1 + $0x10] sm:$0xf] %vm120, %v116
  %126 = vst.msk [vmem:[%s1 + $0x14] sm:$0xf] %vm120, %v117
  %127 = vst.msk [vmem:[%s1 + $0x18] sm:$0xf] %vm120, %v118
  %128 = vst.msk [vmem:[%s1 + $0x1c] sm:$0xf] %vm120, %v119
  // Predicated region
  $region6: #{unet_forward.20} parent=0 // pred_check
    _
  $region7: #{unet_forward.20} parent=0 // pred_check_branch
    %130 = sbr.rel (0) target = $region9
  $region8: #{unet_forward.20} parent=0 // pred_region
    _
  $region9: #{unet_forward.20} parent=0 // pred_fallthru
    _
  // Predicated region
  $region10: #{unet_forward.20} parent=0 // pred_check
    _
  $region11: #{unet_forward.20} parent=0 // pred_check_branch
    %132 = sbr.rel (0) target = $region13
  $region12: #{unet_forward.20} parent=0 // pred_region
    _
  $region13: #{unet_forward.20} parent=0 // pred_fallthru
    _

// kernel: unet_forward.21
$region0: #{unet_forward.21}
  #allocation0 [shape = 'u32[]', space=smem, size = 0x4, offset = 0x4, fixed_abs, tag = 'smem constant byte address 0x4 - core index']
  #allocation1 [shape = 'u32[144,128]{1,0:T(1,128)}', space=vmem, size = 0x12000, scoped, tag = 'internal scratch']
  %s0 = inlined_call_operand.vmem [shape: bf16[128,459], index: 0, kind: input, shape index: {}]
  %s1 = inlined_call_operand.vmem [shape: bf16[459,64], index: 1, kind: input, shape index: {}]
  %s2 = inlined_call_operand.vmem [shape: f32[1,64], index: 2, kind: input, shape index: {}]
  %s3 = inlined_call_operand.vmem [shape: f32[128,64], index: 3, kind: output, shape index: {}]
  %s4 = sld [smem:[#allocation0]]
  $region22: #{unet_forward.21} parent=0
    _
  %s6 = ssub.s32 1, %s4
  %s7 = scalar_select 0, %s6, %s4
  // Predicated region
  $region2: #{unet_forward.21} parent=0 // pred_check
    _
  $region3: #{unet_forward.21} parent=0 // pred_check_branch
    %9 = sbr.rel (0) target = $region5
  $region4: #{unet_forward.21} parent=0 // pred_region
    _
  $region5: #{unet_forward.21} parent=0 // pred_fallthru
    _
  // Predicated region
  $region6: #{unet_forward.21} parent=0 // pred_check
    _
  $region7: #{unet_forward.21} parent=0 // pred_check_branch
    %11 = sbr.rel (0) target = $region9
  $region8: #{unet_forward.21} parent=0 // pred_region
    _
  $region9: #{unet_forward.21} parent=0 // pred_fallthru
    _
  // Predicated region
  $region10: #{unet_forward.21} parent=0 // pred_check
    _
  $region11: #{unet_forward.21} parent=0 // pred_check_branch
    %13 = sbr.rel (0) target = $region13
  $region12: #{unet_forward.21} parent=0 // pred_region
    _
  $region13: #{unet_forward.21} parent=0 // pred_fallthru
    _
  %v15 = vld [vmem:[%s0] sm:$0xff]
  %v16 = vld [vmem:[%s0 + $0x8] sm:$0xff]
  %v17 = vld [vmem:[%s0 + $0x10] sm:$0xff]
  %v18 = vld [vmem:[%s0 + $0x18] sm:$0xff]
  %v19 = vld [vmem:[%s0 + $0x20] sm:$0xff]
  %v20 = vld [vmem:[%s0 + $0x28] sm:$0xff]
  %v21 = vld [vmem:[%s0 + $0x30] sm:$0xff]
  %v22 = vld [vmem:[%s0 + $0x38] sm:$0xff]
  %v23 = vld [vmem:[%s0 + $0x40] sm:$0xff]
  %v24 = vld [vmem:[%s0 + $0x48] sm:$0xff]
  %v25 = vld [vmem:[%s0 + $0x50] sm:$0xff]
  %v26 = vld [vmem:[%s0 + $0x58] sm:$0xff]
  %v27 = vld [vmem:[%s0 + $0x60] sm:$0xff]
  %v28 = vld [vmem:[%s0 + $0x68] sm:$0xff]
  %v29 = vld [vmem:[%s0 + $0x70] sm:$0xff]
  %v30 = vld [vmem:[%s0 + $0x78] sm:$0xff]
  %v31 = vld [vmem:[%s0 + $0x80] sm:$0xff]
  %v32 = vld [vmem:[%s0 + $0x88] sm:$0xff]
  %v33 = vld [vmem:[%s0 + $0x90] sm:$0xff]
  %v34 = vld [vmem:[%s0 + $0x98] sm:$0xff]
  %v35 = vld [vmem:[%s0 + $0xa0] sm:$0xff]
  %v36 = vld [vmem:[%s0 + $0xa8] sm:$0xff]
  %v37 = vld [vmem:[%s0 + $0xb0] sm:$0xff]
  %v38 = vld [vmem:[%s0 + $0xb8] sm:$0xff]
  %v39 = vld [vmem:[%s0 + $0xc0] sm:$0xff]
  %v40 = vld [vmem:[%s0 + $0xc8] sm:$0xff]
  %v41 = vld [vmem:[%s0 + $0xd0] sm:$0xff]
  %v42 = vld [vmem:[%s0 + $0xd8] sm:$0xff]
  %v43 = vld [vmem:[%s0 + $0xe0] sm:$0xff]
  %v44 = vld [vmem:[%s0 + $0xe8] sm:$0xff]
  %v45 = vld [vmem:[%s0 + $0xf0] sm:$0xff]
  %v46 = vld [vmem:[%s0 + $0xf8] sm:$0xff]
  %v47 = vld [vmem:[%s1] sm:$0xf]
  %v48 = vld [vmem:[%s1 + $0x4] sm:$0xf]
  %v49 = vld [vmem:[%s1 + $0x8] sm:$0xf]
  %v50 = vld [vmem:[%s1 + $0xc] sm:$0xf]
  %v51 = vld [vmem:[%s1 + $0x10] sm:$0xf]
  %v52 = vld [vmem:[%s1 + $0x14] sm:$0xf]
  %v53 = vld [vmem:[%s1 + $0x18] sm:$0xf]
  %v54 = vld [vmem:[%s1 + $0x1c] sm:$0xf]
  %v55 = vld [vmem:[%s1 + $0x20] sm:$0xf]
  %v56 = vld [vmem:[%s1 + $0x24] sm:$0xf]
  %v57 = vld [vmem:[%s1 + $0x28] sm:$0xf]
  %v58 = vld [vmem:[%s1 + $0x2c] sm:$0xf]
  %v59 = vld [vmem:[%s1 + $0x30] sm:$0xf]
  %v60 = vld [vmem:[%s1 + $0x34] sm:$0xf]
  %v61 = vld [vmem:[%s1 + $0x38] sm:$0xf]
  %v62 = vld [vmem:[%s1 + $0x3c] sm:$0xf]
  %v63 = vld [vmem:[%s1 + $0x40] sm:$0xf]
  %v64 = vld [vmem:[%s1 + $0x44] sm:$0xf]
  %v65 = vld [vmem:[%s1 + $0x48] sm:$0xf]
  %v66 = vld [vmem:[%s1 + $0x4c] sm:$0xf]
  %v67 = vld [vmem:[%s1 + $0x50] sm:$0xf]
  %v68 = vld [vmem:[%s1 + $0x54] sm:$0xf]
  %v69 = vld [vmem:[%s1 + $0x58] sm:$0xf]
  %v70 = vld [vmem:[%s1 + $0x5c] sm:$0xf]
  %v71 = vld [vmem:[%s1 + $0x60] sm:$0xf]
  %v72 = vld [vmem:[%s1 + $0x64] sm:$0xf]
  %v73 = vld [vmem:[%s1 + $0x68] sm:$0xf]
  %v74 = vld [vmem:[%s1 + $0x6c] sm:$0xf]
  %v75 = vld [vmem:[%s1 + $0x70] sm:$0xf]
  %v76 = vld [vmem:[%s1 + $0x74] sm:$0xf]
  %v77 = vld [vmem:[%s1 + $0x78] sm:$0xf]
  %v78 = vld [vmem:[%s1 + $0x7c] sm:$0xf]
  %v79 = vld [vmem:[%s1 + $0x80] sm:$0xf]
  %v80 = vld [vmem:[%s1 + $0x84] sm:$0xf]
  %v81 = vld [vmem:[%s1 + $0x88] sm:$0xf]
  %v82 = vld [vmem:[%s1 + $0x8c] sm:$0xf]
  %v83 = vld [vmem:[%s1 + $0x90] sm:$0xf]
  %v84 = vld [vmem:[%s1 + $0x94] sm:$0xf]
  %v85 = vld [vmem:[%s1 + $0x98] sm:$0xf]
  %v86 = vld [vmem:[%s1 + $0x9c] sm:$0xf]
  %v87 = vld [vmem:[%s1 + $0xa0] sm:$0xf]
  %v88 = vld [vmem:[%s1 + $0xa4] sm:$0xf]
  %v89 = vld [vmem:[%s1 + $0xa8] sm:$0xf]
  %v90 = vld [vmem:[%s1 + $0xac] sm:$0xf]
  %v91 = vld [vmem:[%s1 + $0xb0] sm:$0xf]
  %v92 = vld [vmem:[%s1 + $0xb4] sm:$0xf]
  %v93 = vld [vmem:[%s1 + $0xb8] sm:$0xf]
  %v94 = vld [vmem:[%s1 + $0xbc] sm:$0xf]
  %v95 = vld [vmem:[%s1 + $0xc0] sm:$0xf]
  %v96 = vld [vmem:[%s1 + $0xc4] sm:$0xf]
  %v97 = vld [vmem:[%s1 + $0xc8] sm:$0xf]
  %v98 = vld [vmem:[%s1 + $0xcc] sm:$0xf]
  %v99 = vld [vmem:[%s1 + $0xd0] sm:$0xf]
  %v100 = vld [vmem:[%s1 + $0xd4] sm:$0xf]
  %v101 = vld [vmem:[%s1 + $0xd8] sm:$0xf]
  %v102 = vld [vmem:[%s1 + $0xdc] sm:$0xf]
  %v103 = vld [vmem:[%s1 + $0xe0] sm:$0xf]
  %v104 = vld [vmem:[%s1 + $0xe4] sm:$0x3]
  %v105 = vld [vmem:[%s2] sm:$0x1]
  %v107 = vlaneseq
  %v108 = vshrl.u32 %v107, 7
  %v109 = vsub.s32 0, %v108
  %v110 = vrot.slane %v105, %v109
  %v144 = vunpack.c.l.b16 %v15
  %v145 = vunpack.c.h.b16 %v15
  %v146 = vunpack.c.l.b16 %v16
  %v147 = vunpack.c.h.b16 %v16
  %v148 = vunpack.c.l.b16 %v17
  %v149 = vunpack.c.h.b16 %v17
  %v150 = vunpack.c.l.b16 %v18
  %v151 = vunpack.c.h.b16 %v18
  %v152 = vunpack.c.l.b16 %v19
  %v153 = vunpack.c.h.b16 %v19
  %v154 = vunpack.c.l.b16 %v20
  %v155 = vunpack.c.h.b16 %v20
  %v156 = vunpack.c.l.b16 %v21
  %v157 = vunpack.c.h.b16 %v21
  %v158 = vunpack.c.l.b16 %v22
  %v159 = vunpack.c.h.b16 %v22
  %v160 = vunpack.c.l.b16 %v23
  %v161 = vunpack.c.h.b16 %v23
  %v162 = vunpack.c.l.b16 %v24
  %v163 = vunpack.c.h.b16 %v24
  %v164 = vunpack.c.l.b16 %v25
  %v165 = vunpack.c.h.b16 %v25
  %v166 = vunpack.c.l.b16 %v26
  %v167 = vunpack.c.h.b16 %v26
  %v168 = vunpack.c.l.b16 %v27
  %v169 = vunpack.c.h.b16 %v27
  %v170 = vunpack.c.l.b16 %v28
  %v171 = vunpack.c.h.b16 %v28
  %v172 = vunpack.c.l.b16 %v29
  %v173 = vunpack.c.h.b16 %v29
  %v174 = vunpack.c.l.b16 %v30
  %v175 = vunpack.c.h.b16 %v30
  %v176 = vunpack.c.l.b16 %v31
  %v177 = vunpack.c.h.b16 %v31
  %v178 = vunpack.c.l.b16 %v32
  %v179 = vunpack.c.h.b16 %v32
  %v180 = vunpack.c.l.b16 %v33
  %v181 = vunpack.c.h.b16 %v33
  %v182 = vunpack.c.l.b16 %v34
  %v183 = vunpack.c.h.b16 %v34
  %v184 = vunpack.c.l.b16 %v35
  %v185 = vunpack.c.h.b16 %v35
  %v186 = vunpack.c.l.b16 %v36
  %v187 = vunpack.c.h.b16 %v36
  %v188 = vunpack.c.l.b16 %v37
  %v189 = vunpack.c.h.b16 %v37
  %v190 = vunpack.c.l.b16 %v38
  %v191 = vunpack.c.h.b16 %v38
  %v192 = vunpack.c.l.b16 %v39
  %v193 = vunpack.c.h.b16 %v39
  %v194 = vunpack.c.l.b16 %v40
  %v195 = vunpack.c.h.b16 %v40
  %v196 = vunpack.c.l.b16 %v41
  %v197 = vunpack.c.h.b16 %v41
  %v198 = vunpack.c.l.b16 %v42
  %v199 = vunpack.c.h.b16 %v42
  %v200 = vunpack.c.l.b16 %v43
  %v201 = vunpack.c.h.b16 %v43
  %v202 = vunpack.c.l.b16 %v44
  %v203 = vunpack.c.h.b16 %v44
  %v204 = vunpack.c.l.b16 %v45
  %v205 = vunpack.c.h.b16 %v45
  %v206 = vunpack.c.l.b16 %v46
  %v207 = vunpack.c.h.b16 %v46
  %v208 = vpack.c.b16 %v148, %v144
  %v209 = vpack.c.b16 %v149, %v145
  %v210 = vpack.c.b16 %v150, %v146
  %v211 = vpack.c.b16 %v151, %v147
  %v212 = vpack.c.b16 %v156, %v152
  %v213 = vpack.c.b16 %v157, %v153
  %v214 = vpack.c.b16 %v158, %v154
  %v215 = vpack.c.b16 %v159, %v155
  %v216 = vpack.c.b16 %v164, %v160
  %v217 = vpack.c.b16 %v165, %v161
  %v218 = vpack.c.b16 %v166, %v162
  %v219 = vpack.c.b16 %v167, %v163
  %v220 = vpack.c.b16 %v172, %v168
  %v221 = vpack.c.b16 %v173, %v169
  %v222 = vpack.c.b16 %v174, %v170
  %v223 = vpack.c.b16 %v175, %v171
  %v224 = vpack.c.b16 %v180, %v176
  %v225 = vpack.c.b16 %v181, %v177
  %v226 = vpack.c.b16 %v182, %v178
  %v227 = vpack.c.b16 %v183, %v179
  %v228 = vpack.c.b16 %v188, %v184
  %v229 = vpack.c.b16 %v189, %v185
  %v230 = vpack.c.b16 %v190, %v186
  %v231 = vpack.c.b16 %v191, %v187
  %v232 = vpack.c.b16 %v196, %v192
  %v233 = vpack.c.b16 %v197, %v193
  %v234 = vpack.c.b16 %v198, %v194
  %v235 = vpack.c.b16 %v199, %v195
  %v236 = vpack.c.b16 %v204, %v200
  %v237 = vpack.c.b16 %v205, %v201
  %v238 = vpack.c.b16 %v206, %v202
  %v239 = vpack.c.b16 %v207, %v203
  %v322 = vunpack.c.l.b16 %v47
  %v323 = vunpack.c.l.b16 %v48
  %v324 = vunpack.c.l.b16 %v49
  %v325 = vunpack.c.l.b16 %v50
  %v326 = vunpack.c.l.b16 %v51
  %v327 = vunpack.c.l.b16 %v52
  %v328 = vunpack.c.l.b16 %v53
  %v329 = vunpack.c.l.b16 %v54
  %v330 = vunpack.c.l.b16 %v55
  %v331 = vunpack.c.l.b16 %v56
  %v332 = vunpack.c.l.b16 %v57
  %v333 = vunpack.c.l.b16 %v58
  %v334 = vunpack.c.l.b16 %v59
  %v335 = vunpack.c.l.b16 %v60
  %v336 = vunpack.c.l.b16 %v61
  %v337 = vunpack.c.l.b16 %v62
  %v338 = vunpack.c.l.b16 %v63
  %v339 = vunpack.c.l.b16 %v64
  %v340 = vunpack.c.l.b16 %v65
  %v341 = vunpack.c.l.b16 %v66
  %v342 = vunpack.c.l.b16 %v67
  %v343 = vunpack.c.l.b16 %v68
  %v344 = vunpack.c.l.b16 %v69
  %v345 = vunpack.c.l.b16 %v70
  %v346 = vunpack.c.l.b16 %v71
  %v347 = vunpack.c.l.b16 %v72
  %v348 = vunpack.c.l.b16 %v73
  %v349 = vunpack.c.l.b16 %v74
  %v350 = vunpack.c.l.b16 %v75
  %v351 = vunpack.c.l.b16 %v76
  %v352 = vunpack.c.l.b16 %v77
  %v353 = vunpack.c.l.b16 %v78
  %v354 = vunpack.c.l.b16 %v79
  %v355 = vunpack.c.l.b16 %v80
  %v356 = vunpack.c.l.b16 %v81
  %v357 = vunpack.c.l.b16 %v82
  %v358 = vunpack.c.l.b16 %v83
  %v359 = vunpack.c.l.b16 %v84
  %v360 = vunpack.c.l.b16 %v85
  %v361 = vunpack.c.l.b16 %v86
  %v362 = vunpack.c.l.b16 %v87
  %v363 = vunpack.c.l.b16 %v88
  %v364 = vunpack.c.l.b16 %v89
  %v365 = vunpack.c.l.b16 %v90
  %v366 = vunpack.c.l.b16 %v91
  %v367 = vunpack.c.l.b16 %v92
  %v368 = vunpack.c.l.b16 %v93
  %v369 = vunpack.c.l.b16 %v94
  %v370 = vunpack.c.l.b16 %v95
  %v371 = vunpack.c.l.b16 %v96
  %v372 = vunpack.c.l.b16 %v97
  %v373 = vunpack.c.l.b16 %v98
  %v374 = vunpack.c.l.b16 %v99
  %v375 = vunpack.c.l.b16 %v100
  %v376 = vunpack.c.l.b16 %v101
  %v377 = vunpack.c.l.b16 %v102
  %v378 = vunpack.c.l.b16 %v103
  %v379 = vunpack.c.l.b16 %v104
  %v380 = vpack.c.b16 %v323, %v322
  %v381 = vpack.c.b16 %v325, %v324
  %v382 = vpack.c.b16 %v327, %v326
  %v383 = vpack.c.b16 %v329, %v328
  %v384 = vpack.c.b16 %v331, %v330
  %v385 = vpack.c.b16 %v333, %v332
  %v386 = vpack.c.b16 %v335, %v334
  %v387 = vpack.c.b16 %v337, %v336
  %v388 = vpack.c.b16 %v339, %v338
  %v389 = vpack.c.b16 %v341, %v340
  %v390 = vpack.c.b16 %v343, %v342
  %v391 = vpack.c.b16 %v345, %v344
  %v392 = vpack.c.b16 %v347, %v346
  %v393 = vpack.c.b16 %v349, %v348
  %v394 = vpack.c.b16 %v351, %v350
  %v395 = vpack.c.b16 %v353, %v352
  %v396 = vpack.c.b16 %v355, %v354
  %v397 = vpack.c.b16 %v357, %v356
  %v398 = vpack.c.b16 %v359, %v358
  %v399 = vpack.c.b16 %v361, %v360
  %v400 = vpack.c.b16 %v363, %v362
  %v401 = vpack.c.b16 %v365, %v364
  %v402 = vpack.c.b16 %v367, %v366
  %v403 = vpack.c.b16 %v369, %v368
  %v404 = vpack.c.b16 %v371, %v370
  %v405 = vpack.c.b16 %v373, %v372
  %v406 = vpack.c.b16 %v375, %v374
  %v407 = vpack.c.b16 %v377, %v376
  %v408 = vpack.c.b16 %v379, %v378
  %vm437 = vcmask 613376
  %v439 = vsel %vm437, %v211, 0
  %v442 = vsel %vm437, %v215, 0
  %v445 = vsel %vm437, %v219, 0
  %v448 = vsel %vm437, %v223, 0
  %v451 = vsel %vm437, %v227, 0
  %v454 = vsel %vm437, %v231, 0
  %v457 = vsel %vm437, %v235, 0
  %v460 = vsel %vm437, %v239, 0
  %vm462 = vcmask 1044480
  %vm463 = vcmask 1045504
  %v464 = vsel %vm462, 4294967295, 65535
  %v465 = vsel %vm463, %v464, 0
  %v467 = vand.u32 %v408, %v465
  %469 = vmatprep.subr.bf16.mxu0 0
  %470 = vmatpush1.bf16.msra.mxu0 %v387
  %471 = vmatprep.subr.bf16.mxu0 0
  %472 = vmatpush1.bf16.msra.mxu0 %v386
  %473 = vmatprep.subr.bf16.mxu0 0
  %474 = vmatpush1.bf16.msra.mxu0 %v385
  %475 = vmatprep.subr.bf16.mxu0 0
  %476 = vmatpush1.bf16.msra.mxu0 %v384
  %477 = vmatprep.subr.bf16.mxu0 0
  %478 = vmatpush1.bf16.msra.mxu0 %v383
  %479 = vmatprep.subr.bf16.mxu0 0
  %480 = vmatpush1.bf16.msra.mxu0 %v382
  %481 = vmatprep.subr.bf16.mxu0 0
  %482 = vmatpush1.bf16.msra.mxu0 %v381
  %483 = vmatprep.subr.bf16.mxu0 0
  %484 = vmatpush1.bf16.msra.mxu0 %v380
  %485 = vmatprep.subr.bf16.mxu0 0
  %486 = vmatpush2.bf16.msra.mxu0 %v395
  %487 = vmatprep.subr.bf16.mxu0 0
  %488 = vmatpush2.bf16.msra.mxu0 %v394
  %489 = vmatprep.subr.bf16.mxu0 0
  %490 = vmatpush2.bf16.msra.mxu0 %v393
  %491 = vmatprep.subr.bf16.mxu0 0
  %492 = vmatpush2.bf16.msra.mxu0 %v392
  %493 = vmatprep.subr.bf16.mxu0 0
  %494 = vmatpush2.bf16.msra.mxu0 %v391
  %495 = vmatprep.subr.bf16.mxu0 0
  %496 = vmatpush2.bf16.msra.mxu0 %v390
  %497 = vmatprep.subr.bf16.mxu0 0
  %498 = vmatpush2.bf16.msra.mxu0 %v389
  %499 = vmatprep.subr.bf16.mxu0 0
  %500 = vmatpush2.bf16.msra.mxu0 %v388
  %501 = vmatprep.mubr.bf16.mxu0 %v209
  %502 = vmatmul.mubr.bf16.gmra.mxu0 %v208
  %v503 = vpop.f32.mrf.mxu0
  %v504 = vadd.f32 %v110, %v503
  %v505 = vpop.f32.mrf.mxu0
  %v506 = vpop.f32.mrf.mxu0
  %v507 = vadd.f32 %v110, %v506
  %v508 = vpop.f32.mrf.mxu0
  %509 = vmatprep.mubr.bf16.mxu0 %v213
  %510 = vmatmul.mubr.bf16.gmra.mxu0 %v212
  %v511 = vpop.f32.mrf.mxu0
  %v512 = vadd.f32 %v110, %v511
  %v513 = vpop.f32.mrf.mxu0
  %v514 = vpop.f32.mrf.mxu0
  %v515 = vadd.f32 %v110, %v514
  %v516 = vpop.f32.mrf.mxu0
  %517 = vmatprep.mubr.bf16.mxu0 %v217
  %518 = vmatmul.mubr.bf16.gmra.mxu0 %v216
  %v519 = vpop.f32.mrf.mxu0
  %v520 = vadd.f32 %v110, %v519
  %v521 = vpop.f32.mrf.mxu0
  %v522 = vpop.f32.mrf.mxu0
  %v523 = vadd.f32 %v110, %v522
  %v524 = vpop.f32.mrf.mxu0
  %525 = vmatprep.mubr.bf16.mxu0 %v221
  %526 = vmatmul.mubr.bf16.gmra.mxu0 %v220
  %v527 = vpop.f32.mrf.mxu0
  %v528 = vadd.f32 %v110, %v527
  %v529 = vpop.f32.mrf.mxu0
  %v530 = vpop.f32.mrf.mxu0
  %v531 = vadd.f32 %v110, %v530
  %v532 = vpop.f32.mrf.mxu0
  %533 = vmatprep.mubr.bf16.mxu0 %v225
  %534 = vmatmul.mubr.bf16.gmra.mxu0 %v224
  %v535 = vpop.f32.mrf.mxu0
  %v536 = vadd.f32 %v110, %v535
  %v537 = vpop.f32.mrf.mxu0
  %v538 = vpop.f32.mrf.mxu0
  %v539 = vadd.f32 %v110, %v538
  %v540 = vpop.f32.mrf.mxu0
  %541 = vmatprep.mubr.bf16.mxu0 %v229
  %542 = vmatmul.mubr.bf16.gmra.mxu0 %v228
  %v543 = vpop.f32.mrf.mxu0
  %v544 = vadd.f32 %v110, %v543
  %v545 = vpop.f32.mrf.mxu0
  %v546 = vpop.f32.mrf.mxu0
  %v547 = vadd.f32 %v110, %v546
  %v548 = vpop.f32.mrf.mxu0
  %549 = vmatprep.mubr.bf16.mxu0 %v233
  %550 = vmatmul.mubr.bf16.gmra.mxu0 %v232
  %v551 = vpop.f32.mrf.mxu0
  %v552 = vadd.f32 %v110, %v551
  %v553 = vpop.f32.mrf.mxu0
  %v554 = vpop.f32.mrf.mxu0
  %v555 = vadd.f32 %v110, %v554
  %v556 = vpop.f32.mrf.mxu0
  %557 = vmatprep.mubr.bf16.mxu0 %v237
  %558 = vmatmul.mubr.bf16.gmra.mxu0 %v236
  %v559 = vpop.f32.mrf.mxu0
  %v560 = vadd.f32 %v110, %v559
  %v561 = vpop.f32.mrf.mxu0
  %v562 = vpop.f32.mrf.mxu0
  %v563 = vadd.f32 %v110, %v562
  %v564 = vpop.f32.mrf.mxu0
  %565 = vdwg.mxu0
  %566 = vmatprep.subr.bf16.mxu0 0
  %567 = vmatpush1.bf16.msra.mxu0 %v403
  %568 = vmatprep.subr.bf16.mxu0 0
  %569 = vmatpush1.bf16.msra.mxu0 %v402
  %570 = vmatprep.subr.bf16.mxu0 0
  %571 = vmatpush1.bf16.msra.mxu0 %v401
  %572 = vmatprep.subr.bf16.mxu0 0
  %573 = vmatpush1.bf16.msra.mxu0 %v400
  %574 = vmatprep.subr.bf16.mxu0 0
  %575 = vmatpush1.bf16.msra.mxu0 %v399
  %576 = vmatprep.subr.bf16.mxu0 0
  %577 = vmatpush1.bf16.msra.mxu0 %v398
  %578 = vmatprep.subr.bf16.mxu0 0
  %579 = vmatpush1.bf16.msra.mxu0 %v397
  %580 = vmatprep.subr.bf16.mxu0 0
  %581 = vmatpush1.bf16.msra.mxu0 %v396
  %582 = vmatprep.subr.bf16.mxu0 0
  %583 = vmatpush2.bf16.msra.mxu0 0
  %584 = vmatprep.subr.bf16.mxu0 0
  %585 = vmatpush2.bf16.msra.mxu0 0
  %586 = vmatprep.subr.bf16.mxu0 0
  %587 = vmatpush2.bf16.msra.mxu0 0
  %588 = vmatprep.subr.bf16.mxu0 0
  %589 = vmatpush2.bf16.msra.mxu0 %v467
  %590 = vmatprep.subr.bf16.mxu0 0
  %591 = vmatpush2.bf16.msra.mxu0 %v407
  %592 = vmatprep.subr.bf16.mxu0 0
  %593 = vmatpush2.bf16.msra.mxu0 %v406
  %594 = vmatprep.subr.bf16.mxu0 0
  %595 = vmatpush2.bf16.msra.mxu0 %v405
  %596 = vmatprep.subr.bf16.mxu0 0
  %597 = vmatpush2.bf16.msra.mxu0 %v404
  %598 = vmatprep.mubr.bf16.mxu0 %v439
  %599 = vmatmul.mubr.bf16.gmra.mxu0 %v210
  %v600 = vpop.f32.mrf.mxu0
  %v601 = vadd.f32 %v504, %v600
  %v602 = vpop.f32.mrf.mxu0
  %v603 = vpop.f32.mrf.mxu0
  %v604 = vadd.f32 %v507, %v603
  %v605 = vpop.f32.mrf.mxu0
  %606 = vmatprep.mubr.bf16.mxu0 %v442
  %607 = vmatmul.mubr.bf16.gmra.mxu0 %v214
  %v608 = vpop.f32.mrf.mxu0
  %v609 = vadd.f32 %v512, %v608
  %v610 = vpop.f32.mrf.mxu0
  %v611 = vpop.f32.mrf.mxu0
  %v612 = vadd.f32 %v515, %v611
  %v613 = vpop.f32.mrf.mxu0
  %614 = vmatprep.mubr.bf16.mxu0 %v445
  %615 = vmatmul.mubr.bf16.gmra.mxu0 %v218
  %v616 = vpop.f32.mrf.mxu0
  %v617 = vadd.f32 %v520, %v616
  %v618 = vpop.f32.mrf.mxu0
  %v619 = vpop.f32.mrf.mxu0
  %v620 = vadd.f32 %v523, %v619
  %v621 = vpop.f32.mrf.mxu0
  %622 = vmatprep.mubr.bf16.mxu0 %v448
  %623 = vmatmul.mubr.bf16.gmra.mxu0 %v222
  %v624 = vpop.f32.mrf.mxu0
  %v625 = vadd.f32 %v528, %v624
  %v626 = vpop.f32.mrf.mxu0
  %v627 = vpop.f32.mrf.mxu0
  %v628 = vadd.f32 %v531, %v627
  %v629 = vpop.f32.mrf.mxu0
  %630 = vmatprep.mubr.bf16.mxu0 %v451
  %631 = vmatmul.mubr.bf16.gmra.mxu0 %v226
  %v632 = vpop.f32.mrf.mxu0
  %v633 = vadd.f32 %v536, %v632
  %v634 = vpop.f32.mrf.mxu0
  %v635 = vpop.f32.mrf.mxu0
  %v636 = vadd.f32 %v539, %v635
  %v637 = vpop.f32.mrf.mxu0
  %638 = vmatprep.mubr.bf16.mxu0 %v454
  %639 = vmatmul.mubr.bf16.gmra.mxu0 %v230
  %v640 = vpop.f32.mrf.mxu0
  %v641 = vadd.f32 %v544, %v640
  %v642 = vpop.f32.mrf.mxu0
  %v643 = vpop.f32.mrf.mxu0
  %v644 = vadd.f32 %v547, %v643
  %v645 = vpop.f32.mrf.mxu0
  %646 = vmatprep.mubr.bf16.mxu0 %v457
  %647 = vmatmul.mubr.bf16.gmra.mxu0 %v234
  %v648 = vpop.f32.mrf.mxu0
  %v649 = vadd.f32 %v552, %v648
  %v650 = vpop.f32.mrf.mxu0
  %v651 = vpop.f32.mrf.mxu0
  %v652 = vadd.f32 %v555, %v651
  %v653 = vpop.f32.mrf.mxu0
  %654 = vmatprep.mubr.bf16.mxu0 %v460
  %655 = vmatmul.mubr.bf16.gmra.mxu0 %v238
  %v656 = vpop.f32.mrf.mxu0
  %v657 = vadd.f32 %v560, %v656
  %v658 = vpop.f32.mrf.mxu0
  %v659 = vpop.f32.mrf.mxu0
  %v660 = vadd.f32 %v563, %v659
  %v661 = vpop.f32.mrf.mxu0
  %662 = vdwg.mxu0
  %v663 = vmax.f32 %v601, 0.0
  %v664 = vmax.f32 %v604, 0.0
  %v665 = vmax.f32 %v609, 0.0
  %v666 = vmax.f32 %v612, 0.0
  %v667 = vmax.f32 %v617, 0.0
  %v668 = vmax.f32 %v620, 0.0
  %v669 = vmax.f32 %v625, 0.0
  %v670 = vmax.f32 %v628, 0.0
  %v671 = vmax.f32 %v633, 0.0
  %v672 = vmax.f32 %v636, 0.0
  %v673 = vmax.f32 %v641, 0.0
  %v674 = vmax.f32 %v644, 0.0
  %v675 = vmax.f32 %v649, 0.0
  %v676 = vmax.f32 %v652, 0.0
  %v677 = vmax.f32 %v657, 0.0
  %v678 = vmax.f32 %v660, 0.0
  %vm679 = vcmask 523264
  %680 = vst.msk [vmem:[%s3] sm:$0xff] %vm679, %v663
  %681 = vst.msk [vmem:[%s3 + $0x8] sm:$0xff] %vm679, %v664
  %682 = vst.msk [vmem:[%s3 + $0x10] sm:$0xff] %vm679, %v665
  %683 = vst.msk [vmem:[%s3 + $0x18] sm:$0xff] %vm679, %v666
  %684 = vst.msk [vmem:[%s3 + $0x20] sm:$0xff] %vm679, %v667
  %685 = vst.msk [vmem:[%s3 + $0x28] sm:$0xff] %vm679, %v668
  %686 = vst.msk [vmem:[%s3 + $0x30] sm:$0xff] %vm679, %v669
  %687 = vst.msk [vmem:[%s3 + $0x38] sm:$0xff] %vm679, %v670
  %688 = vst.msk [vmem:[%s3 + $0x40] sm:$0xff] %vm679, %v671
  %689 = vst.msk [vmem:[%s3 + $0x48] sm:$0xff] %vm679, %v672
  %690 = vst.msk [vmem:[%s3 + $0x50] sm:$0xff] %vm679, %v673
  %691 = vst.msk [vmem:[%s3 + $0x58] sm:$0xff] %vm679, %v674
  %692 = vst.msk [vmem:[%s3 + $0x60] sm:$0xff] %vm679, %v675
  %693 = vst.msk [vmem:[%s3 + $0x68] sm:$0xff] %vm679, %v676
  %694 = vst.msk [vmem:[%s3 + $0x70] sm:$0xff] %vm679, %v677
  %695 = vst.msk [vmem:[%s3 + $0x78] sm:$0xff] %vm679, %v678
  // Predicated region
  $region14: #{unet_forward.21} parent=0 // pred_check
    _
  $region15: #{unet_forward.21} parent=0 // pred_check_branch
    %697 = sbr.rel (0) target = $region17
  $region16: #{unet_forward.21} parent=0 // pred_region
    _
  $region17: #{unet_forward.21} parent=0 // pred_fallthru
    _
  // Predicated region
  $region18: #{unet_forward.21} parent=0 // pred_check
    _
  $region19: #{unet_forward.21} parent=0 // pred_check_branch
    %699 = sbr.rel (0) target = $region21
  $region20: #{unet_forward.21} parent=0 // pred_region
    _
  $region21: #{unet_forward.21} parent=0 // pred_fallthru
    _

// kernel: unet_forward.22
$region0: #{unet_forward.22}
  #allocation0 [shape = 'u32[]', space=smem, size = 0x4, offset = 0x4, fixed_abs, tag = 'smem constant byte address 0x4 - core index']
  #allocation1 [shape = 'u32[144,128]{1,0:T(1,128)}', space=vmem, size = 0x12000, scoped, tag = 'internal scratch']
  %s0 = inlined_call_operand.vmem [shape: f32[8,2,4,128], index: 0, kind: input, shape index: {}]
  %s1 = inlined_call_operand.vmem [shape: f32[8,4,64], index: 1, kind: output, shape index: {}]
  %s2 = sld [smem:[#allocation0]]
  $region14: #{unet_forward.22} parent=0
    _
  %s4 = ssub.s32 1, %s2
  %s5 = scalar_select 0, %s4, %s2
  // Predicated region
  $region2: #{unet_forward.22} parent=0 // pred_check
    _
  $region3: #{unet_forward.22} parent=0 // pred_check_branch
    %7 = sbr.rel (0) target = $region5
  $region4: #{unet_forward.22} parent=0 // pred_region
    _
  $region5: #{unet_forward.22} parent=0 // pred_fallthru
    _
  %v8 = vld [vmem:[%s0] sm:$0xf]
  %v9 = vld [vmem:[%s0 + $0x4] sm:$0xf]
  %v10 = vld [vmem:[%s0 + $0x8] sm:$0xf]
  %v11 = vld [vmem:[%s0 + $0xc] sm:$0xf]
  %v12 = vld [vmem:[%s0 + $0x10] sm:$0xf]
  %v13 = vld [vmem:[%s0 + $0x14] sm:$0xf]
  %v14 = vld [vmem:[%s0 + $0x18] sm:$0xf]
  %v15 = vld [vmem:[%s0 + $0x1c] sm:$0xf]
  %v16 = vld [vmem:[%s0 + $0x20] sm:$0xf]
  %v17 = vld [vmem:[%s0 + $0x24] sm:$0xf]
  %v18 = vld [vmem:[%s0 + $0x28] sm:$0xf]
  %v19 = vld [vmem:[%s0 + $0x2c] sm:$0xf]
  %v20 = vld [vmem:[%s0 + $0x30] sm:$0xf]
  %v21 = vld [vmem:[%s0 + $0x34] sm:$0xf]
  %v22 = vld [vmem:[%s0 + $0x38] sm:$0xf]
  %v23 = vld [vmem:[%s0 + $0x3c] sm:$0xf]
  %32 = vrot.lane.b32.xlu0 %v8, 64
  %v33 = vpop.permute.xlu0 %32
  %34 = vrot.lane.b32.xlu0 %v10, 64
  %v35 = vpop.permute.xlu0 %34
  %36 = vrot.lane.b32.xlu0 %v12, 64
  %v37 = vpop.permute.xlu0 %36
  %38 = vrot.lane.b32.xlu0 %v14, 64
  %v39 = vpop.permute.xlu0 %38
  %40 = vrot.lane.b32.xlu0 %v16, 64
  %v41 = vpop.permute.xlu0 %40
  %42 = vrot.lane.b32.xlu0 %v18, 64
  %v43 = vpop.permute.xlu0 %42
  %44 = vrot.lane.b32.xlu0 %v20, 64
  %v45 = vpop.permute.xlu0 %44
  %46 = vrot.lane.b32.xlu0 %v22, 64
  %v47 = vpop.permute.xlu0 %46
  %v56 = vmax.f32 %v8, %v33
  %v57 = vmax.f32 %v10, %v35
  %v58 = vmax.f32 %v12, %v37
  %v59 = vmax.f32 %v14, %v39
  %v60 = vmax.f32 %v16, %v41
  %v61 = vmax.f32 %v18, %v43
  %v62 = vmax.f32 %v20, %v45
  %v63 = vmax.f32 %v22, %v47
  %v64 = vmax.f32 %v56, %v9
  %v65 = vmax.f32 %v57, %v11
  %v66 = vmax.f32 %v58, %v13
  %v67 = vmax.f32 %v59, %v15
  %v68 = vmax.f32 %v60, %v17
  %v69 = vmax.f32 %v61, %v19
  %v70 = vmax.f32 %v62, %v21
  %v71 = vmax.f32 %v63, %v23
  %80 = vrot.lane.b32.xlu0 %v9, 64
  %v81 = vpop.permute.xlu0 %80
  %82 = vrot.lane.b32.xlu0 %v11, 64
  %v83 = vpop.permute.xlu0 %82
  %84 = vrot.lane.b32.xlu0 %v13, 64
  %v85 = vpop.permute.xlu0 %84
  %86 = vrot.lane.b32.xlu0 %v15, 64
  %v87 = vpop.permute.xlu0 %86
  %88 = vrot.lane.b32.xlu0 %v17, 64
  %v89 = vpop.permute.xlu0 %88
  %90 = vrot.lane.b32.xlu0 %v19, 64
  %v91 = vpop.permute.xlu0 %90
  %92 = vrot.lane.b32.xlu0 %v21, 64
  %v93 = vpop.permute.xlu0 %92
  %94 = vrot.lane.b32.xlu0 %v23, 64
  %v95 = vpop.permute.xlu0 %94
  %v104 = vmax.f32 %v64, %v81
  %v105 = vmax.f32 %v65, %v83
  %v106 = vmax.f32 %v66, %v85
  %v107 = vmax.f32 %v67, %v87
  %v108 = vmax.f32 %v68, %v89
  %v109 = vmax.f32 %v69, %v91
  %v110 = vmax.f32 %v70, %v93
  %v111 = vmax.f32 %v71, %v95
  %vm112 = vcmask 519168
  %113 = vst.msk [vmem:[%s1] sm:$0xf] %vm112, %v104
  %114 = vst.msk [vmem:[%s1 + $0x4] sm:$0xf] %vm112, %v105
  %115 = vst.msk [vmem:[%s1 + $0x8] sm:$0xf] %vm112, %v106
  %116 = vst.msk [vmem:[%s1 + $0xc] sm:$0xf] %vm112, %v107
  %117 = vst.msk [vmem:[%s1 + $0x10] sm:$0xf] %vm112, %v108
  %118 = vst.msk [vmem:[%s1 + $0x14] sm:$0xf] %vm112, %v109
  %119 = vst.msk [vmem:[%s1 + $0x18] sm:$0xf] %vm112, %v110
  %120 = vst.msk [vmem:[%s1 + $0x1c] sm:$0xf] %vm112, %v111
  // Predicated region
  $region6: #{unet_forward.22} parent=0 // pred_check
    _
  $region7: #{unet_forward.22} parent=0 // pred_check_branch
    %122 = sbr.rel (0) target = $region9
  $region8: #{unet_forward.22} parent=0 // pred_region
    _
  $region9: #{unet_forward.22} parent=0 // pred_fallthru
    _
  // Predicated region
  $region10: #{unet_forward.22} parent=0 // pred_check
    _
  $region11: #{unet_forward.22} parent=0 // pred_check_branch
    %124 = sbr.rel (0) target = $region13
  $region12: #{unet_forward.22} parent=0 // pred_region
    _
  $region13: #{unet_forward.22} parent=0 // pred_fallthru
    _

// kernel: unet_forward.23
$region0: #{unet_forward.23}
  #allocation0 [shape = 'u32[]', space=smem, size = 0x4, offset = 0x4, fixed_abs, tag = 'smem constant byte address 0x4 - core index']
  #allocation1 [shape = 'u32[144,128]{1,0:T(1,128)}', space=vmem, size = 0x12000, scoped, tag = 'internal scratch']
  %s0 = inlined_call_operand.vmem [shape: f32[4,2,2,230], index: 0, kind: input, shape index: {}]
  %s1 = inlined_call_operand.vmem [shape: f32[4,2,115], index: 1, kind: output, shape index: {}]
  %s2 = sld [smem:[#allocation0]]
  $region14: #{unet_forward.23} parent=0
    _
  %s4 = ssub.s32 1, %s2
  %s5 = scalar_select 0, %s4, %s2
  // Predicated region
  $region2: #{unet_forward.23} parent=0 // pred_check
    _
  $region3: #{unet_forward.23} parent=0 // pred_check_branch
    %7 = sbr.rel (0) target = $region5
  $region4: #{unet_forward.23} parent=0 // pred_region
    _
  $region5: #{unet_forward.23} parent=0 // pred_fallthru
    _
  %v8 = vld [vmem:[%s0] sm:$0xf]
  %v9 = vld [vmem:[%s0 + $0x4] sm:$0xf]
  %v10 = vld [vmem:[%s0 + $0x8] sm:$0xf]
  %v11 = vld [vmem:[%s0 + $0xc] sm:$0xf]
  %v12 = vld [vmem:[%s0 + $0x10] sm:$0xf]
  %v13 = vld [vmem:[%s0 + $0x14] sm:$0xf]
  %v14 = vld [vmem:[%s0 + $0x18] sm:$0xf]
  %v15 = vld [vmem:[%s0 + $0x1c] sm:$0xf]
  %20 = vrot.lane.b32.xlu0 %v8, 13
  %v21 = vpop.permute.xlu0 %20
  %22 = vrot.lane.b32.xlu0 %v10, 13
  %v23 = vpop.permute.xlu0 %22
  %24 = vrot.lane.b32.xlu0 %v12, 13
  %v25 = vpop.permute.xlu0 %24
  %26 = vrot.lane.b32.xlu0 %v14, 13
  %v27 = vpop.permute.xlu0 %26
  %v28 = vrot.slane %v21, 2
  %v29 = vrot.slane %v23, 2
  %v30 = vrot.slane %v25, 2
  %v31 = vrot.slane %v27, 2
  %vm32 = vcmask 105472
  %v33 = vsel %vm32, %v21, %v28
  %v34 = vsel %vm32, %v23, %v29
  %v35 = vsel %vm32, %v25, %v30
  %v36 = vsel %vm32, %v27, %v31
  %v41 = vadd.f32 %v8, %v33
  %v42 = vadd.f32 %v10, %v34
  %v43 = vadd.f32 %v12, %v35
  %v44 = vadd.f32 %v14, %v36
  %v45 = vadd.f32 %v41, %v9
  %v46 = vadd.f32 %v42, %v11
  %v47 = vadd.f32 %v43, %v13
  %v48 = vadd.f32 %v44, %v15
  %53 = vrot.lane.b32.xlu0 %v9, 13
  %v54 = vpop.permute.xlu0 %53
  %55 = vrot.lane.b32.xlu0 %v11, 13
  %v56 = vpop.permute.xlu0 %55
  %57 = vrot.lane.b32.xlu0 %v13, 13
  %v58 = vpop.permute.xlu0 %57
  %59 = vrot.lane.b32.xlu0 %v15, 13
  %v60 = vpop.permute.xlu0 %59
  %v61 = vrot.slane %v54, 2
  %v62 = vrot.slane %v56, 2
  %v63 = vrot.slane %v58, 2
  %v64 = vrot.slane %v60, 2
  %v65 = vsel %vm32, %v54, %v61
  %v66 = vsel %vm32, %v56, %v62
  %v67 = vsel %vm32, %v58, %v63
  %v68 = vsel %vm32, %v60, %v64
  %v73 = vadd.f32 %v45, %v65
  %v74 = vadd.f32 %v46, %v66
  %v75 = vadd.f32 %v47, %v67
  %v76 = vadd.f32 %v48, %v68
  %v77 = vmul.f32 %v73, 0.25
  %v78 = vmul.f32 %v74, 0.25
  %v79 = vmul.f32 %v75, 0.25
  %v80 = vmul.f32 %v76, 0.25
  %vm81 = vcmask 934912
  %82 = vst.msk [vmem:[%s1] sm:$0x3] %vm81, %v77
  %83 = vst.msk [vmem:[%s1 + $0x2] sm:$0x3] %vm81, %v78
  %84 = vst.msk [vmem:[%s1 + $0x4] sm:$0x3] %vm81, %v79
  %85 = vst.msk [vmem:[%s1 + $0x6] sm:$0x3] %vm81, %v80
  // Predicated region
  $region6: #{unet_forward.23} parent=0 // pred_check
    _
  $region7: #{unet_forward.23} parent=0 // pred_check_branch
    %87 = sbr.rel (0) target = $region9
  $region8: #{unet_forward.23} parent=0 // pred_region
    _
  $region9: #{unet_forward.23} parent=0 // pred_fallthru
    _
  // Predicated region
  $region10: #{unet_forward.23} parent=0 // pred_check
    _
  $region11: #{unet_forward.23} parent=0 // pred_check_branch
    %89 = sbr.rel (0) target = $region13
  $region12: #{unet_forward.23} parent=0 // pred_region
    _
  $region13: #{unet_forward.23} parent=0 // pred_fallthru
    _

// kernel: unet_forward.25
$region0: #{unet_forward.25}
  #allocation0 [shape = 'u32[]', space=smem, size = 0x4, offset = 0x4, fixed_abs, tag = 'smem constant byte address 0x4 - core index']
  #allocation1 [shape = 'u32[144,128]{1,0:T(1,128)}', space=vmem, size = 0x12000, scoped, tag = 'internal scratch']
  %s0 = inlined_call_operand.vmem [shape: f32[4,2,2,256], index: 0, kind: input, shape index: {}]
  %s1 = inlined_call_operand.vmem [shape: f32[4,2,128], index: 1, kind: output, shape index: {}]
  %s2 = sld [smem:[#allocation0]]
  $region14: #{unet_forward.25} parent=0
    _
  %s4 = ssub.s32 1, %s2
  %s5 = scalar_select 0, %s4, %s2
  // Predicated region
  $region2: #{unet_forward.25} parent=0 // pred_check
    _
  $region3: #{unet_forward.25} parent=0 // pred_check_branch
    %7 = sbr.rel (0) target = $region5
  $region4: #{unet_forward.25} parent=0 // pred_region
    _
  $region5: #{unet_forward.25} parent=0 // pred_fallthru
    _
  %v8 = vld [vmem:[%s0] sm:$0xf]
  %v9 = vld [vmem:[%s0 + $0x4] sm:$0xf]
  %v10 = vld [vmem:[%s0 + $0x8] sm:$0xf]
  %v11 = vld [vmem:[%s0 + $0xc] sm:$0xf]
  %v12 = vld [vmem:[%s0 + $0x10] sm:$0xf]
  %v13 = vld [vmem:[%s0 + $0x14] sm:$0xf]
  %v14 = vld [vmem:[%s0 + $0x18] sm:$0xf]
  %v15 = vld [vmem:[%s0 + $0x1c] sm:$0xf]
  %v20 = vrot.slane %v8, 2
  %v21 = vrot.slane %v10, 2
  %v22 = vrot.slane %v12, 2
  %v23 = vrot.slane %v14, 2
  %v28 = vmax.f32 %v8, %v20
  %v29 = vmax.f32 %v10, %v21
  %v30 = vmax.f32 %v12, %v22
  %v31 = vmax.f32 %v14, %v23
  %v32 = vmax.f32 %v28, %v9
  %v33 = vmax.f32 %v29, %v11
  %v34 = vmax.f32 %v30, %v13
  %v35 = vmax.f32 %v31, %v15
  %v40 = vrot.slane %v9, 2
  %v41 = vrot.slane %v11, 2
  %v42 = vrot.slane %v13, 2
  %v43 = vrot.slane %v15, 2
  %v48 = vmax.f32 %v32, %v40
  %v49 = vmax.f32 %v33, %v41
  %v50 = vmax.f32 %v34, %v42
  %v51 = vmax.f32 %v35, %v43
  %52 = vst [vmem:[%s1] sm:$0x3] %v48
  %53 = vst [vmem:[%s1 + $0x2] sm:$0x3] %v49
  %54 = vst [vmem:[%s1 + $0x4] sm:$0x3] %v50
  %55 = vst [vmem:[%s1 + $0x6] sm:$0x3] %v51
  // Predicated region
  $region6: #{unet_forward.25} parent=0 // pred_check
    _
  $region7: #{unet_forward.25} parent=0 // pred_check_branch
    %57 = sbr.rel (0) target = $region9
  $region8: #{unet_forward.25} parent=0 // pred_region
    _
  $region9: #{unet_forward.25} parent=0 // pred_fallthru
    _
  // Predicated region
  $region10: #{unet_forward.25} parent=0 // pred_check
    _
  $region11: #{unet_forward.25} parent=0 // pred_check_branch
    %59 = sbr.rel (0) target = $region13
  $region12: #{unet_forward.25} parent=0 // pred_region
    _
  $region13: #{unet_forward.25} parent=0 // pred_fallthru
    _

// kernel: unet_forward.24
$region0: #{unet_forward.24}
  #allocation0 [shape = 'u32[]', space=smem, size = 0x4, offset = 0x4, fixed_abs, tag = 'smem constant byte address 0x4 - core index']
  #allocation1 [shape = 'u32[144,128]{1,0:T(1,128)}', space=vmem, size = 0x12000, scoped, tag = 'internal scratch']
  %s0 = inlined_call_operand.vmem [shape: bf16[32,1035], index: 0, kind: input, shape index: {}]
  %s1 = inlined_call_operand.vmem [shape: bf16[1035,128], index: 1, kind: input, shape index: {}]
  %s2 = inlined_call_operand.vmem [shape: f32[1,128], index: 2, kind: input, shape index: {}]
  %s3 = inlined_call_operand.vmem [shape: f32[32,128], index: 3, kind: output, shape index: {}]
  %s4 = sld [smem:[#allocation0]]
  $region22: #{unet_forward.24} parent=0
    _
  %s6 = ssub.s32 1, %s4
  %s7 = scalar_select 0, %s6, %s4
  // Predicated region
  $region2: #{unet_forward.24} parent=0 // pred_check
    _
  $region3: #{unet_forward.24} parent=0 // pred_check_branch
    %9 = sbr.rel (0) target = $region5
  $region4: #{unet_forward.24} parent=0 // pred_region
    _
  $region5: #{unet_forward.24} parent=0 // pred_fallthru
    _
  // Predicated region
  $region6: #{unet_forward.24} parent=0 // pred_check
    _
  $region7: #{unet_forward.24} parent=0 // pred_check_branch
    %11 = sbr.rel (0) target = $region9
  $region8: #{unet_forward.24} parent=0 // pred_region
    _
  $region9: #{unet_forward.24} parent=0 // pred_fallthru
    _
  // Predicated region
  $region10: #{unet_forward.24} parent=0 // pred_check
    _
  $region11: #{unet_forward.24} parent=0 // pred_check_branch
    %13 = sbr.rel (0) target = $region13
  $region12: #{unet_forward.24} parent=0 // pred_region
    _
  $region13: #{unet_forward.24} parent=0 // pred_fallthru
    _
  %v15 = vld [vmem:[%s0] sm:$0xff]
  %v16 = vld [vmem:[%s0 + $0x8] sm:$0xff]
  %v17 = vld [vmem:[%s0 + $0x10] sm:$0xff]
  %v18 = vld [vmem:[%s0 + $0x18] sm:$0xff]
  %v19 = vld [vmem:[%s0 + $0x20] sm:$0xf]
  %v20 = vld [vmem:[%s0 + $0x24] sm:$0xff]
  %v21 = vld [vmem:[%s0 + $0x2c] sm:$0xff]
  %v22 = vld [vmem:[%s0 + $0x34] sm:$0xff]
  %v23 = vld [vmem:[%s0 + $0x3c] sm:$0xff]
  %v24 = vld [vmem:[%s0 + $0x44] sm:$0xf]
  %v25 = vld [vmem:[%s0 + $0x48] sm:$0xff]
  %v26 = vld [vmem:[%s0 + $0x50] sm:$0xff]
  %v27 = vld [vmem:[%s0 + $0x58] sm:$0xff]
  %v28 = vld [vmem:[%s0 + $0x60] sm:$0xff]
  %v29 = vld [vmem:[%s0 + $0x68] sm:$0xf]
  %v30 = vld [vmem:[%s0 + $0x6c] sm:$0xff]
  %v31 = vld [vmem:[%s0 + $0x74] sm:$0xff]
  %v32 = vld [vmem:[%s0 + $0x7c] sm:$0xff]
  %v33 = vld [vmem:[%s0 + $0x84] sm:$0xff]
  %v34 = vld [vmem:[%s0 + $0x8c] sm:$0xf]
  %v35 = vld [vmem:[%s1] sm:$0xf]
  %v36 = vld [vmem:[%s1 + $0x4] sm:$0xf]
  %v37 = vld [vmem:[%s1 + $0x8] sm:$0xf]
  %v38 = vld [vmem:[%s1 + $0xc] sm:$0xf]
  %v39 = vld [vmem:[%s1 + $0x10] sm:$0xf]
  %v40 = vld [vmem:[%s1 + $0x14] sm:$0xf]
  %v41 = vld [vmem:[%s1 + $0x18] sm:$0xf]
  %v42 = vld [vmem:[%s1 + $0x1c] sm:$0xf]
  %v43 = vld [vmem:[%s1 + $0x20] sm:$0xf]
  %v44 = vld [vmem:[%s1 + $0x24] sm:$0xf]
  %v45 = vld [vmem:[%s1 + $0x28] sm:$0xf]
  %v46 = vld [vmem:[%s1 + $0x2c] sm:$0xf]
  %v47 = vld [vmem:[%s1 + $0x30] sm:$0xf]
  %v48 = vld [vmem:[%s1 + $0x34] sm:$0xf]
  %v49 = vld [vmem:[%s1 + $0x38] sm:$0xf]
  %v50 = vld [vmem:[%s1 + $0x3c] sm:$0xf]
  %v51 = vld [vmem:[%s1 + $0x40] sm:$0xf]
  %v52 = vld [vmem:[%s1 + $0x44] sm:$0xf]
  %v53 = vld [vmem:[%s1 + $0x48] sm:$0xf]
  %v54 = vld [vmem:[%s1 + $0x4c] sm:$0xf]
  %v55 = vld [vmem:[%s1 + $0x50] sm:$0xf]
  %v56 = vld [vmem:[%s1 + $0x54] sm:$0xf]
  %v57 = vld [vmem:[%s1 + $0x58] sm:$0xf]
  %v58 = vld [vmem:[%s1 + $0x5c] sm:$0xf]
  %v59 = vld [vmem:[%s1 + $0x60] sm:$0xf]
  %v60 = vld [vmem:[%s1 + $0x64] sm:$0xf]
  %v61 = vld [vmem:[%s1 + $0x68] sm:$0xf]
  %v62 = vld [vmem:[%s1 + $0x6c] sm:$0xf]
  %v63 = vld [vmem:[%s1 + $0x70] sm:$0xf]
  %v64 = vld [vmem:[%s1 + $0x74] sm:$0xf]
  %v65 = vld [vmem:[%s1 + $0x78] sm:$0xf]
  %v66 = vld [vmem:[%s1 + $0x7c] sm:$0xf]
  %v67 = vld [vmem:[%s1 + $0x80] sm:$0xf]
  %v68 = vld [vmem:[%s1 + $0x84] sm:$0xf]
  %v69 = vld [vmem:[%s1 + $0x88] sm:$0xf]
  %v70 = vld [vmem:[%s1 + $0x8c] sm:$0xf]
  %v71 = vld [vmem:[%s1 + $0x90] sm:$0xf]
  %v72 = vld [vmem:[%s1 + $0x94] sm:$0xf]
  %v73 = vld [vmem:[%s1 + $0x98] sm:$0xf]
  %v74 = vld [vmem:[%s1 + $0x9c] sm:$0xf]
  %v75 = vld [vmem:[%s1 + $0xa0] sm:$0xf]
  %v76 = vld [vmem:[%s1 + $0xa4] sm:$0xf]
  %v77 = vld [vmem:[%s1 + $0xa8] sm:$0xf]
  %v78 = vld [vmem:[%s1 + $0xac] sm:$0xf]
  %v79 = vld [vmem:[%s1 + $0xb0] sm:$0xf]
  %v80 = vld [vmem:[%s1 + $0xb4] sm:$0xf]
  %v81 = vld [vmem:[%s1 + $0xb8] sm:$0xf]
  %v82 = vld [vmem:[%s1 + $0xbc] sm:$0xf]
  %v83 = vld [vmem:[%s1 + $0xc0] sm:$0xf]
  %v84 = vld [vmem:[%s1 + $0xc4] sm:$0xf]
  %v85 = vld [vmem:[%s1 + $0xc8] sm:$0xf]
  %v86 = vld [vmem:[%s1 + $0xcc] sm:$0xf]
  %v87 = vld [vmem:[%s1 + $0xd0] sm:$0xf]
  %v88 = vld [vmem:[%s1 + $0xd4] sm:$0xf]
  %v89 = vld [vmem:[%s1 + $0xd8] sm:$0xf]
  %v90 = vld [vmem:[%s1 + $0xdc] sm:$0xf]
  %v91 = vld [vmem:[%s1 + $0xe0] sm:$0xf]
  %v92 = vld [vmem:[%s1 + $0xe4] sm:$0xf]
  %v93 = vld [vmem:[%s1 + $0xe8] sm:$0xf]
  %v94 = vld [vmem:[%s1 + $0xec] sm:$0xf]
  %v95 = vld [vmem:[%s1 + $0xf0] sm:$0xf]
  %v96 = vld [vmem:[%s1 + $0xf4] sm:$0xf]
  %v97 = vld [vmem:[%s1 + $0xf8] sm:$0xf]
  %v98 = vld [vmem:[%s1 + $0xfc] sm:$0xf]
  %v99 = vld [vmem:[%s1 + $0x100] sm:$0xf]
  %v100 = vld [vmem:[%s1 + $0x104] sm:$0xf]
  %v101 = vld [vmem:[%s1 + $0x108] sm:$0xf]
  %v102 = vld [vmem:[%s1 + $0x10c] sm:$0xf]
  %v103 = vld [vmem:[%s1 + $0x110] sm:$0xf]
  %v104 = vld [vmem:[%s1 + $0x114] sm:$0xf]
  %v105 = vld [vmem:[%s1 + $0x118] sm:$0xf]
  %v106 = vld [vmem:[%s1 + $0x11c] sm:$0xf]
  %v107 = vld [vmem:[%s1 + $0x120] sm:$0xf]
  %v108 = vld [vmem:[%s1 + $0x124] sm:$0xf]
  %v109 = vld [vmem:[%s1 + $0x128] sm:$0xf]
  %v110 = vld [vmem:[%s1 + $0x12c] sm:$0xf]
  %v111 = vld [vmem:[%s1 + $0x130] sm:$0xf]
  %v112 = vld [vmem:[%s1 + $0x134] sm:$0xf]
  %v113 = vld [vmem:[%s1 + $0x138] sm:$0xf]
  %v114 = vld [vmem:[%s1 + $0x13c] sm:$0xf]
  %v115 = vld [vmem:[%s1 + $0x140] sm:$0xf]
  %v116 = vld [vmem:[%s1 + $0x144] sm:$0xf]
  %v117 = vld [vmem:[%s1 + $0x148] sm:$0xf]
  %v118 = vld [vmem:[%s1 + $0x14c] sm:$0xf]
  %v119 = vld [vmem:[%s1 + $0x150] sm:$0xf]
  %v120 = vld [vmem:[%s1 + $0x154] sm:$0xf]
  %v121 = vld [vmem:[%s1 + $0x158] sm:$0xf]
  %v122 = vld [vmem:[%s1 + $0x15c] sm:$0xf]
  %v123 = vld [vmem:[%s1 + $0x160] sm:$0xf]
  %v124 = vld [vmem:[%s1 + $0x164] sm:$0xf]
  %v125 = vld [vmem:[%s1 + $0x168] sm:$0xf]
  %v126 = vld [vmem:[%s1 + $0x16c] sm:$0xf]
  %v127 = vld [vmem:[%s1 + $0x170] sm:$0xf]
  %v128 = vld [vmem:[%s1 + $0x174] sm:$0xf]
  %v129 = vld [vmem:[%s1 + $0x178] sm:$0xf]
  %v130 = vld [vmem:[%s1 + $0x17c] sm:$0xf]
  %v131 = vld [vmem:[%s1 + $0x180] sm:$0xf]
  %v132 = vld [vmem:[%s1 + $0x184] sm:$0xf]
  %v133 = vld [vmem:[%s1 + $0x188] sm:$0xf]
  %v134 = vld [vmem:[%s1 + $0x18c] sm:$0xf]
  %v135 = vld [vmem:[%s1 + $0x190] sm:$0xf]
  %v136 = vld [vmem:[%s1 + $0x194] sm:$0xf]
  %v137 = vld [vmem:[%s1 + $0x198] sm:$0xf]
  %v138 = vld [vmem:[%s1 + $0x19c] sm:$0xf]
  %v139 = vld [vmem:[%s1 + $0x1a0] sm:$0xf]
  %v140 = vld [vmem:[%s1 + $0x1a4] sm:$0xf]
  %v141 = vld [vmem:[%s1 + $0x1a8] sm:$0xf]
  %v142 = vld [vmem:[%s1 + $0x1ac] sm:$0xf]
  %v143 = vld [vmem:[%s1 + $0x1b0] sm:$0xf]
  %v144 = vld [vmem:[%s1 + $0x1b4] sm:$0xf]
  %v145 = vld [vmem:[%s1 + $0x1b8] sm:$0xf]
  %v146 = vld [vmem:[%s1 + $0x1bc] sm:$0xf]
  %v147 = vld [vmem:[%s1 + $0x1c0] sm:$0xf]
  %v148 = vld [vmem:[%s1 + $0x1c4] sm:$0xf]
  %v149 = vld [vmem:[%s1 + $0x1c8] sm:$0xf]
  %v150 = vld [vmem:[%s1 + $0x1cc] sm:$0xf]
  %v151 = vld [vmem:[%s1 + $0x1d0] sm:$0xf]
  %v152 = vld [vmem:[%s1 + $0x1d4] sm:$0xf]
  %v153 = vld [vmem:[%s1 + $0x1d8] sm:$0xf]
  %v154 = vld [vmem:[%s1 + $0x1dc] sm:$0xf]
  %v155 = vld [vmem:[%s1 + $0x1e0] sm:$0xf]
  %v156 = vld [vmem:[%s1 + $0x1e4] sm:$0xf]
  %v157 = vld [vmem:[%s1 + $0x1e8] sm:$0xf]
  %v158 = vld [vmem:[%s1 + $0x1ec] sm:$0xf]
  %v159 = vld [vmem:[%s1 + $0x1f0] sm:$0xf]
  %v160 = vld [vmem:[%s1 + $0x1f4] sm:$0xf]
  %v161 = vld [vmem:[%s1 + $0x1f8] sm:$0xf]
  %v162 = vld [vmem:[%s1 + $0x1fc] sm:$0xf]
  %v163 = vld [vmem:[%s1 + $0x200] sm:$0xf]
  %v164 = vld [vmem:[%s1 + $0x204] sm:$0x3]
  %v165 = vld [vmem:[%s2] sm:$0x1]
  %v167 = vlaneseq
  %v168 = vshrl.u32 %v167, 7
  %v169 = vsub.s32 0, %v168
  %v170 = vrot.slane %v165, %v169
  %v192 = vunpack.c.l.b16 %v15
  %v193 = vunpack.c.h.b16 %v15
  %v194 = vunpack.c.l.b16 %v16
  %v195 = vunpack.c.h.b16 %v16
  %v196 = vunpack.c.l.b16 %v17
  %v197 = vunpack.c.h.b16 %v17
  %v198 = vunpack.c.l.b16 %v18
  %v199 = vunpack.c.h.b16 %v18
  %v200 = vunpack.c.l.b16 %v19
  %v201 = vunpack.c.l.b16 %v20
  %v202 = vunpack.c.h.b16 %v20
  %v203 = vunpack.c.l.b16 %v21
  %v204 = vunpack.c.h.b16 %v21
  %v205 = vunpack.c.l.b16 %v22
  %v206 = vunpack.c.h.b16 %v22
  %v207 = vunpack.c.l.b16 %v23
  %v208 = vunpack.c.h.b16 %v23
  %v209 = vunpack.c.l.b16 %v24
  %v210 = vunpack.c.l.b16 %v25
  %v211 = vunpack.c.h.b16 %v25
  %v212 = vunpack.c.l.b16 %v26
  %v213 = vunpack.c.h.b16 %v26
  %v214 = vunpack.c.l.b16 %v27
  %v215 = vunpack.c.h.b16 %v27
  %v216 = vunpack.c.l.b16 %v28
  %v217 = vunpack.c.h.b16 %v28
  %v218 = vunpack.c.l.b16 %v29
  %v219 = vunpack.c.l.b16 %v30
  %v220 = vunpack.c.h.b16 %v30
  %v221 = vunpack.c.l.b16 %v31
  %v222 = vunpack.c.h.b16 %v31
  %v223 = vunpack.c.l.b16 %v32
  %v224 = vunpack.c.h.b16 %v32
  %v225 = vunpack.c.l.b16 %v33
  %v226 = vunpack.c.h.b16 %v33
  %v227 = vunpack.c.l.b16 %v34
  %v228 = vpack.c.b16 %v201, %v192
  %v229 = vpack.c.b16 %v202, %v193
  %v230 = vpack.c.b16 %v203, %v194
  %v231 = vpack.c.b16 %v204, %v195
  %v232 = vpack.c.b16 %v205, %v196
  %v233 = vpack.c.b16 %v206, %v197
  %v234 = vpack.c.b16 %v207, %v198
  %v235 = vpack.c.b16 %v208, %v199
  %v236 = vpack.c.b16 %v209, %v200
  %v237 = vpack.c.b16 %v219, %v210
  %v238 = vpack.c.b16 %v220, %v211
  %v239 = vpack.c.b16 %v221, %v212
  %v240 = vpack.c.b16 %v222, %v213
  %v241 = vpack.c.b16 %v223, %v214
  %v242 = vpack.c.b16 %v224, %v215
  %v243 = vpack.c.b16 %v225, %v216
  %v244 = vpack.c.b16 %v226, %v217
  %v245 = vpack.c.b16 %v227, %v218
  %v392 = vunpack.c.l.b16 %v35
  %v393 = vunpack.c.l.b16 %v36
  %v394 = vunpack.c.l.b16 %v37
  %v395 = vunpack.c.l.b16 %v38
  %v396 = vunpack.c.l.b16 %v39
  %v397 = vunpack.c.l.b16 %v40
  %v398 = vunpack.c.l.b16 %v41
  %v399 = vunpack.c.l.b16 %v42
  %v400 = vunpack.c.l.b16 %v43
  %v401 = vunpack.c.l.b16 %v44
  %v402 = vunpack.c.l.b16 %v45
  %v403 = vunpack.c.l.b16 %v46
  %v404 = vunpack.c.l.b16 %v47
  %v405 = vunpack.c.l.b16 %v48
  %v406 = vunpack.c.l.b16 %v49
  %v407 = vunpack.c.l.b16 %v50
  %v408 = vunpack.c.l.b16 %v51
  %v409 = vunpack.c.l.b16 %v52
  %v410 = vunpack.c.l.b16 %v53
  %v411 = vunpack.c.l.b16 %v54
  %v412 = vunpack.c.l.b16 %v55
  %v413 = vunpack.c.l.b16 %v56
  %v414 = vunpack.c.l.b16 %v57
  %v415 = vunpack.c.l.b16 %v58
  %v416 = vunpack.c.l.b16 %v59
  %v417 = vunpack.c.l.b16 %v60
  %v418 = vunpack.c.l.b16 %v61
  %v419 = vunpack.c.l.b16 %v62
  %v420 = vunpack.c.l.b16 %v63
  %v421 = vunpack.c.l.b16 %v64
  %v422 = vunpack.c.l.b16 %v65
  %v423 = vunpack.c.l.b16 %v66
  %v424 = vunpack.c.l.b16 %v67
  %v425 = vunpack.c.l.b16 %v68
  %v426 = vunpack.c.l.b16 %v69
  %v427 = vunpack.c.l.b16 %v70
  %v428 = vunpack.c.l.b16 %v71
  %v429 = vunpack.c.l.b16 %v72
  %v430 = vunpack.c.l.b16 %v73
  %v431 = vunpack.c.l.b16 %v74
  %v432 = vunpack.c.l.b16 %v75
  %v433 = vunpack.c.l.b16 %v76
  %v434 = vunpack.c.l.b16 %v77
  %v435 = vunpack.c.l.b16 %v78
  %v436 = vunpack.c.l.b16 %v79
  %v437 = vunpack.c.l.b16 %v80
  %v438 = vunpack.c.l.b16 %v81
  %v439 = vunpack.c.l.b16 %v82
  %v440 = vunpack.c.l.b16 %v83
  %v441 = vunpack.c.l.b16 %v84
  %v442 = vunpack.c.l.b16 %v85
  %v443 = vunpack.c.l.b16 %v86
  %v444 = vunpack.c.l.b16 %v87
  %v445 = vunpack.c.l.b16 %v88
  %v446 = vunpack.c.l.b16 %v89
  %v447 = vunpack.c.l.b16 %v90
  %v448 = vunpack.c.l.b16 %v91
  %v449 = vunpack.c.l.b16 %v92
  %v450 = vunpack.c.l.b16 %v93
  %v451 = vunpack.c.l.b16 %v94
  %v452 = vunpack.c.l.b16 %v95
  %v453 = vunpack.c.l.b16 %v96
  %v454 = vunpack.c.l.b16 %v97
  %v455 = vunpack.c.l.b16 %v98
  %v456 = vunpack.c.l.b16 %v99
  %v457 = vunpack.c.l.b16 %v100
  %v458 = vunpack.c.l.b16 %v101
  %v459 = vunpack.c.l.b16 %v102
  %v460 = vunpack.c.l.b16 %v103
  %v461 = vunpack.c.l.b16 %v104
  %v462 = vunpack.c.l.b16 %v105
  %v463 = vunpack.c.l.b16 %v106
  %v464 = vunpack.c.l.b16 %v107
  %v465 = vunpack.c.l.b16 %v108
  %v466 = vunpack.c.l.b16 %v109
  %v467 = vunpack.c.l.b16 %v110
  %v468 = vunpack.c.l.b16 %v111
  %v469 = vunpack.c.l.b16 %v112
  %v470 = vunpack.c.l.b16 %v113
  %v471 = vunpack.c.l.b16 %v114
  %v472 = vunpack.c.l.b16 %v115
  %v473 = vunpack.c.l.b16 %v116
  %v474 = vunpack.c.l.b16 %v117
  %v475 = vunpack.c.l.b16 %v118
  %v476 = vunpack.c.l.b16 %v119
  %v477 = vunpack.c.l.b16 %v120
  %v478 = vunpack.c.l.b16 %v121
  %v479 = vunpack.c.l.b16 %v122
  %v480 = vunpack.c.l.b16 %v123
  %v481 = vunpack.c.l.b16 %v124
  %v482 = vunpack.c.l.b16 %v125
  %v483 = vunpack.c.l.b16 %v126
  %v484 = vunpack.c.l.b16 %v127
  %v485 = vunpack.c.l.b16 %v128
  %v486 = vunpack.c.l.b16 %v129
  %v487 = vunpack.c.l.b16 %v130
  %v488 = vunpack.c.l.b16 %v131
  %v489 = vunpack.c.l.b16 %v132
  %v490 = vunpack.c.l.b16 %v133
  %v491 = vunpack.c.l.b16 %v134
  %v492 = vunpack.c.l.b16 %v135
  %v493 = vunpack.c.l.b16 %v136
  %v494 = vunpack.c.l.b16 %v137
  %v495 = vunpack.c.l.b16 %v138
  %v496 = vunpack.c.l.b16 %v139
  %v497 = vunpack.c.l.b16 %v140
  %v498 = vunpack.c.l.b16 %v141
  %v499 = vunpack.c.l.b16 %v142
  %v500 = vunpack.c.l.b16 %v143
  %v501 = vunpack.c.l.b16 %v144
  %v502 = vunpack.c.l.b16 %v145
  %v503 = vunpack.c.l.b16 %v146
  %v504 = vunpack.c.l.b16 %v147
  %v505 = vunpack.c.l.b16 %v148
  %v506 = vunpack.c.l.b16 %v149
  %v507 = vunpack.c.l.b16 %v150
  %v508 = vunpack.c.l.b16 %v151
  %v509 = vunpack.c.l.b16 %v152
  %v510 = vunpack.c.l.b16 %v153
  %v511 = vunpack.c.l.b16 %v154
  %v512 = vunpack.c.l.b16 %v155
  %v513 = vunpack.c.l.b16 %v156
  %v514 = vunpack.c.l.b16 %v157
  %v515 = vunpack.c.l.b16 %v158
  %v516 = vunpack.c.l.b16 %v159
  %v517 = vunpack.c.l.b16 %v160
  %v518 = vunpack.c.l.b16 %v161
  %v519 = vunpack.c.l.b16 %v162
  %v520 = vunpack.c.l.b16 %v163
  %v521 = vunpack.c.l.b16 %v164
  %v522 = vpack.c.b16 %v393, %v392
  %v523 = vpack.c.b16 %v395, %v394
  %v524 = vpack.c.b16 %v397, %v396
  %v525 = vpack.c.b16 %v399, %v398
  %v526 = vpack.c.b16 %v401, %v400
  %v527 = vpack.c.b16 %v403, %v402
  %v528 = vpack.c.b16 %v405, %v404
  %v529 = vpack.c.b16 %v407, %v406
  %v530 = vpack.c.b16 %v409, %v408
  %v531 = vpack.c.b16 %v411, %v410
  %v532 = vpack.c.b16 %v413, %v412
  %v533 = vpack.c.b16 %v415, %v414
  %v534 = vpack.c.b16 %v417, %v416
  %v535 = vpack.c.b16 %v419, %v418
  %v536 = vpack.c.b16 %v421, %v420
  %v537 = vpack.c.b16 %v423, %v422
  %v538 = vpack.c.b16 %v425, %v424
  %v539 = vpack.c.b16 %v427, %v426
  %v540 = vpack.c.b16 %v429, %v428
  %v541 = vpack.c.b16 %v431, %v430
  %v542 = vpack.c.b16 %v433, %v432
  %v543 = vpack.c.b16 %v435, %v434
  %v544 = vpack.c.b16 %v437, %v436
  %v545 = vpack.c.b16 %v439, %v438
  %v546 = vpack.c.b16 %v441, %v440
  %v547 = vpack.c.b16 %v443, %v442
  %v548 = vpack.c.b16 %v445, %v444
  %v549 = vpack.c.b16 %v447, %v446
  %v550 = vpack.c.b16 %v449, %v448
  %v551 = vpack.c.b16 %v451, %v450
  %v552 = vpack.c.b16 %v453, %v452
  %v553 = vpack.c.b16 %v455, %v454
  %v554 = vpack.c.b16 %v457, %v456
  %v555 = vpack.c.b16 %v459, %v458
  %v556 = vpack.c.b16 %v461, %v460
  %v557 = vpack.c.b16 %v463, %v462
  %v558 = vpack.c.b16 %v465, %v464
  %v559 = vpack.c.b16 %v467, %v466
  %v560 = vpack.c.b16 %v469, %v468
  %v561 = vpack.c.b16 %v471, %v470
  %v562 = vpack.c.b16 %v473, %v472
  %v563 = vpack.c.b16 %v475, %v474
  %v564 = vpack.c.b16 %v477, %v476
  %v565 = vpack.c.b16 %v479, %v478
  %v566 = vpack.c.b16 %v481, %v480
  %v567 = vpack.c.b16 %v483, %v482
  %v568 = vpack.c.b16 %v485, %v484
  %v569 = vpack.c.b16 %v487, %v486
  %v570 = vpack.c.b16 %v489, %v488
  %v571 = vpack.c.b16 %v491, %v490
  %v572 = vpack.c.b16 %v493, %v492
  %v573 = vpack.c.b16 %v495, %v494
  %v574 = vpack.c.b16 %v497, %v496
  %v575 = vpack.c.b16 %v499, %v498
  %v576 = vpack.c.b16 %v501, %v500
  %v577 = vpack.c.b16 %v503, %v502
  %v578 = vpack.c.b16 %v505, %v504
  %v579 = vpack.c.b16 %v507, %v506
  %v580 = vpack.c.b16 %v509, %v508
  %v581 = vpack.c.b16 %v511, %v510
  %v582 = vpack.c.b16 %v513, %v512
  %v583 = vpack.c.b16 %v515, %v514
  %v584 = vpack.c.b16 %v517, %v516
  %v585 = vpack.c.b16 %v519, %v518
  %v586 = vpack.c.b16 %v521, %v520
  %vm651 = vcmask 89088
  %v653 = vsel %vm651, %v236, 0
  %v656 = vsel %vm651, %v245, 0
  %vm658 = vcmask 1044480
  %vm659 = vcmask 1045504
  %v660 = vsel %vm658, 4294967295, 65535
  %v661 = vsel %vm659, %v660, 0
  %v663 = vand.u32 %v586, %v661
  %665 = vmatprep.subr.bf16.mxu0 0
  %666 = vmatpush1.bf16.msra.mxu0 %v529
  %667 = vmatprep.subr.bf16.mxu0 0
  %668 = vmatpush1.bf16.msra.mxu0 %v528
  %669 = vmatprep.subr.bf16.mxu0 0
  %670 = vmatpush1.bf16.msra.mxu0 %v527
  %671 = vmatprep.subr.bf16.mxu0 0
  %672 = vmatpush1.bf16.msra.mxu0 %v526
  %673 = vmatprep.subr.bf16.mxu0 0
  %674 = vmatpush1.bf16.msra.mxu0 %v525
  %675 = vmatprep.subr.bf16.mxu0 0
  %676 = vmatpush1.bf16.msra.mxu0 %v524
  %677 = vmatprep.subr.bf16.mxu0 0
  %678 = vmatpush1.bf16.msra.mxu0 %v523
  %679 = vmatprep.subr.bf16.mxu0 0
  %680 = vmatpush1.bf16.msra.mxu0 %v522
  %681 = vmatprep.subr.bf16.mxu0 0
  %682 = vmatpush2.bf16.msra.mxu0 %v537
  %683 = vmatprep.subr.bf16.mxu0 0
  %684 = vmatpush2.bf16.msra.mxu0 %v536
  %685 = vmatprep.subr.bf16.mxu0 0
  %686 = vmatpush2.bf16.msra.mxu0 %v535
  %687 = vmatprep.subr.bf16.mxu0 0
  %688 = vmatpush2.bf16.msra.mxu0 %v534
  %689 = vmatprep.subr.bf16.mxu0 0
  %690 = vmatpush2.bf16.msra.mxu0 %v533
  %691 = vmatprep.subr.bf16.mxu0 0
  %692 = vmatpush2.bf16.msra.mxu0 %v532
  %693 = vmatprep.subr.bf16.mxu0 0
  %694 = vmatpush2.bf16.msra.mxu0 %v531
  %695 = vmatprep.subr.bf16.mxu0 0
  %696 = vmatpush2.bf16.msra.mxu0 %v530
  %697 = vmatprep.mubr.bf16.mxu0 %v229
  %698 = vmatmul.mubr.bf16.gmra.mxu0 %v228
  %v699 = vpop.f32.mrf.mxu0
  %v700 = vadd.f32 %v170, %v699
  %v701 = vpop.f32.mrf.mxu0
  %v702 = vpop.f32.mrf.mxu0
  %v703 = vadd.f32 %v170, %v702
  %v704 = vpop.f32.mrf.mxu0
  %705 = vmatprep.mubr.bf16.mxu0 %v238
  %706 = vmatmul.mubr.bf16.gmra.mxu0 %v237
  %v707 = vpop.f32.mrf.mxu0
  %v708 = vadd.f32 %v170, %v707
  %v709 = vpop.f32.mrf.mxu0
  %v710 = vpop.f32.mrf.mxu0
  %v711 = vadd.f32 %v170, %v710
  %v712 = vpop.f32.mrf.mxu0
  %713 = vdwg.mxu0
  %714 = vmatprep.subr.bf16.mxu0 0
  %715 = vmatpush1.bf16.msra.mxu0 %v545
  %716 = vmatprep.subr.bf16.mxu0 0
  %717 = vmatpush1.bf16.msra.mxu0 %v544
  %718 = vmatprep.subr.bf16.mxu0 0
  %719 = vmatpush1.bf16.msra.mxu0 %v543
  %720 = vmatprep.subr.bf16.mxu0 0
  %721 = vmatpush1.bf16.msra.mxu0 %v542
  %722 = vmatprep.subr.bf16.mxu0 0
  %723 = vmatpush1.bf16.msra.mxu0 %v541
  %724 = vmatprep.subr.bf16.mxu0 0
  %725 = vmatpush1.bf16.msra.mxu0 %v540
  %726 = vmatprep.subr.bf16.mxu0 0
  %727 = vmatpush1.bf16.msra.mxu0 %v539
  %728 = vmatprep.subr.bf16.mxu0 0
  %729 = vmatpush1.bf16.msra.mxu0 %v538
  %730 = vmatprep.subr.bf16.mxu0 0
  %731 = vmatpush2.bf16.msra.mxu0 %v553
  %732 = vmatprep.subr.bf16.mxu0 0
  %733 = vmatpush2.bf16.msra.mxu0 %v552
  %734 = vmatprep.subr.bf16.mxu0 0
  %735 = vmatpush2.bf16.msra.mxu0 %v551
  %736 = vmatprep.subr.bf16.mxu0 0
  %737 = vmatpush2.bf16.msra.mxu0 %v550
  %738 = vmatprep.subr.bf16.mxu0 0
  %739 = vmatpush2.bf16.msra.mxu0 %v549
  %740 = vmatprep.subr.bf16.mxu0 0
  %741 = vmatpush2.bf16.msra.mxu0 %v548
  %742 = vmatprep.subr.bf16.mxu0 0
  %743 = vmatpush2.bf16.msra.mxu0 %v547
  %744 = vmatprep.subr.bf16.mxu0 0
  %745 = vmatpush2.bf16.msra.mxu0 %v546
  %746 = vmatprep.mubr.bf16.mxu0 %v231
  %747 = vmatmul.mubr.bf16.gmra.mxu0 %v230
  %v748 = vpop.f32.mrf.mxu0
  %v749 = vadd.f32 %v700, %v748
  %v750 = vpop.f32.mrf.mxu0
  %v751 = vpop.f32.mrf.mxu0
  %v752 = vadd.f32 %v703, %v751
  %v753 = vpop.f32.mrf.mxu0
  %754 = vmatprep.mubr.bf16.mxu0 %v240
  %755 = vmatmul.mubr.bf16.gmra.mxu0 %v239
  %v756 = vpop.f32.mrf.mxu0
  %v757 = vadd.f32 %v708, %v756
  %v758 = vpop.f32.mrf.mxu0
  %v759 = vpop.f32.mrf.mxu0
  %v760 = vadd.f32 %v711, %v759
  %v761 = vpop.f32.mrf.mxu0
  %762 = vdwg.mxu0
  %763 = vmatprep.subr.bf16.mxu0 0
  %764 = vmatpush1.bf16.msra.mxu0 %v561
  %765 = vmatprep.subr.bf16.mxu0 0
  %766 = vmatpush1.bf16.msra.mxu0 %v560
  %767 = vmatprep.subr.bf16.mxu0 0
  %768 = vmatpush1.bf16.msra.mxu0 %v559
  %769 = vmatprep.subr.bf16.mxu0 0
  %770 = vmatpush1.bf16.msra.mxu0 %v558
  %771 = vmatprep.subr.bf16.mxu0 0
  %772 = vmatpush1.bf16.msra.mxu0 %v557
  %773 = vmatprep.subr.bf16.mxu0 0
  %774 = vmatpush1.bf16.msra.mxu0 %v556
  %775 = vmatprep.subr.bf16.mxu0 0
  %776 = vmatpush1.bf16.msra.mxu0 %v555
  %777 = vmatprep.subr.bf16.mxu0 0
  %778 = vmatpush1.bf16.msra.mxu0 %v554
  %779 = vmatprep.subr.bf16.mxu0 0
  %780 = vmatpush2.bf16.msra.mxu0 %v569
  %781 = vmatprep.subr.bf16.mxu0 0
  %782 = vmatpush2.bf16.msra.mxu0 %v568
  %783 = vmatprep.subr.bf16.mxu0 0
  %784 = vmatpush2.bf16.msra.mxu0 %v567
  %785 = vmatprep.subr.bf16.mxu0 0
  %786 = vmatpush2.bf16.msra.mxu0 %v566
  %787 = vmatprep.subr.bf16.mxu0 0
  %788 = vmatpush2.bf16.msra.mxu0 %v565
  %789 = vmatprep.subr.bf16.mxu0 0
  %790 = vmatpush2.bf16.msra.mxu0 %v564
  %791 = vmatprep.subr.bf16.mxu0 0
  %792 = vmatpush2.bf16.msra.mxu0 %v563
  %793 = vmatprep.subr.bf16.mxu0 0
  %794 = vmatpush2.bf16.msra.mxu0 %v562
  %795 = vmatprep.mubr.bf16.mxu0 %v233
  %796 = vmatmul.mubr.bf16.gmra.mxu0 %v232
  %v797 = vpop.f32.mrf.mxu0
  %v798 = vadd.f32 %v749, %v797
  %v799 = vpop.f32.mrf.mxu0
  %v800 = vpop.f32.mrf.mxu0
  %v801 = vadd.f32 %v752, %v800
  %v802 = vpop.f32.mrf.mxu0
  %803 = vmatprep.mubr.bf16.mxu0 %v242
  %804 = vmatmul.mubr.bf16.gmra.mxu0 %v241
  %v805 = vpop.f32.mrf.mxu0
  %v806 = vadd.f32 %v757, %v805
  %v807 = vpop.f32.mrf.mxu0
  %v808 = vpop.f32.mrf.mxu0
  %v809 = vadd.f32 %v760, %v808
  %v810 = vpop.f32.mrf.mxu0
  %811 = vdwg.mxu0
  %812 = vmatprep.subr.bf16.mxu0 0
  %813 = vmatpush1.bf16.msra.mxu0 %v577
  %814 = vmatprep.subr.bf16.mxu0 0
  %815 = vmatpush1.bf16.msra.mxu0 %v576
  %816 = vmatprep.subr.bf16.mxu0 0
  %817 = vmatpush1.bf16.msra.mxu0 %v575
  %818 = vmatprep.subr.bf16.mxu0 0
  %819 = vmatpush1.bf16.msra.mxu0 %v574
  %820 = vmatprep.subr.bf16.mxu0 0
  %821 = vmatpush1.bf16.msra.mxu0 %v573
  %822 = vmatprep.subr.bf16.mxu0 0
  %823 = vmatpush1.bf16.msra.mxu0 %v572
  %824 = vmatprep.subr.bf16.mxu0 0
  %825 = vmatpush1.bf16.msra.mxu0 %v571
  %826 = vmatprep.subr.bf16.mxu0 0
  %827 = vmatpush1.bf16.msra.mxu0 %v570
  %828 = vmatprep.subr.bf16.mxu0 0
  %829 = vmatpush2.bf16.msra.mxu0 %v585
  %830 = vmatprep.subr.bf16.mxu0 0
  %831 = vmatpush2.bf16.msra.mxu0 %v584
  %832 = vmatprep.subr.bf16.mxu0 0
  %833 = vmatpush2.bf16.msra.mxu0 %v583
  %834 = vmatprep.subr.bf16.mxu0 0
  %835 = vmatpush2.bf16.msra.mxu0 %v582
  %836 = vmatprep.subr.bf16.mxu0 0
  %837 = vmatpush2.bf16.msra.mxu0 %v581
  %838 = vmatprep.subr.bf16.mxu0 0
  %839 = vmatpush2.bf16.msra.mxu0 %v580
  %840 = vmatprep.subr.bf16.mxu0 0
  %841 = vmatpush2.bf16.msra.mxu0 %v579
  %842 = vmatprep.subr.bf16.mxu0 0
  %843 = vmatpush2.bf16.msra.mxu0 %v578
  %844 = vmatprep.mubr.bf16.mxu0 %v235
  %845 = vmatmul.mubr.bf16.gmra.mxu0 %v234
  %v846 = vpop.f32.mrf.mxu0
  %v847 = vadd.f32 %v798, %v846
  %v848 = vpop.f32.mrf.mxu0
  %v849 = vpop.f32.mrf.mxu0
  %v850 = vadd.f32 %v801, %v849
  %v851 = vpop.f32.mrf.mxu0
  %852 = vmatprep.mubr.bf16.mxu0 %v244
  %853 = vmatmul.mubr.bf16.gmra.mxu0 %v243
  %v854 = vpop.f32.mrf.mxu0
  %v855 = vadd.f32 %v806, %v854
  %v856 = vpop.f32.mrf.mxu0
  %v857 = vpop.f32.mrf.mxu0
  %v858 = vadd.f32 %v809, %v857
  %v859 = vpop.f32.mrf.mxu0
  %860 = vdwg.mxu0
  %861 = vmatprep.subr.bf16.mxu0 0
  %862 = vmatpush1.bf16.msra.mxu0 0
  %863 = vmatprep.subr.bf16.mxu0 0
  %864 = vmatpush1.bf16.msra.mxu0 0
  %865 = vmatprep.subr.bf16.mxu0 0
  %866 = vmatpush1.bf16.msra.mxu0 0
  %867 = vmatprep.subr.bf16.mxu0 0
  %868 = vmatpush1.bf16.msra.mxu0 0
  %869 = vmatprep.subr.bf16.mxu0 0
  %870 = vmatpush1.bf16.msra.mxu0 0
  %871 = vmatprep.subr.bf16.mxu0 0
  %872 = vmatpush1.bf16.msra.mxu0 0
  %873 = vmatprep.subr.bf16.mxu0 0
  %874 = vmatpush1.bf16.msra.mxu0 0
  %875 = vmatprep.subr.bf16.mxu0 0
  %876 = vmatpush1.bf16.msra.mxu0 %v663
  %877 = vmatprep.subr.bf16.mxu0 0
  %878 = vmatpush2.bf16.msra.mxu0 0
  %879 = vmatprep.subr.bf16.mxu0 0
  %880 = vmatpush2.bf16.msra.mxu0 0
  %881 = vmatprep.subr.bf16.mxu0 0
  %882 = vmatpush2.bf16.msra.mxu0 0
  %883 = vmatprep.subr.bf16.mxu0 0
  %884 = vmatpush2.bf16.msra.mxu0 0
  %885 = vmatprep.subr.bf16.mxu0 0
  %886 = vmatpush2.bf16.msra.mxu0 0
  %887 = vmatprep.subr.bf16.mxu0 0
  %888 = vmatpush2.bf16.msra.mxu0 0
  %889 = vmatprep.subr.bf16.mxu0 0
  %890 = vmatpush2.bf16.msra.mxu0 0
  %891 = vmatprep.subr.bf16.mxu0 0
  %892 = vmatpush2.bf16.msra.mxu0 0
  %893 = vmatprep.mubr.bf16.mxu0 0
  %894 = vmatmul.mubr.bf16.gmra.mxu0 %v653
  %v895 = vpop.f32.mrf.mxu0
  %v896 = vadd.f32 %v847, %v895
  %v897 = vpop.f32.mrf.mxu0
  %v898 = vpop.f32.mrf.mxu0
  %v899 = vadd.f32 %v850, %v898
  %v900 = vpop.f32.mrf.mxu0
  %901 = vmatprep.mubr.bf16.mxu0 0
  %902 = vmatmul.mubr.bf16.gmra.mxu0 %v656
  %v903 = vpop.f32.mrf.mxu0
  %v904 = vadd.f32 %v855, %v903
  %v905 = vpop.f32.mrf.mxu0
  %v906 = vpop.f32.mrf.mxu0
  %v907 = vadd.f32 %v858, %v906
  %v908 = vpop.f32.mrf.mxu0
  %909 = vdwg.mxu0
  %v910 = vmax.f32 %v896, 0.0
  %v911 = vmax.f32 %v899, 0.0
  %v912 = vmax.f32 %v904, 0.0
  %v913 = vmax.f32 %v907, 0.0
  %914 = vst [vmem:[%s3] sm:$0xff] %v910
  %915 = vst [vmem:[%s3 + $0x8] sm:$0xff] %v911
  %916 = vst [vmem:[%s3 + $0x10] sm:$0xff] %v912
  %917 = vst [vmem:[%s3 + $0x18] sm:$0xff] %v913
  // Predicated region
  $region14: #{unet_forward.24} parent=0 // pred_check
    _
  $region15: #{unet_forward.24} parent=0 // pred_check_branch
    %919 = sbr.rel (0) target = $region17
  $region16: #{unet_forward.24} parent=0 // pred_region
    _
  $region17: #{unet_forward.24} parent=0 // pred_fallthru
    _
  // Predicated region
  $region18: #{unet_forward.24} parent=0 // pred_check
    _
  $region19: #{unet_forward.24} parent=0 // pred_check_branch
    %921 = sbr.rel (0) target = $region21
  $region20: #{unet_forward.24} parent=0 // pred_region
    _
  $region21: #{unet_forward.24} parent=0 // pred_fallthru
    _

// kernel: unet_forward.27
$region0: #{unet_forward.27}
  #allocation0 [shape = 'u32[]', space=smem, size = 0x4, offset = 0x4, fixed_abs, tag = 'smem constant byte address 0x4 - core index']
  #allocation1 [shape = 'u32[144,128]{1,0:T(1,128)}', space=vmem, size = 0x12000, scoped, tag = 'internal scratch']
  %s0 = inlined_call_operand.vmem [shape: f32[8,256], index: 0, kind: input, shape index: {}]
  %s1 = inlined_call_operand.vmem [shape: f32[2,8], index: 1, kind: input, shape index: {}]
  %s2 = inlined_call_operand.vmem [shape: f32[256,2], index: 2, kind: input, shape index: {}]
  %s3 = inlined_call_operand.vmem [shape: f32[1,2], index: 3, kind: input, shape index: {}]
  %s4 = inlined_call_operand.hbm [shape: f32[2,2], index: 4, kind: output, shape index: {}]
  %s5 = sld [smem:[#allocation0]]
  $region26: #{unet_forward.27} parent=0
    _
  %s7 = ssub.s32 1, %s5
  %s8 = scalar_select 0, %s7, %s5
  $region1: #{unet_forward.27} parent=0
    #allocation2 [shape = 'u8[1024]{0}', space=vmem, size = 0x400, scoped, tag = 'output window, operand 0, single buffered']
    #allocation3 [shape = 's32[1]{0}', space=sflag, size = 0x4, scoped, tag = 'scoped memory for unet_forward.27']
    %9 = vsyncpa [#allocation3], 0
    // Predicated region
    $region2: #{unet_forward.27} parent=1 // pred_check
      _
    $region3: #{unet_forward.27} parent=1 // pred_check_branch
      %11 = sbr.rel (0) target = $region5
    $region4: #{unet_forward.27} parent=1 // pred_region
      _
    $region5: #{unet_forward.27} parent=1 // pred_fallthru
      _
    // Predicated region
    $region6: #{unet_forward.27} parent=1 // pred_check
      _
    $region7: #{unet_forward.27} parent=1 // pred_check_branch
      %13 = sbr.rel (0) target = $region9
    $region8: #{unet_forward.27} parent=1 // pred_region
      _
    $region9: #{unet_forward.27} parent=1 // pred_fallthru
      _
    // Predicated region
    $region10: #{unet_forward.27} parent=1 // pred_check
      _
    $region11: #{unet_forward.27} parent=1 // pred_check_branch
      %15 = sbr.rel (0) target = $region13
    $region12: #{unet_forward.27} parent=1 // pred_region
      _
    $region13: #{unet_forward.27} parent=1 // pred_fallthru
      _
    // Predicated region
    $region14: #{unet_forward.27} parent=1 // pred_check
      _
    $region15: #{unet_forward.27} parent=1 // pred_check_branch
      %17 = sbr.rel (0) target = $region17
    $region16: #{unet_forward.27} parent=1 // pred_region
      _
    $region17: #{unet_forward.27} parent=1 // pred_fallthru
      _
    %v18 = vld [vmem:[%s1] sm:$0x3]
    %v19 = vld [vmem:[%s0] sm:$0xff]
    %v20 = vld [vmem:[%s0 + $0x8] sm:$0xff]
    %vm21 = vcmask 64512
    %v23 = vsel %vm21, %v18, 0
    %25 = vmatprep.subr.mxu0 0.0
    %26 = vmatpush1.msra.mxu0 0.0
    %27 = vmatprep.subr.mxu0 0.0
    %28 = vmatpush1.msra.mxu0 0.0
    %29 = vmatprep.subr.mxu0 0.0
    %30 = vmatpush1.msra.mxu0 0.0
    %31 = vmatprep.subr.mxu0 0.0
    %32 = vmatpush1.msra.mxu0 0.0
    %33 = vmatprep.subr.mxu0 0.0
    %34 = vmatpush1.msra.mxu0 0.0
    %35 = vmatprep.subr.mxu0 0.0
    %36 = vmatpush1.msra.mxu0 0.0
    %37 = vmatprep.subr.mxu0 0.0
    %38 = vmatpush1.msra.mxu0 0.0
    %39 = vmatprep.subr.mxu0 0.0
    %40 = vmatpush1.msra.mxu0 0.0
    %41 = vmatprep.subr.mxu0 0.0
    %42 = vmatpush1.msra.mxu0 0.0
    %43 = vmatprep.subr.mxu0 0.0
    %44 = vmatpush1.msra.mxu0 0.0
    %45 = vmatprep.subr.mxu0 0.0
    %46 = vmatpush1.msra.mxu0 0.0
    %47 = vmatprep.subr.mxu0 0.0
    %48 = vmatpush1.msra.mxu0 0.0
    %49 = vmatprep.subr.mxu0 0.0
    %50 = vmatpush1.msra.mxu0 0.0
    %51 = vmatprep.subr.mxu0 0.0
    %52 = vmatpush1.msra.mxu0 0.0
    %53 = vmatprep.subr.mxu0 0.0
    %54 = vmatpush1.msra.mxu0 0.0
    %55 = vmatprep.subr.mxu0 %v20
    %56 = vmatpush1.msra.mxu0 %v19
    %57 = vmatprep.subr.mxu0 0.0
    %58 = vmatpush2.msra.mxu0 0.0
    %59 = vmatprep.subr.mxu0 0.0
    %60 = vmatpush2.msra.mxu0 0.0
    %61 = vmatprep.subr.mxu0 0.0
    %62 = vmatpush2.msra.mxu0 0.0
    %63 = vmatprep.subr.mxu0 0.0
    %64 = vmatpush2.msra.mxu0 0.0
    %65 = vmatprep.subr.mxu0 0.0
    %66 = vmatpush2.msra.mxu0 0.0
    %67 = vmatprep.subr.mxu0 0.0
    %68 = vmatpush2.msra.mxu0 0.0
    %69 = vmatprep.subr.mxu0 0.0
    %70 = vmatpush2.msra.mxu0 0.0
    %71 = vmatprep.subr.mxu0 0.0
    %72 = vmatpush2.msra.mxu0 0.0
    %73 = vmatprep.subr.mxu0 0.0
    %74 = vmatpush2.msra.mxu0 0.0
    %75 = vmatprep.subr.mxu0 0.0
    %76 = vmatpush2.msra.mxu0 0.0
    %77 = vmatprep.subr.mxu0 0.0
    %78 = vmatpush2.msra.mxu0 0.0
    %79 = vmatprep.subr.mxu0 0.0
    %80 = vmatpush2.msra.mxu0 0.0
    %81 = vmatprep.subr.mxu0 0.0
    %82 = vmatpush2.msra.mxu0 0.0
    %83 = vmatprep.subr.mxu0 0.0
    %84 = vmatpush2.msra.mxu0 0.0
    %85 = vmatprep.subr.mxu0 0.0
    %86 = vmatpush2.msra.mxu0 0.0
    %87 = vmatprep.subr.mxu0 0.0
    %88 = vmatpush2.msra.mxu0 0.0
    %89 = vmatprep.mubr.f32.mxu0 0.0
    %90 = vmatmul.mubr.f32.gmra.mxu0 %v23
    %v91 = vpop.f32.mrf.mxu0
    %v92 = vadd.f32 0.0, %v91
    %v93 = vpop.f32.mrf.mxu0
    %v94 = vadd.f32 0.0, %v93
    %95 = vdwg.mxu0
    %v96 = vld [vmem:[%s2] sm:$0xff]
    %v97 = vld [vmem:[%s2 + $0x8] sm:$0xff]
    %v98 = vld [vmem:[%s2 + $0x10] sm:$0xff]
    %v99 = vld [vmem:[%s2 + $0x18] sm:$0xff]
    %v100 = vld [vmem:[%s2 + $0x20] sm:$0xff]
    %v101 = vld [vmem:[%s2 + $0x28] sm:$0xff]
    %v102 = vld [vmem:[%s2 + $0x30] sm:$0xff]
    %v103 = vld [vmem:[%s2 + $0x38] sm:$0xff]
    %v104 = vld [vmem:[%s2 + $0x40] sm:$0xff]
    %v105 = vld [vmem:[%s2 + $0x48] sm:$0xff]
    %v106 = vld [vmem:[%s2 + $0x50] sm:$0xff]
    %v107 = vld [vmem:[%s2 + $0x58] sm:$0xff]
    %v108 = vld [vmem:[%s2 + $0x60] sm:$0xff]
    %v109 = vld [vmem:[%s2 + $0x68] sm:$0xff]
    %v110 = vld [vmem:[%s2 + $0x70] sm:$0xff]
    %v111 = vld [vmem:[%s2 + $0x78] sm:$0xff]
    %v112 = vld [vmem:[%s2 + $0x80] sm:$0xff]
    %v113 = vld [vmem:[%s2 + $0x88] sm:$0xff]
    %v114 = vld [vmem:[%s2 + $0x90] sm:$0xff]
    %v115 = vld [vmem:[%s2 + $0x98] sm:$0xff]
    %v116 = vld [vmem:[%s2 + $0xa0] sm:$0xff]
    %v117 = vld [vmem:[%s2 + $0xa8] sm:$0xff]
    %v118 = vld [vmem:[%s2 + $0xb0] sm:$0xff]
    %v119 = vld [vmem:[%s2 + $0xb8] sm:$0xff]
    %v120 = vld [vmem:[%s2 + $0xc0] sm:$0xff]
    %v121 = vld [vmem:[%s2 + $0xc8] sm:$0xff]
    %v122 = vld [vmem:[%s2 + $0xd0] sm:$0xff]
    %v123 = vld [vmem:[%s2 + $0xd8] sm:$0xff]
    %v124 = vld [vmem:[%s2 + $0xe0] sm:$0xff]
    %v125 = vld [vmem:[%s2 + $0xe8] sm:$0xff]
    %v126 = vld [vmem:[%s2 + $0xf0] sm:$0xff]
    %v127 = vld [vmem:[%s2 + $0xf8] sm:$0xff]
    %v128 = vld [vmem:[%s3] sm:$0x1]
    %v130 = vlaneseq
    %v131 = vshrl.u32 %v130, 7
    %v132 = vsub.s32 0, %v131
    %v133 = vrot.slane %v128, %v132
    %135 = vmatprep.subr.mxu0 0.0
    %136 = vmatpush1.msra.mxu0 %v111
    %137 = vmatprep.subr.mxu0 0.0
    %138 = vmatpush1.msra.mxu0 %v110
    %139 = vmatprep.subr.mxu0 0.0
    %140 = vmatpush1.msra.mxu0 %v109
    %141 = vmatprep.subr.mxu0 0.0
    %142 = vmatpush1.msra.mxu0 %v108
    %143 = vmatprep.subr.mxu0 0.0
    %144 = vmatpush1.msra.mxu0 %v107
    %145 = vmatprep.subr.mxu0 0.0
    %146 = vmatpush1.msra.mxu0 %v106
    %147 = vmatprep.subr.mxu0 0.0
    %148 = vmatpush1.msra.mxu0 %v105
    %149 = vmatprep.subr.mxu0 0.0
    %150 = vmatpush1.msra.mxu0 %v104
    %151 = vmatprep.subr.mxu0 0.0
    %152 = vmatpush1.msra.mxu0 %v103
    %153 = vmatprep.subr.mxu0 0.0
    %154 = vmatpush1.msra.mxu0 %v102
    %155 = vmatprep.subr.mxu0 0.0
    %156 = vmatpush1.msra.mxu0 %v101
    %157 = vmatprep.subr.mxu0 0.0
    %158 = vmatpush1.msra.mxu0 %v100
    %159 = vmatprep.subr.mxu0 0.0
    %160 = vmatpush1.msra.mxu0 %v99
    %161 = vmatprep.subr.mxu0 0.0
    %162 = vmatpush1.msra.mxu0 %v98
    %163 = vmatprep.subr.mxu0 0.0
    %164 = vmatpush1.msra.mxu0 %v97
    %165 = vmatprep.subr.mxu0 0.0
    %166 = vmatpush1.msra.mxu0 %v96
    %167 = vmatprep.subr.mxu0 0.0
    %168 = vmatpush2.msra.mxu0 %v127
    %169 = vmatprep.subr.mxu0 0.0
    %170 = vmatpush2.msra.mxu0 %v126
    %171 = vmatprep.subr.mxu0 0.0
    %172 = vmatpush2.msra.mxu0 %v125
    %173 = vmatprep.subr.mxu0 0.0
    %174 = vmatpush2.msra.mxu0 %v124
    %175 = vmatprep.subr.mxu0 0.0
    %176 = vmatpush2.msra.mxu0 %v123
    %177 = vmatprep.subr.mxu0 0.0
    %178 = vmatpush2.msra.mxu0 %v122
    %179 = vmatprep.subr.mxu0 0.0
    %180 = vmatpush2.msra.mxu0 %v121
    %181 = vmatprep.subr.mxu0 0.0
    %182 = vmatpush2.msra.mxu0 %v120
    %183 = vmatprep.subr.mxu0 0.0
    %184 = vmatpush2.msra.mxu0 %v119
    %185 = vmatprep.subr.mxu0 0.0
    %186 = vmatpush2.msra.mxu0 %v118
    %187 = vmatprep.subr.mxu0 0.0
    %188 = vmatpush2.msra.mxu0 %v117
    %189 = vmatprep.subr.mxu0 0.0
    %190 = vmatpush2.msra.mxu0 %v116
    %191 = vmatprep.subr.mxu0 0.0
    %192 = vmatpush2.msra.mxu0 %v115
    %193 = vmatprep.subr.mxu0 0.0
    %194 = vmatpush2.msra.mxu0 %v114
    %195 = vmatprep.subr.mxu0 0.0
    %196 = vmatpush2.msra.mxu0 %v113
    %197 = vmatprep.subr.mxu0 0.0
    %198 = vmatpush2.msra.mxu0 %v112
    %199 = vmatprep.mubr.f32.mxu0 %v94
    %200 = vmatmul.mubr.f32.gmra.mxu0 %v92
    %v201 = vpop.f32.mrf.mxu0
    %v202 = vadd.f32 %v133, %v201
    %v203 = vpop.f32.mrf.mxu0
    %204 = vdwg.mxu0
    %vm205 = vcmask 9216
    %206 = vst.msk [vmem:[#allocation2] sm:$0x3] %vm205, %v202
    // Predicated region
    $region18: #{unet_forward.27} parent=1 // pred_check
      _
    $region19: #{unet_forward.27} parent=1 // pred_check_branch
      %208 = sbr.rel (0) target = $region21
    $region20: #{unet_forward.27} parent=1 // pred_region
      %s210 = ssub.s32 32, 32
      %211 = vsyncadd [#allocation3], %s210
      %s213 = sshll.u32 [#allocation2], 4
      %s214 = int_to_ptr.vmem [resolvable:$true] %s213
      %216 = dma.vmem_to_hbm [thread:$0]  %s214, 32, %s4, [#allocation3]
    $region21: #{unet_forward.27} parent=1 // pred_fallthru
      _
    // Predicated region
    $region22: #{unet_forward.27} parent=1 // pred_check
      _
    $region23: #{unet_forward.27} parent=1 // pred_check_branch
      %218 = sbr.rel (0) target = $region25
    $region24: #{unet_forward.27} parent=1 // pred_region
      %219 = dma.done [#allocation3], 32
    $region25: #{unet_forward.27} parent=1 // pred_fallthru
      _
    %220 = vsyncpa [#allocation3], 1

// kernel: unet_forward.26
$region0: #{unet_forward.26}
  #allocation0 [shape = 'u32[]', space=smem, size = 0x4, offset = 0x4, fixed_abs, tag = 'smem constant byte address 0x4 - core index']
  #allocation1 [shape = 'u32[144,128]{1,0:T(1,128)}', space=vmem, size = 0x12000, scoped, tag = 'internal scratch']
  %s0 = inlined_call_operand.vmem [shape: bf16[8,2187], index: 0, kind: input, shape index: {}]
  %s1 = inlined_call_operand.vmem [shape: bf16[2187,256], index: 1, kind: input, shape index: {}]
  %s2 = inlined_call_operand.vmem [shape: f32[1,256], index: 2, kind: input, shape index: {}]
  %s3 = inlined_call_operand.vmem [shape: f32[8,256], index: 3, kind: output, shape index: {}]
  %s4 = sld [smem:[#allocation0]]
  $region22: #{unet_forward.26} parent=0
    _
  %s6 = ssub.s32 1, %s4
  %s7 = scalar_select 0, %s6, %s4
  // Predicated region
  $region2: #{unet_forward.26} parent=0 // pred_check
    _
  $region3: #{unet_forward.26} parent=0 // pred_check_branch
    %9 = sbr.rel (0) target = $region5
  $region4: #{unet_forward.26} parent=0 // pred_region
    _
  $region5: #{unet_forward.26} parent=0 // pred_fallthru
    _
  // Predicated region
  $region6: #{unet_forward.26} parent=0 // pred_check
    _
  $region7: #{unet_forward.26} parent=0 // pred_check_branch
    %11 = sbr.rel (0) target = $region9
  $region8: #{unet_forward.26} parent=0 // pred_region
    _
  $region9: #{unet_forward.26} parent=0 // pred_fallthru
    _
  // Predicated region
  $region10: #{unet_forward.26} parent=0 // pred_check
    _
  $region11: #{unet_forward.26} parent=0 // pred_check_branch
    %13 = sbr.rel (0) target = $region13
  $region12: #{unet_forward.26} parent=0 // pred_region
    _
  $region13: #{unet_forward.26} parent=0 // pred_fallthru
    _
  %v15 = vld [vmem:[%s0] sm:$0xff]
  %v16 = vld [vmem:[%s0 + $0x8] sm:$0xff]
  %v17 = vld [vmem:[%s0 + $0x10] sm:$0xff]
  %v18 = vld [vmem:[%s0 + $0x18] sm:$0xff]
  %v19 = vld [vmem:[%s0 + $0x20] sm:$0xff]
  %v20 = vld [vmem:[%s0 + $0x28] sm:$0xff]
  %v21 = vld [vmem:[%s0 + $0x30] sm:$0xff]
  %v22 = vld [vmem:[%s0 + $0x38] sm:$0xff]
  %v23 = vld [vmem:[%s0 + $0x40] sm:$0xff]
  %v24 = vld [vmem:[%s1] sm:$0xff]
  %v25 = vld [vmem:[%s1 + $0x8] sm:$0xff]
  %v26 = vld [vmem:[%s1 + $0x10] sm:$0xff]
  %v27 = vld [vmem:[%s1 + $0x18] sm:$0xff]
  %v28 = vld [vmem:[%s1 + $0x20] sm:$0xff]
  %v29 = vld [vmem:[%s1 + $0x28] sm:$0xff]
  %v30 = vld [vmem:[%s1 + $0x30] sm:$0xff]
  %v31 = vld [vmem:[%s1 + $0x38] sm:$0xff]
  %v32 = vld [vmem:[%s1 + $0x40] sm:$0xff]
  %v33 = vld [vmem:[%s1 + $0x48] sm:$0xff]
  %v34 = vld [vmem:[%s1 + $0x50] sm:$0xff]
  %v35 = vld [vmem:[%s1 + $0x58] sm:$0xff]
  %v36 = vld [vmem:[%s1 + $0x60] sm:$0xff]
  %v37 = vld [vmem:[%s1 + $0x68] sm:$0xff]
  %v38 = vld [vmem:[%s1 + $0x70] sm:$0xff]
  %v39 = vld [vmem:[%s1 + $0x78] sm:$0xff]
  %v40 = vld [vmem:[%s1 + $0x80] sm:$0xff]
  %v41 = vld [vmem:[%s1 + $0x88] sm:$0xff]
  %v42 = vld [vmem:[%s1 + $0x90] sm:$0xff]
  %v43 = vld [vmem:[%s1 + $0x98] sm:$0xff]
  %v44 = vld [vmem:[%s1 + $0xa0] sm:$0xff]
  %v45 = vld [vmem:[%s1 + $0xa8] sm:$0xff]
  %v46 = vld [vmem:[%s1 + $0xb0] sm:$0xff]
  %v47 = vld [vmem:[%s1 + $0xb8] sm:$0xff]
  %v48 = vld [vmem:[%s1 + $0xc0] sm:$0xff]
  %v49 = vld [vmem:[%s1 + $0xc8] sm:$0xff]
  %v50 = vld [vmem:[%s1 + $0xd0] sm:$0xff]
  %v51 = vld [vmem:[%s1 + $0xd8] sm:$0xff]
  %v52 = vld [vmem:[%s1 + $0xe0] sm:$0xff]
  %v53 = vld [vmem:[%s1 + $0xe8] sm:$0xff]
  %v54 = vld [vmem:[%s1 + $0xf0] sm:$0xff]
  %v55 = vld [vmem:[%s1 + $0xf8] sm:$0xff]
  %v56 = vld [vmem:[%s1 + $0x100] sm:$0xff]
  %v57 = vld [vmem:[%s1 + $0x108] sm:$0xff]
  %v58 = vld [vmem:[%s1 + $0x110] sm:$0xff]
  %v59 = vld [vmem:[%s1 + $0x118] sm:$0xff]
  %v60 = vld [vmem:[%s1 + $0x120] sm:$0xff]
  %v61 = vld [vmem:[%s1 + $0x128] sm:$0xff]
  %v62 = vld [vmem:[%s1 + $0x130] sm:$0xff]
  %v63 = vld [vmem:[%s1 + $0x138] sm:$0xff]
  %v64 = vld [vmem:[%s1 + $0x140] sm:$0xff]
  %v65 = vld [vmem:[%s1 + $0x148] sm:$0xff]
  %v66 = vld [vmem:[%s1 + $0x150] sm:$0xff]
  %v67 = vld [vmem:[%s1 + $0x158] sm:$0xff]
  %v68 = vld [vmem:[%s1 + $0x160] sm:$0xff]
  %v69 = vld [vmem:[%s1 + $0x168] sm:$0xff]
  %v70 = vld [vmem:[%s1 + $0x170] sm:$0xff]
  %v71 = vld [vmem:[%s1 + $0x178] sm:$0xff]
  %v72 = vld [vmem:[%s1 + $0x180] sm:$0xff]
  %v73 = vld [vmem:[%s1 + $0x188] sm:$0xff]
  %v74 = vld [vmem:[%s1 + $0x190] sm:$0xff]
  %v75 = vld [vmem:[%s1 + $0x198] sm:$0xff]
  %v76 = vld [vmem:[%s1 + $0x1a0] sm:$0xff]
  %v77 = vld [vmem:[%s1 + $0x1a8] sm:$0xff]
  %v78 = vld [vmem:[%s1 + $0x1b0] sm:$0xff]
  %v79 = vld [vmem:[%s1 + $0x1b8] sm:$0xff]
  %v80 = vld [vmem:[%s1 + $0x1c0] sm:$0xff]
  %v81 = vld [vmem:[%s1 + $0x1c8] sm:$0xff]
  %v82 = vld [vmem:[%s1 + $0x1d0] sm:$0xff]
  %v83 = vld [vmem:[%s1 + $0x1d8] sm:$0xff]
  %v84 = vld [vmem:[%s1 + $0x1e0] sm:$0xff]
  %v85 = vld [vmem:[%s1 + $0x1e8] sm:$0xff]
  %v86 = vld [vmem:[%s1 + $0x1f0] sm:$0xff]
  %v87 = vld [vmem:[%s1 + $0x1f8] sm:$0xff]
  %v88 = vld [vmem:[%s1 + $0x200] sm:$0xff]
  %v89 = vld [vmem:[%s1 + $0x208] sm:$0xff]
  %v90 = vld [vmem:[%s1 + $0x210] sm:$0xff]
  %v91 = vld [vmem:[%s1 + $0x218] sm:$0xff]
  %v92 = vld [vmem:[%s1 + $0x220] sm:$0xff]
  %v93 = vld [vmem:[%s1 + $0x228] sm:$0xff]
  %v94 = vld [vmem:[%s1 + $0x230] sm:$0xff]
  %v95 = vld [vmem:[%s1 + $0x238] sm:$0xff]
  %v96 = vld [vmem:[%s1 + $0x240] sm:$0xff]
  %v97 = vld [vmem:[%s1 + $0x248] sm:$0xff]
  %v98 = vld [vmem:[%s1 + $0x250] sm:$0xff]
  %v99 = vld [vmem:[%s1 + $0x258] sm:$0xff]
  %v100 = vld [vmem:[%s1 + $0x260] sm:$0xff]
  %v101 = vld [vmem:[%s1 + $0x268] sm:$0xff]
  %v102 = vld [vmem:[%s1 + $0x270] sm:$0xff]
  %v103 = vld [vmem:[%s1 + $0x278] sm:$0xff]
  %v104 = vld [vmem:[%s1 + $0x280] sm:$0xff]
  %v105 = vld [vmem:[%s1 + $0x288] sm:$0xff]
  %v106 = vld [vmem:[%s1 + $0x290] sm:$0xff]
  %v107 = vld [vmem:[%s1 + $0x298] sm:$0xff]
  %v108 = vld [vmem:[%s1 + $0x2a0] sm:$0xff]
  %v109 = vld [vmem:[%s1 + $0x2a8] sm:$0xff]
  %v110 = vld [vmem:[%s1 + $0x2b0] sm:$0xff]
  %v111 = vld [vmem:[%s1 + $0x2b8] sm:$0xff]
  %v112 = vld [vmem:[%s1 + $0x2c0] sm:$0xff]
  %v113 = vld [vmem:[%s1 + $0x2c8] sm:$0xff]
  %v114 = vld [vmem:[%s1 + $0x2d0] sm:$0xff]
  %v115 = vld [vmem:[%s1 + $0x2d8] sm:$0xff]
  %v116 = vld [vmem:[%s1 + $0x2e0] sm:$0xff]
  %v117 = vld [vmem:[%s1 + $0x2e8] sm:$0xff]
  %v118 = vld [vmem:[%s1 + $0x2f0] sm:$0xff]
  %v119 = vld [vmem:[%s1 + $0x2f8] sm:$0xff]
  %v120 = vld [vmem:[%s1 + $0x300] sm:$0xff]
  %v121 = vld [vmem:[%s1 + $0x308] sm:$0xff]
  %v122 = vld [vmem:[%s1 + $0x310] sm:$0xff]
  %v123 = vld [vmem:[%s1 + $0x318] sm:$0xff]
  %v124 = vld [vmem:[%s1 + $0x320] sm:$0xff]
  %v125 = vld [vmem:[%s1 + $0x328] sm:$0xff]
  %v126 = vld [vmem:[%s1 + $0x330] sm:$0xff]
  %v127 = vld [vmem:[%s1 + $0x338] sm:$0xff]
  %v128 = vld [vmem:[%s1 + $0x340] sm:$0xff]
  %v129 = vld [vmem:[%s1 + $0x348] sm:$0xff]
  %v130 = vld [vmem:[%s1 + $0x350] sm:$0xff]
  %v131 = vld [vmem:[%s1 + $0x358] sm:$0xff]
  %v132 = vld [vmem:[%s1 + $0x360] sm:$0xff]
  %v133 = vld [vmem:[%s1 + $0x368] sm:$0xff]
  %v134 = vld [vmem:[%s1 + $0x370] sm:$0xff]
  %v135 = vld [vmem:[%s1 + $0x378] sm:$0xff]
  %v136 = vld [vmem:[%s1 + $0x380] sm:$0xff]
  %v137 = vld [vmem:[%s1 + $0x388] sm:$0xff]
  %v138 = vld [vmem:[%s1 + $0x390] sm:$0xff]
  %v139 = vld [vmem:[%s1 + $0x398] sm:$0xff]
  %v140 = vld [vmem:[%s1 + $0x3a0] sm:$0xff]
  %v141 = vld [vmem:[%s1 + $0x3a8] sm:$0xff]
  %v142 = vld [vmem:[%s1 + $0x3b0] sm:$0xff]
  %v143 = vld [vmem:[%s1 + $0x3b8] sm:$0xff]
  %v144 = vld [vmem:[%s1 + $0x3c0] sm:$0xff]
  %v145 = vld [vmem:[%s1 + $0x3c8] sm:$0xff]
  %v146 = vld [vmem:[%s1 + $0x3d0] sm:$0xff]
  %v147 = vld [vmem:[%s1 + $0x3d8] sm:$0xff]
  %v148 = vld [vmem:[%s1 + $0x3e0] sm:$0xff]
  %v149 = vld [vmem:[%s1 + $0x3e8] sm:$0xff]
  %v150 = vld [vmem:[%s1 + $0x3f0] sm:$0xff]
  %v151 = vld [vmem:[%s1 + $0x3f8] sm:$0xff]
  %v152 = vld [vmem:[%s1 + $0x400] sm:$0xff]
  %v153 = vld [vmem:[%s1 + $0x408] sm:$0xff]
  %v154 = vld [vmem:[%s1 + $0x410] sm:$0xff]
  %v155 = vld [vmem:[%s1 + $0x418] sm:$0xff]
  %v156 = vld [vmem:[%s1 + $0x420] sm:$0xff]
  %v157 = vld [vmem:[%s1 + $0x428] sm:$0xff]
  %v158 = vld [vmem:[%s1 + $0x430] sm:$0xff]
  %v159 = vld [vmem:[%s1 + $0x438] sm:$0xff]
  %v160 = vld [vmem:[%s1 + $0x440] sm:$0xff]
  %v161 = vld [vmem:[%s1 + $0x448] sm:$0xff]
  %v162 = vld [vmem:[%s1 + $0x450] sm:$0xff]
  %v163 = vld [vmem:[%s1 + $0x458] sm:$0xff]
  %v164 = vld [vmem:[%s1 + $0x460] sm:$0xff]
  %v165 = vld [vmem:[%s1 + $0x468] sm:$0xff]
  %v166 = vld [vmem:[%s1 + $0x470] sm:$0xff]
  %v167 = vld [vmem:[%s1 + $0x478] sm:$0xff]
  %v168 = vld [vmem:[%s1 + $0x480] sm:$0xff]
  %v169 = vld [vmem:[%s1 + $0x488] sm:$0xff]
  %v170 = vld [vmem:[%s1 + $0x490] sm:$0xff]
  %v171 = vld [vmem:[%s1 + $0x498] sm:$0xff]
  %v172 = vld [vmem:[%s1 + $0x4a0] sm:$0xff]
  %v173 = vld [vmem:[%s1 + $0x4a8] sm:$0xff]
  %v174 = vld [vmem:[%s1 + $0x4b0] sm:$0xff]
  %v175 = vld [vmem:[%s1 + $0x4b8] sm:$0xff]
  %v176 = vld [vmem:[%s1 + $0x4c0] sm:$0xff]
  %v177 = vld [vmem:[%s1 + $0x4c8] sm:$0xff]
  %v178 = vld [vmem:[%s1 + $0x4d0] sm:$0xff]
  %v179 = vld [vmem:[%s1 + $0x4d8] sm:$0xff]
  %v180 = vld [vmem:[%s1 + $0x4e0] sm:$0xff]
  %v181 = vld [vmem:[%s1 + $0x4e8] sm:$0xff]
  %v182 = vld [vmem:[%s1 + $0x4f0] sm:$0xff]
  %v183 = vld [vmem:[%s1 + $0x4f8] sm:$0xff]
  %v184 = vld [vmem:[%s1 + $0x500] sm:$0xff]
  %v185 = vld [vmem:[%s1 + $0x508] sm:$0xff]
  %v186 = vld [vmem:[%s1 + $0x510] sm:$0xff]
  %v187 = vld [vmem:[%s1 + $0x518] sm:$0xff]
  %v188 = vld [vmem:[%s1 + $0x520] sm:$0xff]
  %v189 = vld [vmem:[%s1 + $0x528] sm:$0xff]
  %v190 = vld [vmem:[%s1 + $0x530] sm:$0xff]
  %v191 = vld [vmem:[%s1 + $0x538] sm:$0xff]
  %v192 = vld [vmem:[%s1 + $0x540] sm:$0xff]
  %v193 = vld [vmem:[%s1 + $0x548] sm:$0xff]
  %v194 = vld [vmem:[%s1 + $0x550] sm:$0xff]
  %v195 = vld [vmem:[%s1 + $0x558] sm:$0xff]
  %v196 = vld [vmem:[%s1 + $0x560] sm:$0xff]
  %v197 = vld [vmem:[%s1 + $0x568] sm:$0xff]
  %v198 = vld [vmem:[%s1 + $0x570] sm:$0xff]
  %v199 = vld [vmem:[%s1 + $0x578] sm:$0xff]
  %v200 = vld [vmem:[%s1 + $0x580] sm:$0xff]
  %v201 = vld [vmem:[%s1 + $0x588] sm:$0xff]
  %v202 = vld [vmem:[%s1 + $0x590] sm:$0xff]
  %v203 = vld [vmem:[%s1 + $0x598] sm:$0xff]
  %v204 = vld [vmem:[%s1 + $0x5a0] sm:$0xff]
  %v205 = vld [vmem:[%s1 + $0x5a8] sm:$0xff]
  %v206 = vld [vmem:[%s1 + $0x5b0] sm:$0xff]
  %v207 = vld [vmem:[%s1 + $0x5b8] sm:$0xff]
  %v208 = vld [vmem:[%s1 + $0x5c0] sm:$0xff]
  %v209 = vld [vmem:[%s1 + $0x5c8] sm:$0xff]
  %v210 = vld [vmem:[%s1 + $0x5d0] sm:$0xff]
  %v211 = vld [vmem:[%s1 + $0x5d8] sm:$0xff]
  %v212 = vld [vmem:[%s1 + $0x5e0] sm:$0xff]
  %v213 = vld [vmem:[%s1 + $0x5e8] sm:$0xff]
  %v214 = vld [vmem:[%s1 + $0x5f0] sm:$0xff]
  %v215 = vld [vmem:[%s1 + $0x5f8] sm:$0xff]
  %v216 = vld [vmem:[%s1 + $0x600] sm:$0xff]
  %v217 = vld [vmem:[%s1 + $0x608] sm:$0xff]
  %v218 = vld [vmem:[%s1 + $0x610] sm:$0xff]
  %v219 = vld [vmem:[%s1 + $0x618] sm:$0xff]
  %v220 = vld [vmem:[%s1 + $0x620] sm:$0xff]
  %v221 = vld [vmem:[%s1 + $0x628] sm:$0xff]
  %v222 = vld [vmem:[%s1 + $0x630] sm:$0xff]
  %v223 = vld [vmem:[%s1 + $0x638] sm:$0xff]
  %v224 = vld [vmem:[%s1 + $0x640] sm:$0xff]
  %v225 = vld [vmem:[%s1 + $0x648] sm:$0xff]
  %v226 = vld [vmem:[%s1 + $0x650] sm:$0xff]
  %v227 = vld [vmem:[%s1 + $0x658] sm:$0xff]
  %v228 = vld [vmem:[%s1 + $0x660] sm:$0xff]
  %v229 = vld [vmem:[%s1 + $0x668] sm:$0xff]
  %v230 = vld [vmem:[%s1 + $0x670] sm:$0xff]
  %v231 = vld [vmem:[%s1 + $0x678] sm:$0xff]
  %v232 = vld [vmem:[%s1 + $0x680] sm:$0xff]
  %v233 = vld [vmem:[%s1 + $0x688] sm:$0xff]
  %v234 = vld [vmem:[%s1 + $0x690] sm:$0xff]
  %v235 = vld [vmem:[%s1 + $0x698] sm:$0xff]
  %v236 = vld [vmem:[%s1 + $0x6a0] sm:$0xff]
  %v237 = vld [vmem:[%s1 + $0x6a8] sm:$0xff]
  %v238 = vld [vmem:[%s1 + $0x6b0] sm:$0xff]
  %v239 = vld [vmem:[%s1 + $0x6b8] sm:$0xff]
  %v240 = vld [vmem:[%s1 + $0x6c0] sm:$0xff]
  %v241 = vld [vmem:[%s1 + $0x6c8] sm:$0xff]
  %v242 = vld [vmem:[%s1 + $0x6d0] sm:$0xff]
  %v243 = vld [vmem:[%s1 + $0x6d8] sm:$0xff]
  %v244 = vld [vmem:[%s1 + $0x6e0] sm:$0xff]
  %v245 = vld [vmem:[%s1 + $0x6e8] sm:$0xff]
  %v246 = vld [vmem:[%s1 + $0x6f0] sm:$0xff]
  %v247 = vld [vmem:[%s1 + $0x6f8] sm:$0xff]
  %v248 = vld [vmem:[%s1 + $0x700] sm:$0xff]
  %v249 = vld [vmem:[%s1 + $0x708] sm:$0xff]
  %v250 = vld [vmem:[%s1 + $0x710] sm:$0xff]
  %v251 = vld [vmem:[%s1 + $0x718] sm:$0xff]
  %v252 = vld [vmem:[%s1 + $0x720] sm:$0xff]
  %v253 = vld [vmem:[%s1 + $0x728] sm:$0xff]
  %v254 = vld [vmem:[%s1 + $0x730] sm:$0xff]
  %v255 = vld [vmem:[%s1 + $0x738] sm:$0xff]
  %v256 = vld [vmem:[%s1 + $0x740] sm:$0xff]
  %v257 = vld [vmem:[%s1 + $0x748] sm:$0xff]
  %v258 = vld [vmem:[%s1 + $0x750] sm:$0xff]
  %v259 = vld [vmem:[%s1 + $0x758] sm:$0xff]
  %v260 = vld [vmem:[%s1 + $0x760] sm:$0xff]
  %v261 = vld [vmem:[%s1 + $0x768] sm:$0xff]
  %v262 = vld [vmem:[%s1 + $0x770] sm:$0xff]
  %v263 = vld [vmem:[%s1 + $0x778] sm:$0xff]
  %v264 = vld [vmem:[%s1 + $0x780] sm:$0xff]
  %v265 = vld [vmem:[%s1 + $0x788] sm:$0xff]
  %v266 = vld [vmem:[%s1 + $0x790] sm:$0xff]
  %v267 = vld [vmem:[%s1 + $0x798] sm:$0xff]
  %v268 = vld [vmem:[%s1 + $0x7a0] sm:$0xff]
  %v269 = vld [vmem:[%s1 + $0x7a8] sm:$0xff]
  %v270 = vld [vmem:[%s1 + $0x7b0] sm:$0xff]
  %v271 = vld [vmem:[%s1 + $0x7b8] sm:$0xff]
  %v272 = vld [vmem:[%s1 + $0x7c0] sm:$0xff]
  %v273 = vld [vmem:[%s1 + $0x7c8] sm:$0xff]
  %v274 = vld [vmem:[%s1 + $0x7d0] sm:$0xff]
  %v275 = vld [vmem:[%s1 + $0x7d8] sm:$0xff]
  %v276 = vld [vmem:[%s1 + $0x7e0] sm:$0xff]
  %v277 = vld [vmem:[%s1 + $0x7e8] sm:$0xff]
  %v278 = vld [vmem:[%s1 + $0x7f0] sm:$0xff]
  %v279 = vld [vmem:[%s1 + $0x7f8] sm:$0xff]
  %v280 = vld [vmem:[%s1 + $0x800] sm:$0xff]
  %v281 = vld [vmem:[%s1 + $0x808] sm:$0xff]
  %v282 = vld [vmem:[%s1 + $0x810] sm:$0xff]
  %v283 = vld [vmem:[%s1 + $0x818] sm:$0xff]
  %v284 = vld [vmem:[%s1 + $0x820] sm:$0xff]
  %v285 = vld [vmem:[%s1 + $0x828] sm:$0xff]
  %v286 = vld [vmem:[%s1 + $0x830] sm:$0xff]
  %v287 = vld [vmem:[%s1 + $0x838] sm:$0xff]
  %v288 = vld [vmem:[%s1 + $0x840] sm:$0xff]
  %v289 = vld [vmem:[%s1 + $0x848] sm:$0xff]
  %v290 = vld [vmem:[%s1 + $0x850] sm:$0xff]
  %v291 = vld [vmem:[%s1 + $0x858] sm:$0xff]
  %v292 = vld [vmem:[%s1 + $0x860] sm:$0xff]
  %v293 = vld [vmem:[%s1 + $0x868] sm:$0xff]
  %v294 = vld [vmem:[%s1 + $0x870] sm:$0xff]
  %v295 = vld [vmem:[%s1 + $0x878] sm:$0xff]
  %v296 = vld [vmem:[%s1 + $0x880] sm:$0xff]
  %v297 = vld [vmem:[%s1 + $0x888] sm:$0x33]
  %v298 = vld [vmem:[%s2] sm:$0x3]
  %v300 = vlaneseq
  %v301 = vshrl.u32 %v300, 7
  %v302 = vsub.s32 0, %v301
  %v303 = vrot.slane %v298, %v302
  %v304 = vlaneseq
  %v305 = vshrl.u32 %v304, 7
  %v306 = vsub.s32 1, %v305
  %v307 = vrot.slane %v298, %v306
  %v319 = vunpack.c.l.b16 %v15
  %v320 = vunpack.c.h.b16 %v15
  %v321 = vunpack.c.l.b16 %v16
  %v322 = vunpack.c.h.b16 %v16
  %v323 = vunpack.c.l.b16 %v17
  %v324 = vunpack.c.h.b16 %v17
  %v325 = vunpack.c.l.b16 %v18
  %v326 = vunpack.c.h.b16 %v18
  %v327 = vunpack.c.l.b16 %v19
  %v328 = vunpack.c.h.b16 %v19
  %v329 = vunpack.c.l.b16 %v20
  %v330 = vunpack.c.h.b16 %v20
  %v331 = vunpack.c.l.b16 %v21
  %v332 = vunpack.c.h.b16 %v21
  %v333 = vunpack.c.l.b16 %v22
  %v334 = vunpack.c.h.b16 %v22
  %v335 = vunpack.c.l.b16 %v23
  %v336 = vunpack.c.h.b16 %v23
  %v337 = vpack.c.b16 %v319, %v319
  %v338 = vpack.c.b16 %v320, %v320
  %v339 = vpack.c.b16 %v321, %v321
  %v340 = vpack.c.b16 %v322, %v322
  %v341 = vpack.c.b16 %v323, %v323
  %v342 = vpack.c.b16 %v324, %v324
  %v343 = vpack.c.b16 %v325, %v325
  %v344 = vpack.c.b16 %v326, %v326
  %v345 = vpack.c.b16 %v327, %v327
  %v346 = vpack.c.b16 %v328, %v328
  %v347 = vpack.c.b16 %v329, %v329
  %v348 = vpack.c.b16 %v330, %v330
  %v349 = vpack.c.b16 %v331, %v331
  %v350 = vpack.c.b16 %v332, %v332
  %v351 = vpack.c.b16 %v333, %v333
  %v352 = vpack.c.b16 %v334, %v334
  %v353 = vpack.c.b16 %v335, %v335
  %v354 = vpack.c.b16 %v336, %v336
  %v646 = vunpack.c.l.b16 %v24
  %v647 = vunpack.c.h.b16 %v24
  %v648 = vunpack.c.l.b16 %v25
  %v649 = vunpack.c.h.b16 %v25
  %v650 = vunpack.c.l.b16 %v26
  %v651 = vunpack.c.h.b16 %v26
  %v652 = vunpack.c.l.b16 %v27
  %v653 = vunpack.c.h.b16 %v27
  %v654 = vunpack.c.l.b16 %v28
  %v655 = vunpack.c.h.b16 %v28
  %v656 = vunpack.c.l.b16 %v29
  %v657 = vunpack.c.h.b16 %v29
  %v658 = vunpack.c.l.b16 %v30
  %v659 = vunpack.c.h.b16 %v30
  %v660 = vunpack.c.l.b16 %v31
  %v661 = vunpack.c.h.b16 %v31
  %v662 = vunpack.c.l.b16 %v32
  %v663 = vunpack.c.h.b16 %v32
  %v664 = vunpack.c.l.b16 %v33
  %v665 = vunpack.c.h.b16 %v33
  %v666 = vunpack.c.l.b16 %v34
  %v667 = vunpack.c.h.b16 %v34
  %v668 = vunpack.c.l.b16 %v35
  %v669 = vunpack.c.h.b16 %v35
  %v670 = vunpack.c.l.b16 %v36
  %v671 = vunpack.c.h.b16 %v36
  %v672 = vunpack.c.l.b16 %v37
  %v673 = vunpack.c.h.b16 %v37
  %v674 = vunpack.c.l.b16 %v38
  %v675 = vunpack.c.h.b16 %v38
  %v676 = vunpack.c.l.b16 %v39
  %v677 = vunpack.c.h.b16 %v39
  %v678 = vunpack.c.l.b16 %v40
  %v679 = vunpack.c.h.b16 %v40
  %v680 = vunpack.c.l.b16 %v41
  %v681 = vunpack.c.h.b16 %v41
  %v682 = vunpack.c.l.b16 %v42
  %v683 = vunpack.c.h.b16 %v42
  %v684 = vunpack.c.l.b16 %v43
  %v685 = vunpack.c.h.b16 %v43
  %v686 = vunpack.c.l.b16 %v44
  %v687 = vunpack.c.h.b16 %v44
  %v688 = vunpack.c.l.b16 %v45
  %v689 = vunpack.c.h.b16 %v45
  %v690 = vunpack.c.l.b16 %v46
  %v691 = vunpack.c.h.b16 %v46
  %v692 = vunpack.c.l.b16 %v47
  %v693 = vunpack.c.h.b16 %v47
  %v694 = vunpack.c.l.b16 %v48
  %v695 = vunpack.c.h.b16 %v48
  %v696 = vunpack.c.l.b16 %v49
  %v697 = vunpack.c.h.b16 %v49
  %v698 = vunpack.c.l.b16 %v50
  %v699 = vunpack.c.h.b16 %v50
  %v700 = vunpack.c.l.b16 %v51
  %v701 = vunpack.c.h.b16 %v51
  %v702 = vunpack.c.l.b16 %v52
  %v703 = vunpack.c.h.b16 %v52
  %v704 = vunpack.c.l.b16 %v53
  %v705 = vunpack.c.h.b16 %v53
  %v706 = vunpack.c.l.b16 %v54
  %v707 = vunpack.c.h.b16 %v54
  %v708 = vunpack.c.l.b16 %v55
  %v709 = vunpack.c.h.b16 %v55
  %v710 = vunpack.c.l.b16 %v56
  %v711 = vunpack.c.h.b16 %v56
  %v712 = vunpack.c.l.b16 %v57
  %v713 = vunpack.c.h.b16 %v57
  %v714 = vunpack.c.l.b16 %v58
  %v715 = vunpack.c.h.b16 %v58
  %v716 = vunpack.c.l.b16 %v59
  %v717 = vunpack.c.h.b16 %v59
  %v718 = vunpack.c.l.b16 %v60
  %v719 = vunpack.c.h.b16 %v60
  %v720 = vunpack.c.l.b16 %v61
  %v721 = vunpack.c.h.b16 %v61
  %v722 = vunpack.c.l.b16 %v62
  %v723 = vunpack.c.h.b16 %v62
  %v724 = vunpack.c.l.b16 %v63
  %v725 = vunpack.c.h.b16 %v63
  %v726 = vunpack.c.l.b16 %v64
  %v727 = vunpack.c.h.b16 %v64
  %v728 = vunpack.c.l.b16 %v65
  %v729 = vunpack.c.h.b16 %v65
  %v730 = vunpack.c.l.b16 %v66
  %v731 = vunpack.c.h.b16 %v66
  %v732 = vunpack.c.l.b16 %v67
  %v733 = vunpack.c.h.b16 %v67
  %v734 = vunpack.c.l.b16 %v68
  %v735 = vunpack.c.h.b16 %v68
  %v736 = vunpack.c.l.b16 %v69
  %v737 = vunpack.c.h.b16 %v69
  %v738 = vunpack.c.l.b16 %v70
  %v739 = vunpack.c.h.b16 %v70
  %v740 = vunpack.c.l.b16 %v71
  %v741 = vunpack.c.h.b16 %v71
  %v742 = vunpack.c.l.b16 %v72
  %v743 = vunpack.c.h.b16 %v72
  %v744 = vunpack.c.l.b16 %v73
  %v745 = vunpack.c.h.b16 %v73
  %v746 = vunpack.c.l.b16 %v74
  %v747 = vunpack.c.h.b16 %v74
  %v748 = vunpack.c.l.b16 %v75
  %v749 = vunpack.c.h.b16 %v75
  %v750 = vunpack.c.l.b16 %v76
  %v751 = vunpack.c.h.b16 %v76
  %v752 = vunpack.c.l.b16 %v77
  %v753 = vunpack.c.h.b16 %v77
  %v754 = vunpack.c.l.b16 %v78
  %v755 = vunpack.c.h.b16 %v78
  %v756 = vunpack.c.l.b16 %v79
  %v757 = vunpack.c.h.b16 %v79
  %v758 = vunpack.c.l.b16 %v80
  %v759 = vunpack.c.h.b16 %v80
  %v760 = vunpack.c.l.b16 %v81
  %v761 = vunpack.c.h.b16 %v81
  %v762 = vunpack.c.l.b16 %v82
  %v763 = vunpack.c.h.b16 %v82
  %v764 = vunpack.c.l.b16 %v83
  %v765 = vunpack.c.h.b16 %v83
  %v766 = vunpack.c.l.b16 %v84
  %v767 = vunpack.c.h.b16 %v84
  %v768 = vunpack.c.l.b16 %v85
  %v769 = vunpack.c.h.b16 %v85
  %v770 = vunpack.c.l.b16 %v86
  %v771 = vunpack.c.h.b16 %v86
  %v772 = vunpack.c.l.b16 %v87
  %v773 = vunpack.c.h.b16 %v87
  %v774 = vunpack.c.l.b16 %v88
  %v775 = vunpack.c.h.b16 %v88
  %v776 = vunpack.c.l.b16 %v89
  %v777 = vunpack.c.h.b16 %v89
  %v778 = vunpack.c.l.b16 %v90
  %v779 = vunpack.c.h.b16 %v90
  %v780 = vunpack.c.l.b16 %v91
  %v781 = vunpack.c.h.b16 %v91
  %v782 = vunpack.c.l.b16 %v92
  %v783 = vunpack.c.h.b16 %v92
  %v784 = vunpack.c.l.b16 %v93
  %v785 = vunpack.c.h.b16 %v93
  %v786 = vunpack.c.l.b16 %v94
  %v787 = vunpack.c.h.b16 %v94
  %v788 = vunpack.c.l.b16 %v95
  %v789 = vunpack.c.h.b16 %v95
  %v790 = vunpack.c.l.b16 %v96
  %v791 = vunpack.c.h.b16 %v96
  %v792 = vunpack.c.l.b16 %v97
  %v793 = vunpack.c.h.b16 %v97
  %v794 = vunpack.c.l.b16 %v98
  %v795 = vunpack.c.h.b16 %v98
  %v796 = vunpack.c.l.b16 %v99
  %v797 = vunpack.c.h.b16 %v99
  %v798 = vunpack.c.l.b16 %v100
  %v799 = vunpack.c.h.b16 %v100
  %v800 = vunpack.c.l.b16 %v101
  %v801 = vunpack.c.h.b16 %v101
  %v802 = vunpack.c.l.b16 %v102
  %v803 = vunpack.c.h.b16 %v102
  %v804 = vunpack.c.l.b16 %v103
  %v805 = vunpack.c.h.b16 %v103
  %v806 = vunpack.c.l.b16 %v104
  %v807 = vunpack.c.h.b16 %v104
  %v808 = vunpack.c.l.b16 %v105
  %v809 = vunpack.c.h.b16 %v105
  %v810 = vunpack.c.l.b16 %v106
  %v811 = vunpack.c.h.b16 %v106
  %v812 = vunpack.c.l.b16 %v107
  %v813 = vunpack.c.h.b16 %v107
  %v814 = vunpack.c.l.b16 %v108
  %v815 = vunpack.c.h.b16 %v108
  %v816 = vunpack.c.l.b16 %v109
  %v817 = vunpack.c.h.b16 %v109
  %v818 = vunpack.c.l.b16 %v110
  %v819 = vunpack.c.h.b16 %v110
  %v820 = vunpack.c.l.b16 %v111
  %v821 = vunpack.c.h.b16 %v111
  %v822 = vunpack.c.l.b16 %v112
  %v823 = vunpack.c.h.b16 %v112
  %v824 = vunpack.c.l.b16 %v113
  %v825 = vunpack.c.h.b16 %v113
  %v826 = vunpack.c.l.b16 %v114
  %v827 = vunpack.c.h.b16 %v114
  %v828 = vunpack.c.l.b16 %v115
  %v829 = vunpack.c.h.b16 %v115
  %v830 = vunpack.c.l.b16 %v116
  %v831 = vunpack.c.h.b16 %v116
  %v832 = vunpack.c.l.b16 %v117
  %v833 = vunpack.c.h.b16 %v117
  %v834 = vunpack.c.l.b16 %v118
  %v835 = vunpack.c.h.b16 %v118
  %v836 = vunpack.c.l.b16 %v119
  %v837 = vunpack.c.h.b16 %v119
  %v838 = vunpack.c.l.b16 %v120
  %v839 = vunpack.c.h.b16 %v120
  %v840 = vunpack.c.l.b16 %v121
  %v841 = vunpack.c.h.b16 %v121
  %v842 = vunpack.c.l.b16 %v122
  %v843 = vunpack.c.h.b16 %v122
  %v844 = vunpack.c.l.b16 %v123
  %v845 = vunpack.c.h.b16 %v123
  %v846 = vunpack.c.l.b16 %v124
  %v847 = vunpack.c.h.b16 %v124
  %v848 = vunpack.c.l.b16 %v125
  %v849 = vunpack.c.h.b16 %v125
  %v850 = vunpack.c.l.b16 %v126
  %v851 = vunpack.c.h.b16 %v126
  %v852 = vunpack.c.l.b16 %v127
  %v853 = vunpack.c.h.b16 %v127
  %v854 = vunpack.c.l.b16 %v128
  %v855 = vunpack.c.h.b16 %v128
  %v856 = vunpack.c.l.b16 %v129
  %v857 = vunpack.c.h.b16 %v129
  %v858 = vunpack.c.l.b16 %v130
  %v859 = vunpack.c.h.b16 %v130
  %v860 = vunpack.c.l.b16 %v131
  %v861 = vunpack.c.h.b16 %v131
  %v862 = vunpack.c.l.b16 %v132
  %v863 = vunpack.c.h.b16 %v132
  %v864 = vunpack.c.l.b16 %v133
  %v865 = vunpack.c.h.b16 %v133
  %v866 = vunpack.c.l.b16 %v134
  %v867 = vunpack.c.h.b16 %v134
  %v868 = vunpack.c.l.b16 %v135
  %v869 = vunpack.c.h.b16 %v135
  %v870 = vunpack.c.l.b16 %v136
  %v871 = vunpack.c.h.b16 %v136
  %v872 = vunpack.c.l.b16 %v137
  %v873 = vunpack.c.h.b16 %v137
  %v874 = vunpack.c.l.b16 %v138
  %v875 = vunpack.c.h.b16 %v138
  %v876 = vunpack.c.l.b16 %v139
  %v877 = vunpack.c.h.b16 %v139
  %v878 = vunpack.c.l.b16 %v140
  %v879 = vunpack.c.h.b16 %v140
  %v880 = vunpack.c.l.b16 %v141
  %v881 = vunpack.c.h.b16 %v141
  %v882 = vunpack.c.l.b16 %v142
  %v883 = vunpack.c.h.b16 %v142
  %v884 = vunpack.c.l.b16 %v143
  %v885 = vunpack.c.h.b16 %v143
  %v886 = vunpack.c.l.b16 %v144
  %v887 = vunpack.c.h.b16 %v144
  %v888 = vunpack.c.l.b16 %v145
  %v889 = vunpack.c.h.b16 %v145
  %v890 = vunpack.c.l.b16 %v146
  %v891 = vunpack.c.h.b16 %v146
  %v892 = vunpack.c.l.b16 %v147
  %v893 = vunpack.c.h.b16 %v147
  %v894 = vunpack.c.l.b16 %v148
  %v895 = vunpack.c.h.b16 %v148
  %v896 = vunpack.c.l.b16 %v149
  %v897 = vunpack.c.h.b16 %v149
  %v898 = vunpack.c.l.b16 %v150
  %v899 = vunpack.c.h.b16 %v150
  %v900 = vunpack.c.l.b16 %v151
  %v901 = vunpack.c.h.b16 %v151
  %v902 = vunpack.c.l.b16 %v152
  %v903 = vunpack.c.h.b16 %v152
  %v904 = vunpack.c.l.b16 %v153
  %v905 = vunpack.c.h.b16 %v153
  %v906 = vunpack.c.l.b16 %v154
  %v907 = vunpack.c.h.b16 %v154
  %v908 = vunpack.c.l.b16 %v155
  %v909 = vunpack.c.h.b16 %v155
  %v910 = vunpack.c.l.b16 %v156
  %v911 = vunpack.c.h.b16 %v156
  %v912 = vunpack.c.l.b16 %v157
  %v913 = vunpack.c.h.b16 %v157
  %v914 = vunpack.c.l.b16 %v158
  %v915 = vunpack.c.h.b16 %v158
  %v916 = vunpack.c.l.b16 %v159
  %v917 = vunpack.c.h.b16 %v159
  %v918 = vunpack.c.l.b16 %v160
  %v919 = vunpack.c.h.b16 %v160
  %v920 = vunpack.c.l.b16 %v161
  %v921 = vunpack.c.h.b16 %v161
  %v922 = vunpack.c.l.b16 %v162
  %v923 = vunpack.c.h.b16 %v162
  %v924 = vunpack.c.l.b16 %v163
  %v925 = vunpack.c.h.b16 %v163
  %v926 = vunpack.c.l.b16 %v164
  %v927 = vunpack.c.h.b16 %v164
  %v928 = vunpack.c.l.b16 %v165
  %v929 = vunpack.c.h.b16 %v165
  %v930 = vunpack.c.l.b16 %v166
  %v931 = vunpack.c.h.b16 %v166
  %v932 = vunpack.c.l.b16 %v167
  %v933 = vunpack.c.h.b16 %v167
  %v934 = vunpack.c.l.b16 %v168
  %v935 = vunpack.c.h.b16 %v168
  %v936 = vunpack.c.l.b16 %v169
  %v937 = vunpack.c.h.b16 %v169
  %v938 = vunpack.c.l.b16 %v170
  %v939 = vunpack.c.h.b16 %v170
  %v940 = vunpack.c.l.b16 %v171
  %v941 = vunpack.c.h.b16 %v171
  %v942 = vunpack.c.l.b16 %v172
  %v943 = vunpack.c.h.b16 %v172
  %v944 = vunpack.c.l.b16 %v173
  %v945 = vunpack.c.h.b16 %v173
  %v946 = vunpack.c.l.b16 %v174
  %v947 = vunpack.c.h.b16 %v174
  %v948 = vunpack.c.l.b16 %v175
  %v949 = vunpack.c.h.b16 %v175
  %v950 = vunpack.c.l.b16 %v176
  %v951 = vunpack.c.h.b16 %v176
  %v952 = vunpack.c.l.b16 %v177
  %v953 = vunpack.c.h.b16 %v177
  %v954 = vunpack.c.l.b16 %v178
  %v955 = vunpack.c.h.b16 %v178
  %v956 = vunpack.c.l.b16 %v179
  %v957 = vunpack.c.h.b16 %v179
  %v958 = vunpack.c.l.b16 %v180
  %v959 = vunpack.c.h.b16 %v180
  %v960 = vunpack.c.l.b16 %v181
  %v961 = vunpack.c.h.b16 %v181
  %v962 = vunpack.c.l.b16 %v182
  %v963 = vunpack.c.h.b16 %v182
  %v964 = vunpack.c.l.b16 %v183
  %v965 = vunpack.c.h.b16 %v183
  %v966 = vunpack.c.l.b16 %v184
  %v967 = vunpack.c.h.b16 %v184
  %v968 = vunpack.c.l.b16 %v185
  %v969 = vunpack.c.h.b16 %v185
  %v970 = vunpack.c.l.b16 %v186
  %v971 = vunpack.c.h.b16 %v186
  %v972 = vunpack.c.l.b16 %v187
  %v973 = vunpack.c.h.b16 %v187
  %v974 = vunpack.c.l.b16 %v188
  %v975 = vunpack.c.h.b16 %v188
  %v976 = vunpack.c.l.b16 %v189
  %v977 = vunpack.c.h.b16 %v189
  %v978 = vunpack.c.l.b16 %v190
  %v979 = vunpack.c.h.b16 %v190
  %v980 = vunpack.c.l.b16 %v191
  %v981 = vunpack.c.h.b16 %v191
  %v982 = vunpack.c.l.b16 %v192
  %v983 = vunpack.c.h.b16 %v192
  %v984 = vunpack.c.l.b16 %v193
  %v985 = vunpack.c.h.b16 %v193
  %v986 = vunpack.c.l.b16 %v194
  %v987 = vunpack.c.h.b16 %v194
  %v988 = vunpack.c.l.b16 %v195
  %v989 = vunpack.c.h.b16 %v195
  %v990 = vunpack.c.l.b16 %v196
  %v991 = vunpack.c.h.b16 %v196
  %v992 = vunpack.c.l.b16 %v197
  %v993 = vunpack.c.h.b16 %v197
  %v994 = vunpack.c.l.b16 %v198
  %v995 = vunpack.c.h.b16 %v198
  %v996 = vunpack.c.l.b16 %v199
  %v997 = vunpack.c.h.b16 %v199
  %v998 = vunpack.c.l.b16 %v200
  %v999 = vunpack.c.h.b16 %v200
  %v1000 = vunpack.c.l.b16 %v201
  %v1001 = vunpack.c.h.b16 %v201
  %v1002 = vunpack.c.l.b16 %v202
  %v1003 = vunpack.c.h.b16 %v202
  %v1004 = vunpack.c.l.b16 %v203
  %v1005 = vunpack.c.h.b16 %v203
  %v1006 = vunpack.c.l.b16 %v204
  %v1007 = vunpack.c.h.b16 %v204
  %v1008 = vunpack.c.l.b16 %v205
  %v1009 = vunpack.c.h.b16 %v205
  %v1010 = vunpack.c.l.b16 %v206
  %v1011 = vunpack.c.h.b16 %v206
  %v1012 = vunpack.c.l.b16 %v207
  %v1013 = vunpack.c.h.b16 %v207
  %v1014 = vunpack.c.l.b16 %v208
  %v1015 = vunpack.c.h.b16 %v208
  %v1016 = vunpack.c.l.b16 %v209
  %v1017 = vunpack.c.h.b16 %v209
  %v1018 = vunpack.c.l.b16 %v210
  %v1019 = vunpack.c.h.b16 %v210
  %v1020 = vunpack.c.l.b16 %v211
  %v1021 = vunpack.c.h.b16 %v211
  %v1022 = vunpack.c.l.b16 %v212
  %v1023 = vunpack.c.h.b16 %v212
  %v1024 = vunpack.c.l.b16 %v213
  %v1025 = vunpack.c.h.b16 %v213
  %v1026 = vunpack.c.l.b16 %v214
  %v1027 = vunpack.c.h.b16 %v214
  %v1028 = vunpack.c.l.b16 %v215
  %v1029 = vunpack.c.h.b16 %v215
  %v1030 = vunpack.c.l.b16 %v216
  %v1031 = vunpack.c.h.b16 %v216
  %v1032 = vunpack.c.l.b16 %v217
  %v1033 = vunpack.c.h.b16 %v217
  %v1034 = vunpack.c.l.b16 %v218
  %v1035 = vunpack.c.h.b16 %v218
  %v1036 = vunpack.c.l.b16 %v219
  %v1037 = vunpack.c.h.b16 %v219
  %v1038 = vunpack.c.l.b16 %v220
  %v1039 = vunpack.c.h.b16 %v220
  %v1040 = vunpack.c.l.b16 %v221
  %v1041 = vunpack.c.h.b16 %v221
  %v1042 = vunpack.c.l.b16 %v222
  %v1043 = vunpack.c.h.b16 %v222
  %v1044 = vunpack.c.l.b16 %v223
  %v1045 = vunpack.c.h.b16 %v223
  %v1046 = vunpack.c.l.b16 %v224
  %v1047 = vunpack.c.h.b16 %v224
  %v1048 = vunpack.c.l.b16 %v225
  %v1049 = vunpack.c.h.b16 %v225
  %v1050 = vunpack.c.l.b16 %v226
  %v1051 = vunpack.c.h.b16 %v226
  %v1052 = vunpack.c.l.b16 %v227
  %v1053 = vunpack.c.h.b16 %v227
  %v1054 = vunpack.c.l.b16 %v228
  %v1055 = vunpack.c.h.b16 %v228
  %v1056 = vunpack.c.l.b16 %v229
  %v1057 = vunpack.c.h.b16 %v229
  %v1058 = vunpack.c.l.b16 %v230
  %v1059 = vunpack.c.h.b16 %v230
  %v1060 = vunpack.c.l.b16 %v231
  %v1061 = vunpack.c.h.b16 %v231
  %v1062 = vunpack.c.l.b16 %v232
  %v1063 = vunpack.c.h.b16 %v232
  %v1064 = vunpack.c.l.b16 %v233
  %v1065 = vunpack.c.h.b16 %v233
  %v1066 = vunpack.c.l.b16 %v234
  %v1067 = vunpack.c.h.b16 %v234
  %v1068 = vunpack.c.l.b16 %v235
  %v1069 = vunpack.c.h.b16 %v235
  %v1070 = vunpack.c.l.b16 %v236
  %v1071 = vunpack.c.h.b16 %v236
  %v1072 = vunpack.c.l.b16 %v237
  %v1073 = vunpack.c.h.b16 %v237
  %v1074 = vunpack.c.l.b16 %v238
  %v1075 = vunpack.c.h.b16 %v238
  %v1076 = vunpack.c.l.b16 %v239
  %v1077 = vunpack.c.h.b16 %v239
  %v1078 = vunpack.c.l.b16 %v240
  %v1079 = vunpack.c.h.b16 %v240
  %v1080 = vunpack.c.l.b16 %v241
  %v1081 = vunpack.c.h.b16 %v241
  %v1082 = vunpack.c.l.b16 %v242
  %v1083 = vunpack.c.h.b16 %v242
  %v1084 = vunpack.c.l.b16 %v243
  %v1085 = vunpack.c.h.b16 %v243
  %v1086 = vunpack.c.l.b16 %v244
  %v1087 = vunpack.c.h.b16 %v244
  %v1088 = vunpack.c.l.b16 %v245
  %v1089 = vunpack.c.h.b16 %v245
  %v1090 = vunpack.c.l.b16 %v246
  %v1091 = vunpack.c.h.b16 %v246
  %v1092 = vunpack.c.l.b16 %v247
  %v1093 = vunpack.c.h.b16 %v247
  %v1094 = vunpack.c.l.b16 %v248
  %v1095 = vunpack.c.h.b16 %v248
  %v1096 = vunpack.c.l.b16 %v249
  %v1097 = vunpack.c.h.b16 %v249
  %v1098 = vunpack.c.l.b16 %v250
  %v1099 = vunpack.c.h.b16 %v250
  %v1100 = vunpack.c.l.b16 %v251
  %v1101 = vunpack.c.h.b16 %v251
  %v1102 = vunpack.c.l.b16 %v252
  %v1103 = vunpack.c.h.b16 %v252
  %v1104 = vunpack.c.l.b16 %v253
  %v1105 = vunpack.c.h.b16 %v253
  %v1106 = vunpack.c.l.b16 %v254
  %v1107 = vunpack.c.h.b16 %v254
  %v1108 = vunpack.c.l.b16 %v255
  %v1109 = vunpack.c.h.b16 %v255
  %v1110 = vunpack.c.l.b16 %v256
  %v1111 = vunpack.c.h.b16 %v256
  %v1112 = vunpack.c.l.b16 %v257
  %v1113 = vunpack.c.h.b16 %v257
  %v1114 = vunpack.c.l.b16 %v258
  %v1115 = vunpack.c.h.b16 %v258
  %v1116 = vunpack.c.l.b16 %v259
  %v1117 = vunpack.c.h.b16 %v259
  %v1118 = vunpack.c.l.b16 %v260
  %v1119 = vunpack.c.h.b16 %v260
  %v1120 = vunpack.c.l.b16 %v261
  %v1121 = vunpack.c.h.b16 %v261
  %v1122 = vunpack.c.l.b16 %v262
  %v1123 = vunpack.c.h.b16 %v262
  %v1124 = vunpack.c.l.b16 %v263
  %v1125 = vunpack.c.h.b16 %v263
  %v1126 = vunpack.c.l.b16 %v264
  %v1127 = vunpack.c.h.b16 %v264
  %v1128 = vunpack.c.l.b16 %v265
  %v1129 = vunpack.c.h.b16 %v265
  %v1130 = vunpack.c.l.b16 %v266
  %v1131 = vunpack.c.h.b16 %v266
  %v1132 = vunpack.c.l.b16 %v267
  %v1133 = vunpack.c.h.b16 %v267
  %v1134 = vunpack.c.l.b16 %v268
  %v1135 = vunpack.c.h.b16 %v268
  %v1136 = vunpack.c.l.b16 %v269
  %v1137 = vunpack.c.h.b16 %v269
  %v1138 = vunpack.c.l.b16 %v270
  %v1139 = vunpack.c.h.b16 %v270
  %v1140 = vunpack.c.l.b16 %v271
  %v1141 = vunpack.c.h.b16 %v271
  %v1142 = vunpack.c.l.b16 %v272
  %v1143 = vunpack.c.h.b16 %v272
  %v1144 = vunpack.c.l.b16 %v273
  %v1145 = vunpack.c.h.b16 %v273
  %v1146 = vunpack.c.l.b16 %v274
  %v1147 = vunpack.c.h.b16 %v274
  %v1148 = vunpack.c.l.b16 %v275
  %v1149 = vunpack.c.h.b16 %v275
  %v1150 = vunpack.c.l.b16 %v276
  %v1151 = vunpack.c.h.b16 %v276
  %v1152 = vunpack.c.l.b16 %v277
  %v1153 = vunpack.c.h.b16 %v277
  %v1154 = vunpack.c.l.b16 %v278
  %v1155 = vunpack.c.h.b16 %v278
  %v1156 = vunpack.c.l.b16 %v279
  %v1157 = vunpack.c.h.b16 %v279
  %v1158 = vunpack.c.l.b16 %v280
  %v1159 = vunpack.c.h.b16 %v280
  %v1160 = vunpack.c.l.b16 %v281
  %v1161 = vunpack.c.h.b16 %v281
  %v1162 = vunpack.c.l.b16 %v282
  %v1163 = vunpack.c.h.b16 %v282
  %v1164 = vunpack.c.l.b16 %v283
  %v1165 = vunpack.c.h.b16 %v283
  %v1166 = vunpack.c.l.b16 %v284
  %v1167 = vunpack.c.h.b16 %v284
  %v1168 = vunpack.c.l.b16 %v285
  %v1169 = vunpack.c.h.b16 %v285
  %v1170 = vunpack.c.l.b16 %v286
  %v1171 = vunpack.c.h.b16 %v286
  %v1172 = vunpack.c.l.b16 %v287
  %v1173 = vunpack.c.h.b16 %v287
  %v1174 = vunpack.c.l.b16 %v288
  %v1175 = vunpack.c.h.b16 %v288
  %v1176 = vunpack.c.l.b16 %v289
  %v1177 = vunpack.c.h.b16 %v289
  %v1178 = vunpack.c.l.b16 %v290
  %v1179 = vunpack.c.h.b16 %v290
  %v1180 = vunpack.c.l.b16 %v291
  %v1181 = vunpack.c.h.b16 %v291
  %v1182 = vunpack.c.l.b16 %v292
  %v1183 = vunpack.c.h.b16 %v292
  %v1184 = vunpack.c.l.b16 %v293
  %v1185 = vunpack.c.h.b16 %v293
  %v1186 = vunpack.c.l.b16 %v294
  %v1187 = vunpack.c.h.b16 %v294
  %v1188 = vunpack.c.l.b16 %v295
  %v1189 = vunpack.c.h.b16 %v295
  %v1190 = vunpack.c.l.b16 %v296
  %v1191 = vunpack.c.h.b16 %v296
  %v1192 = vunpack.c.l.b16 %v297
  %v1193 = vunpack.c.h.b16 %v297
  %v1194 = vpack.c.b16 %v648, %v646
  %v1195 = vpack.c.b16 %v649, %v647
  %v1196 = vpack.c.b16 %v652, %v650
  %v1197 = vpack.c.b16 %v653, %v651
  %v1198 = vpack.c.b16 %v656, %v654
  %v1199 = vpack.c.b16 %v657, %v655
  %v1200 = vpack.c.b16 %v660, %v658
  %v1201 = vpack.c.b16 %v661, %v659
  %v1202 = vpack.c.b16 %v664, %v662
  %v1203 = vpack.c.b16 %v665, %v663
  %v1204 = vpack.c.b16 %v668, %v666
  %v1205 = vpack.c.b16 %v669, %v667
  %v1206 = vpack.c.b16 %v672, %v670
  %v1207 = vpack.c.b16 %v673, %v671
  %v1208 = vpack.c.b16 %v676, %v674
  %v1209 = vpack.c.b16 %v677, %v675
  %v1210 = vpack.c.b16 %v680, %v678
  %v1211 = vpack.c.b16 %v681, %v679
  %v1212 = vpack.c.b16 %v684, %v682
  %v1213 = vpack.c.b16 %v685, %v683
  %v1214 = vpack.c.b16 %v688, %v686
  %v1215 = vpack.c.b16 %v689, %v687
  %v1216 = vpack.c.b16 %v692, %v690
  %v1217 = vpack.c.b16 %v693, %v691
  %v1218 = vpack.c.b16 %v696, %v694
  %v1219 = vpack.c.b16 %v697, %v695
  %v1220 = vpack.c.b16 %v700, %v698
  %v1221 = vpack.c.b16 %v701, %v699
  %v1222 = vpack.c.b16 %v704, %v702
  %v1223 = vpack.c.b16 %v705, %v703
  %v1224 = vpack.c.b16 %v708, %v706
  %v1225 = vpack.c.b16 %v709, %v707
  %v1226 = vpack.c.b16 %v712, %v710
  %v1227 = vpack.c.b16 %v713, %v711
  %v1228 = vpack.c.b16 %v716, %v714
  %v1229 = vpack.c.b16 %v717, %v715
  %v1230 = vpack.c.b16 %v720, %v718
  %v1231 = vpack.c.b16 %v721, %v719
  %v1232 = vpack.c.b16 %v724, %v722
  %v1233 = vpack.c.b16 %v725, %v723
  %v1234 = vpack.c.b16 %v728, %v726
  %v1235 = vpack.c.b16 %v729, %v727
  %v1236 = vpack.c.b16 %v732, %v730
  %v1237 = vpack.c.b16 %v733, %v731
  %v1238 = vpack.c.b16 %v736, %v734
  %v1239 = vpack.c.b16 %v737, %v735
  %v1240 = vpack.c.b16 %v740, %v738
  %v1241 = vpack.c.b16 %v741, %v739
  %v1242 = vpack.c.b16 %v744, %v742
  %v1243 = vpack.c.b16 %v745, %v743
  %v1244 = vpack.c.b16 %v748, %v746
  %v1245 = vpack.c.b16 %v749, %v747
  %v1246 = vpack.c.b16 %v752, %v750
  %v1247 = vpack.c.b16 %v753, %v751
  %v1248 = vpack.c.b16 %v756, %v754
  %v1249 = vpack.c.b16 %v757, %v755
  %v1250 = vpack.c.b16 %v760, %v758
  %v1251 = vpack.c.b16 %v761, %v759
  %v1252 = vpack.c.b16 %v764, %v762
  %v1253 = vpack.c.b16 %v765, %v763
  %v1254 = vpack.c.b16 %v768, %v766
  %v1255 = vpack.c.b16 %v769, %v767
  %v1256 = vpack.c.b16 %v772, %v770
  %v1257 = vpack.c.b16 %v773, %v771
  %v1258 = vpack.c.b16 %v776, %v774
  %v1259 = vpack.c.b16 %v777, %v775
  %v1260 = vpack.c.b16 %v780, %v778
  %v1261 = vpack.c.b16 %v781, %v779
  %v1262 = vpack.c.b16 %v784, %v782
  %v1263 = vpack.c.b16 %v785, %v783
  %v1264 = vpack.c.b16 %v788, %v786
  %v1265 = vpack.c.b16 %v789, %v787
  %v1266 = vpack.c.b16 %v792, %v790
  %v1267 = vpack.c.b16 %v793, %v791
  %v1268 = vpack.c.b16 %v796, %v794
  %v1269 = vpack.c.b16 %v797, %v795
  %v1270 = vpack.c.b16 %v800, %v798
  %v1271 = vpack.c.b16 %v801, %v799
  %v1272 = vpack.c.b16 %v804, %v802
  %v1273 = vpack.c.b16 %v805, %v803
  %v1274 = vpack.c.b16 %v808, %v806
  %v1275 = vpack.c.b16 %v809, %v807
  %v1276 = vpack.c.b16 %v812, %v810
  %v1277 = vpack.c.b16 %v813, %v811
  %v1278 = vpack.c.b16 %v816, %v814
  %v1279 = vpack.c.b16 %v817, %v815
  %v1280 = vpack.c.b16 %v820, %v818
  %v1281 = vpack.c.b16 %v821, %v819
  %v1282 = vpack.c.b16 %v824, %v822
  %v1283 = vpack.c.b16 %v825, %v823
  %v1284 = vpack.c.b16 %v828, %v826
  %v1285 = vpack.c.b16 %v829, %v827
  %v1286 = vpack.c.b16 %v832, %v830
  %v1287 = vpack.c.b16 %v833, %v831
  %v1288 = vpack.c.b16 %v836, %v834
  %v1289 = vpack.c.b16 %v837, %v835
  %v1290 = vpack.c.b16 %v840, %v838
  %v1291 = vpack.c.b16 %v841, %v839
  %v1292 = vpack.c.b16 %v844, %v842
  %v1293 = vpack.c.b16 %v845, %v843
  %v1294 = vpack.c.b16 %v848, %v846
  %v1295 = vpack.c.b16 %v849, %v847
  %v1296 = vpack.c.b16 %v852, %v850
  %v1297 = vpack.c.b16 %v853, %v851
  %v1298 = vpack.c.b16 %v856, %v854
  %v1299 = vpack.c.b16 %v857, %v855
  %v1300 = vpack.c.b16 %v860, %v858
  %v1301 = vpack.c.b16 %v861, %v859
  %v1302 = vpack.c.b16 %v864, %v862
  %v1303 = vpack.c.b16 %v865, %v863
  %v1304 = vpack.c.b16 %v868, %v866
  %v1305 = vpack.c.b16 %v869, %v867
  %v1306 = vpack.c.b16 %v872, %v870
  %v1307 = vpack.c.b16 %v873, %v871
  %v1308 = vpack.c.b16 %v876, %v874
  %v1309 = vpack.c.b16 %v877, %v875
  %v1310 = vpack.c.b16 %v880, %v878
  %v1311 = vpack.c.b16 %v881, %v879
  %v1312 = vpack.c.b16 %v884, %v882
  %v1313 = vpack.c.b16 %v885, %v883
  %v1314 = vpack.c.b16 %v888, %v886
  %v1315 = vpack.c.b16 %v889, %v887
  %v1316 = vpack.c.b16 %v892, %v890
  %v1317 = vpack.c.b16 %v893, %v891
  %v1318 = vpack.c.b16 %v896, %v894
  %v1319 = vpack.c.b16 %v897, %v895
  %v1320 = vpack.c.b16 %v900, %v898
  %v1321 = vpack.c.b16 %v901, %v899
  %v1322 = vpack.c.b16 %v904, %v902
  %v1323 = vpack.c.b16 %v905, %v903
  %v1324 = vpack.c.b16 %v908, %v906
  %v1325 = vpack.c.b16 %v909, %v907
  %v1326 = vpack.c.b16 %v912, %v910
  %v1327 = vpack.c.b16 %v913, %v911
  %v1328 = vpack.c.b16 %v916, %v914
  %v1329 = vpack.c.b16 %v917, %v915
  %v1330 = vpack.c.b16 %v920, %v918
  %v1331 = vpack.c.b16 %v921, %v919
  %v1332 = vpack.c.b16 %v924, %v922
  %v1333 = vpack.c.b16 %v925, %v923
  %v1334 = vpack.c.b16 %v928, %v926
  %v1335 = vpack.c.b16 %v929, %v927
  %v1336 = vpack.c.b16 %v932, %v930
  %v1337 = vpack.c.b16 %v933, %v931
  %v1338 = vpack.c.b16 %v936, %v934
  %v1339 = vpack.c.b16 %v937, %v935
  %v1340 = vpack.c.b16 %v940, %v938
  %v1341 = vpack.c.b16 %v941, %v939
  %v1342 = vpack.c.b16 %v944, %v942
  %v1343 = vpack.c.b16 %v945, %v943
  %v1344 = vpack.c.b16 %v948, %v946
  %v1345 = vpack.c.b16 %v949, %v947
  %v1346 = vpack.c.b16 %v952, %v950
  %v1347 = vpack.c.b16 %v953, %v951
  %v1348 = vpack.c.b16 %v956, %v954
  %v1349 = vpack.c.b16 %v957, %v955
  %v1350 = vpack.c.b16 %v960, %v958
  %v1351 = vpack.c.b16 %v961, %v959
  %v1352 = vpack.c.b16 %v964, %v962
  %v1353 = vpack.c.b16 %v965, %v963
  %v1354 = vpack.c.b16 %v968, %v966
  %v1355 = vpack.c.b16 %v969, %v967
  %v1356 = vpack.c.b16 %v972, %v970
  %v1357 = vpack.c.b16 %v973, %v971
  %v1358 = vpack.c.b16 %v976, %v974
  %v1359 = vpack.c.b16 %v977, %v975
  %v1360 = vpack.c.b16 %v980, %v978
  %v1361 = vpack.c.b16 %v981, %v979
  %v1362 = vpack.c.b16 %v984, %v982
  %v1363 = vpack.c.b16 %v985, %v983
  %v1364 = vpack.c.b16 %v988, %v986
  %v1365 = vpack.c.b16 %v989, %v987
  %v1366 = vpack.c.b16 %v992, %v990
  %v1367 = vpack.c.b16 %v993, %v991
  %v1368 = vpack.c.b16 %v996, %v994
  %v1369 = vpack.c.b16 %v997, %v995
  %v1370 = vpack.c.b16 %v1000, %v998
  %v1371 = vpack.c.b16 %v1001, %v999
  %v1372 = vpack.c.b16 %v1004, %v1002
  %v1373 = vpack.c.b16 %v1005, %v1003
  %v1374 = vpack.c.b16 %v1008, %v1006
  %v1375 = vpack.c.b16 %v1009, %v1007
  %v1376 = vpack.c.b16 %v1012, %v1010
  %v1377 = vpack.c.b16 %v1013, %v1011
  %v1378 = vpack.c.b16 %v1016, %v1014
  %v1379 = vpack.c.b16 %v1017, %v1015
  %v1380 = vpack.c.b16 %v1020, %v1018
  %v1381 = vpack.c.b16 %v1021, %v1019
  %v1382 = vpack.c.b16 %v1024, %v1022
  %v1383 = vpack.c.b16 %v1025, %v1023
  %v1384 = vpack.c.b16 %v1028, %v1026
  %v1385 = vpack.c.b16 %v1029, %v1027
  %v1386 = vpack.c.b16 %v1032, %v1030
  %v1387 = vpack.c.b16 %v1033, %v1031
  %v1388 = vpack.c.b16 %v1036, %v1034
  %v1389 = vpack.c.b16 %v1037, %v1035
  %v1390 = vpack.c.b16 %v1040, %v1038
  %v1391 = vpack.c.b16 %v1041, %v1039
  %v1392 = vpack.c.b16 %v1044, %v1042
  %v1393 = vpack.c.b16 %v1045, %v1043
  %v1394 = vpack.c.b16 %v1048, %v1046
  %v1395 = vpack.c.b16 %v1049, %v1047
  %v1396 = vpack.c.b16 %v1052, %v1050
  %v1397 = vpack.c.b16 %v1053, %v1051
  %v1398 = vpack.c.b16 %v1056, %v1054
  %v1399 = vpack.c.b16 %v1057, %v1055
  %v1400 = vpack.c.b16 %v1060, %v1058
  %v1401 = vpack.c.b16 %v1061, %v1059
  %v1402 = vpack.c.b16 %v1064, %v1062
  %v1403 = vpack.c.b16 %v1065, %v1063
  %v1404 = vpack.c.b16 %v1068, %v1066
  %v1405 = vpack.c.b16 %v1069, %v1067
  %v1406 = vpack.c.b16 %v1072, %v1070
  %v1407 = vpack.c.b16 %v1073, %v1071
  %v1408 = vpack.c.b16 %v1076, %v1074
  %v1409 = vpack.c.b16 %v1077, %v1075
  %v1410 = vpack.c.b16 %v1080, %v1078
  %v1411 = vpack.c.b16 %v1081, %v1079
  %v1412 = vpack.c.b16 %v1084, %v1082
  %v1413 = vpack.c.b16 %v1085, %v1083
  %v1414 = vpack.c.b16 %v1088, %v1086
  %v1415 = vpack.c.b16 %v1089, %v1087
  %v1416 = vpack.c.b16 %v1092, %v1090
  %v1417 = vpack.c.b16 %v1093, %v1091
  %v1418 = vpack.c.b16 %v1096, %v1094
  %v1419 = vpack.c.b16 %v1097, %v1095
  %v1420 = vpack.c.b16 %v1100, %v1098
  %v1421 = vpack.c.b16 %v1101, %v1099
  %v1422 = vpack.c.b16 %v1104, %v1102
  %v1423 = vpack.c.b16 %v1105, %v1103
  %v1424 = vpack.c.b16 %v1108, %v1106
  %v1425 = vpack.c.b16 %v1109, %v1107
  %v1426 = vpack.c.b16 %v1112, %v1110
  %v1427 = vpack.c.b16 %v1113, %v1111
  %v1428 = vpack.c.b16 %v1116, %v1114
  %v1429 = vpack.c.b16 %v1117, %v1115
  %v1430 = vpack.c.b16 %v1120, %v1118
  %v1431 = vpack.c.b16 %v1121, %v1119
  %v1432 = vpack.c.b16 %v1124, %v1122
  %v1433 = vpack.c.b16 %v1125, %v1123
  %v1434 = vpack.c.b16 %v1128, %v1126
  %v1435 = vpack.c.b16 %v1129, %v1127
  %v1436 = vpack.c.b16 %v1132, %v1130
  %v1437 = vpack.c.b16 %v1133, %v1131
  %v1438 = vpack.c.b16 %v1136, %v1134
  %v1439 = vpack.c.b16 %v1137, %v1135
  %v1440 = vpack.c.b16 %v1140, %v1138
  %v1441 = vpack.c.b16 %v1141, %v1139
  %v1442 = vpack.c.b16 %v1144, %v1142
  %v1443 = vpack.c.b16 %v1145, %v1143
  %v1444 = vpack.c.b16 %v1148, %v1146
  %v1445 = vpack.c.b16 %v1149, %v1147
  %v1446 = vpack.c.b16 %v1152, %v1150
  %v1447 = vpack.c.b16 %v1153, %v1151
  %v1448 = vpack.c.b16 %v1156, %v1154
  %v1449 = vpack.c.b16 %v1157, %v1155
  %v1450 = vpack.c.b16 %v1160, %v1158
  %v1451 = vpack.c.b16 %v1161, %v1159
  %v1452 = vpack.c.b16 %v1164, %v1162
  %v1453 = vpack.c.b16 %v1165, %v1163
  %v1454 = vpack.c.b16 %v1168, %v1166
  %v1455 = vpack.c.b16 %v1169, %v1167
  %v1456 = vpack.c.b16 %v1172, %v1170
  %v1457 = vpack.c.b16 %v1173, %v1171
  %v1458 = vpack.c.b16 %v1176, %v1174
  %v1459 = vpack.c.b16 %v1177, %v1175
  %v1460 = vpack.c.b16 %v1180, %v1178
  %v1461 = vpack.c.b16 %v1181, %v1179
  %v1462 = vpack.c.b16 %v1184, %v1182
  %v1463 = vpack.c.b16 %v1185, %v1183
  %v1464 = vpack.c.b16 %v1188, %v1186
  %v1465 = vpack.c.b16 %v1189, %v1187
  %v1466 = vpack.c.b16 %v1192, %v1190
  %v1467 = vpack.c.b16 %v1193, %v1191
  %vm1740 = vcmask 89088
  %v1742 = vsel %vm1740, %v354, 0
  %vm1744 = vcmask 1044480
  %vm1745 = vcmask 1045504
  %v1746 = vsel %vm1744, 4294967295, 65535
  %v1747 = vsel %vm1745, %v1746, 0
  %v1749 = vand.u32 %v1466, %v1747
  %v1752 = vand.u32 %v1467, %v1747
  %1754 = vmatprep.subr.bf16.mxu0 %v1209
  %1755 = vmatpush1.bf16.msra.mxu0 %v1208
  %1756 = vmatprep.subr.bf16.mxu0 %v1207
  %1757 = vmatpush1.bf16.msra.mxu0 %v1206
  %1758 = vmatprep.subr.bf16.mxu0 %v1205
  %1759 = vmatpush1.bf16.msra.mxu0 %v1204
  %1760 = vmatprep.subr.bf16.mxu0 %v1203
  %1761 = vmatpush1.bf16.msra.mxu0 %v1202
  %1762 = vmatprep.subr.bf16.mxu0 %v1201
  %1763 = vmatpush1.bf16.msra.mxu0 %v1200
  %1764 = vmatprep.subr.bf16.mxu0 %v1199
  %1765 = vmatpush1.bf16.msra.mxu0 %v1198
  %1766 = vmatprep.subr.bf16.mxu0 %v1197
  %1767 = vmatpush1.bf16.msra.mxu0 %v1196
  %1768 = vmatprep.subr.bf16.mxu0 %v1195
  %1769 = vmatpush1.bf16.msra.mxu0 %v1194
  %1770 = vmatprep.subr.bf16.mxu0 %v1225
  %1771 = vmatpush2.bf16.msra.mxu0 %v1224
  %1772 = vmatprep.subr.bf16.mxu0 %v1223
  %1773 = vmatpush2.bf16.msra.mxu0 %v1222
  %1774 = vmatprep.subr.bf16.mxu0 %v1221
  %1775 = vmatpush2.bf16.msra.mxu0 %v1220
  %1776 = vmatprep.subr.bf16.mxu0 %v1219
  %1777 = vmatpush2.bf16.msra.mxu0 %v1218
  %1778 = vmatprep.subr.bf16.mxu0 %v1217
  %1779 = vmatpush2.bf16.msra.mxu0 %v1216
  %1780 = vmatprep.subr.bf16.mxu0 %v1215
  %1781 = vmatpush2.bf16.msra.mxu0 %v1214
  %1782 = vmatprep.subr.bf16.mxu0 %v1213
  %1783 = vmatpush2.bf16.msra.mxu0 %v1212
  %1784 = vmatprep.subr.bf16.mxu0 %v1211
  %1785 = vmatpush2.bf16.msra.mxu0 %v1210
  %1786 = vmatprep.mubr.bf16.mxu0 %v338
  %1787 = vmatmul.mubr.bf16.gmra.mxu0 %v337
  %v1788 = vpop.f32.mrf.mxu0
  %v1789 = vadd.f32 %v303, %v1788
  %v1790 = vpop.f32.mrf.mxu0
  %v1791 = vadd.f32 %v307, %v1790
  %v1792 = vpop.f32.mrf.mxu0
  %v1793 = vpop.f32.mrf.mxu0
  %1794 = vdwg.mxu0
  %1795 = vmatprep.subr.bf16.mxu0 %v1241
  %1796 = vmatpush1.bf16.msra.mxu0 %v1240
  %1797 = vmatprep.subr.bf16.mxu0 %v1239
  %1798 = vmatpush1.bf16.msra.mxu0 %v1238
  %1799 = vmatprep.subr.bf16.mxu0 %v1237
  %1800 = vmatpush1.bf16.msra.mxu0 %v1236
  %1801 = vmatprep.subr.bf16.mxu0 %v1235
  %1802 = vmatpush1.bf16.msra.mxu0 %v1234
  %1803 = vmatprep.subr.bf16.mxu0 %v1233
  %1804 = vmatpush1.bf16.msra.mxu0 %v1232
  %1805 = vmatprep.subr.bf16.mxu0 %v1231
  %1806 = vmatpush1.bf16.msra.mxu0 %v1230
  %1807 = vmatprep.subr.bf16.mxu0 %v1229
  %1808 = vmatpush1.bf16.msra.mxu0 %v1228
  %1809 = vmatprep.subr.bf16.mxu0 %v1227
  %1810 = vmatpush1.bf16.msra.mxu0 %v1226
  %1811 = vmatprep.subr.bf16.mxu0 %v1257
  %1812 = vmatpush2.bf16.msra.mxu0 %v1256
  %1813 = vmatprep.subr.bf16.mxu0 %v1255
  %1814 = vmatpush2.bf16.msra.mxu0 %v1254
  %1815 = vmatprep.subr.bf16.mxu0 %v1253
  %1816 = vmatpush2.bf16.msra.mxu0 %v1252
  %1817 = vmatprep.subr.bf16.mxu0 %v1251
  %1818 = vmatpush2.bf16.msra.mxu0 %v1250
  %1819 = vmatprep.subr.bf16.mxu0 %v1249
  %1820 = vmatpush2.bf16.msra.mxu0 %v1248
  %1821 = vmatprep.subr.bf16.mxu0 %v1247
  %1822 = vmatpush2.bf16.msra.mxu0 %v1246
  %1823 = vmatprep.subr.bf16.mxu0 %v1245
  %1824 = vmatpush2.bf16.msra.mxu0 %v1244
  %1825 = vmatprep.subr.bf16.mxu0 %v1243
  %1826 = vmatpush2.bf16.msra.mxu0 %v1242
  %1827 = vmatprep.mubr.bf16.mxu0 %v340
  %1828 = vmatmul.mubr.bf16.gmra.mxu0 %v339
  %v1829 = vpop.f32.mrf.mxu0
  %v1830 = vadd.f32 %v1789, %v1829
  %v1831 = vpop.f32.mrf.mxu0
  %v1832 = vadd.f32 %v1791, %v1831
  %v1833 = vpop.f32.mrf.mxu0
  %v1834 = vpop.f32.mrf.mxu0
  %1835 = vdwg.mxu0
  %1836 = vmatprep.subr.bf16.mxu0 %v1273
  %1837 = vmatpush1.bf16.msra.mxu0 %v1272
  %1838 = vmatprep.subr.bf16.mxu0 %v1271
  %1839 = vmatpush1.bf16.msra.mxu0 %v1270
  %1840 = vmatprep.subr.bf16.mxu0 %v1269
  %1841 = vmatpush1.bf16.msra.mxu0 %v1268
  %1842 = vmatprep.subr.bf16.mxu0 %v1267
  %1843 = vmatpush1.bf16.msra.mxu0 %v1266
  %1844 = vmatprep.subr.bf16.mxu0 %v1265
  %1845 = vmatpush1.bf16.msra.mxu0 %v1264
  %1846 = vmatprep.subr.bf16.mxu0 %v1263
  %1847 = vmatpush1.bf16.msra.mxu0 %v1262
  %1848 = vmatprep.subr.bf16.mxu0 %v1261
  %1849 = vmatpush1.bf16.msra.mxu0 %v1260
  %1850 = vmatprep.subr.bf16.mxu0 %v1259
  %1851 = vmatpush1.bf16.msra.mxu0 %v1258
  %1852 = vmatprep.subr.bf16.mxu0 %v1289
  %1853 = vmatpush2.bf16.msra.mxu0 %v1288
  %1854 = vmatprep.subr.bf16.mxu0 %v1287
  %1855 = vmatpush2.bf16.msra.mxu0 %v1286
  %1856 = vmatprep.subr.bf16.mxu0 %v1285
  %1857 = vmatpush2.bf16.msra.mxu0 %v1284
  %1858 = vmatprep.subr.bf16.mxu0 %v1283
  %1859 = vmatpush2.bf16.msra.mxu0 %v1282
  %1860 = vmatprep.subr.bf16.mxu0 %v1281
  %1861 = vmatpush2.bf16.msra.mxu0 %v1280
  %1862 = vmatprep.subr.bf16.mxu0 %v1279
  %1863 = vmatpush2.bf16.msra.mxu0 %v1278
  %1864 = vmatprep.subr.bf16.mxu0 %v1277
  %1865 = vmatpush2.bf16.msra.mxu0 %v1276
  %1866 = vmatprep.subr.bf16.mxu0 %v1275
  %1867 = vmatpush2.bf16.msra.mxu0 %v1274
  %1868 = vmatprep.mubr.bf16.mxu0 %v342
  %1869 = vmatmul.mubr.bf16.gmra.mxu0 %v341
  %v1870 = vpop.f32.mrf.mxu0
  %v1871 = vadd.f32 %v1830, %v1870
  %v1872 = vpop.f32.mrf.mxu0
  %v1873 = vadd.f32 %v1832, %v1872
  %v1874 = vpop.f32.mrf.mxu0
  %v1875 = vpop.f32.mrf.mxu0
  %1876 = vdwg.mxu0
  %1877 = vmatprep.subr.bf16.mxu0 %v1305
  %1878 = vmatpush1.bf16.msra.mxu0 %v1304
  %1879 = vmatprep.subr.bf16.mxu0 %v1303
  %1880 = vmatpush1.bf16.msra.mxu0 %v1302
  %1881 = vmatprep.subr.bf16.mxu0 %v1301
  %1882 = vmatpush1.bf16.msra.mxu0 %v1300
  %1883 = vmatprep.subr.bf16.mxu0 %v1299
  %1884 = vmatpush1.bf16.msra.mxu0 %v1298
  %1885 = vmatprep.subr.bf16.mxu0 %v1297
  %1886 = vmatpush1.bf16.msra.mxu0 %v1296
  %1887 = vmatprep.subr.bf16.mxu0 %v1295
  %1888 = vmatpush1.bf16.msra.mxu0 %v1294
  %1889 = vmatprep.subr.bf16.mxu0 %v1293
  %1890 = vmatpush1.bf16.msra.mxu0 %v1292
  %1891 = vmatprep.subr.bf16.mxu0 %v1291
  %1892 = vmatpush1.bf16.msra.mxu0 %v1290
  %1893 = vmatprep.subr.bf16.mxu0 %v1321
  %1894 = vmatpush2.bf16.msra.mxu0 %v1320
  %1895 = vmatprep.subr.bf16.mxu0 %v1319
  %1896 = vmatpush2.bf16.msra.mxu0 %v1318
  %1897 = vmatprep.subr.bf16.mxu0 %v1317
  %1898 = vmatpush2.bf16.msra.mxu0 %v1316
  %1899 = vmatprep.subr.bf16.mxu0 %v1315
  %1900 = vmatpush2.bf16.msra.mxu0 %v1314
  %1901 = vmatprep.subr.bf16.mxu0 %v1313
  %1902 = vmatpush2.bf16.msra.mxu0 %v1312
  %1903 = vmatprep.subr.bf16.mxu0 %v1311
  %1904 = vmatpush2.bf16.msra.mxu0 %v1310
  %1905 = vmatprep.subr.bf16.mxu0 %v1309
  %1906 = vmatpush2.bf16.msra.mxu0 %v1308
  %1907 = vmatprep.subr.bf16.mxu0 %v1307
  %1908 = vmatpush2.bf16.msra.mxu0 %v1306
  %1909 = vmatprep.mubr.bf16.mxu0 %v344
  %1910 = vmatmul.mubr.bf16.gmra.mxu0 %v343
  %v1911 = vpop.f32.mrf.mxu0
  %v1912 = vadd.f32 %v1871, %v1911
  %v1913 = vpop.f32.mrf.mxu0
  %v1914 = vadd.f32 %v1873, %v1913
  %v1915 = vpop.f32.mrf.mxu0
  %v1916 = vpop.f32.mrf.mxu0
  %1917 = vdwg.mxu0
  %1918 = vmatprep.subr.bf16.mxu0 %v1337
  %1919 = vmatpush1.bf16.msra.mxu0 %v1336
  %1920 = vmatprep.subr.bf16.mxu0 %v1335
  %1921 = vmatpush1.bf16.msra.mxu0 %v1334
  %1922 = vmatprep.subr.bf16.mxu0 %v1333
  %1923 = vmatpush1.bf16.msra.mxu0 %v1332
  %1924 = vmatprep.subr.bf16.mxu0 %v1331
  %1925 = vmatpush1.bf16.msra.mxu0 %v1330
  %1926 = vmatprep.subr.bf16.mxu0 %v1329
  %1927 = vmatpush1.bf16.msra.mxu0 %v1328
  %1928 = vmatprep.subr.bf16.mxu0 %v1327
  %1929 = vmatpush1.bf16.msra.mxu0 %v1326
  %1930 = vmatprep.subr.bf16.mxu0 %v1325
  %1931 = vmatpush1.bf16.msra.mxu0 %v1324
  %1932 = vmatprep.subr.bf16.mxu0 %v1323
  %1933 = vmatpush1.bf16.msra.mxu0 %v1322
  %1934 = vmatprep.subr.bf16.mxu0 %v1353
  %1935 = vmatpush2.bf16.msra.mxu0 %v1352
  %1936 = vmatprep.subr.bf16.mxu0 %v1351
  %1937 = vmatpush2.bf16.msra.mxu0 %v1350
  %1938 = vmatprep.subr.bf16.mxu0 %v1349
  %1939 = vmatpush2.bf16.msra.mxu0 %v1348
  %1940 = vmatprep.subr.bf16.mxu0 %v1347
  %1941 = vmatpush2.bf16.msra.mxu0 %v1346
  %1942 = vmatprep.subr.bf16.mxu0 %v1345
  %1943 = vmatpush2.bf16.msra.mxu0 %v1344
  %1944 = vmatprep.subr.bf16.mxu0 %v1343
  %1945 = vmatpush2.bf16.msra.mxu0 %v1342
  %1946 = vmatprep.subr.bf16.mxu0 %v1341
  %1947 = vmatpush2.bf16.msra.mxu0 %v1340
  %1948 = vmatprep.subr.bf16.mxu0 %v1339
  %1949 = vmatpush2.bf16.msra.mxu0 %v1338
  %1950 = vmatprep.mubr.bf16.mxu0 %v346
  %1951 = vmatmul.mubr.bf16.gmra.mxu0 %v345
  %v1952 = vpop.f32.mrf.mxu0
  %v1953 = vadd.f32 %v1912, %v1952
  %v1954 = vpop.f32.mrf.mxu0
  %v1955 = vadd.f32 %v1914, %v1954
  %v1956 = vpop.f32.mrf.mxu0
  %v1957 = vpop.f32.mrf.mxu0
  %1958 = vdwg.mxu0
  %1959 = vmatprep.subr.bf16.mxu0 %v1369
  %1960 = vmatpush1.bf16.msra.mxu0 %v1368
  %1961 = vmatprep.subr.bf16.mxu0 %v1367
  %1962 = vmatpush1.bf16.msra.mxu0 %v1366
  %1963 = vmatprep.subr.bf16.mxu0 %v1365
  %1964 = vmatpush1.bf16.msra.mxu0 %v1364
  %1965 = vmatprep.subr.bf16.mxu0 %v1363
  %1966 = vmatpush1.bf16.msra.mxu0 %v1362
  %1967 = vmatprep.subr.bf16.mxu0 %v1361
  %1968 = vmatpush1.bf16.msra.mxu0 %v1360
  %1969 = vmatprep.subr.bf16.mxu0 %v1359
  %1970 = vmatpush1.bf16.msra.mxu0 %v1358
  %1971 = vmatprep.subr.bf16.mxu0 %v1357
  %1972 = vmatpush1.bf16.msra.mxu0 %v1356
  %1973 = vmatprep.subr.bf16.mxu0 %v1355
  %1974 = vmatpush1.bf16.msra.mxu0 %v1354
  %1975 = vmatprep.subr.bf16.mxu0 %v1385
  %1976 = vmatpush2.bf16.msra.mxu0 %v1384
  %1977 = vmatprep.subr.bf16.mxu0 %v1383
  %1978 = vmatpush2.bf16.msra.mxu0 %v1382
  %1979 = vmatprep.subr.bf16.mxu0 %v1381
  %1980 = vmatpush2.bf16.msra.mxu0 %v1380
  %1981 = vmatprep.subr.bf16.mxu0 %v1379
  %1982 = vmatpush2.bf16.msra.mxu0 %v1378
  %1983 = vmatprep.subr.bf16.mxu0 %v1377
  %1984 = vmatpush2.bf16.msra.mxu0 %v1376
  %1985 = vmatprep.subr.bf16.mxu0 %v1375
  %1986 = vmatpush2.bf16.msra.mxu0 %v1374
  %1987 = vmatprep.subr.bf16.mxu0 %v1373
  %1988 = vmatpush2.bf16.msra.mxu0 %v1372
  %1989 = vmatprep.subr.bf16.mxu0 %v1371
  %1990 = vmatpush2.bf16.msra.mxu0 %v1370
  %1991 = vmatprep.mubr.bf16.mxu0 %v348
  %1992 = vmatmul.mubr.bf16.gmra.mxu0 %v347
  %v1993 = vpop.f32.mrf.mxu0
  %v1994 = vadd.f32 %v1953, %v1993
  %v1995 = vpop.f32.mrf.mxu0
  %v1996 = vadd.f32 %v1955, %v1995
  %v1997 = vpop.f32.mrf.mxu0
  %v1998 = vpop.f32.mrf.mxu0
  %1999 = vdwg.mxu0
  %2000 = vmatprep.subr.bf16.mxu0 %v1401
  %2001 = vmatpush1.bf16.msra.mxu0 %v1400
  %2002 = vmatprep.subr.bf16.mxu0 %v1399
  %2003 = vmatpush1.bf16.msra.mxu0 %v1398
  %2004 = vmatprep.subr.bf16.mxu0 %v1397
  %2005 = vmatpush1.bf16.msra.mxu0 %v1396
  %2006 = vmatprep.subr.bf16.mxu0 %v1395
  %2007 = vmatpush1.bf16.msra.mxu0 %v1394
  %2008 = vmatprep.subr.bf16.mxu0 %v1393
  %2009 = vmatpush1.bf16.msra.mxu0 %v1392
  %2010 = vmatprep.subr.bf16.mxu0 %v1391
  %2011 = vmatpush1.bf16.msra.mxu0 %v1390
  %2012 = vmatprep.subr.bf16.mxu0 %v1389
  %2013 = vmatpush1.bf16.msra.mxu0 %v1388
  %2014 = vmatprep.subr.bf16.mxu0 %v1387
  %2015 = vmatpush1.bf16.msra.mxu0 %v1386
  %2016 = vmatprep.subr.bf16.mxu0 %v1417
  %2017 = vmatpush2.bf16.msra.mxu0 %v1416
  %2018 = vmatprep.subr.bf16.mxu0 %v1415
  %2019 = vmatpush2.bf16.msra.mxu0 %v1414
  %2020 = vmatprep.subr.bf16.mxu0 %v1413
  %2021 = vmatpush2.bf16.msra.mxu0 %v1412
  %2022 = vmatprep.subr.bf16.mxu0 %v1411
  %2023 = vmatpush2.bf16.msra.mxu0 %v1410
  %2024 = vmatprep.subr.bf16.mxu0 %v1409
  %2025 = vmatpush2.bf16.msra.mxu0 %v1408
  %2026 = vmatprep.subr.bf16.mxu0 %v1407
  %2027 = vmatpush2.bf16.msra.mxu0 %v1406
  %2028 = vmatprep.subr.bf16.mxu0 %v1405
  %2029 = vmatpush2.bf16.msra.mxu0 %v1404
  %2030 = vmatprep.subr.bf16.mxu0 %v1403
  %2031 = vmatpush2.bf16.msra.mxu0 %v1402
  %2032 = vmatprep.mubr.bf16.mxu0 %v350
  %2033 = vmatmul.mubr.bf16.gmra.mxu0 %v349
  %v2034 = vpop.f32.mrf.mxu0
  %v2035 = vadd.f32 %v1994, %v2034
  %v2036 = vpop.f32.mrf.mxu0
  %v2037 = vadd.f32 %v1996, %v2036
  %v2038 = vpop.f32.mrf.mxu0
  %v2039 = vpop.f32.mrf.mxu0
  %2040 = vdwg.mxu0
  %2041 = vmatprep.subr.bf16.mxu0 %v1433
  %2042 = vmatpush1.bf16.msra.mxu0 %v1432
  %2043 = vmatprep.subr.bf16.mxu0 %v1431
  %2044 = vmatpush1.bf16.msra.mxu0 %v1430
  %2045 = vmatprep.subr.bf16.mxu0 %v1429
  %2046 = vmatpush1.bf16.msra.mxu0 %v1428
  %2047 = vmatprep.subr.bf16.mxu0 %v1427
  %2048 = vmatpush1.bf16.msra.mxu0 %v1426
  %2049 = vmatprep.subr.bf16.mxu0 %v1425
  %2050 = vmatpush1.bf16.msra.mxu0 %v1424
  %2051 = vmatprep.subr.bf16.mxu0 %v1423
  %2052 = vmatpush1.bf16.msra.mxu0 %v1422
  %2053 = vmatprep.subr.bf16.mxu0 %v1421
  %2054 = vmatpush1.bf16.msra.mxu0 %v1420
  %2055 = vmatprep.subr.bf16.mxu0 %v1419
  %2056 = vmatpush1.bf16.msra.mxu0 %v1418
  %2057 = vmatprep.subr.bf16.mxu0 %v1449
  %2058 = vmatpush2.bf16.msra.mxu0 %v1448
  %2059 = vmatprep.subr.bf16.mxu0 %v1447
  %2060 = vmatpush2.bf16.msra.mxu0 %v1446
  %2061 = vmatprep.subr.bf16.mxu0 %v1445
  %2062 = vmatpush2.bf16.msra.mxu0 %v1444
  %2063 = vmatprep.subr.bf16.mxu0 %v1443
  %2064 = vmatpush2.bf16.msra.mxu0 %v1442
  %2065 = vmatprep.subr.bf16.mxu0 %v1441
  %2066 = vmatpush2.bf16.msra.mxu0 %v1440
  %2067 = vmatprep.subr.bf16.mxu0 %v1439
  %2068 = vmatpush2.bf16.msra.mxu0 %v1438
  %2069 = vmatprep.subr.bf16.mxu0 %v1437
  %2070 = vmatpush2.bf16.msra.mxu0 %v1436
  %2071 = vmatprep.subr.bf16.mxu0 %v1435
  %2072 = vmatpush2.bf16.msra.mxu0 %v1434
  %2073 = vmatprep.mubr.bf16.mxu0 %v352
  %2074 = vmatmul.mubr.bf16.gmra.mxu0 %v351
  %v2075 = vpop.f32.mrf.mxu0
  %v2076 = vadd.f32 %v2035, %v2075
  %v2077 = vpop.f32.mrf.mxu0
  %v2078 = vadd.f32 %v2037, %v2077
  %v2079 = vpop.f32.mrf.mxu0
  %v2080 = vpop.f32.mrf.mxu0
  %2081 = vdwg.mxu0
  %2082 = vmatprep.subr.bf16.mxu0 %v1465
  %2083 = vmatpush1.bf16.msra.mxu0 %v1464
  %2084 = vmatprep.subr.bf16.mxu0 %v1463
  %2085 = vmatpush1.bf16.msra.mxu0 %v1462
  %2086 = vmatprep.subr.bf16.mxu0 %v1461
  %2087 = vmatpush1.bf16.msra.mxu0 %v1460
  %2088 = vmatprep.subr.bf16.mxu0 %v1459
  %2089 = vmatpush1.bf16.msra.mxu0 %v1458
  %2090 = vmatprep.subr.bf16.mxu0 %v1457
  %2091 = vmatpush1.bf16.msra.mxu0 %v1456
  %2092 = vmatprep.subr.bf16.mxu0 %v1455
  %2093 = vmatpush1.bf16.msra.mxu0 %v1454
  %2094 = vmatprep.subr.bf16.mxu0 %v1453
  %2095 = vmatpush1.bf16.msra.mxu0 %v1452
  %2096 = vmatprep.subr.bf16.mxu0 %v1451
  %2097 = vmatpush1.bf16.msra.mxu0 %v1450
  %2098 = vmatprep.subr.bf16.mxu0 0
  %2099 = vmatpush2.bf16.msra.mxu0 0
  %2100 = vmatprep.subr.bf16.mxu0 0
  %2101 = vmatpush2.bf16.msra.mxu0 0
  %2102 = vmatprep.subr.bf16.mxu0 0
  %2103 = vmatpush2.bf16.msra.mxu0 0
  %2104 = vmatprep.subr.bf16.mxu0 0
  %2105 = vmatpush2.bf16.msra.mxu0 0
  %2106 = vmatprep.subr.bf16.mxu0 0
  %2107 = vmatpush2.bf16.msra.mxu0 0
  %2108 = vmatprep.subr.bf16.mxu0 0
  %2109 = vmatpush2.bf16.msra.mxu0 0
  %2110 = vmatprep.subr.bf16.mxu0 0
  %2111 = vmatpush2.bf16.msra.mxu0 0
  %2112 = vmatprep.subr.bf16.mxu0 %v1752
  %2113 = vmatpush2.bf16.msra.mxu0 %v1749
  %2114 = vmatprep.mubr.bf16.mxu0 %v1742
  %2115 = vmatmul.mubr.bf16.gmra.mxu0 %v353
  %v2116 = vpop.f32.mrf.mxu0
  %v2117 = vadd.f32 %v2076, %v2116
  %v2118 = vpop.f32.mrf.mxu0
  %v2119 = vadd.f32 %v2078, %v2118
  %v2120 = vpop.f32.mrf.mxu0
  %v2121 = vpop.f32.mrf.mxu0
  %2122 = vdwg.mxu0
  %v2123 = vmax.f32 %v2117, 0.0
  %v2124 = vmax.f32 %v2119, 0.0
  %2125 = vst [vmem:[%s3] sm:$0xff] %v2123
  %2126 = vst [vmem:[%s3 + $0x8] sm:$0xff] %v2124
  // Predicated region
  $region14: #{unet_forward.26} parent=0 // pred_check
    _
  $region15: #{unet_forward.26} parent=0 // pred_check_branch
    %2128 = sbr.rel (0) target = $region17
  $region16: #{unet_forward.26} parent=0 // pred_region
    _
  $region17: #{unet_forward.26} parent=0 // pred_fallthru
    _
  // Predicated region
  $region18: #{unet_forward.26} parent=0 // pred_check
    _
  $region19: #{unet_forward.26} parent=0 // pred_check_branch
    %2130 = sbr.rel (0) target = $region21
  $region20: #{unet_forward.26} parent=0 // pred_region
    _
  $region21: #{unet_forward.26} parent=0 // pred_fallthru
    _

</llo_original>
